<compile_context>
chip_gen: v7x
topology: tpu7x:2x2x1
jax: 0.10.0
libtpu: 0.0.40
codegen_flags: <defaults>
</compile_context>

<pallas_src>
import functools

import jax
import jax.numpy as jnp
from jax.experimental import pallas as pl
from jax.experimental.pallas import tpu as pltpu

LEAKY_SLOPE = 0.1
IN_EPS = 1e-5
LANE = 128                      # Cout padding / tile granularity
SUB = 16                        # sublane alignment for bf16 row offsets


def _round_up(x, m):
    return (x + m - 1) // m * m


@functools.lru_cache(maxsize=1)
def _vmem_budget():
    """Generation-aware (budget, vmem_limit) in bytes. Falls back to 64 MiB caps."""
    cap = 64 * 1024 * 1024
    try:
        info = pltpu.get_tpu_info()
        cap_attr = getattr(info, "vmem_capacity_bytes", None)
        if cap_attr:
            cap = int(cap_attr)
    except Exception:
        pass
    budget = min(int(cap * 0.70), 96 * 1024 * 1024)    # working-set estimate target
    limit = min(int(cap * 0.80), 104 * 1024 * 1024)    # Mosaic scoped-VMEM limit
    return budget, limit


# ----------------------------------------------------------------------------
# Fused Pallas kernel: conv (r aligned row-tap matmuls) + bias + IN + activation
# ----------------------------------------------------------------------------
def _conv_fused_kernel(*refs, r, row_stride, qout, ow_valid, has_bias, has_in,
                       apply_leaky, apply_sigmoid, inv_count):
    it = iter(refs)
    z_ref = next(it)                        # (1, Q, Kc)   bf16  column-folded input
    w_ref = next(it)                        # (r, Kc, TN)  bf16  row-tap weight stack
    b_ref = next(it) if has_bias else None  # (1, TN)      f32
    g_ref = next(it) if has_in else None    # (1, TN)      f32   gamma
    bt_ref = next(it) if has_in else None   # (1, TN)      f32   beta
    o_ref = next(it)                        # (1, qout, TN)

    # Convolution: the dw taps are already folded into Kc, so only r row taps
    # remain.  Every LHS slice offset (dh * row_stride) is a static multiple of 16
    # (aligned, zero-cost view) and all taps chain into one f32 accumulator.
    acc = None
    for dh in range(r):
        off = dh * row_stride
        lhs = z_ref[0, off:off + qout, :]                          # (qout, Kc) bf16
        p = jnp.dot(lhs, w_ref[dh], preferred_element_type=jnp.float32)
        acc = p if acc is None else acc + p

    x = acc                                                        # (qout, TN) f32
    if has_bias:
        x = x + b_ref[...]

    if has_in:
        # InstanceNorm2d, train-mode per-(sample, channel) stats over valid spatial
        # positions, biased variance, eps inside rsqrt, affine.
        if row_stride > ow_valid:
            col = jax.lax.broadcasted_iota(jnp.int32, (qout, 1), 0) % row_stride
            m = (col < ow_valid).astype(jnp.float32)
            xm = x * m                                             # reused for both sums
        else:
            xm = x
        mean = jnp.sum(xm, axis=0, keepdims=True) * inv_count
        ex2 = jnp.sum(xm * x, axis=0, keepdims=True) * inv_count
        var = jnp.maximum(ex2 - mean * mean, 0.0)
        x = (x - mean) * jax.lax.rsqrt(var + IN_EPS)
        x = x * g_ref[...] + bt_ref[...]

    if apply_leaky:
        x = jnp.maximum(x, LEAKY_SLOPE * x)
    if apply_sigmoid:
        x = 1.0 / (1.0 + jnp.exp(-x))        # exact sigmoid (output parity)

    o_ref[0] = x.astype(o_ref.dtype)


# ----------------------------------------------------------------------------
# Pallas wrapper
# ----------------------------------------------------------------------------
def _pick_tn(q, kc, r, qout, cout_pad, out_bytes, budget):
    """Largest Cout tile (multiple of 128) whose working set fits the VMEM budget."""
    kc_lane = _round_up(kc, LANE)
    kc_sub = _round_up(kc, SUB)
    for tn in (512, 256, 128):
        if cout_pad % tn != 0:
            continue
        vmem = (
            2 * q * kc_lane * 2          # input block, double-buffered, bf16 (lane-padded)
            + 2 * r * kc_sub * tn * 2    # weight block, double-buffered, bf16
            + 2 * qout * tn * out_bytes  # output block, double-buffered
            + 2 * qout * tn * 4          # f32 accumulator + live product temp
        )
        if vmem <= budget:
            return tn
    return 128


def conv_fused(zf, wst, bias, gamma, beta, *, r, row_stride, qout, ow_valid,
               inv_count, apply_leaky, apply_sigmoid, out_dtype):
    """Fused conv(+bias)(+InstanceNorm)(+LeakyReLU/Sigmoid).

    zf:   (N, Q, Kc)        bf16  column-folded, flattened, zero-padded input
    wst:  (r, Kc, Cout_pad) bf16  row-tap weight stack
    bias/gamma/beta: (1, Cout_pad) f32 or None
    ->    (N, qout, Cout_pad) in out_dtype
    """
    n, q, kc = zf.shape
    _, _, cout_pad = wst.shape
    has_bias = bias is not None
    has_in = gamma is not None
    out_bytes = jnp.dtype(out_dtype).itemsize
    budget, limit = _vmem_budget()
    tn = _pick_tn(q, kc, r, qout, cout_pad, out_bytes, budget)
    ct = cout_pad // tn

    # Grid: Cout tiles OUTER, samples INNER.  The weight index_map is independent
    # of the inner axis, so the weight tile stays resident in VMEM across the batch.
    in_specs = [
        pl.BlockSpec((1, q, kc), lambda c, i: (i, 0, 0)),
        pl.BlockSpec((r, kc, tn), lambda c, i: (0, 0, c)),
    ]
    operands = [zf, wst]
    if has_bias:
        in_specs.append(pl.BlockSpec((1, tn), lambda c, i: (0, c)))
        operands.append(bias)
    if has_in:
        in_specs.append(pl.BlockSpec((1, tn), lambda c, i: (0, c)))
        operands.append(gamma)
        in_specs.append(pl.BlockSpec((1, tn), lambda c, i: (0, c)))
        operands.append(beta)

    kernel = functools.partial(
        _conv_fused_kernel, r=r, row_stride=row_stride, qout=qout,
        ow_valid=ow_valid, has_bias=has_bias, has_in=has_in,
        apply_leaky=apply_leaky, apply_sigmoid=apply_sigmoid, inv_count=inv_count)

    flops = 2 * n * qout * kc * r * cout_pad
    bytes_accessed = (ct * n * q * kc * 2                 # input re-read per Cout tile
                      + r * kc * cout_pad * 2             # weights read once
                      + n * qout * cout_pad * out_bytes   # output written once
                      + (int(has_bias) + 2 * int(has_in)) * cout_pad * 4)
    transcendentals = (n * qout * cout_pad if apply_sigmoid
                       else (n * cout_pad if has_in else 0))

    return pl.pallas_call(
        kernel,
        out_shape=jax.ShapeDtypeStruct((n, qout, cout_pad), out_dtype),
        grid=(ct, n),
        in_specs=in_specs,
        out_specs=pl.BlockSpec((1, qout, tn), lambda c, i: (i, 0, c)),
        compiler_params=pltpu.CompilerParams(
            dimension_semantics=("parallel", "parallel"),
            vmem_limit_bytes=limit),
        cost_estimate=pl.CostEstimate(
            flops=flops, transcendentals=transcendentals,
            bytes_accessed=bytes_accessed),
    )(*operands)


# ----------------------------------------------------------------------------
# JAX glue: geometry, space-to-depth, column fold, weight restack, params
# ----------------------------------------------------------------------------
def _layer_geometry(h, w, k, s):
    if s == 2:
        assert k == 4 and h % 2 == 0 and w % 2 == 0, (h, w, k, s)
        oh, ow = h // 2, w // 2
        ih, r = oh + 1, 2           # space-to-depth'd grid rows / effective taps
    else:
        assert k == 3 and s == 1, (k, s)
        oh, ow = h, w
        ih, r = h + 2, 3
    ow_pad = _round_up(ow, SUB)     # row stride: multiple of 16 -> aligned row taps
    return dict(oh=oh, ow=ow, ih=ih, r=r, ow_pad=ow_pad,
                q=ih * ow_pad, qout=oh * ow_pad)


def _space_to_depth2(xp):
    n, hp, wp, c = xp.shape
    z = xp.reshape(n, hp // 2, 2, wp // 2, 2, c)
    z = jnp.transpose(z, (0, 1, 3, 2, 4, 5))        # (n, y, x, a, b, c)
    return z.reshape(n, hp // 2, wp // 2, 4 * c)


def _prep_input(x, s, geom):
    """x: (N,H,W,C) -> column-folded, flattened, zero-padded (N, Q, Kc) bf16."""
    n = x.shape[0]
    xp = jnp.pad(x, ((0, 0), (1, 1), (1, 1), (0, 0)))
    z = _space_to_depth2(xp) if s == 2 else xp
    r, ow, ow_pad = geom["r"], geom["ow"], geom["ow_pad"]
    # Fold the dw (column) taps into channels: Kc = r * Cz.
    zc = jnp.concatenate([z[:, :, dw:dw + ow, :] for dw in range(r)], axis=-1)
    if ow_pad > ow:
        zc = jnp.pad(zc, ((0, 0), (0, 0), (0, ow_pad - ow), (0, 0)))
    return zc.reshape(n, geom["q"], zc.shape[-1]).astype(jnp.bfloat16)


def _prep_weight(w, s, cin_act, cout_pad):
    """(Cout,Cin,K,K) torch-layout -> (r, Kc, Cout_pad) bf16 row-tap weight stack."""
    cout, cin, k, _ = w.shape
    if cin_act > cin:                               # zero rows for padded input channels
        w = jnp.pad(w, ((0, 0), (0, cin_act - cin), (0, 0), (0, 0)))
    wt = jnp.transpose(w, (2, 3, 1, 0))             # (kh, kw, cin_act, cout)
    if s == 2:
        # kh = 2*dh + a, kw = 2*dw + b ; folded channel order is (dw, a, b, c)
        wt = wt.reshape(2, 2, 2, 2, cin_act, cout)  # (dh, a, dw, b, c, co)
        wt = jnp.transpose(wt, (0, 2, 1, 3, 4, 5))  # (dh, dw, a, b, c, co)
        wst = wt.reshape(2, 8 * cin_act, cout)
    else:
        wst = wt.reshape(3, 3 * cin_act, cout)      # (dh, dw*cin + c, co)
    if cout_pad > cout:
        wst = jnp.pad(wst, ((0, 0), (0, 0), (0, cout_pad - cout)))
    return wst.astype(jnp.bfloat16)


def _extract_valid(y, geom, cout_keep):
    n = y.shape[0]
    y = y[:, :, :cout_keep]
    y = y.reshape(n, geom["oh"], geom["ow_pad"], cout_keep)
    return y[:, :, : geom["ow"], :]


def _conv_weight(key, cout, cin, k):
    # PyTorch Conv2d default init: uniform(-b, b), b = 1/sqrt(fan_in)
    bound = 1.0 / (cin * k * k) ** 0.5
    kw, kb = jax.random.split(key)
    w = jax.random.uniform(kw, (cout, cin, k, k), jnp.float32, -bound, bound)
    b = jax.random.uniform(kb, (cout,), jnp.float32, -bound, bound)
    return w, b


def init_discriminator_params(key, input_nc, conv_dim=64, n_layers=6):
    layers = []
    key, k0 = jax.random.split(key)
    w, b = _conv_weight(k0, conv_dim, input_nc, 4)
    layers.append(dict(w=w, b=b, k=4, s=2))
    curr = conv_dim
    for _ in range(1, n_layers):
        nxt = curr * 2
        key, kc = jax.random.split(key)
        w, b = _conv_weight(kc, nxt, curr, 4)
        layers.append(dict(w=w, b=b, k=4, s=2,
                           gamma=jnp.ones((nxt,), jnp.float32),
                           beta=jnp.zeros((nxt,), jnp.float32)))
        curr = nxt
    key, kc = jax.random.split(key)
    w, b = _conv_weight(kc, curr, curr, 3)
    layers.append(dict(w=w, b=b, k=3, s=1,
                       gamma=jnp.ones((curr,), jnp.float32),
                       beta=jnp.zeros((curr,), jnp.float32)))
    key, kc = jax.random.split(key)
    w, _ = _conv_weight(kc, 1, curr, 3)
    layers.append(dict(w=w, b=None, k=3, s=1))      # final conv: bias=False
    return layers


def discriminator_forward(x_nchw, layers, use_sigmoid=False):
    # Boundary layout is NCHW (PyTorch); compute in NHWC, return NCHW.
    x = jnp.transpose(x_nchw, (0, 2, 3, 1)).astype(jnp.float32)
    num = len(layers)
    for li, layer in enumerate(layers):
        k, s = layer["k"], layer["s"]
        is_final = li == num - 1
        has_in = "gamma" in layer
        _, h, w, cin_act = x.shape
        geom = _layer_geometry(h, w, k, s)
        cout = layer["w"].shape[0]
        cout_pad = _round_up(cout, LANE)            # lane-dense stores, incl. Cout=1

        zf = _prep_input(x, s, geom)
        wst = _prep_weight(layer["w"], s, cin_act, cout_pad)
        bias = gamma = beta = None
        if layer["b"] is not None:
            bias = jnp.pad(layer["b"], (0, cout_pad - cout)).reshape(1, cout_pad)
        if has_in:
            gamma = jnp.pad(layer["gamma"], (0, cout_pad - cout),
                            constant_values=1.0).reshape(1, cout_pad)
            beta = jnp.pad(layer["beta"], (0, cout_pad - cout)).reshape(1, cout_pad)

        y = conv_fused(
            zf, wst, bias, gamma, beta,
            r=geom["r"], row_stride=geom["ow_pad"], qout=geom["qout"],
            ow_valid=geom["ow"],
            inv_count=1.0 / float(geom["oh"] * geom["ow"]),
            apply_leaky=not is_final,
            apply_sigmoid=is_final and use_sigmoid,
            out_dtype=jnp.float32 if is_final else jnp.bfloat16)

        cout_keep = 1 if is_final else cout_pad     # padded channels are exact zeros
        x = _extract_valid(y, geom, cout_keep)
    return jnp.transpose(x, (0, 3, 1, 2))           # NCHW (N, 1, H', W')


# ----------------------------------------------------------------------------
if __name__ == "__main__":
    key = jax.random.PRNGKey(0)
    # Small instantiation: Discriminator(input_nc=3, conv_dim=8, n_layers=3)
    input_nc, conv_dim, n_layers = 3, 8, 3
    N, H, W = 2, 16, 16

    kx, kp = jax.random.split(key)
    x = jax.random.normal(kx, (N, input_nc, H, W), jnp.float32)   # NCHW input
    params = init_discriminator_params(kp, input_nc, conv_dim, n_layers)

    fwd = jax.jit(lambda inp: discriminator_forward(inp, params, use_sigmoid=False))
    out = jax.block_until_ready(fwd(x))

    # 3 stride-2 convs: 16 -> 8 -> 4 -> 2, then two stride-1 convs keep 2x2
    assert out.shape == (N, 1, H // (2 ** n_layers), W // (2 ** n_layers)), out.shape
    assert jnp.all(jnp.isfinite(out))
    print("KERNEL_OK")
</pallas_src>

<mosaic_0001>
module attributes {stable_mosaic.version = 11 : i64} {
  func.func @_conv_fused_kernel(%arg0: i32, %arg1: i32, %arg2: memref<1x144x24xbf16, #tpu.memory_space<vmem>>, %arg3: memref<2x24x128xbf16, #tpu.memory_space<vmem>>, %arg4: memref<1x128xf32, #tpu.memory_space<vmem>>, %arg5: memref<1x128x128xbf16, #tpu.memory_space<vmem>>) attributes {dimension_semantics = [#tpu.dimension_semantics<parallel>, #tpu.dimension_semantics<parallel>], iteration_bounds = array<i64: 1, 2>, scalar_prefetch = 0 : i64, scratch_operands = 0 : i64, tpu.core_type = #tpu.core_type<tc>, window_params = [{transform_indices = @transform_0, window_bounds = array<i64: 1, 144, 24>}, {transform_indices = @transform_1, window_bounds = array<i64: 2, 24, 128>}, {transform_indices = @transform_2, window_bounds = array<i64: 1, 128>}, {transform_indices = @transform_3, window_bounds = array<i64: 1, 128, 128>}]} {
    %c0 = arith.constant 0 : index
    %c0_0 = arith.constant 0 : index
    %c0_1 = arith.constant 0 : index
    %0 = vector.load %arg2[%c0, %c0_0, %c0_1] : memref<1x144x24xbf16, #tpu.memory_space<vmem>>, vector<1x128x24xbf16>
    %1 = vector.shape_cast %0 : vector<1x128x24xbf16> to vector<128x24xbf16>
    %c0_2 = arith.constant 0 : index
    %c0_3 = arith.constant 0 : index
    %c0_4 = arith.constant 0 : index
    %2 = vector.load %arg3[%c0_2, %c0_3, %c0_4] : memref<2x24x128xbf16, #tpu.memory_space<vmem>>, vector<1x24x128xbf16>
    %3 = vector.shape_cast %2 : vector<1x24x128xbf16> to vector<24x128xbf16>
    %cst = arith.constant dense<0.000000e+00> : vector<128x128xf32>
    %4 = tpu.matmul %1, %3, %cst {dimension_numbers = #tpu.dot_dimension_numbers<[1], [0], [0], [1], [0, 0, 1, 1], [], []>} : vector<128x24xbf16>, vector<24x128xbf16>, vector<128x128xf32> -> vector<128x128xf32>
    %c0_5 = arith.constant 0 : index
    %c16 = arith.constant 16 : index
    %c0_6 = arith.constant 0 : index
    %5 = vector.load %arg2[%c0_5, %c16, %c0_6] : memref<1x144x24xbf16, #tpu.memory_space<vmem>>, vector<1x128x24xbf16>
    %6 = vector.shape_cast %5 : vector<1x128x24xbf16> to vector<128x24xbf16>
    %c1 = arith.constant 1 : index
    %c0_7 = arith.constant 0 : index
    %c0_8 = arith.constant 0 : index
    %7 = vector.load %arg3[%c1, %c0_7, %c0_8] : memref<2x24x128xbf16, #tpu.memory_space<vmem>>, vector<1x24x128xbf16>
    %8 = vector.shape_cast %7 : vector<1x24x128xbf16> to vector<24x128xbf16>
    %cst_9 = arith.constant dense<0.000000e+00> : vector<128x128xf32>
    %9 = tpu.matmul %6, %8, %cst_9 {dimension_numbers = #tpu.dot_dimension_numbers<[1], [0], [0], [1], [0, 0, 1, 1], [], []>} : vector<128x24xbf16>, vector<24x128xbf16>, vector<128x128xf32> -> vector<128x128xf32>
    %10 = arith.addf %4, %9 : vector<128x128xf32>
    %c0_10 = arith.constant 0 : index
    %c0_11 = arith.constant 0 : index
    %11 = vector.load %arg4[%c0_10, %c0_11] : memref<1x128xf32, #tpu.memory_space<vmem>>, vector<1x128xf32>
    %12 = vector.broadcast %11 : vector<1x128xf32> to vector<128x128xf32>
    %13 = arith.addf %10, %12 : vector<128x128xf32>
    %cst_12 = arith.constant 1.000000e-01 : f32
    %14 = vector.broadcast %cst_12 : f32 to vector<128x128xf32>
    %15 = arith.mulf %14, %13 : vector<128x128xf32>
    %16 = arith.maximumf %13, %15 : vector<128x128xf32>
    %17 = arith.truncf %16 : vector<128x128xf32> to vector<128x128xbf16>
    %c0_13 = arith.constant 0 : index
    %c0_14 = arith.constant 0 : index
    %c0_15 = arith.constant 0 : index
    %18 = vector.load %arg5[%c0_13, %c0_14, %c0_15] : memref<1x128x128xbf16, #tpu.memory_space<vmem>>, vector<1x128x128xbf16>
    %19 = vector.shape_cast %18 : vector<1x128x128xbf16> to vector<128x128xbf16>
    %20 = vector.shape_cast %17 : vector<128x128xbf16> to vector<1x128x128xbf16>
    tpu.vector_store %arg5[%c0_13, %c0_14, %c0_15], %20 {strides = array<i32>} : memref<1x128x128xbf16, #tpu.memory_space<vmem>>, vector<1x128x128xbf16>,
    return
  }
  func.func @transform_0(%arg0: i32, %arg1: i32) -> (i32, i32, i32) {
    %c0_i32 = arith.constant 0 : i32
    %c0_i32_0 = arith.constant 0 : i32
    %c0_i32_1 = arith.constant 0 : i32
    return %arg1, %c0_i32, %c0_i32_0 : i32, i32, i32
  }
  func.func @transform_1(%arg0: i32, %arg1: i32) -> (i32, i32, i32) {
    %c0_i32 = arith.constant 0 : i32
    %c0_i32_0 = arith.constant 0 : i32
    %c0_i32_1 = arith.constant 0 : i32
    return %c0_i32, %c0_i32_0, %arg0 : i32, i32, i32
  }
  func.func @transform_2(%arg0: i32, %arg1: i32) -> (i32, i32) {
    %c0_i32 = arith.constant 0 : i32
    %c0_i32_0 = arith.constant 0 : i32
    return %c0_i32, %arg0 : i32, i32
  }
  func.func @transform_3(%arg0: i32, %arg1: i32) -> (i32, i32, i32) {
    %c0_i32 = arith.constant 0 : i32
    %c0_i32_0 = arith.constant 0 : i32
    return %arg1, %c0_i32, %arg0 : i32, i32, i32
  }
}

module attributes {stable_mosaic.version = 11 : i64} {
  func.func @_conv_fused_kernel(%arg0: i32, %arg1: i32, %arg2: memref<1x80x1024xbf16, #tpu.memory_space<vmem>>, %arg3: memref<2x1024x128xbf16, #tpu.memory_space<vmem>>, %arg4: memref<1x128xf32, #tpu.memory_space<vmem>>, %arg5: memref<1x128xf32, #tpu.memory_space<vmem>>, %arg6: memref<1x128xf32, #tpu.memory_space<vmem>>, %arg7: memref<1x64x128xbf16, #tpu.memory_space<vmem>>) attributes {dimension_semantics = [#tpu.dimension_semantics<parallel>, #tpu.dimension_semantics<parallel>], iteration_bounds = array<i64: 1, 2>, scalar_prefetch = 0 : i64, scratch_operands = 0 : i64, tpu.core_type = #tpu.core_type<tc>, window_params = [{transform_indices = @transform_0, window_bounds = array<i64: 1, 80, 1024>}, {transform_indices = @transform_1, window_bounds = array<i64: 2, 1024, 128>}, {transform_indices = @transform_2, window_bounds = array<i64: 1, 128>}, {transform_indices = @transform_3, window_bounds = array<i64: 1, 128>}, {transform_indices = @transform_4, window_bounds = array<i64: 1, 128>}, {transform_indices = @transform_5, window_bounds = array<i64: 1, 64, 128>}]} {
    %c0 = arith.constant 0 : index
    %c0_0 = arith.constant 0 : index
    %c0_1 = arith.constant 0 : index
    %0 = vector.load %arg2[%c0, %c0_0, %c0_1] : memref<1x80x1024xbf16, #tpu.memory_space<vmem>>, vector<1x64x1024xbf16>
    %1 = vector.shape_cast %0 : vector<1x64x1024xbf16> to vector<64x1024xbf16>
    %c0_2 = arith.constant 0 : index
    %c0_3 = arith.constant 0 : index
    %c0_4 = arith.constant 0 : index
    %2 = vector.load %arg3[%c0_2, %c0_3, %c0_4] : memref<2x1024x128xbf16, #tpu.memory_space<vmem>>, vector<1x1024x128xbf16>
    %3 = vector.shape_cast %2 : vector<1x1024x128xbf16> to vector<1024x128xbf16>
    %cst = arith.constant dense<0.000000e+00> : vector<64x128xf32>
    %4 = tpu.matmul %1, %3, %cst {dimension_numbers = #tpu.dot_dimension_numbers<[1], [0], [0], [1], [0, 0, 1, 1], [], []>} : vector<64x1024xbf16>, vector<1024x128xbf16>, vector<64x128xf32> -> vector<64x128xf32>
    %c0_5 = arith.constant 0 : index
    %c16 = arith.constant 16 : index
    %c0_6 = arith.constant 0 : index
    %5 = vector.load %arg2[%c0_5, %c16, %c0_6] : memref<1x80x1024xbf16, #tpu.memory_space<vmem>>, vector<1x64x1024xbf16>
    %6 = vector.shape_cast %5 : vector<1x64x1024xbf16> to vector<64x1024xbf16>
    %c1 = arith.constant 1 : index
    %c0_7 = arith.constant 0 : index
    %c0_8 = arith.constant 0 : index
    %7 = vector.load %arg3[%c1, %c0_7, %c0_8] : memref<2x1024x128xbf16, #tpu.memory_space<vmem>>, vector<1x1024x128xbf16>
    %8 = vector.shape_cast %7 : vector<1x1024x128xbf16> to vector<1024x128xbf16>
    %cst_9 = arith.constant dense<0.000000e+00> : vector<64x128xf32>
    %9 = tpu.matmul %6, %8, %cst_9 {dimension_numbers = #tpu.dot_dimension_numbers<[1], [0], [0], [1], [0, 0, 1, 1], [], []>} : vector<64x1024xbf16>, vector<1024x128xbf16>, vector<64x128xf32> -> vector<64x128xf32>
    %10 = arith.addf %4, %9 : vector<64x128xf32>
    %c0_10 = arith.constant 0 : index
    %c0_11 = arith.constant 0 : index
    %11 = vector.load %arg4[%c0_10, %c0_11] : memref<1x128xf32, #tpu.memory_space<vmem>>, vector<1x128xf32>
    %12 = vector.broadcast %11 : vector<1x128xf32> to vector<64x128xf32>
    %13 = arith.addf %10, %12 : vector<64x128xf32>
    %14 = tpu.iota {dimensions = array<i32: 0>} : vector<64x1xi32>
    %c16_i32 = arith.constant 16 : i32
    %c0_i32 = arith.constant 0 : i32
    %15 = arith.cmpi eq, %c16_i32, %c0_i32 : i32
    %c1_i32 = arith.constant 1 : i32
    %16 = arith.select %15, %c1_i32, %c16_i32 : i32
    %17 = vector.broadcast %16 : i32 to vector<64x1xi32>
    %18 = arith.remsi %14, %17 : vector<64x1xi32>
    %c0_i32_12 = arith.constant 0 : i32
    %19 = vector.broadcast %c0_i32_12 : i32 to vector<64x1xi32>
    %20 = arith.cmpi ne, %18, %19 : vector<64x1xi32>
    %c0_i32_13 = arith.constant 0 : i32
    %21 = vector.broadcast %c0_i32_13 : i32 to vector<64x1xi32>
    %22 = arith.cmpi slt, %18, %21 : vector<64x1xi32>
    %c0_i32_14 = arith.constant 0 : i32
    %23 = arith.cmpi slt, %16, %c0_i32_14 : i32
    %24 = vector.broadcast %23 : i1 to vector<64x1xi1>
    %25 = vector.broadcast %24 : vector<64x1xi1> to vector<64x1xi1>
    %26 = arith.xori %22, %25 : vector<64x1xi1>
    %27 = arith.andi %26, %20 : vector<64x1xi1>
    %28 = vector.broadcast %16 : i32 to vector<64x1xi32>
    %29 = arith.addi %18, %28 : vector<64x1xi32>
    %30 = arith.select %27, %29, %18 : vector<64x1xi1>, vector<64x1xi32>
    %c4_i32 = arith.constant 4 : i32
    %31 = vector.broadcast %c4_i32 : i32 to vector<64x1xi32>
    %32 = arith.cmpi slt, %30, %31 : vector<64x1xi32>
    %33 = arith.extui %32 : vector<64x1xi1> to vector<64x1xi32>
    %34 = arith.sitofp %33 : vector<64x1xi32> to vector<64x1xf32>
    %35 = vector.broadcast %34 : vector<64x1xf32> to vector<64x128xf32>
    %36 = arith.mulf %13, %35 : vector<64x128xf32>
    %cst_15 = arith.constant dense<0.000000e+00> : vector<128xf32>
    %37 = vector.multi_reduction <add>, %36, %cst_15 [0] : vector<64x128xf32> to vector<128xf32>
    %38 = vector.shape_cast %37 : vector<128xf32> to vector<1x128xf32>
    %cst_16 = arith.constant 6.250000e-02 : f32
    %39 = vector.broadcast %cst_16 : f32 to vector<1x128xf32>
    %40 = arith.mulf %38, %39 : vector<1x128xf32>
    %41 = arith.mulf %36, %13 : vector<64x128xf32>
    %cst_17 = arith.constant dense<0.000000e+00> : vector<128xf32>
    %42 = vector.multi_reduction <add>, %41, %cst_17 [0] : vector<64x128xf32> to vector<128xf32>
    %43 = vector.shape_cast %42 : vector<128xf32> to vector<1x128xf32>
    %cst_18 = arith.constant 6.250000e-02 : f32
    %44 = vector.broadcast %cst_18 : f32 to vector<1x128xf32>
    %45 = arith.mulf %43, %44 : vector<1x128xf32>
    %46 = arith.mulf %40, %40 : vector<1x128xf32>
    %47 = arith.subf %45, %46 : vector<1x128xf32>
    %cst_19 = arith.constant 0.000000e+00 : f32
    %48 = vector.broadcast %cst_19 : f32 to vector<1x128xf32>
    %49 = arith.maximumf %47, %48 : vector<1x128xf32>
    %50 = vector.broadcast %40 : vector<1x128xf32> to vector<64x128xf32>
    %51 = arith.subf %13, %50 : vector<64x128xf32>
    %cst_20 = arith.constant 9.99999974E-6 : f32
    %52 = vector.broadcast %cst_20 : f32 to vector<1x128xf32>
    %53 = arith.addf %49, %52 : vector<1x128xf32>
    %54 = math.rsqrt %53 : vector<1x128xf32>
    %55 = vector.broadcast %54 : vector<1x128xf32> to vector<64x128xf32>
    %56 = arith.mulf %51, %55 : vector<64x128xf32>
    %c0_21 = arith.constant 0 : index
    %c0_22 = arith.constant 0 : index
    %57 = vector.load %arg5[%c0_21, %c0_22] : memref<1x128xf32, #tpu.memory_space<vmem>>, vector<1x128xf32>
    %58 = vector.broadcast %57 : vector<1x128xf32> to vector<64x128xf32>
    %59 = arith.mulf %56, %58 : vector<64x128xf32>
    %c0_23 = arith.constant 0 : index
    %c0_24 = arith.constant 0 : index
    %60 = vector.load %arg6[%c0_23, %c0_24] : memref<1x128xf32, #tpu.memory_space<vmem>>, vector<1x128xf32>
    %61 = vector.broadcast %60 : vector<1x128xf32> to vector<64x128xf32>
    %62 = arith.addf %59, %61 : vector<64x128xf32>
    %cst_25 = arith.constant 1.000000e-01 : f32
    %63 = vector.broadcast %cst_25 : f32 to vector<64x128xf32>
    %64 = arith.mulf %63, %62 : vector<64x128xf32>
    %65 = arith.maximumf %62, %64 : vector<64x128xf32>
    %66 = arith.truncf %65 : vector<64x128xf32> to vector<64x128xbf16>
    %c0_26 = arith.constant 0 : index
    %c0_27 = arith.constant 0 : index
    %c0_28 = arith.constant 0 : index
    %67 = vector.load %arg7[%c0_26, %c0_27, %c0_28] : memref<1x64x128xbf16, #tpu.memory_space<vmem>>, vector<1x64x128xbf16>
    %68 = vector.shape_cast %67 : vector<1x64x128xbf16> to vector<64x128xbf16>
    %69 = vector.shape_cast %66 : vector<64x128xbf16> to vector<1x64x128xbf16>
    tpu.vector_store %arg7[%c0_26, %c0_27, %c0_28], %69 {strides = array<i32>} : memref<1x64x128xbf16, #tpu.memory_space<vmem>>, vector<1x64x128xbf16>,
    return
  }
  func.func @transform_0(%arg0: i32, %arg1: i32) -> (i32, i32, i32) {
    %c0_i32 = arith.constant 0 : i32
    %c0_i32_0 = arith.constant 0 : i32
    %c0_i32_1 = arith.constant 0 : i32
    return %arg1, %c0_i32, %c0_i32_0 : i32, i32, i32
  }
  func.func @transform_1(%arg0: i32, %arg1: i32) -> (i32, i32, i32) {
    %c0_i32 = arith.constant 0 : i32
    %c0_i32_0 = arith.constant 0 : i32
    %c0_i32_1 = arith.constant 0 : i32
    return %c0_i32, %c0_i32_0, %arg0 : i32, i32, i32
  }
  func.func @transform_2(%arg0: i32, %arg1: i32) -> (i32, i32) {
    %c0_i32 = arith.constant 0 : i32
    %c0_i32_0 = arith.constant 0 : i32
    return %c0_i32, %arg0 : i32, i32
  }
  func.func @transform_3(%arg0: i32, %arg1: i32) -> (i32, i32) {
    %c0_i32 = arith.constant 0 : i32
    %c0_i32_0 = arith.constant 0 : i32
    return %c0_i32, %arg0 : i32, i32
  }
  func.func @transform_4(%arg0: i32, %arg1: i32) -> (i32, i32) {
    %c0_i32 = arith.constant 0 : i32
    %c0_i32_0 = arith.constant 0 : i32
    return %c0_i32, %arg0 : i32, i32
  }
  func.func @transform_5(%arg0: i32, %arg1: i32) -> (i32, i32, i32) {
    %c0_i32 = arith.constant 0 : i32
    %c0_i32_0 = arith.constant 0 : i32
    return %arg1, %c0_i32, %arg0 : i32, i32, i32
  }
}

module attributes {stable_mosaic.version = 11 : i64} {
  func.func @_conv_fused_kernel(%arg0: i32, %arg1: i32, %arg2: memref<1x48x1024xbf16, #tpu.memory_space<vmem>>, %arg3: memref<2x1024x128xbf16, #tpu.memory_space<vmem>>, %arg4: memref<1x128xf32, #tpu.memory_space<vmem>>, %arg5: memref<1x128xf32, #tpu.memory_space<vmem>>, %arg6: memref<1x128xf32, #tpu.memory_space<vmem>>, %arg7: memref<1x32x128xbf16, #tpu.memory_space<vmem>>) attributes {dimension_semantics = [#tpu.dimension_semantics<parallel>, #tpu.dimension_semantics<parallel>], iteration_bounds = array<i64: 1, 2>, scalar_prefetch = 0 : i64, scratch_operands = 0 : i64, tpu.core_type = #tpu.core_type<tc>, window_params = [{transform_indices = @transform_0, window_bounds = array<i64: 1, 48, 1024>}, {transform_indices = @transform_1, window_bounds = array<i64: 2, 1024, 128>}, {transform_indices = @transform_2, window_bounds = array<i64: 1, 128>}, {transform_indices = @transform_3, window_bounds = array<i64: 1, 128>}, {transform_indices = @transform_4, window_bounds = array<i64: 1, 128>}, {transform_indices = @transform_5, window_bounds = array<i64: 1, 32, 128>}]} {
    %c0 = arith.constant 0 : index
    %c0_0 = arith.constant 0 : index
    %c0_1 = arith.constant 0 : index
    %0 = vector.load %arg2[%c0, %c0_0, %c0_1] : memref<1x48x1024xbf16, #tpu.memory_space<vmem>>, vector<1x32x1024xbf16>
    %1 = vector.shape_cast %0 : vector<1x32x1024xbf16> to vector<32x1024xbf16>
    %c0_2 = arith.constant 0 : index
    %c0_3 = arith.constant 0 : index
    %c0_4 = arith.constant 0 : index
    %2 = vector.load %arg3[%c0_2, %c0_3, %c0_4] : memref<2x1024x128xbf16, #tpu.memory_space<vmem>>, vector<1x1024x128xbf16>
    %3 = vector.shape_cast %2 : vector<1x1024x128xbf16> to vector<1024x128xbf16>
    %cst = arith.constant dense<0.000000e+00> : vector<32x128xf32>
    %4 = tpu.matmul %1, %3, %cst {dimension_numbers = #tpu.dot_dimension_numbers<[1], [0], [0], [1], [0, 0, 1, 1], [], []>} : vector<32x1024xbf16>, vector<1024x128xbf16>, vector<32x128xf32> -> vector<32x128xf32>
    %c0_5 = arith.constant 0 : index
    %c16 = arith.constant 16 : index
    %c0_6 = arith.constant 0 : index
    %5 = vector.load %arg2[%c0_5, %c16, %c0_6] : memref<1x48x1024xbf16, #tpu.memory_space<vmem>>, vector<1x32x1024xbf16>
    %6 = vector.shape_cast %5 : vector<1x32x1024xbf16> to vector<32x1024xbf16>
    %c1 = arith.constant 1 : index
    %c0_7 = arith.constant 0 : index
    %c0_8 = arith.constant 0 : index
    %7 = vector.load %arg3[%c1, %c0_7, %c0_8] : memref<2x1024x128xbf16, #tpu.memory_space<vmem>>, vector<1x1024x128xbf16>
    %8 = vector.shape_cast %7 : vector<1x1024x128xbf16> to vector<1024x128xbf16>
    %cst_9 = arith.constant dense<0.000000e+00> : vector<32x128xf32>
    %9 = tpu.matmul %6, %8, %cst_9 {dimension_numbers = #tpu.dot_dimension_numbers<[1], [0], [0], [1], [0, 0, 1, 1], [], []>} : vector<32x1024xbf16>, vector<1024x128xbf16>, vector<32x128xf32> -> vector<32x128xf32>
    %10 = arith.addf %4, %9 : vector<32x128xf32>
    %c0_10 = arith.constant 0 : index
    %c0_11 = arith.constant 0 : index
    %11 = vector.load %arg4[%c0_10, %c0_11] : memref<1x128xf32, #tpu.memory_space<vmem>>, vector<1x128xf32>
    %12 = vector.broadcast %11 : vector<1x128xf32> to vector<32x128xf32>
    %13 = arith.addf %10, %12 : vector<32x128xf32>
    %14 = tpu.iota {dimensions = array<i32: 0>} : vector<32x1xi32>
    %c16_i32 = arith.constant 16 : i32
    %c0_i32 = arith.constant 0 : i32
    %15 = arith.cmpi eq, %c16_i32, %c0_i32 : i32
    %c1_i32 = arith.constant 1 : i32
    %16 = arith.select %15, %c1_i32, %c16_i32 : i32
    %17 = vector.broadcast %16 : i32 to vector<32x1xi32>
    %18 = arith.remsi %14, %17 : vector<32x1xi32>
    %c0_i32_12 = arith.constant 0 : i32
    %19 = vector.broadcast %c0_i32_12 : i32 to vector<32x1xi32>
    %20 = arith.cmpi ne, %18, %19 : vector<32x1xi32>
    %c0_i32_13 = arith.constant 0 : i32
    %21 = vector.broadcast %c0_i32_13 : i32 to vector<32x1xi32>
    %22 = arith.cmpi slt, %18, %21 : vector<32x1xi32>
    %c0_i32_14 = arith.constant 0 : i32
    %23 = arith.cmpi slt, %16, %c0_i32_14 : i32
    %24 = vector.broadcast %23 : i1 to vector<32x1xi1>
    %25 = vector.broadcast %24 : vector<32x1xi1> to vector<32x1xi1>
    %26 = arith.xori %22, %25 : vector<32x1xi1>
    %27 = arith.andi %26, %20 : vector<32x1xi1>
    %28 = vector.broadcast %16 : i32 to vector<32x1xi32>
    %29 = arith.addi %18, %28 : vector<32x1xi32>
    %30 = arith.select %27, %29, %18 : vector<32x1xi1>, vector<32x1xi32>
    %c2_i32 = arith.constant 2 : i32
    %31 = vector.broadcast %c2_i32 : i32 to vector<32x1xi32>
    %32 = arith.cmpi slt, %30, %31 : vector<32x1xi32>
    %33 = arith.extui %32 : vector<32x1xi1> to vector<32x1xi32>
    %34 = arith.sitofp %33 : vector<32x1xi32> to vector<32x1xf32>
    %35 = vector.broadcast %34 : vector<32x1xf32> to vector<32x128xf32>
    %36 = arith.mulf %13, %35 : vector<32x128xf32>
    %cst_15 = arith.constant dense<0.000000e+00> : vector<128xf32>
    %37 = vector.multi_reduction <add>, %36, %cst_15 [0] : vector<32x128xf32> to vector<128xf32>
    %38 = vector.shape_cast %37 : vector<128xf32> to vector<1x128xf32>
    %cst_16 = arith.constant 2.500000e-01 : f32
    %39 = vector.broadcast %cst_16 : f32 to vector<1x128xf32>
    %40 = arith.mulf %38, %39 : vector<1x128xf32>
    %41 = arith.mulf %36, %13 : vector<32x128xf32>
    %cst_17 = arith.constant dense<0.000000e+00> : vector<128xf32>
    %42 = vector.multi_reduction <add>, %41, %cst_17 [0] : vector<32x128xf32> to vector<128xf32>
    %43 = vector.shape_cast %42 : vector<128xf32> to vector<1x128xf32>
    %cst_18 = arith.constant 2.500000e-01 : f32
    %44 = vector.broadcast %cst_18 : f32 to vector<1x128xf32>
    %45 = arith.mulf %43, %44 : vector<1x128xf32>
    %46 = arith.mulf %40, %40 : vector<1x128xf32>
    %47 = arith.subf %45, %46 : vector<1x128xf32>
    %cst_19 = arith.constant 0.000000e+00 : f32
    %48 = vector.broadcast %cst_19 : f32 to vector<1x128xf32>
    %49 = arith.maximumf %47, %48 : vector<1x128xf32>
    %50 = vector.broadcast %40 : vector<1x128xf32> to vector<32x128xf32>
    %51 = arith.subf %13, %50 : vector<32x128xf32>
    %cst_20 = arith.constant 9.99999974E-6 : f32
    %52 = vector.broadcast %cst_20 : f32 to vector<1x128xf32>
    %53 = arith.addf %49, %52 : vector<1x128xf32>
    %54 = math.rsqrt %53 : vector<1x128xf32>
    %55 = vector.broadcast %54 : vector<1x128xf32> to vector<32x128xf32>
    %56 = arith.mulf %51, %55 : vector<32x128xf32>
    %c0_21 = arith.constant 0 : index
    %c0_22 = arith.constant 0 : index
    %57 = vector.load %arg5[%c0_21, %c0_22] : memref<1x128xf32, #tpu.memory_space<vmem>>, vector<1x128xf32>
    %58 = vector.broadcast %57 : vector<1x128xf32> to vector<32x128xf32>
    %59 = arith.mulf %56, %58 : vector<32x128xf32>
    %c0_23 = arith.constant 0 : index
    %c0_24 = arith.constant 0 : index
    %60 = vector.load %arg6[%c0_23, %c0_24] : memref<1x128xf32, #tpu.memory_space<vmem>>, vector<1x128xf32>
    %61 = vector.broadcast %60 : vector<1x128xf32> to vector<32x128xf32>
    %62 = arith.addf %59, %61 : vector<32x128xf32>
    %cst_25 = arith.constant 1.000000e-01 : f32
    %63 = vector.broadcast %cst_25 : f32 to vector<32x128xf32>
    %64 = arith.mulf %63, %62 : vector<32x128xf32>
    %65 = arith.maximumf %62, %64 : vector<32x128xf32>
    %66 = arith.truncf %65 : vector<32x128xf32> to vector<32x128xbf16>
    %c0_26 = arith.constant 0 : index
    %c0_27 = arith.constant 0 : index
    %c0_28 = arith.constant 0 : index
    %67 = vector.load %arg7[%c0_26, %c0_27, %c0_28] : memref<1x32x128xbf16, #tpu.memory_space<vmem>>, vector<1x32x128xbf16>
    %68 = vector.shape_cast %67 : vector<1x32x128xbf16> to vector<32x128xbf16>
    %69 = vector.shape_cast %66 : vector<32x128xbf16> to vector<1x32x128xbf16>
    tpu.vector_store %arg7[%c0_26, %c0_27, %c0_28], %69 {strides = array<i32>} : memref<1x32x128xbf16, #tpu.memory_space<vmem>>, vector<1x32x128xbf16>,
    return
  }
  func.func @transform_0(%arg0: i32, %arg1: i32) -> (i32, i32, i32) {
    %c0_i32 = arith.constant 0 : i32
    %c0_i32_0 = arith.constant 0 : i32
    %c0_i32_1 = arith.constant 0 : i32
    return %arg1, %c0_i32, %c0_i32_0 : i32, i32, i32
  }
  func.func @transform_1(%arg0: i32, %arg1: i32) -> (i32, i32, i32) {
    %c0_i32 = arith.constant 0 : i32
    %c0_i32_0 = arith.constant 0 : i32
    %c0_i32_1 = arith.constant 0 : i32
    return %c0_i32, %c0_i32_0, %arg0 : i32, i32, i32
  }
  func.func @transform_2(%arg0: i32, %arg1: i32) -> (i32, i32) {
    %c0_i32 = arith.constant 0 : i32
    %c0_i32_0 = arith.constant 0 : i32
    return %c0_i32, %arg0 : i32, i32
  }
  func.func @transform_3(%arg0: i32, %arg1: i32) -> (i32, i32) {
    %c0_i32 = arith.constant 0 : i32
    %c0_i32_0 = arith.constant 0 : i32
    return %c0_i32, %arg0 : i32, i32
  }
  func.func @transform_4(%arg0: i32, %arg1: i32) -> (i32, i32) {
    %c0_i32 = arith.constant 0 : i32
    %c0_i32_0 = arith.constant 0 : i32
    return %c0_i32, %arg0 : i32, i32
  }
  func.func @transform_5(%arg0: i32, %arg1: i32) -> (i32, i32, i32) {
    %c0_i32 = arith.constant 0 : i32
    %c0_i32_0 = arith.constant 0 : i32
    return %arg1, %c0_i32, %arg0 : i32, i32, i32
  }
}

module attributes {stable_mosaic.version = 11 : i64} {
  func.func @_conv_fused_kernel(%arg0: i32, %arg1: i32, %arg2: memref<1x64x384xbf16, #tpu.memory_space<vmem>>, %arg3: memref<3x384x128xbf16, #tpu.memory_space<vmem>>, %arg4: memref<1x128xf32, #tpu.memory_space<vmem>>, %arg5: memref<1x128xf32, #tpu.memory_space<vmem>>, %arg6: memref<1x128xf32, #tpu.memory_space<vmem>>, %arg7: memref<1x32x128xbf16, #tpu.memory_space<vmem>>) attributes {dimension_semantics = [#tpu.dimension_semantics<parallel>, #tpu.dimension_semantics<parallel>], iteration_bounds = array<i64: 1, 2>, scalar_prefetch = 0 : i64, scratch_operands = 0 : i64, tpu.core_type = #tpu.core_type<tc>, window_params = [{transform_indices = @transform_0, window_bounds = array<i64: 1, 64, 384>}, {transform_indices = @transform_1, window_bounds = array<i64: 3, 384, 128>}, {transform_indices = @transform_2, window_bounds = array<i64: 1, 128>}, {transform_indices = @transform_3, window_bounds = array<i64: 1, 128>}, {transform_indices = @transform_4, window_bounds = array<i64: 1, 128>}, {transform_indices = @transform_5, window_bounds = array<i64: 1, 32, 128>}]} {
    %c0 = arith.constant 0 : index
    %c0_0 = arith.constant 0 : index
    %c0_1 = arith.constant 0 : index
    %0 = vector.load %arg2[%c0, %c0_0, %c0_1] : memref<1x64x384xbf16, #tpu.memory_space<vmem>>, vector<1x32x384xbf16>
    %1 = vector.shape_cast %0 : vector<1x32x384xbf16> to vector<32x384xbf16>
    %c0_2 = arith.constant 0 : index
    %c0_3 = arith.constant 0 : index
    %c0_4 = arith.constant 0 : index
    %2 = vector.load %arg3[%c0_2, %c0_3, %c0_4] : memref<3x384x128xbf16, #tpu.memory_space<vmem>>, vector<1x384x128xbf16>
    %3 = vector.shape_cast %2 : vector<1x384x128xbf16> to vector<384x128xbf16>
    %cst = arith.constant dense<0.000000e+00> : vector<32x128xf32>
    %4 = tpu.matmul %1, %3, %cst {dimension_numbers = #tpu.dot_dimension_numbers<[1], [0], [0], [1], [0, 0, 1, 1], [], []>} : vector<32x384xbf16>, vector<384x128xbf16>, vector<32x128xf32> -> vector<32x128xf32>
    %c0_5 = arith.constant 0 : index
    %c16 = arith.constant 16 : index
    %c0_6 = arith.constant 0 : index
    %5 = vector.load %arg2[%c0_5, %c16, %c0_6] : memref<1x64x384xbf16, #tpu.memory_space<vmem>>, vector<1x32x384xbf16>
    %6 = vector.shape_cast %5 : vector<1x32x384xbf16> to vector<32x384xbf16>
    %c1 = arith.constant 1 : index
    %c0_7 = arith.constant 0 : index
    %c0_8 = arith.constant 0 : index
    %7 = vector.load %arg3[%c1, %c0_7, %c0_8] : memref<3x384x128xbf16, #tpu.memory_space<vmem>>, vector<1x384x128xbf16>
    %8 = vector.shape_cast %7 : vector<1x384x128xbf16> to vector<384x128xbf16>
    %cst_9 = arith.constant dense<0.000000e+00> : vector<32x128xf32>
    %9 = tpu.matmul %6, %8, %cst_9 {dimension_numbers = #tpu.dot_dimension_numbers<[1], [0], [0], [1], [0, 0, 1, 1], [], []>} : vector<32x384xbf16>, vector<384x128xbf16>, vector<32x128xf32> -> vector<32x128xf32>
    %10 = arith.addf %4, %9 : vector<32x128xf32>
    %c0_10 = arith.constant 0 : index
    %c32 = arith.constant 32 : index
    %c0_11 = arith.constant 0 : index
    %11 = vector.load %arg2[%c0_10, %c32, %c0_11] : memref<1x64x384xbf16, #tpu.memory_space<vmem>>, vector<1x32x384xbf16>
    %12 = vector.shape_cast %11 : vector<1x32x384xbf16> to vector<32x384xbf16>
    %c2 = arith.constant 2 : index
    %c0_12 = arith.constant 0 : index
    %c0_13 = arith.constant 0 : index
    %13 = vector.load %arg3[%c2, %c0_12, %c0_13] : memref<3x384x128xbf16, #tpu.memory_space<vmem>>, vector<1x384x128xbf16>
    %14 = vector.shape_cast %13 : vector<1x384x128xbf16> to vector<384x128xbf16>
    %cst_14 = arith.constant dense<0.000000e+00> : vector<32x128xf32>
    %15 = tpu.matmul %12, %14, %cst_14 {dimension_numbers = #tpu.dot_dimension_numbers<[1], [0], [0], [1], [0, 0, 1, 1], [], []>} : vector<32x384xbf16>, vector<384x128xbf16>, vector<32x128xf32> -> vector<32x128xf32>
    %16 = arith.addf %10, %15 : vector<32x128xf32>
    %c0_15 = arith.constant 0 : index
    %c0_16 = arith.constant 0 : index
    %17 = vector.load %arg4[%c0_15, %c0_16] : memref<1x128xf32, #tpu.memory_space<vmem>>, vector<1x128xf32>
    %18 = vector.broadcast %17 : vector<1x128xf32> to vector<32x128xf32>
    %19 = arith.addf %16, %18 : vector<32x128xf32>
    %20 = tpu.iota {dimensions = array<i32: 0>} : vector<32x1xi32>
    %c16_i32 = arith.constant 16 : i32
    %c0_i32 = arith.constant 0 : i32
    %21 = arith.cmpi eq, %c16_i32, %c0_i32 : i32
    %c1_i32 = arith.constant 1 : i32
    %22 = arith.select %21, %c1_i32, %c16_i32 : i32
    %23 = vector.broadcast %22 : i32 to vector<32x1xi32>
    %24 = arith.remsi %20, %23 : vector<32x1xi32>
    %c0_i32_17 = arith.constant 0 : i32
    %25 = vector.broadcast %c0_i32_17 : i32 to vector<32x1xi32>
    %26 = arith.cmpi ne, %24, %25 : vector<32x1xi32>
    %c0_i32_18 = arith.constant 0 : i32
    %27 = vector.broadcast %c0_i32_18 : i32 to vector<32x1xi32>
    %28 = arith.cmpi slt, %24, %27 : vector<32x1xi32>
    %c0_i32_19 = arith.constant 0 : i32
    %29 = arith.cmpi slt, %22, %c0_i32_19 : i32
    %30 = vector.broadcast %29 : i1 to vector<32x1xi1>
    %31 = vector.broadcast %30 : vector<32x1xi1> to vector<32x1xi1>
    %32 = arith.xori %28, %31 : vector<32x1xi1>
    %33 = arith.andi %32, %26 : vector<32x1xi1>
    %34 = vector.broadcast %22 : i32 to vector<32x1xi32>
    %35 = arith.addi %24, %34 : vector<32x1xi32>
    %36 = arith.select %33, %35, %24 : vector<32x1xi1>, vector<32x1xi32>
    %c2_i32 = arith.constant 2 : i32
    %37 = vector.broadcast %c2_i32 : i32 to vector<32x1xi32>
    %38 = arith.cmpi slt, %36, %37 : vector<32x1xi32>
    %39 = arith.extui %38 : vector<32x1xi1> to vector<32x1xi32>
    %40 = arith.sitofp %39 : vector<32x1xi32> to vector<32x1xf32>
    %41 = vector.broadcast %40 : vector<32x1xf32> to vector<32x128xf32>
    %42 = arith.mulf %19, %41 : vector<32x128xf32>
    %cst_20 = arith.constant dense<0.000000e+00> : vector<128xf32>
    %43 = vector.multi_reduction <add>, %42, %cst_20 [0] : vector<32x128xf32> to vector<128xf32>
    %44 = vector.shape_cast %43 : vector<128xf32> to vector<1x128xf32>
    %cst_21 = arith.constant 2.500000e-01 : f32
    %45 = vector.broadcast %cst_21 : f32 to vector<1x128xf32>
    %46 = arith.mulf %44, %45 : vector<1x128xf32>
    %47 = arith.mulf %42, %19 : vector<32x128xf32>
    %cst_22 = arith.constant dense<0.000000e+00> : vector<128xf32>
    %48 = vector.multi_reduction <add>, %47, %cst_22 [0] : vector<32x128xf32> to vector<128xf32>
    %49 = vector.shape_cast %48 : vector<128xf32> to vector<1x128xf32>
    %cst_23 = arith.constant 2.500000e-01 : f32
    %50 = vector.broadcast %cst_23 : f32 to vector<1x128xf32>
    %51 = arith.mulf %49, %50 : vector<1x128xf32>
    %52 = arith.mulf %46, %46 : vector<1x128xf32>
    %53 = arith.subf %51, %52 : vector<1x128xf32>
    %cst_24 = arith.constant 0.000000e+00 : f32
    %54 = vector.broadcast %cst_24 : f32 to vector<1x128xf32>
    %55 = arith.maximumf %53, %54 : vector<1x128xf32>
    %56 = vector.broadcast %46 : vector<1x128xf32> to vector<32x128xf32>
    %57 = arith.subf %19, %56 : vector<32x128xf32>
    %cst_25 = arith.constant 9.99999974E-6 : f32
    %58 = vector.broadcast %cst_25 : f32 to vector<1x128xf32>
    %59 = arith.addf %55, %58 : vector<1x128xf32>
    %60 = math.rsqrt %59 : vector<1x128xf32>
    %61 = vector.broadcast %60 : vector<1x128xf32> to vector<32x128xf32>
    %62 = arith.mulf %57, %61 : vector<32x128xf32>
    %c0_26 = arith.constant 0 : index
    %c0_27 = arith.constant 0 : index
    %63 = vector.load %arg5[%c0_26, %c0_27] : memref<1x128xf32, #tpu.memory_space<vmem>>, vector<1x128xf32>
    %64 = vector.broadcast %63 : vector<1x128xf32> to vector<32x128xf32>
    %65 = arith.mulf %62, %64 : vector<32x128xf32>
    %c0_28 = arith.constant 0 : index
    %c0_29 = arith.constant 0 : index
    %66 = vector.load %arg6[%c0_28, %c0_29] : memref<1x128xf32, #tpu.memory_space<vmem>>, vector<1x128xf32>
    %67 = vector.broadcast %66 : vector<1x128xf32> to vector<32x128xf32>
    %68 = arith.addf %65, %67 : vector<32x128xf32>
    %cst_30 = arith.constant 1.000000e-01 : f32
    %69 = vector.broadcast %cst_30 : f32 to vector<32x128xf32>
    %70 = arith.mulf %69, %68 : vector<32x128xf32>
    %71 = arith.maximumf %68, %70 : vector<32x128xf32>
    %72 = arith.truncf %71 : vector<32x128xf32> to vector<32x128xbf16>
    %c0_31 = arith.constant 0 : index
    %c0_32 = arith.constant 0 : index
    %c0_33 = arith.constant 0 : index
    %73 = vector.load %arg7[%c0_31, %c0_32, %c0_33] : memref<1x32x128xbf16, #tpu.memory_space<vmem>>, vector<1x32x128xbf16>
    %74 = vector.shape_cast %73 : vector<1x32x128xbf16> to vector<32x128xbf16>
    %75 = vector.shape_cast %72 : vector<32x128xbf16> to vector<1x32x128xbf16>
    tpu.vector_store %arg7[%c0_31, %c0_32, %c0_33], %75 {strides = array<i32>} : memref<1x32x128xbf16, #tpu.memory_space<vmem>>, vector<1x32x128xbf16>,
    return
  }
  func.func @transform_0(%arg0: i32, %arg1: i32) -> (i32, i32, i32) {
    %c0_i32 = arith.constant 0 : i32
    %c0_i32_0 = arith.constant 0 : i32
    %c0_i32_1 = arith.constant 0 : i32
    return %arg1, %c0_i32, %c0_i32_0 : i32, i32, i32
  }
  func.func @transform_1(%arg0: i32, %arg1: i32) -> (i32, i32, i32) {
    %c0_i32 = arith.constant 0 : i32
    %c0_i32_0 = arith.constant 0 : i32
    %c0_i32_1 = arith.constant 0 : i32
    return %c0_i32, %c0_i32_0, %arg0 : i32, i32, i32
  }
  func.func @transform_2(%arg0: i32, %arg1: i32) -> (i32, i32) {
    %c0_i32 = arith.constant 0 : i32
    %c0_i32_0 = arith.constant 0 : i32
    return %c0_i32, %arg0 : i32, i32
  }
  func.func @transform_3(%arg0: i32, %arg1: i32) -> (i32, i32) {
    %c0_i32 = arith.constant 0 : i32
    %c0_i32_0 = arith.constant 0 : i32
    return %c0_i32, %arg0 : i32, i32
  }
  func.func @transform_4(%arg0: i32, %arg1: i32) -> (i32, i32) {
    %c0_i32 = arith.constant 0 : i32
    %c0_i32_0 = arith.constant 0 : i32
    return %c0_i32, %arg0 : i32, i32
  }
  func.func @transform_5(%arg0: i32, %arg1: i32) -> (i32, i32, i32) {
    %c0_i32 = arith.constant 0 : i32
    %c0_i32_0 = arith.constant 0 : i32
    return %arg1, %c0_i32, %arg0 : i32, i32, i32
  }
}

module attributes {stable_mosaic.version = 11 : i64} {
  func.func @_conv_fused_kernel(%arg0: i32, %arg1: i32, %arg2: memref<1x64x384xbf16, #tpu.memory_space<vmem>>, %arg3: memref<3x384x128xbf16, #tpu.memory_space<vmem>>, %arg4: memref<1x32x128xf32, #tpu.memory_space<vmem>>) attributes {dimension_semantics = [#tpu.dimension_semantics<parallel>, #tpu.dimension_semantics<parallel>], iteration_bounds = array<i64: 1, 2>, scalar_prefetch = 0 : i64, scratch_operands = 0 : i64, tpu.core_type = #tpu.core_type<tc>, window_params = [{transform_indices = @transform_0, window_bounds = array<i64: 1, 64, 384>}, {transform_indices = @transform_1, window_bounds = array<i64: 3, 384, 128>}, {transform_indices = @transform_2, window_bounds = array<i64: 1, 32, 128>}]} {
    %c0 = arith.constant 0 : index
    %c0_0 = arith.constant 0 : index
    %c0_1 = arith.constant 0 : index
    %0 = vector.load %arg2[%c0, %c0_0, %c0_1] : memref<1x64x384xbf16, #tpu.memory_space<vmem>>, vector<1x32x384xbf16>
    %1 = vector.shape_cast %0 : vector<1x32x384xbf16> to vector<32x384xbf16>
    %c0_2 = arith.constant 0 : index
    %c0_3 = arith.constant 0 : index
    %c0_4 = arith.constant 0 : index
    %2 = vector.load %arg3[%c0_2, %c0_3, %c0_4] : memref<3x384x128xbf16, #tpu.memory_space<vmem>>, vector<1x384x128xbf16>
    %3 = vector.shape_cast %2 : vector<1x384x128xbf16> to vector<384x128xbf16>
    %cst = arith.constant dense<0.000000e+00> : vector<32x128xf32>
    %4 = tpu.matmul %1, %3, %cst {dimension_numbers = #tpu.dot_dimension_numbers<[1], [0], [0], [1], [0, 0, 1, 1], [], []>} : vector<32x384xbf16>, vector<384x128xbf16>, vector<32x128xf32> -> vector<32x128xf32>
    %c0_5 = arith.constant 0 : index
    %c16 = arith.constant 16 : index
    %c0_6 = arith.constant 0 : index
    %5 = vector.load %arg2[%c0_5, %c16, %c0_6] : memref<1x64x384xbf16, #tpu.memory_space<vmem>>, vector<1x32x384xbf16>
    %6 = vector.shape_cast %5 : vector<1x32x384xbf16> to vector<32x384xbf16>
    %c1 = arith.constant 1 : index
    %c0_7 = arith.constant 0 : index
    %c0_8 = arith.constant 0 : index
    %7 = vector.load %arg3[%c1, %c0_7, %c0_8] : memref<3x384x128xbf16, #tpu.memory_space<vmem>>, vector<1x384x128xbf16>
    %8 = vector.shape_cast %7 : vector<1x384x128xbf16> to vector<384x128xbf16>
    %cst_9 = arith.constant dense<0.000000e+00> : vector<32x128xf32>
    %9 = tpu.matmul %6, %8, %cst_9 {dimension_numbers = #tpu.dot_dimension_numbers<[1], [0], [0], [1], [0, 0, 1, 1], [], []>} : vector<32x384xbf16>, vector<384x128xbf16>, vector<32x128xf32> -> vector<32x128xf32>
    %10 = arith.addf %4, %9 : vector<32x128xf32>
    %c0_10 = arith.constant 0 : index
    %c32 = arith.constant 32 : index
    %c0_11 = arith.constant 0 : index
    %11 = vector.load %arg2[%c0_10, %c32, %c0_11] : memref<1x64x384xbf16, #tpu.memory_space<vmem>>, vector<1x32x384xbf16>
    %12 = vector.shape_cast %11 : vector<1x32x384xbf16> to vector<32x384xbf16>
    %c2 = arith.constant 2 : index
    %c0_12 = arith.constant 0 : index
    %c0_13 = arith.constant 0 : index
    %13 = vector.load %arg3[%c2, %c0_12, %c0_13] : memref<3x384x128xbf16, #tpu.memory_space<vmem>>, vector<1x384x128xbf16>
    %14 = vector.shape_cast %13 : vector<1x384x128xbf16> to vector<384x128xbf16>
    %cst_14 = arith.constant dense<0.000000e+00> : vector<32x128xf32>
    %15 = tpu.matmul %12, %14, %cst_14 {dimension_numbers = #tpu.dot_dimension_numbers<[1], [0], [0], [1], [0, 0, 1, 1], [], []>} : vector<32x384xbf16>, vector<384x128xbf16>, vector<32x128xf32> -> vector<32x128xf32>
    %16 = arith.addf %10, %15 : vector<32x128xf32>
    %c0_15 = arith.constant 0 : index
    %c0_16 = arith.constant 0 : index
    %c0_17 = arith.constant 0 : index
    %17 = vector.load %arg4[%c0_15, %c0_16, %c0_17] : memref<1x32x128xf32, #tpu.memory_space<vmem>>, vector<1x32x128xf32>
    %18 = vector.shape_cast %17 : vector<1x32x128xf32> to vector<32x128xf32>
    %19 = vector.shape_cast %16 : vector<32x128xf32> to vector<1x32x128xf32>
    tpu.vector_store %arg4[%c0_15, %c0_16, %c0_17], %19 {strides = array<i32>} : memref<1x32x128xf32, #tpu.memory_space<vmem>>, vector<1x32x128xf32>,
    return
  }
  func.func @transform_0(%arg0: i32, %arg1: i32) -> (i32, i32, i32) {
    %c0_i32 = arith.constant 0 : i32
    %c0_i32_0 = arith.constant 0 : i32
    %c0_i32_1 = arith.constant 0 : i32
    return %arg1, %c0_i32, %c0_i32_0 : i32, i32, i32
  }
  func.func @transform_1(%arg0: i32, %arg1: i32) -> (i32, i32, i32) {
    %c0_i32 = arith.constant 0 : i32
    %c0_i32_0 = arith.constant 0 : i32
    %c0_i32_1 = arith.constant 0 : i32
    return %c0_i32, %c0_i32_0, %arg0 : i32, i32, i32
  }
  func.func @transform_2(%arg0: i32, %arg1: i32) -> (i32, i32, i32) {
    %c0_i32 = arith.constant 0 : i32
    %c0_i32_0 = arith.constant 0 : i32
    return %arg1, %c0_i32, %arg0 : i32, i32, i32
  }
}

</mosaic_0001>

<llo_original>
// kernel: _lambda_.5
$region0: #{_lambda_.5}
  #allocation0 [shape = 'u32[]', space=smem, size = 0x4, offset = 0x4, fixed_abs, tag = 'smem constant byte address 0x4 - core index']
  #allocation1 [shape = 'u32[144,128]{1,0:T(1,128)}', space=vmem, size = 0x12000, scoped, tag = 'internal scratch']
  %s0 = inlined_call_operand.vmem [shape: bf16[2,144,24], index: 0, kind: input, shape index: {}]
  %s1 = inlined_call_operand.vmem [shape: bf16[2,24,128], index: 1, kind: input, shape index: {}]
  %s2 = inlined_call_operand.vmem [shape: f32[1,128], index: 2, kind: input, shape index: {}]
  %s3 = inlined_call_operand.vmem [shape: bf16[2,128,128], index: 3, kind: output, shape index: {}]
  %s4 = sld [smem:[#allocation0]]
  $region45: #{_lambda_.5} parent=0
    _
  %s6 = ssub.s32 1, %s4
  %s7 = scalar_select 0, %s6, %s4
  loop: start=0, step=1, limit=4
  $region2: #{_lambda_.5} parent=0 // loop_pre_header
    _
  $region3: #{_lambda_.5} parent=0 // loop_header
    %s9 = sphi 0, %s13
    %p10 = scmp.ge.s32.totalorder %s9, 4
    %s16 = sphi 0, %s28
    %s17 = sphi 0, %s24
    %s18 = sphi 0, %s16
    %s19 = sphi 0, %s17
    %s20 = sphi 0, %s18
    %s21 = sphi 0, %s19
    %s31 = sphi 0, %s33
    %s34 = sphi 0, %s31
    %s35 = sphi 0, %s34
    %s51 = sphi 0, %s35
    %s57 = sphi 0, %s59
    %s60 = sphi 0, %s57
    %s61 = sphi 0, %s60
    %s77 = sphi 0, %s61
    %s83 = sphi 0, %s85
    %s86 = sphi 0, %s83
    %s87 = sphi 0, %s86
    %s103 = sphi 0, %s87
    %s111 = sphi 0, %s113
    %s114 = sphi 0, %s111
    %s115 = sphi 0, %s114
    %s131 = sphi 0, %s115
  $region4: #{_lambda_.5} parent=0 // loop_header_branch
    %12 = sbr.rel (%p10) target = $region8
  $region5: #{_lambda_.5} parent=0 // loop_body
    %s14 = ssub.s32 %s9, 1
    %s15 = ssub.s32 %s9, 2
    %s22 = sadd.s32 1, %s17
    %p23 = scmp.ge.s32.totalorder %s22, 2
    %s24 = scalar_select %p23, 0, %s22
    %s25 = sadd.s32 1, %s16
    %s26 = scalar_select %p23, %s25, %s16
    %p27 = scmp.ge.s32.totalorder %s26, 1
    %s28 = scalar_select %p27, 0, %s26
    %s29 = ssub.s32 %s17, %s24
    %p30 = scmp.eq.s32.totalorder %s29, 0
    %s32 = sadd.s32 %s31, 1
    %s33 = scalar_select %p30, %s31, %s32
    %p36 = pneg %p30
    %p37 = scmp.eq.s32.totalorder %s9, 1
    %p38 = por %p36, %p37
    %p39 = scmp.ne.s32.totalorder %s31, %s34
    %p40 = scmp.eq.s32.totalorder %s9, 0
    %p41 = por %p39, %p40
    %p42 = scmp.ne.s32.totalorder %s31, %s34
    %p43 = scmp.eq.s32.totalorder %s14, 1
    %p44 = por %p42, %p43
    %p45 = scmp.ne.s32.totalorder %s34, %s35
    %p46 = scmp.eq.s32.totalorder %s14, 0
    %p47 = por %p45, %p46
    %p48 = scmp.ne.s32.totalorder %s34, %s35
    %p49 = scmp.eq.s32.totalorder %s15, 1
    %p50 = por %p48, %p49
    %p52 = scmp.ne.s32.totalorder %s35, %s51
    %p53 = scmp.eq.s32.totalorder %s15, 0
    %p54 = por %p52, %p53
    %s55 = ssub.s32 %s16, %s28
    %p56 = scmp.eq.s32.totalorder %s55, 0
    %s58 = sadd.s32 %s57, 1
    %s59 = scalar_select %p56, %s57, %s58
    %p62 = pneg %p56
    %p63 = scmp.eq.s32.totalorder %s9, 1
    %p64 = por %p62, %p63
    %p65 = scmp.ne.s32.totalorder %s57, %s60
    %p66 = scmp.eq.s32.totalorder %s9, 0
    %p67 = por %p65, %p66
    %p68 = scmp.ne.s32.totalorder %s57, %s60
    %p69 = scmp.eq.s32.totalorder %s14, 1
    %p70 = por %p68, %p69
    %p71 = scmp.ne.s32.totalorder %s60, %s61
    %p72 = scmp.eq.s32.totalorder %s14, 0
    %p73 = por %p71, %p72
    %p74 = scmp.ne.s32.totalorder %s60, %s61
    %p75 = scmp.eq.s32.totalorder %s15, 1
    %p76 = por %p74, %p75
    %p78 = scmp.ne.s32.totalorder %s61, %s77
    %p79 = scmp.eq.s32.totalorder %s15, 0
    %p80 = por %p78, %p79
    %s81 = ssub.s32 %s16, %s28
    %p82 = scmp.eq.s32.totalorder %s81, 0
    %s84 = sadd.s32 %s83, 1
    %s85 = scalar_select %p82, %s83, %s84
    %p88 = pneg %p82
    %p89 = scmp.eq.s32.totalorder %s9, 1
    %p90 = por %p88, %p89
    %p91 = scmp.ne.s32.totalorder %s83, %s86
    %p92 = scmp.eq.s32.totalorder %s9, 0
    %p93 = por %p91, %p92
    %p94 = scmp.ne.s32.totalorder %s83, %s86
    %p95 = scmp.eq.s32.totalorder %s14, 1
    %p96 = por %p94, %p95
    %p97 = scmp.ne.s32.totalorder %s86, %s87
    %p98 = scmp.eq.s32.totalorder %s14, 0
    %p99 = por %p97, %p98
    %p100 = scmp.ne.s32.totalorder %s86, %s87
    %p101 = scmp.eq.s32.totalorder %s15, 1
    %p102 = por %p100, %p101
    %p104 = scmp.ne.s32.totalorder %s87, %s103
    %p105 = scmp.eq.s32.totalorder %s15, 0
    %p106 = por %p104, %p105
    %s107 = ssub.s32 %s17, %s24
    %s108 = ssub.s32 %s16, %s28
    %s109 = sor.u32 %s107, %s108
    %p110 = scmp.eq.s32.totalorder %s109, 0
    %s112 = sadd.s32 %s111, 1
    %s113 = scalar_select %p110, %s111, %s112
    %p116 = pneg %p110
    %p117 = scmp.eq.s32.totalorder %s9, 1
    %p118 = por %p116, %p117
    %p119 = scmp.ne.s32.totalorder %s111, %s114
    %p120 = scmp.eq.s32.totalorder %s9, 0
    %p121 = por %p119, %p120
    %p122 = scmp.ne.s32.totalorder %s111, %s114
    %p123 = scmp.eq.s32.totalorder %s14, 1
    %p124 = por %p122, %p123
    %p125 = scmp.ne.s32.totalorder %s114, %s115
    %p126 = scmp.eq.s32.totalorder %s14, 0
    %p127 = por %p125, %p126
    %p128 = scmp.ne.s32.totalorder %s114, %s115
    %p129 = scmp.eq.s32.totalorder %s15, 1
    %p130 = por %p128, %p129
    %p132 = scmp.ne.s32.totalorder %s115, %s131
    %p133 = scmp.eq.s32.totalorder %s15, 0
    %p134 = por %p132, %p133
    %p135 = scmp.le.s32.totalorder 1, %s9
    %p136 = scmp.lt.s32.totalorder %s9, 3
    %p137 = pnand %p135, %p136
    %p138 = pneg %p137
    // Predicated region
    $region9: #{_lambda_.5} parent=5 // pred_check
      _
    $region10: #{_lambda_.5} parent=5 // pred_check_branch
      %140 = sbr.rel (%p137) target = $region12
    $region11: #{_lambda_.5} parent=5 // pred_region
      %s141 = ssub.s32 %s9, 1
      // Predicated region
      $region13: #{_lambda_.5} parent=11 // pred_check
        %p142 = pneg %p73
      $region14: #{_lambda_.5} parent=11 // pred_check_branch
        %144 = sbr.rel (%p142) target = $region16
      $region15: #{_lambda_.5} parent=11 // pred_region
        %p145 = scmp.lt.s32.totalorder %s18, 0
        %s146 = scalar_select %p145, %s18, 0
        %s147 = smul.addr %s146, 4
        %s148 = scalar_lea.vmem %s1, %s147
      $region16: #{_lambda_.5} parent=11 // pred_fallthru
        _
      // Predicated region
      $region17: #{_lambda_.5} parent=11 // pred_check
        %p149 = pneg %p99
      $region18: #{_lambda_.5} parent=11 // pred_check_branch
        %151 = sbr.rel (%p149) target = $region20
      $region19: #{_lambda_.5} parent=11 // pred_region
        %p152 = scmp.lt.s32.totalorder %s18, 0
        %s153 = scalar_select %p152, %s18, 0
        %s154 = scalar_lea.vmem %s2, %s153
      $region20: #{_lambda_.5} parent=11 // pred_fallthru
        _
    $region12: #{_lambda_.5} parent=5 // pred_fallthru
      _
    %p155 = scmp.lt.s32.totalorder %s9, 2
    // Predicated region
    $region21: #{_lambda_.5} parent=5 // pred_check
      %p156 = pneg %p155
    $region22: #{_lambda_.5} parent=5 // pred_check_branch
      %158 = sbr.rel (%p156) target = $region24
    $region23: #{_lambda_.5} parent=5 // pred_region
      // Predicated region
      $region25: #{_lambda_.5} parent=23 // pred_check
        %p159 = pneg %p41
      $region26: #{_lambda_.5} parent=23 // pred_check_branch
        %161 = sbr.rel (%p159) target = $region28
      $region27: #{_lambda_.5} parent=23 // pred_region
        %p162 = scmp.lt.s32.totalorder %s17, 1
        %s163 = scalar_select %p162, %s17, 1
        %s164 = smul.addr %s163, 18
        %s165 = smul.addr %s164, 4
        %s166 = scalar_lea.vmem %s0, %s165
      $region28: #{_lambda_.5} parent=23 // pred_fallthru
        _
    $region24: #{_lambda_.5} parent=5 // pred_fallthru
      _
    %p167 = scmp.le.s32.totalorder 1, %s9
    %p168 = scmp.lt.s32.totalorder %s9, 3
    %p169 = pnand %p167, %p168
    %p170 = pneg %p169
    // Predicated region
    $region29: #{_lambda_.5} parent=5 // pred_check
      _
    $region30: #{_lambda_.5} parent=5 // pred_check_branch
      %172 = sbr.rel (%p169) target = $region32
    $region31: #{_lambda_.5} parent=5 // pred_region
      %s173 = ssub.s32 %s9, 1
      %p174 = scmp.lt.s32.totalorder %s19, 1
      %s175 = scalar_select %p174, %s19, 1
      %s176 = smul.addr %s175, 18
      %s177 = smul.addr %s176, 4
      %s178 = scalar_lea.vmem %s0, %s177
      %p179 = pneg %p47
      %p180 = pneg %p44
      %p181 = scmp.lt.s32.totalorder %s18, 0
      %s182 = scalar_select %p181, %s18, 0
      %s183 = smul.addr %s182, 4
      %s184 = scalar_lea.vmem %s1, %s183
      %p185 = pneg %p73
      %p186 = pneg %p70
      %p187 = scmp.lt.s32.totalorder %s18, 0
      %s188 = scalar_select %p187, %s18, 0
      %s189 = scalar_lea.vmem %s2, %s188
      %p190 = pneg %p99
      %p191 = pneg %p96
      %p192 = pneg %p127
      %p193 = pneg %p124
      %p194 = scmp.lt.s32.totalorder %s19, 1
      %s195 = scalar_select %p194, %s19, 1
      %p196 = scmp.lt.s32.totalorder %s18, 0
      %s197 = scalar_select %p196, %s18, 0
      %s198 = smul.addr %s195, 16
      %s199 = sadd.s32 %s197, %s198
      %s200 = smul.addr %s199, 4
      %s201 = scalar_lea.vmem %s3, %s200
      %p202 = scmp.lt.s32.totalorder %s19, 1
      %s203 = scalar_select %p202, %s19, 1
      %s204 = smul.addr %s203, 18
      %s205 = smul.addr %s204, 4
      %s206 = scalar_lea.vmem %s0, %s205
      %p207 = scmp.lt.s32.totalorder %s18, 0
      %s208 = scalar_select %p207, %s18, 0
      %s209 = smul.addr %s208, 4
      %s210 = scalar_lea.vmem %s1, %s209
      %p211 = scmp.lt.s32.totalorder %s18, 0
      %s212 = scalar_select %p211, %s18, 0
      %s213 = scalar_lea.vmem %s2, %s212
      %p214 = scmp.lt.s32.totalorder %s19, 1
      %s215 = scalar_select %p214, %s19, 1
      %p216 = scmp.lt.s32.totalorder %s18, 0
      %s217 = scalar_select %p216, %s18, 0
      %s218 = smul.addr %s215, 16
      %s219 = sadd.s32 %s217, %s218
      %s220 = smul.addr %s219, 4
      %s221 = scalar_lea.vmem %s3, %s220
      %v223 = vld [vmem:[%s206] sm:$0xf]
      %v224 = vld [vmem:[%s206 + $0x4] sm:$0xf]
      %v225 = vld [vmem:[%s206 + $0x8] sm:$0xf]
      %v226 = vld [vmem:[%s206 + $0xc] sm:$0xf]
      %v227 = vld [vmem:[%s206 + $0x10] sm:$0xf]
      %v228 = vld [vmem:[%s206 + $0x14] sm:$0xf]
      %v229 = vld [vmem:[%s206 + $0x18] sm:$0xf]
      %v230 = vld [vmem:[%s206 + $0x1c] sm:$0xf]
      %v231 = vld [vmem:[%s206 + $0x20] sm:$0xf]
      %v232 = vld [vmem:[%s206 + $0x24] sm:$0xf]
      %v233 = vld [vmem:[%s206 + $0x28] sm:$0xf]
      %v234 = vld [vmem:[%s206 + $0x2c] sm:$0xf]
      %v235 = vld [vmem:[%s206 + $0x30] sm:$0xf]
      %v236 = vld [vmem:[%s206 + $0x34] sm:$0xf]
      %v237 = vld [vmem:[%s206 + $0x38] sm:$0xf]
      %v238 = vld [vmem:[%s206 + $0x3c] sm:$0xf]
      %v239 = vld [vmem:[%s210] sm:$0xf]
      %v240 = vld [vmem:[%s210 + $0x4] sm:$0xf]
      %v241 = vld [vmem:[%s210 + $0x8] sm:$0xf]
      %v242 = vld [vmem:[%s206 + $0x40] sm:$0xf]
      %v243 = vld [vmem:[%s206 + $0x44] sm:$0xf]
      %s244 = scalar_lea.vmem %s210, 12
      %v245 = vld [vmem:[%s244] sm:$0xf]
      %v246 = vld [vmem:[%s244 + $0x4] sm:$0xf]
      %v247 = vld [vmem:[%s244 + $0x8] sm:$0xf]
      %v264 = vunpack.c.l.b16 %v225
      %v265 = vunpack.c.l.b16 %v226
      %v266 = vunpack.c.l.b16 %v227
      %v267 = vunpack.c.l.b16 %v228
      %v268 = vunpack.c.l.b16 %v229
      %v269 = vunpack.c.l.b16 %v230
      %v270 = vunpack.c.l.b16 %v231
      %v271 = vunpack.c.l.b16 %v232
      %v272 = vunpack.c.l.b16 %v233
      %v273 = vunpack.c.l.b16 %v234
      %v274 = vunpack.c.l.b16 %v235
      %v275 = vunpack.c.l.b16 %v236
      %v276 = vunpack.c.l.b16 %v237
      %v277 = vunpack.c.l.b16 %v238
      %v278 = vunpack.c.l.b16 %v242
      %v279 = vunpack.c.l.b16 %v243
      %v280 = vpack.c.b16 %v265, %v264
      %v281 = vpack.c.b16 %v267, %v266
      %v282 = vpack.c.b16 %v269, %v268
      %v283 = vpack.c.b16 %v271, %v270
      %v284 = vpack.c.b16 %v273, %v272
      %v285 = vpack.c.b16 %v275, %v274
      %v286 = vpack.c.b16 %v277, %v276
      %v287 = vpack.c.b16 %v279, %v278
      %v291 = vunpack.c.l.b16 %v245
      %v292 = vunpack.c.l.b16 %v246
      %v293 = vunpack.c.l.b16 %v247
      %v294 = vpack.c.b16 %v292, %v291
      %v295 = vpack.c.b16 %v293, %v293
      %vm297 = vcmask 195584
      %v299 = vsel %vm297, %v280, 0
      %v302 = vsel %vm297, %v281, 0
      %v305 = vsel %vm297, %v282, 0
      %v308 = vsel %vm297, %v283, 0
      %v311 = vsel %vm297, %v284, 0
      %v314 = vsel %vm297, %v285, 0
      %v317 = vsel %vm297, %v286, 0
      %v320 = vsel %vm297, %v287, 0
      %vm322 = vcmask 1043456
      %v324 = vsel %vm322, %v295, 0
      %326 = vmatprep.subr.bf16.mxu0 0
      %327 = vmatpush1.bf16.msra.mxu0 %v294
      %328 = vmatprep.subr.bf16.mxu0 0
      %329 = vmatpush1.bf16.msra.mxu0 %v324
      %330 = vmatprep.subr.bf16.mxu0 0
      %331 = vmatpush1.bf16.msra.mxu0 0
      %332 = vmatprep.subr.bf16.mxu0 0
      %333 = vmatpush1.bf16.msra.mxu0 0
      %334 = vmatprep.subr.bf16.mxu0 0
      %335 = vmatpush1.bf16.msra.mxu0 0
      %336 = vmatprep.subr.bf16.mxu0 0
      %337 = vmatpush1.bf16.msra.mxu0 0
      %338 = vmatprep.subr.bf16.mxu0 0
      %339 = vmatpush1.bf16.msra.mxu0 0
      %340 = vmatprep.subr.bf16.mxu0 0
      %341 = vmatpush1.bf16.msra.mxu0 0
      %342 = vmatprep.subr.bf16.mxu0 0
      %343 = vmatpush1.bf16.msra.mxu0 0
      %344 = vmatprep.subr.bf16.mxu0 0
      %345 = vmatpush1.bf16.msra.mxu0 0
      %346 = vmatprep.subr.bf16.mxu0 0
      %347 = vmatpush1.bf16.msra.mxu0 0
      %348 = vmatprep.subr.bf16.mxu0 0
      %349 = vmatpush1.bf16.msra.mxu0 0
      %350 = vmatprep.subr.bf16.mxu0 0
      %351 = vmatpush1.bf16.msra.mxu0 0
      %352 = vmatprep.subr.bf16.mxu0 0
      %353 = vmatpush1.bf16.msra.mxu0 0
      %354 = vmatprep.subr.bf16.mxu0 0
      %355 = vmatpush1.bf16.msra.mxu0 0
      %356 = vmatprep.subr.bf16.mxu0 0
      %357 = vmatpush1.bf16.msra.mxu0 0
      %358 = vmatprep.mubr.bf16.mxu0 0
      %359 = vmatmul.mubr.bf16.gmra.mrb[0].mxu0 %v299
      %v360 = vpop.f32.mrb[0].mxu0
      %v361 = vadd.f32 0.0, %v360
      %v362 = vpop.f32.mrb[0].mxu0
      %v363 = vpop.f32.mrb[0].mxu0
      %v364 = vadd.f32 0.0, %v363
      %v365 = vpop.f32.mrb[0].mxu0
      %366 = vmatprep.mubr.bf16.mxu0 0
      %367 = vmatmul.mubr.bf16.gmra.mrb[0].mxu0 %v302
      %v368 = vpop.f32.mrb[0].mxu0
      %v369 = vadd.f32 0.0, %v368
      %v370 = vpop.f32.mrb[0].mxu0
      %v371 = vpop.f32.mrb[0].mxu0
      %v372 = vadd.f32 0.0, %v371
      %v373 = vpop.f32.mrb[0].mxu0
      %374 = vmatprep.mubr.bf16.mxu0 0
      %375 = vmatmul.mubr.bf16.gmra.mrb[0].mxu0 %v305
      %v376 = vpop.f32.mrb[0].mxu0
      %v377 = vadd.f32 0.0, %v376
      %v378 = vpop.f32.mrb[0].mxu0
      %v379 = vpop.f32.mrb[0].mxu0
      %v380 = vadd.f32 0.0, %v379
      %v381 = vpop.f32.mrb[0].mxu0
      %382 = vmatprep.mubr.bf16.mxu0 0
      %383 = vmatmul.mubr.bf16.gmra.mrb[0].mxu0 %v308
      %v384 = vpop.f32.mrb[0].mxu0
      %v385 = vadd.f32 0.0, %v384
      %v386 = vpop.f32.mrb[0].mxu0
      %v387 = vpop.f32.mrb[0].mxu0
      %v388 = vadd.f32 0.0, %v387
      %v389 = vpop.f32.mrb[0].mxu0
      %390 = vmatprep.mubr.bf16.mxu0 0
      %391 = vmatmul.mubr.bf16.gmra.mrb[0].mxu0 %v311
      %v392 = vpop.f32.mrb[0].mxu0
      %v393 = vadd.f32 0.0, %v392
      %v394 = vpop.f32.mrb[0].mxu0
      %v395 = vpop.f32.mrb[0].mxu0
      %v396 = vadd.f32 0.0, %v395
      %v397 = vpop.f32.mrb[0].mxu0
      %398 = vmatprep.mubr.bf16.mxu0 0
      %399 = vmatmul.mubr.bf16.gmra.mrb[0].mxu0 %v314
      %v400 = vpop.f32.mrb[0].mxu0
      %v401 = vadd.f32 0.0, %v400
      %v402 = vpop.f32.mrb[0].mxu0
      %v403 = vpop.f32.mrb[0].mxu0
      %v404 = vadd.f32 0.0, %v403
      %v405 = vpop.f32.mrb[0].mxu0
      %406 = vmatprep.mubr.bf16.mxu0 0
      %407 = vmatmul.mubr.bf16.gmra.mrb[0].mxu0 %v317
      %v408 = vpop.f32.mrb[0].mxu0
      %v409 = vadd.f32 0.0, %v408
      %v410 = vpop.f32.mrb[0].mxu0
      %v411 = vpop.f32.mrb[0].mxu0
      %v412 = vadd.f32 0.0, %v411
      %v413 = vpop.f32.mrb[0].mxu0
      %414 = vmatprep.mubr.bf16.mxu0 0
      %415 = vmatmul.mubr.bf16.gmra.mrb[0].mxu0 %v320
      %v416 = vpop.f32.mrb[0].mxu0
      %v417 = vadd.f32 0.0, %v416
      %v418 = vpop.f32.mrb[0].mxu0
      %v419 = vpop.f32.mrb[0].mxu0
      %v420 = vadd.f32 0.0, %v419
      %v421 = vpop.f32.mrb[0].mxu0
      %422 = vdwg.mxu0
      %v425 = vunpack.c.l.b16 %v223
      %v426 = vunpack.c.l.b16 %v224
      %v427 = vpack.c.b16 %v426, %v425
      %v431 = vunpack.c.l.b16 %v239
      %v432 = vunpack.c.l.b16 %v240
      %v433 = vunpack.c.l.b16 %v241
      %v434 = vpack.c.b16 %v432, %v431
      %v435 = vpack.c.b16 %v433, %v433
      %v438 = vsel %vm297, %v427, 0
      %v441 = vsel %vm322, %v435, 0
      %443 = vmatprep.subr.bf16.mxu0 0
      %444 = vmatpush1.bf16.msra.mxu0 %v434
      %445 = vmatprep.subr.bf16.mxu0 0
      %446 = vmatpush1.bf16.msra.mxu0 %v441
      %447 = vmatprep.subr.bf16.mxu0 0
      %448 = vmatpush1.bf16.msra.mxu0 0
      %449 = vmatprep.subr.bf16.mxu0 0
      %450 = vmatpush1.bf16.msra.mxu0 0
      %451 = vmatprep.subr.bf16.mxu0 0
      %452 = vmatpush1.bf16.msra.mxu0 0
      %453 = vmatprep.subr.bf16.mxu0 0
      %454 = vmatpush1.bf16.msra.mxu0 0
      %455 = vmatprep.subr.bf16.mxu0 0
      %456 = vmatpush1.bf16.msra.mxu0 0
      %457 = vmatprep.subr.bf16.mxu0 0
      %458 = vmatpush1.bf16.msra.mxu0 0
      %459 = vmatprep.subr.bf16.mxu0 0
      %460 = vmatpush1.bf16.msra.mxu0 0
      %461 = vmatprep.subr.bf16.mxu0 0
      %462 = vmatpush1.bf16.msra.mxu0 0
      %463 = vmatprep.subr.bf16.mxu0 0
      %464 = vmatpush1.bf16.msra.mxu0 0
      %465 = vmatprep.subr.bf16.mxu0 0
      %466 = vmatpush1.bf16.msra.mxu0 0
      %467 = vmatprep.subr.bf16.mxu0 0
      %468 = vmatpush1.bf16.msra.mxu0 0
      %469 = vmatprep.subr.bf16.mxu0 0
      %470 = vmatpush1.bf16.msra.mxu0 0
      %471 = vmatprep.subr.bf16.mxu0 0
      %472 = vmatpush1.bf16.msra.mxu0 0
      %473 = vmatprep.subr.bf16.mxu0 0
      %474 = vmatpush1.bf16.msra.mxu0 0
      %475 = vmatprep.mubr.bf16.mxu0 0
      %476 = vmatmul.mubr.bf16.gmra.mrb[0].mxu0 %v438
      %v477 = vpop.f32.mrb[0].mxu0
      %v478 = vadd.f32 %v361, %v477
      %v479 = vpop.f32.mrb[0].mxu0
      %v480 = vpop.f32.mrb[0].mxu0
      %v481 = vadd.f32 %v364, %v480
      %v482 = vpop.f32.mrb[0].mxu0
      %483 = vmatprep.mubr.bf16.mxu0 0
      %484 = vmatmul.mubr.bf16.gmra.mrb[0].mxu0 %v299
      %v485 = vpop.f32.mrb[0].mxu0
      %v486 = vadd.f32 %v369, %v485
      %v487 = vpop.f32.mrb[0].mxu0
      %v488 = vpop.f32.mrb[0].mxu0
      %v489 = vadd.f32 %v372, %v488
      %v490 = vpop.f32.mrb[0].mxu0
      %491 = vmatprep.mubr.bf16.mxu0 0
      %492 = vmatmul.mubr.bf16.gmra.mrb[0].mxu0 %v302
      %v493 = vpop.f32.mrb[0].mxu0
      %v494 = vadd.f32 %v377, %v493
      %v495 = vpop.f32.mrb[0].mxu0
      %v496 = vpop.f32.mrb[0].mxu0
      %v497 = vadd.f32 %v380, %v496
      %v498 = vpop.f32.mrb[0].mxu0
      %499 = vmatprep.mubr.bf16.mxu0 0
      %500 = vmatmul.mubr.bf16.gmra.mrb[0].mxu0 %v305
      %v501 = vpop.f32.mrb[0].mxu0
      %v502 = vadd.f32 %v385, %v501
      %v503 = vpop.f32.mrb[0].mxu0
      %v504 = vpop.f32.mrb[0].mxu0
      %v505 = vadd.f32 %v388, %v504
      %v506 = vpop.f32.mrb[0].mxu0
      %507 = vmatprep.mubr.bf16.mxu0 0
      %508 = vmatmul.mubr.bf16.gmra.mrb[0].mxu0 %v308
      %v509 = vpop.f32.mrb[0].mxu0
      %v510 = vadd.f32 %v393, %v509
      %v511 = vpop.f32.mrb[0].mxu0
      %v512 = vpop.f32.mrb[0].mxu0
      %v513 = vadd.f32 %v396, %v512
      %v514 = vpop.f32.mrb[0].mxu0
      %515 = vmatprep.mubr.bf16.mxu0 0
      %516 = vmatmul.mubr.bf16.gmra.mrb[0].mxu0 %v311
      %v517 = vpop.f32.mrb[0].mxu0
      %v518 = vadd.f32 %v401, %v517
      %v519 = vpop.f32.mrb[0].mxu0
      %v520 = vpop.f32.mrb[0].mxu0
      %v521 = vadd.f32 %v404, %v520
      %v522 = vpop.f32.mrb[0].mxu0
      %523 = vmatprep.mubr.bf16.mxu0 0
      %524 = vmatmul.mubr.bf16.gmra.mrb[0].mxu0 %v314
      %v525 = vpop.f32.mrb[0].mxu0
      %v526 = vadd.f32 %v409, %v525
      %v527 = vpop.f32.mrb[0].mxu0
      %v528 = vpop.f32.mrb[0].mxu0
      %v529 = vadd.f32 %v412, %v528
      %v530 = vpop.f32.mrb[0].mxu0
      %531 = vmatprep.mubr.bf16.mxu0 0
      %532 = vmatmul.mubr.bf16.gmra.mrb[0].mxu0 %v317
      %v533 = vpop.f32.mrb[0].mxu0
      %v534 = vadd.f32 %v417, %v533
      %v535 = vpop.f32.mrb[0].mxu0
      %v536 = vpop.f32.mrb[0].mxu0
      %v537 = vadd.f32 %v420, %v536
      %v538 = vpop.f32.mrb[0].mxu0
      %539 = vdwg.mxu0
      %v540 = vld [vmem:[%s213] sm:$0x1]
      %v542 = vlaneseq
      %v543 = vshrl.u32 %v542, 7
      %v544 = vsub.s32 0, %v543
      %v545 = vrot.slane %v540, %v544
      %v547 = vadd.f32 %v478, %v545
      %v548 = vadd.f32 %v481, %v545
      %v549 = vadd.f32 %v486, %v545
      %v550 = vadd.f32 %v489, %v545
      %v551 = vadd.f32 %v494, %v545
      %v552 = vadd.f32 %v497, %v545
      %v553 = vadd.f32 %v502, %v545
      %v554 = vadd.f32 %v505, %v545
      %v555 = vadd.f32 %v510, %v545
      %v556 = vadd.f32 %v513, %v545
      %v557 = vadd.f32 %v518, %v545
      %v558 = vadd.f32 %v521, %v545
      %v559 = vadd.f32 %v526, %v545
      %v560 = vadd.f32 %v529, %v545
      %v561 = vadd.f32 %v534, %v545
      %v562 = vadd.f32 %v537, %v545
      %v563 = vmul.f32 %v547, 0.1
      %v564 = vmul.f32 %v548, 0.1
      %v565 = vmul.f32 %v549, 0.1
      %v566 = vmul.f32 %v550, 0.1
      %v567 = vmul.f32 %v551, 0.1
      %v568 = vmul.f32 %v552, 0.1
      %v569 = vmul.f32 %v553, 0.1
      %v570 = vmul.f32 %v554, 0.1
      %v571 = vmul.f32 %v555, 0.1
      %v572 = vmul.f32 %v556, 0.1
      %v573 = vmul.f32 %v557, 0.1
      %v574 = vmul.f32 %v558, 0.1
      %v575 = vmul.f32 %v559, 0.1
      %v576 = vmul.f32 %v560, 0.1
      %v577 = vmul.f32 %v561, 0.1
      %v578 = vmul.f32 %v562, 0.1
      %v579 = vmax.f32 %v547, %v563
      %v580 = vmax.f32 %v548, %v564
      %v581 = vmax.f32 %v549, %v565
      %v582 = vmax.f32 %v550, %v566
      %v583 = vmax.f32 %v551, %v567
      %v584 = vmax.f32 %v552, %v568
      %v585 = vmax.f32 %v553, %v569
      %v586 = vmax.f32 %v554, %v570
      %v587 = vmax.f32 %v555, %v571
      %v588 = vmax.f32 %v556, %v572
      %v589 = vmax.f32 %v557, %v573
      %v590 = vmax.f32 %v558, %v574
      %v591 = vmax.f32 %v559, %v575
      %v592 = vmax.f32 %v560, %v576
      %v593 = vmax.f32 %v561, %v577
      %v594 = vmax.f32 %v562, %v578
      %v595 = vpack.c.bf16 %v580, %v579
      %v596 = vpack.c.bf16 %v582, %v581
      %v597 = vpack.c.bf16 %v584, %v583
      %v598 = vpack.c.bf16 %v586, %v585
      %v599 = vpack.c.bf16 %v588, %v587
      %v600 = vpack.c.bf16 %v590, %v589
      %v601 = vpack.c.bf16 %v592, %v591
      %v602 = vpack.c.bf16 %v594, %v593
      %v611 = vunpack.c.l.b16 %v595
      %v612 = vunpack.c.h.b16 %v595
      %v613 = vunpack.c.l.b16 %v596
      %v614 = vunpack.c.h.b16 %v596
      %v615 = vunpack.c.l.b16 %v597
      %v616 = vunpack.c.h.b16 %v597
      %v617 = vunpack.c.l.b16 %v598
      %v618 = vunpack.c.h.b16 %v598
      %v619 = vunpack.c.l.b16 %v599
      %v620 = vunpack.c.h.b16 %v599
      %v621 = vunpack.c.l.b16 %v600
      %v622 = vunpack.c.h.b16 %v600
      %v623 = vunpack.c.l.b16 %v601
      %v624 = vunpack.c.h.b16 %v601
      %v625 = vunpack.c.l.b16 %v602
      %v626 = vunpack.c.h.b16 %v602
      %v627 = vpack.c.b16 %v611, %v611
      %v628 = vpack.c.b16 %v612, %v612
      %v629 = vpack.c.b16 %v613, %v613
      %v630 = vpack.c.b16 %v614, %v614
      %v631 = vpack.c.b16 %v615, %v615
      %v632 = vpack.c.b16 %v616, %v616
      %v633 = vpack.c.b16 %v617, %v617
      %v634 = vpack.c.b16 %v618, %v618
      %v635 = vpack.c.b16 %v619, %v619
      %v636 = vpack.c.b16 %v620, %v620
      %v637 = vpack.c.b16 %v621, %v621
      %v638 = vpack.c.b16 %v622, %v622
      %v639 = vpack.c.b16 %v623, %v623
      %v640 = vpack.c.b16 %v624, %v624
      %v641 = vpack.c.b16 %v625, %v625
      %v642 = vpack.c.b16 %v626, %v626
      %659 = vst [vmem:[%s221] sm:$0xf] %v627
      %660 = vst [vmem:[%s221 + $0x4] sm:$0xf] %v628
      %661 = vst [vmem:[%s221 + $0x8] sm:$0xf] %v629
      %662 = vst [vmem:[%s221 + $0xc] sm:$0xf] %v630
      %663 = vst [vmem:[%s221 + $0x10] sm:$0xf] %v631
      %664 = vst [vmem:[%s221 + $0x14] sm:$0xf] %v632
      %665 = vst [vmem:[%s221 + $0x18] sm:$0xf] %v633
      %666 = vst [vmem:[%s221 + $0x1c] sm:$0xf] %v634
      %667 = vst [vmem:[%s221 + $0x20] sm:$0xf] %v635
      %668 = vst [vmem:[%s221 + $0x24] sm:$0xf] %v636
      %669 = vst [vmem:[%s221 + $0x28] sm:$0xf] %v637
      %670 = vst [vmem:[%s221 + $0x2c] sm:$0xf] %v638
      %671 = vst [vmem:[%s221 + $0x30] sm:$0xf] %v639
      %672 = vst [vmem:[%s221 + $0x34] sm:$0xf] %v640
      %673 = vst [vmem:[%s221 + $0x38] sm:$0xf] %v641
      %674 = vst [vmem:[%s221 + $0x3c] sm:$0xf] %v642
      %p675 = scmp.lt.s32.totalorder %s19, 1
      %s676 = scalar_select %p675, %s19, 1
      %p677 = scmp.lt.s32.totalorder %s18, 0
      %s678 = scalar_select %p677, %s18, 0
      %s679 = smul.addr %s676, 16
      %s680 = sadd.s32 %s678, %s679
      %s681 = smul.addr %s680, 4
      %s682 = scalar_lea.vmem %s3, %s681
      // Predicated region
      $region33: #{_lambda_.5} parent=31 // pred_check
        %p683 = pneg %p124
      $region34: #{_lambda_.5} parent=31 // pred_check_branch
        %685 = sbr.rel (%p683) target = $region36
      $region35: #{_lambda_.5} parent=31 // pred_region
        _
      $region36: #{_lambda_.5} parent=31 // pred_fallthru
        _
    $region32: #{_lambda_.5} parent=5 // pred_fallthru
      _
    %p686 = scmp.le.s32.totalorder 2, %s9
    // Predicated region
    $region37: #{_lambda_.5} parent=5 // pred_check
      %p687 = pneg %p686
    $region38: #{_lambda_.5} parent=5 // pred_check_branch
      %689 = sbr.rel (%p687) target = $region40
    $region39: #{_lambda_.5} parent=5 // pred_region
      %s690 = ssub.s32 %s9, 2
      // Predicated region
      $region41: #{_lambda_.5} parent=39 // pred_check
        %p691 = pneg %p130
      $region42: #{_lambda_.5} parent=39 // pred_check_branch
        %693 = sbr.rel (%p691) target = $region44
      $region43: #{_lambda_.5} parent=39 // pred_region
        %p694 = scmp.lt.s32.totalorder %s21, 1
        %s695 = scalar_select %p694, %s21, 1
        %p696 = scmp.lt.s32.totalorder %s20, 0
        %s697 = scalar_select %p696, %s20, 0
        %s698 = smul.addr %s695, 16
        %s699 = sadd.s32 %s697, %s698
        %s700 = smul.addr %s699, 4
        %s701 = scalar_lea.vmem %s3, %s700
      $region44: #{_lambda_.5} parent=39 // pred_fallthru
        _
    $region40: #{_lambda_.5} parent=5 // pred_fallthru
      _
  $region6: #{_lambda_.5} parent=0 // loop_footer
    %s13 = sadd.s32 1, %s9
  $region7: #{_lambda_.5} parent=0 // loop_footer_branch
    %8 = sbr.rel target = $region3
  $region8: #{_lambda_.5} parent=0 // loop_exit
    _

// kernel: _lambda_.6
$region0: #{_lambda_.6}
  #allocation0 [shape = 'u32[]', space=smem, size = 0x4, offset = 0x4, fixed_abs, tag = 'smem constant byte address 0x4 - core index']
  #allocation1 [shape = 'u32[144,128]{1,0:T(1,128)}', space=vmem, size = 0x12000, scoped, tag = 'internal scratch']
  %s0 = inlined_call_operand.vmem [shape: bf16[2,80,1024], index: 0, kind: input, shape index: {}]
  %s1 = inlined_call_operand.vmem [shape: bf16[2,1024,128], index: 1, kind: input, shape index: {}]
  %s2 = inlined_call_operand.vmem [shape: f32[1,128], index: 2, kind: input, shape index: {}]
  %s3 = inlined_call_operand.vmem [shape: f32[1,128], index: 3, kind: input, shape index: {}]
  %s4 = inlined_call_operand.vmem [shape: f32[1,128], index: 4, kind: input, shape index: {}]
  %s5 = inlined_call_operand.vmem [shape: bf16[2,64,128], index: 5, kind: output, shape index: {}]
  %s6 = sld [smem:[#allocation0]]
  $region53: #{_lambda_.6} parent=0
    _
  %s8 = ssub.s32 1, %s6
  %s9 = scalar_select 0, %s8, %s6
  loop: start=0, step=1, limit=4
  $region2: #{_lambda_.6} parent=0 // loop_pre_header
    _
  $region3: #{_lambda_.6} parent=0 // loop_header
    %s11 = sphi 0, %s15
    %p12 = scmp.ge.s32.totalorder %s11, 4
    %s18 = sphi 0, %s30
    %s19 = sphi 0, %s26
    %s20 = sphi 0, %s18
    %s21 = sphi 0, %s19
    %s22 = sphi 0, %s20
    %s23 = sphi 0, %s21
    %s33 = sphi 0, %s35
    %s36 = sphi 0, %s33
    %s37 = sphi 0, %s36
    %s53 = sphi 0, %s37
    %s59 = sphi 0, %s61
    %s62 = sphi 0, %s59
    %s63 = sphi 0, %s62
    %s79 = sphi 0, %s63
    %s85 = sphi 0, %s87
    %s88 = sphi 0, %s85
    %s89 = sphi 0, %s88
    %s105 = sphi 0, %s89
    %s111 = sphi 0, %s113
    %s114 = sphi 0, %s111
    %s115 = sphi 0, %s114
    %s131 = sphi 0, %s115
    %s137 = sphi 0, %s139
    %s140 = sphi 0, %s137
    %s141 = sphi 0, %s140
    %s157 = sphi 0, %s141
    %s165 = sphi 0, %s167
    %s168 = sphi 0, %s165
    %s169 = sphi 0, %s168
    %s185 = sphi 0, %s169
  $region4: #{_lambda_.6} parent=0 // loop_header_branch
    %14 = sbr.rel (%p12) target = $region8
  $region5: #{_lambda_.6} parent=0 // loop_body
    %s16 = ssub.s32 %s11, 1
    %s17 = ssub.s32 %s11, 2
    %s24 = sadd.s32 1, %s19
    %p25 = scmp.ge.s32.totalorder %s24, 2
    %s26 = scalar_select %p25, 0, %s24
    %s27 = sadd.s32 1, %s18
    %s28 = scalar_select %p25, %s27, %s18
    %p29 = scmp.ge.s32.totalorder %s28, 1
    %s30 = scalar_select %p29, 0, %s28
    %s31 = ssub.s32 %s19, %s26
    %p32 = scmp.eq.s32.totalorder %s31, 0
    %s34 = sadd.s32 %s33, 1
    %s35 = scalar_select %p32, %s33, %s34
    %p38 = pneg %p32
    %p39 = scmp.eq.s32.totalorder %s11, 1
    %p40 = por %p38, %p39
    %p41 = scmp.ne.s32.totalorder %s33, %s36
    %p42 = scmp.eq.s32.totalorder %s11, 0
    %p43 = por %p41, %p42
    %p44 = scmp.ne.s32.totalorder %s33, %s36
    %p45 = scmp.eq.s32.totalorder %s16, 1
    %p46 = por %p44, %p45
    %p47 = scmp.ne.s32.totalorder %s36, %s37
    %p48 = scmp.eq.s32.totalorder %s16, 0
    %p49 = por %p47, %p48
    %p50 = scmp.ne.s32.totalorder %s36, %s37
    %p51 = scmp.eq.s32.totalorder %s17, 1
    %p52 = por %p50, %p51
    %p54 = scmp.ne.s32.totalorder %s37, %s53
    %p55 = scmp.eq.s32.totalorder %s17, 0
    %p56 = por %p54, %p55
    %s57 = ssub.s32 %s18, %s30
    %p58 = scmp.eq.s32.totalorder %s57, 0
    %s60 = sadd.s32 %s59, 1
    %s61 = scalar_select %p58, %s59, %s60
    %p64 = pneg %p58
    %p65 = scmp.eq.s32.totalorder %s11, 1
    %p66 = por %p64, %p65
    %p67 = scmp.ne.s32.totalorder %s59, %s62
    %p68 = scmp.eq.s32.totalorder %s11, 0
    %p69 = por %p67, %p68
    %p70 = scmp.ne.s32.totalorder %s59, %s62
    %p71 = scmp.eq.s32.totalorder %s16, 1
    %p72 = por %p70, %p71
    %p73 = scmp.ne.s32.totalorder %s62, %s63
    %p74 = scmp.eq.s32.totalorder %s16, 0
    %p75 = por %p73, %p74
    %p76 = scmp.ne.s32.totalorder %s62, %s63
    %p77 = scmp.eq.s32.totalorder %s17, 1
    %p78 = por %p76, %p77
    %p80 = scmp.ne.s32.totalorder %s63, %s79
    %p81 = scmp.eq.s32.totalorder %s17, 0
    %p82 = por %p80, %p81
    %s83 = ssub.s32 %s18, %s30
    %p84 = scmp.eq.s32.totalorder %s83, 0
    %s86 = sadd.s32 %s85, 1
    %s87 = scalar_select %p84, %s85, %s86
    %p90 = pneg %p84
    %p91 = scmp.eq.s32.totalorder %s11, 1
    %p92 = por %p90, %p91
    %p93 = scmp.ne.s32.totalorder %s85, %s88
    %p94 = scmp.eq.s32.totalorder %s11, 0
    %p95 = por %p93, %p94
    %p96 = scmp.ne.s32.totalorder %s85, %s88
    %p97 = scmp.eq.s32.totalorder %s16, 1
    %p98 = por %p96, %p97
    %p99 = scmp.ne.s32.totalorder %s88, %s89
    %p100 = scmp.eq.s32.totalorder %s16, 0
    %p101 = por %p99, %p100
    %p102 = scmp.ne.s32.totalorder %s88, %s89
    %p103 = scmp.eq.s32.totalorder %s17, 1
    %p104 = por %p102, %p103
    %p106 = scmp.ne.s32.totalorder %s89, %s105
    %p107 = scmp.eq.s32.totalorder %s17, 0
    %p108 = por %p106, %p107
    %s109 = ssub.s32 %s18, %s30
    %p110 = scmp.eq.s32.totalorder %s109, 0
    %s112 = sadd.s32 %s111, 1
    %s113 = scalar_select %p110, %s111, %s112
    %p116 = pneg %p110
    %p117 = scmp.eq.s32.totalorder %s11, 1
    %p118 = por %p116, %p117
    %p119 = scmp.ne.s32.totalorder %s111, %s114
    %p120 = scmp.eq.s32.totalorder %s11, 0
    %p121 = por %p119, %p120
    %p122 = scmp.ne.s32.totalorder %s111, %s114
    %p123 = scmp.eq.s32.totalorder %s16, 1
    %p124 = por %p122, %p123
    %p125 = scmp.ne.s32.totalorder %s114, %s115
    %p126 = scmp.eq.s32.totalorder %s16, 0
    %p127 = por %p125, %p126
    %p128 = scmp.ne.s32.totalorder %s114, %s115
    %p129 = scmp.eq.s32.totalorder %s17, 1
    %p130 = por %p128, %p129
    %p132 = scmp.ne.s32.totalorder %s115, %s131
    %p133 = scmp.eq.s32.totalorder %s17, 0
    %p134 = por %p132, %p133
    %s135 = ssub.s32 %s18, %s30
    %p136 = scmp.eq.s32.totalorder %s135, 0
    %s138 = sadd.s32 %s137, 1
    %s139 = scalar_select %p136, %s137, %s138
    %p142 = pneg %p136
    %p143 = scmp.eq.s32.totalorder %s11, 1
    %p144 = por %p142, %p143
    %p145 = scmp.ne.s32.totalorder %s137, %s140
    %p146 = scmp.eq.s32.totalorder %s11, 0
    %p147 = por %p145, %p146
    %p148 = scmp.ne.s32.totalorder %s137, %s140
    %p149 = scmp.eq.s32.totalorder %s16, 1
    %p150 = por %p148, %p149
    %p151 = scmp.ne.s32.totalorder %s140, %s141
    %p152 = scmp.eq.s32.totalorder %s16, 0
    %p153 = por %p151, %p152
    %p154 = scmp.ne.s32.totalorder %s140, %s141
    %p155 = scmp.eq.s32.totalorder %s17, 1
    %p156 = por %p154, %p155
    %p158 = scmp.ne.s32.totalorder %s141, %s157
    %p159 = scmp.eq.s32.totalorder %s17, 0
    %p160 = por %p158, %p159
    %s161 = ssub.s32 %s19, %s26
    %s162 = ssub.s32 %s18, %s30
    %s163 = sor.u32 %s161, %s162
    %p164 = scmp.eq.s32.totalorder %s163, 0
    %s166 = sadd.s32 %s165, 1
    %s167 = scalar_select %p164, %s165, %s166
    %p170 = pneg %p164
    %p171 = scmp.eq.s32.totalorder %s11, 1
    %p172 = por %p170, %p171
    %p173 = scmp.ne.s32.totalorder %s165, %s168
    %p174 = scmp.eq.s32.totalorder %s11, 0
    %p175 = por %p173, %p174
    %p176 = scmp.ne.s32.totalorder %s165, %s168
    %p177 = scmp.eq.s32.totalorder %s16, 1
    %p178 = por %p176, %p177
    %p179 = scmp.ne.s32.totalorder %s168, %s169
    %p180 = scmp.eq.s32.totalorder %s16, 0
    %p181 = por %p179, %p180
    %p182 = scmp.ne.s32.totalorder %s168, %s169
    %p183 = scmp.eq.s32.totalorder %s17, 1
    %p184 = por %p182, %p183
    %p186 = scmp.ne.s32.totalorder %s169, %s185
    %p187 = scmp.eq.s32.totalorder %s17, 0
    %p188 = por %p186, %p187
    %p189 = scmp.le.s32.totalorder 1, %s11
    %p190 = scmp.lt.s32.totalorder %s11, 3
    %p191 = pnand %p189, %p190
    %p192 = pneg %p191
    // Predicated region
    $region9: #{_lambda_.6} parent=5 // pred_check
      _
    $region10: #{_lambda_.6} parent=5 // pred_check_branch
      %194 = sbr.rel (%p191) target = $region12
    $region11: #{_lambda_.6} parent=5 // pred_region
      %s195 = ssub.s32 %s11, 1
      // Predicated region
      $region13: #{_lambda_.6} parent=11 // pred_check
        %p196 = pneg %p75
      $region14: #{_lambda_.6} parent=11 // pred_check_branch
        %198 = sbr.rel (%p196) target = $region16
      $region15: #{_lambda_.6} parent=11 // pred_region
        %p199 = scmp.lt.s32.totalorder %s20, 0
        %s200 = scalar_select %p199, %s20, 0
        %s201 = smul.addr %s200, 4
        %s202 = scalar_lea.vmem %s1, %s201
      $region16: #{_lambda_.6} parent=11 // pred_fallthru
        _
      // Predicated region
      $region17: #{_lambda_.6} parent=11 // pred_check
        %p203 = pneg %p101
      $region18: #{_lambda_.6} parent=11 // pred_check_branch
        %205 = sbr.rel (%p203) target = $region20
      $region19: #{_lambda_.6} parent=11 // pred_region
        %p206 = scmp.lt.s32.totalorder %s20, 0
        %s207 = scalar_select %p206, %s20, 0
        %s208 = scalar_lea.vmem %s2, %s207
      $region20: #{_lambda_.6} parent=11 // pred_fallthru
        _
      // Predicated region
      $region21: #{_lambda_.6} parent=11 // pred_check
        %p209 = pneg %p127
      $region22: #{_lambda_.6} parent=11 // pred_check_branch
        %211 = sbr.rel (%p209) target = $region24
      $region23: #{_lambda_.6} parent=11 // pred_region
        %p212 = scmp.lt.s32.totalorder %s20, 0
        %s213 = scalar_select %p212, %s20, 0
        %s214 = scalar_lea.vmem %s3, %s213
      $region24: #{_lambda_.6} parent=11 // pred_fallthru
        _
      // Predicated region
      $region25: #{_lambda_.6} parent=11 // pred_check
        %p215 = pneg %p153
      $region26: #{_lambda_.6} parent=11 // pred_check_branch
        %217 = sbr.rel (%p215) target = $region28
      $region27: #{_lambda_.6} parent=11 // pred_region
        %p218 = scmp.lt.s32.totalorder %s20, 0
        %s219 = scalar_select %p218, %s20, 0
        %s220 = scalar_lea.vmem %s4, %s219
      $region28: #{_lambda_.6} parent=11 // pred_fallthru
        _
    $region12: #{_lambda_.6} parent=5 // pred_fallthru
      _
    %p221 = scmp.lt.s32.totalorder %s11, 2
    // Predicated region
    $region29: #{_lambda_.6} parent=5 // pred_check
      %p222 = pneg %p221
    $region30: #{_lambda_.6} parent=5 // pred_check_branch
      %224 = sbr.rel (%p222) target = $region32
    $region31: #{_lambda_.6} parent=5 // pred_region
      // Predicated region
      $region33: #{_lambda_.6} parent=31 // pred_check
        %p225 = pneg %p43
      $region34: #{_lambda_.6} parent=31 // pred_check_branch
        %227 = sbr.rel (%p225) target = $region36
      $region35: #{_lambda_.6} parent=31 // pred_region
        %p228 = scmp.lt.s32.totalorder %s19, 1
        %s229 = scalar_select %p228, %s19, 1
        %s230 = smul.addr %s229, 80
        %s231 = smul.addr %s230, 4
        %s232 = scalar_lea.vmem %s0, %s231
      $region36: #{_lambda_.6} parent=31 // pred_fallthru
        _
    $region32: #{_lambda_.6} parent=5 // pred_fallthru
      _
    %p233 = scmp.le.s32.totalorder 1, %s11
    %p234 = scmp.lt.s32.totalorder %s11, 3
    %p235 = pnand %p233, %p234
    %p236 = pneg %p235
    // Predicated region
    $region37: #{_lambda_.6} parent=5 // pred_check
      _
    $region38: #{_lambda_.6} parent=5 // pred_check_branch
      %238 = sbr.rel (%p235) target = $region40
    $region39: #{_lambda_.6} parent=5 // pred_region
      %s239 = ssub.s32 %s11, 1
      %p240 = scmp.lt.s32.totalorder %s21, 1
      %s241 = scalar_select %p240, %s21, 1
      %s242 = smul.addr %s241, 80
      %s243 = smul.addr %s242, 4
      %s244 = scalar_lea.vmem %s0, %s243
      %p245 = pneg %p49
      %p246 = pneg %p46
      %p247 = scmp.lt.s32.totalorder %s20, 0
      %s248 = scalar_select %p247, %s20, 0
      %s249 = smul.addr %s248, 4
      %s250 = scalar_lea.vmem %s1, %s249
      %p251 = pneg %p75
      %p252 = pneg %p72
      %p253 = scmp.lt.s32.totalorder %s20, 0
      %s254 = scalar_select %p253, %s20, 0
      %s255 = scalar_lea.vmem %s2, %s254
      %p256 = pneg %p101
      %p257 = pneg %p98
      %p258 = scmp.lt.s32.totalorder %s20, 0
      %s259 = scalar_select %p258, %s20, 0
      %s260 = scalar_lea.vmem %s3, %s259
      %p261 = pneg %p127
      %p262 = pneg %p124
      %p263 = scmp.lt.s32.totalorder %s20, 0
      %s264 = scalar_select %p263, %s20, 0
      %s265 = scalar_lea.vmem %s4, %s264
      %p266 = pneg %p153
      %p267 = pneg %p150
      %p268 = pneg %p181
      %p269 = pneg %p178
      %p270 = scmp.lt.s32.totalorder %s21, 1
      %s271 = scalar_select %p270, %s21, 1
      %p272 = scmp.lt.s32.totalorder %s20, 0
      %s273 = scalar_select %p272, %s20, 0
      %s274 = smul.addr %s271, 8
      %s275 = sadd.s32 %s273, %s274
      %s276 = smul.addr %s275, 4
      %s277 = scalar_lea.vmem %s5, %s276
      %p278 = scmp.lt.s32.totalorder %s21, 1
      %s279 = scalar_select %p278, %s21, 1
      %s280 = smul.addr %s279, 80
      %s281 = smul.addr %s280, 4
      %s282 = scalar_lea.vmem %s0, %s281
      %p283 = scmp.lt.s32.totalorder %s20, 0
      %s284 = scalar_select %p283, %s20, 0
      %s285 = smul.addr %s284, 4
      %s286 = scalar_lea.vmem %s1, %s285
      %p287 = scmp.lt.s32.totalorder %s20, 0
      %s288 = scalar_select %p287, %s20, 0
      %s289 = scalar_lea.vmem %s2, %s288
      %p290 = scmp.lt.s32.totalorder %s20, 0
      %s291 = scalar_select %p290, %s20, 0
      %s292 = scalar_lea.vmem %s3, %s291
      %p293 = scmp.lt.s32.totalorder %s20, 0
      %s294 = scalar_select %p293, %s20, 0
      %s295 = scalar_lea.vmem %s4, %s294
      %p296 = scmp.lt.s32.totalorder %s21, 1
      %s297 = scalar_select %p296, %s21, 1
      %p298 = scmp.lt.s32.totalorder %s20, 0
      %s299 = scalar_select %p298, %s20, 0
      %s300 = smul.addr %s297, 8
      %s301 = sadd.s32 %s299, %s300
      %s302 = smul.addr %s301, 4
      %s303 = scalar_lea.vmem %s5, %s302
      %v305 = vld [vmem:[%s282] sm:$0xff]
      %v306 = vld [vmem:[%s282 + $0x8] sm:$0xff]
      %v307 = vld [vmem:[%s282 + $0x10] sm:$0xff]
      %v308 = vld [vmem:[%s282 + $0x18] sm:$0xff]
      %v309 = vld [vmem:[%s282 + $0x20] sm:$0xff]
      %v310 = vld [vmem:[%s282 + $0x28] sm:$0xff]
      %v311 = vld [vmem:[%s282 + $0x30] sm:$0xff]
      %v312 = vld [vmem:[%s282 + $0x38] sm:$0xff]
      %v313 = vld [vmem:[%s282 + $0x40] sm:$0xff]
      %v314 = vld [vmem:[%s282 + $0x48] sm:$0xff]
      %v315 = vld [vmem:[%s282 + $0x50] sm:$0xff]
      %v316 = vld [vmem:[%s282 + $0x58] sm:$0xff]
      %v317 = vld [vmem:[%s282 + $0x60] sm:$0xff]
      %v318 = vld [vmem:[%s282 + $0x68] sm:$0xff]
      %v319 = vld [vmem:[%s282 + $0x70] sm:$0xff]
      %v320 = vld [vmem:[%s282 + $0x78] sm:$0xff]
      %v321 = vld [vmem:[%s282 + $0x80] sm:$0xff]
      %v322 = vld [vmem:[%s282 + $0x88] sm:$0xff]
      %v323 = vld [vmem:[%s282 + $0x90] sm:$0xff]
      %v324 = vld [vmem:[%s282 + $0x98] sm:$0xff]
      %v325 = vld [vmem:[%s282 + $0xa0] sm:$0xff]
      %v326 = vld [vmem:[%s282 + $0xa8] sm:$0xff]
      %v327 = vld [vmem:[%s282 + $0xb0] sm:$0xff]
      %v328 = vld [vmem:[%s282 + $0xb8] sm:$0xff]
      %v329 = vld [vmem:[%s282 + $0xc0] sm:$0xff]
      %v330 = vld [vmem:[%s282 + $0xc8] sm:$0xff]
      %v331 = vld [vmem:[%s282 + $0xd0] sm:$0xff]
      %v332 = vld [vmem:[%s282 + $0xd8] sm:$0xff]
      %v333 = vld [vmem:[%s282 + $0xe0] sm:$0xff]
      %v334 = vld [vmem:[%s282 + $0xe8] sm:$0xff]
      %v335 = vld [vmem:[%s282 + $0xf0] sm:$0xff]
      %v336 = vld [vmem:[%s282 + $0xf8] sm:$0xff]
      %v337 = vld [vmem:[%s286] sm:$0xf]
      %v338 = vld [vmem:[%s286 + $0x4] sm:$0xf]
      %v339 = vld [vmem:[%s286 + $0x8] sm:$0xf]
      %v340 = vld [vmem:[%s286 + $0xc] sm:$0xf]
      %v341 = vld [vmem:[%s286 + $0x10] sm:$0xf]
      %v342 = vld [vmem:[%s286 + $0x14] sm:$0xf]
      %v343 = vld [vmem:[%s286 + $0x18] sm:$0xf]
      %v344 = vld [vmem:[%s286 + $0x1c] sm:$0xf]
      %v345 = vld [vmem:[%s286 + $0x20] sm:$0xf]
      %v346 = vld [vmem:[%s286 + $0x24] sm:$0xf]
      %v347 = vld [vmem:[%s286 + $0x28] sm:$0xf]
      %v348 = vld [vmem:[%s286 + $0x2c] sm:$0xf]
      %v349 = vld [vmem:[%s286 + $0x30] sm:$0xf]
      %v350 = vld [vmem:[%s286 + $0x34] sm:$0xf]
      %v351 = vld [vmem:[%s286 + $0x38] sm:$0xf]
      %v352 = vld [vmem:[%s286 + $0x3c] sm:$0xf]
      %v353 = vld [vmem:[%s286 + $0x40] sm:$0xf]
      %v354 = vld [vmem:[%s286 + $0x44] sm:$0xf]
      %v355 = vld [vmem:[%s286 + $0x48] sm:$0xf]
      %v356 = vld [vmem:[%s286 + $0x4c] sm:$0xf]
      %v357 = vld [vmem:[%s286 + $0x50] sm:$0xf]
      %v358 = vld [vmem:[%s286 + $0x54] sm:$0xf]
      %v359 = vld [vmem:[%s286 + $0x58] sm:$0xf]
      %v360 = vld [vmem:[%s286 + $0x5c] sm:$0xf]
      %v361 = vld [vmem:[%s286 + $0x60] sm:$0xf]
      %v362 = vld [vmem:[%s286 + $0x64] sm:$0xf]
      %v363 = vld [vmem:[%s286 + $0x68] sm:$0xf]
      %v364 = vld [vmem:[%s286 + $0x6c] sm:$0xf]
      %v365 = vld [vmem:[%s286 + $0x70] sm:$0xf]
      %v366 = vld [vmem:[%s286 + $0x74] sm:$0xf]
      %v367 = vld [vmem:[%s286 + $0x78] sm:$0xf]
      %v368 = vld [vmem:[%s286 + $0x7c] sm:$0xf]
      %v369 = vld [vmem:[%s286 + $0x80] sm:$0xf]
      %v370 = vld [vmem:[%s286 + $0x84] sm:$0xf]
      %v371 = vld [vmem:[%s286 + $0x88] sm:$0xf]
      %v372 = vld [vmem:[%s286 + $0x8c] sm:$0xf]
      %v373 = vld [vmem:[%s286 + $0x90] sm:$0xf]
      %v374 = vld [vmem:[%s286 + $0x94] sm:$0xf]
      %v375 = vld [vmem:[%s286 + $0x98] sm:$0xf]
      %v376 = vld [vmem:[%s286 + $0x9c] sm:$0xf]
      %v377 = vld [vmem:[%s286 + $0xa0] sm:$0xf]
      %v378 = vld [vmem:[%s286 + $0xa4] sm:$0xf]
      %v379 = vld [vmem:[%s286 + $0xa8] sm:$0xf]
      %v380 = vld [vmem:[%s286 + $0xac] sm:$0xf]
      %v381 = vld [vmem:[%s286 + $0xb0] sm:$0xf]
      %v382 = vld [vmem:[%s286 + $0xb4] sm:$0xf]
      %v383 = vld [vmem:[%s286 + $0xb8] sm:$0xf]
      %v384 = vld [vmem:[%s286 + $0xbc] sm:$0xf]
      %v385 = vld [vmem:[%s286 + $0xc0] sm:$0xf]
      %v386 = vld [vmem:[%s286 + $0xc4] sm:$0xf]
      %v387 = vld [vmem:[%s286 + $0xc8] sm:$0xf]
      %v388 = vld [vmem:[%s286 + $0xcc] sm:$0xf]
      %v389 = vld [vmem:[%s286 + $0xd0] sm:$0xf]
      %v390 = vld [vmem:[%s286 + $0xd4] sm:$0xf]
      %v391 = vld [vmem:[%s286 + $0xd8] sm:$0xf]
      %v392 = vld [vmem:[%s286 + $0xdc] sm:$0xf]
      %v393 = vld [vmem:[%s286 + $0xe0] sm:$0xf]
      %v394 = vld [vmem:[%s286 + $0xe4] sm:$0xf]
      %v395 = vld [vmem:[%s286 + $0xe8] sm:$0xf]
      %v396 = vld [vmem:[%s286 + $0xec] sm:$0xf]
      %v397 = vld [vmem:[%s286 + $0xf0] sm:$0xf]
      %v398 = vld [vmem:[%s286 + $0xf4] sm:$0xf]
      %v399 = vld [vmem:[%s286 + $0xf8] sm:$0xf]
      %v400 = vld [vmem:[%s286 + $0xfc] sm:$0xf]
      %v401 = vld [vmem:[%s286 + $0x100] sm:$0xf]
      %v402 = vld [vmem:[%s286 + $0x104] sm:$0xf]
      %v403 = vld [vmem:[%s286 + $0x108] sm:$0xf]
      %v404 = vld [vmem:[%s286 + $0x10c] sm:$0xf]
      %v405 = vld [vmem:[%s286 + $0x110] sm:$0xf]
      %v406 = vld [vmem:[%s286 + $0x114] sm:$0xf]
      %v407 = vld [vmem:[%s286 + $0x118] sm:$0xf]
      %v408 = vld [vmem:[%s286 + $0x11c] sm:$0xf]
      %v409 = vld [vmem:[%s286 + $0x120] sm:$0xf]
      %v410 = vld [vmem:[%s286 + $0x124] sm:$0xf]
      %v411 = vld [vmem:[%s286 + $0x128] sm:$0xf]
      %v412 = vld [vmem:[%s286 + $0x12c] sm:$0xf]
      %v413 = vld [vmem:[%s286 + $0x130] sm:$0xf]
      %v414 = vld [vmem:[%s286 + $0x134] sm:$0xf]
      %v415 = vld [vmem:[%s286 + $0x138] sm:$0xf]
      %v416 = vld [vmem:[%s286 + $0x13c] sm:$0xf]
      %v417 = vld [vmem:[%s286 + $0x140] sm:$0xf]
      %v418 = vld [vmem:[%s286 + $0x144] sm:$0xf]
      %v419 = vld [vmem:[%s286 + $0x148] sm:$0xf]
      %v420 = vld [vmem:[%s286 + $0x14c] sm:$0xf]
      %v421 = vld [vmem:[%s286 + $0x150] sm:$0xf]
      %v422 = vld [vmem:[%s286 + $0x154] sm:$0xf]
      %v423 = vld [vmem:[%s286 + $0x158] sm:$0xf]
      %v424 = vld [vmem:[%s286 + $0x15c] sm:$0xf]
      %v425 = vld [vmem:[%s286 + $0x160] sm:$0xf]
      %v426 = vld [vmem:[%s286 + $0x164] sm:$0xf]
      %v427 = vld [vmem:[%s286 + $0x168] sm:$0xf]
      %v428 = vld [vmem:[%s286 + $0x16c] sm:$0xf]
      %v429 = vld [vmem:[%s286 + $0x170] sm:$0xf]
      %v430 = vld [vmem:[%s286 + $0x174] sm:$0xf]
      %v431 = vld [vmem:[%s286 + $0x178] sm:$0xf]
      %v432 = vld [vmem:[%s286 + $0x17c] sm:$0xf]
      %v433 = vld [vmem:[%s286 + $0x180] sm:$0xf]
      %v434 = vld [vmem:[%s286 + $0x184] sm:$0xf]
      %v435 = vld [vmem:[%s286 + $0x188] sm:$0xf]
      %v436 = vld [vmem:[%s286 + $0x18c] sm:$0xf]
      %v437 = vld [vmem:[%s286 + $0x190] sm:$0xf]
      %v438 = vld [vmem:[%s286 + $0x194] sm:$0xf]
      %v439 = vld [vmem:[%s286 + $0x198] sm:$0xf]
      %v440 = vld [vmem:[%s286 + $0x19c] sm:$0xf]
      %v441 = vld [vmem:[%s286 + $0x1a0] sm:$0xf]
      %v442 = vld [vmem:[%s286 + $0x1a4] sm:$0xf]
      %v443 = vld [vmem:[%s286 + $0x1a8] sm:$0xf]
      %v444 = vld [vmem:[%s286 + $0x1ac] sm:$0xf]
      %v445 = vld [vmem:[%s286 + $0x1b0] sm:$0xf]
      %v446 = vld [vmem:[%s286 + $0x1b4] sm:$0xf]
      %v447 = vld [vmem:[%s286 + $0x1b8] sm:$0xf]
      %v448 = vld [vmem:[%s286 + $0x1bc] sm:$0xf]
      %v449 = vld [vmem:[%s286 + $0x1c0] sm:$0xf]
      %v450 = vld [vmem:[%s286 + $0x1c4] sm:$0xf]
      %v451 = vld [vmem:[%s286 + $0x1c8] sm:$0xf]
      %v452 = vld [vmem:[%s286 + $0x1cc] sm:$0xf]
      %v453 = vld [vmem:[%s286 + $0x1d0] sm:$0xf]
      %v454 = vld [vmem:[%s286 + $0x1d4] sm:$0xf]
      %v455 = vld [vmem:[%s286 + $0x1d8] sm:$0xf]
      %v456 = vld [vmem:[%s286 + $0x1dc] sm:$0xf]
      %v457 = vld [vmem:[%s286 + $0x1e0] sm:$0xf]
      %v458 = vld [vmem:[%s286 + $0x1e4] sm:$0xf]
      %v459 = vld [vmem:[%s286 + $0x1e8] sm:$0xf]
      %v460 = vld [vmem:[%s286 + $0x1ec] sm:$0xf]
      %v461 = vld [vmem:[%s286 + $0x1f0] sm:$0xf]
      %v462 = vld [vmem:[%s286 + $0x1f4] sm:$0xf]
      %v463 = vld [vmem:[%s286 + $0x1f8] sm:$0xf]
      %v464 = vld [vmem:[%s286 + $0x1fc] sm:$0xf]
      %v465 = vld [vmem:[%s282 + $0x40] sm:$0xff]
      %v466 = vld [vmem:[%s282 + $0x48] sm:$0xff]
      %v467 = vld [vmem:[%s282 + $0x50] sm:$0xff]
      %v468 = vld [vmem:[%s282 + $0x58] sm:$0xff]
      %v469 = vld [vmem:[%s282 + $0x60] sm:$0xff]
      %v470 = vld [vmem:[%s282 + $0x68] sm:$0xff]
      %v471 = vld [vmem:[%s282 + $0x70] sm:$0xff]
      %v472 = vld [vmem:[%s282 + $0x78] sm:$0xff]
      %v473 = vld [vmem:[%s282 + $0x80] sm:$0xff]
      %v474 = vld [vmem:[%s282 + $0x88] sm:$0xff]
      %v475 = vld [vmem:[%s282 + $0x90] sm:$0xff]
      %v476 = vld [vmem:[%s282 + $0x98] sm:$0xff]
      %v477 = vld [vmem:[%s282 + $0xa0] sm:$0xff]
      %v478 = vld [vmem:[%s282 + $0xa8] sm:$0xff]
      %v479 = vld [vmem:[%s282 + $0xb0] sm:$0xff]
      %v480 = vld [vmem:[%s282 + $0xb8] sm:$0xff]
      %v481 = vld [vmem:[%s282 + $0xc0] sm:$0xff]
      %v482 = vld [vmem:[%s282 + $0xc8] sm:$0xff]
      %v483 = vld [vmem:[%s282 + $0xd0] sm:$0xff]
      %v484 = vld [vmem:[%s282 + $0xd8] sm:$0xff]
      %v485 = vld [vmem:[%s282 + $0xe0] sm:$0xff]
      %v486 = vld [vmem:[%s282 + $0xe8] sm:$0xff]
      %v487 = vld [vmem:[%s282 + $0xf0] sm:$0xff]
      %v488 = vld [vmem:[%s282 + $0xf8] sm:$0xff]
      %v489 = vld [vmem:[%s282 + $0x100] sm:$0xff]
      %v490 = vld [vmem:[%s282 + $0x108] sm:$0xff]
      %v491 = vld [vmem:[%s282 + $0x110] sm:$0xff]
      %v492 = vld [vmem:[%s282 + $0x118] sm:$0xff]
      %v493 = vld [vmem:[%s282 + $0x120] sm:$0xff]
      %v494 = vld [vmem:[%s282 + $0x128] sm:$0xff]
      %v495 = vld [vmem:[%s282 + $0x130] sm:$0xff]
      %v496 = vld [vmem:[%s282 + $0x138] sm:$0xff]
      %s497 = scalar_lea.vmem %s286, 512
      %v498 = vld [vmem:[%s497] sm:$0xf]
      %v499 = vld [vmem:[%s497 + $0x4] sm:$0xf]
      %v500 = vld [vmem:[%s497 + $0x8] sm:$0xf]
      %v501 = vld [vmem:[%s497 + $0xc] sm:$0xf]
      %v502 = vld [vmem:[%s497 + $0x10] sm:$0xf]
      %v503 = vld [vmem:[%s497 + $0x14] sm:$0xf]
      %v504 = vld [vmem:[%s497 + $0x18] sm:$0xf]
      %v505 = vld [vmem:[%s497 + $0x1c] sm:$0xf]
      %v506 = vld [vmem:[%s497 + $0x20] sm:$0xf]
      %v507 = vld [vmem:[%s497 + $0x24] sm:$0xf]
      %v508 = vld [vmem:[%s497 + $0x28] sm:$0xf]
      %v509 = vld [vmem:[%s497 + $0x2c] sm:$0xf]
      %v510 = vld [vmem:[%s497 + $0x30] sm:$0xf]
      %v511 = vld [vmem:[%s497 + $0x34] sm:$0xf]
      %v512 = vld [vmem:[%s497 + $0x38] sm:$0xf]
      %v513 = vld [vmem:[%s497 + $0x3c] sm:$0xf]
      %v514 = vld [vmem:[%s497 + $0x40] sm:$0xf]
      %v515 = vld [vmem:[%s497 + $0x44] sm:$0xf]
      %v516 = vld [vmem:[%s497 + $0x48] sm:$0xf]
      %v517 = vld [vmem:[%s497 + $0x4c] sm:$0xf]
      %v518 = vld [vmem:[%s497 + $0x50] sm:$0xf]
      %v519 = vld [vmem:[%s497 + $0x54] sm:$0xf]
      %v520 = vld [vmem:[%s497 + $0x58] sm:$0xf]
      %v521 = vld [vmem:[%s497 + $0x5c] sm:$0xf]
      %v522 = vld [vmem:[%s497 + $0x60] sm:$0xf]
      %v523 = vld [vmem:[%s497 + $0x64] sm:$0xf]
      %v524 = vld [vmem:[%s497 + $0x68] sm:$0xf]
      %v525 = vld [vmem:[%s497 + $0x6c] sm:$0xf]
      %v526 = vld [vmem:[%s497 + $0x70] sm:$0xf]
      %v527 = vld [vmem:[%s497 + $0x74] sm:$0xf]
      %v528 = vld [vmem:[%s497 + $0x78] sm:$0xf]
      %v529 = vld [vmem:[%s497 + $0x7c] sm:$0xf]
      %v530 = vld [vmem:[%s497 + $0x80] sm:$0xf]
      %v531 = vld [vmem:[%s497 + $0x84] sm:$0xf]
      %v532 = vld [vmem:[%s497 + $0x88] sm:$0xf]
      %v533 = vld [vmem:[%s497 + $0x8c] sm:$0xf]
      %v534 = vld [vmem:[%s497 + $0x90] sm:$0xf]
      %v535 = vld [vmem:[%s497 + $0x94] sm:$0xf]
      %v536 = vld [vmem:[%s497 + $0x98] sm:$0xf]
      %v537 = vld [vmem:[%s497 + $0x9c] sm:$0xf]
      %v538 = vld [vmem:[%s497 + $0xa0] sm:$0xf]
      %v539 = vld [vmem:[%s497 + $0xa4] sm:$0xf]
      %v540 = vld [vmem:[%s497 + $0xa8] sm:$0xf]
      %v541 = vld [vmem:[%s497 + $0xac] sm:$0xf]
      %v542 = vld [vmem:[%s497 + $0xb0] sm:$0xf]
      %v543 = vld [vmem:[%s497 + $0xb4] sm:$0xf]
      %v544 = vld [vmem:[%s497 + $0xb8] sm:$0xf]
      %v545 = vld [vmem:[%s497 + $0xbc] sm:$0xf]
      %v546 = vld [vmem:[%s497 + $0xc0] sm:$0xf]
      %v547 = vld [vmem:[%s497 + $0xc4] sm:$0xf]
      %v548 = vld [vmem:[%s497 + $0xc8] sm:$0xf]
      %v549 = vld [vmem:[%s497 + $0xcc] sm:$0xf]
      %v550 = vld [vmem:[%s497 + $0xd0] sm:$0xf]
      %v551 = vld [vmem:[%s497 + $0xd4] sm:$0xf]
      %v552 = vld [vmem:[%s497 + $0xd8] sm:$0xf]
      %v553 = vld [vmem:[%s497 + $0xdc] sm:$0xf]
      %v554 = vld [vmem:[%s497 + $0xe0] sm:$0xf]
      %v555 = vld [vmem:[%s497 + $0xe4] sm:$0xf]
      %v556 = vld [vmem:[%s497 + $0xe8] sm:$0xf]
      %v557 = vld [vmem:[%s497 + $0xec] sm:$0xf]
      %v558 = vld [vmem:[%s497 + $0xf0] sm:$0xf]
      %v559 = vld [vmem:[%s497 + $0xf4] sm:$0xf]
      %v560 = vld [vmem:[%s497 + $0xf8] sm:$0xf]
      %v561 = vld [vmem:[%s497 + $0xfc] sm:$0xf]
      %v562 = vld [vmem:[%s497 + $0x100] sm:$0xf]
      %v563 = vld [vmem:[%s497 + $0x104] sm:$0xf]
      %v564 = vld [vmem:[%s497 + $0x108] sm:$0xf]
      %v565 = vld [vmem:[%s497 + $0x10c] sm:$0xf]
      %v566 = vld [vmem:[%s497 + $0x110] sm:$0xf]
      %v567 = vld [vmem:[%s497 + $0x114] sm:$0xf]
      %v568 = vld [vmem:[%s497 + $0x118] sm:$0xf]
      %v569 = vld [vmem:[%s497 + $0x11c] sm:$0xf]
      %v570 = vld [vmem:[%s497 + $0x120] sm:$0xf]
      %v571 = vld [vmem:[%s497 + $0x124] sm:$0xf]
      %v572 = vld [vmem:[%s497 + $0x128] sm:$0xf]
      %v573 = vld [vmem:[%s497 + $0x12c] sm:$0xf]
      %v574 = vld [vmem:[%s497 + $0x130] sm:$0xf]
      %v575 = vld [vmem:[%s497 + $0x134] sm:$0xf]
      %v576 = vld [vmem:[%s497 + $0x138] sm:$0xf]
      %v577 = vld [vmem:[%s497 + $0x13c] sm:$0xf]
      %v578 = vld [vmem:[%s497 + $0x140] sm:$0xf]
      %v579 = vld [vmem:[%s497 + $0x144] sm:$0xf]
      %v580 = vld [vmem:[%s497 + $0x148] sm:$0xf]
      %v581 = vld [vmem:[%s497 + $0x14c] sm:$0xf]
      %v582 = vld [vmem:[%s497 + $0x150] sm:$0xf]
      %v583 = vld [vmem:[%s497 + $0x154] sm:$0xf]
      %v584 = vld [vmem:[%s497 + $0x158] sm:$0xf]
      %v585 = vld [vmem:[%s497 + $0x15c] sm:$0xf]
      %v586 = vld [vmem:[%s497 + $0x160] sm:$0xf]
      %v587 = vld [vmem:[%s497 + $0x164] sm:$0xf]
      %v588 = vld [vmem:[%s497 + $0x168] sm:$0xf]
      %v589 = vld [vmem:[%s497 + $0x16c] sm:$0xf]
      %v590 = vld [vmem:[%s497 + $0x170] sm:$0xf]
      %v591 = vld [vmem:[%s497 + $0x174] sm:$0xf]
      %v592 = vld [vmem:[%s497 + $0x178] sm:$0xf]
      %v593 = vld [vmem:[%s497 + $0x17c] sm:$0xf]
      %v594 = vld [vmem:[%s497 + $0x180] sm:$0xf]
      %v595 = vld [vmem:[%s497 + $0x184] sm:$0xf]
      %v596 = vld [vmem:[%s497 + $0x188] sm:$0xf]
      %v597 = vld [vmem:[%s497 + $0x18c] sm:$0xf]
      %v598 = vld [vmem:[%s497 + $0x190] sm:$0xf]
      %v599 = vld [vmem:[%s497 + $0x194] sm:$0xf]
      %v600 = vld [vmem:[%s497 + $0x198] sm:$0xf]
      %v601 = vld [vmem:[%s497 + $0x19c] sm:$0xf]
      %v602 = vld [vmem:[%s497 + $0x1a0] sm:$0xf]
      %v603 = vld [vmem:[%s497 + $0x1a4] sm:$0xf]
      %v604 = vld [vmem:[%s497 + $0x1a8] sm:$0xf]
      %v605 = vld [vmem:[%s497 + $0x1ac] sm:$0xf]
      %v606 = vld [vmem:[%s497 + $0x1b0] sm:$0xf]
      %v607 = vld [vmem:[%s497 + $0x1b4] sm:$0xf]
      %v608 = vld [vmem:[%s497 + $0x1b8] sm:$0xf]
      %v609 = vld [vmem:[%s497 + $0x1bc] sm:$0xf]
      %v610 = vld [vmem:[%s497 + $0x1c0] sm:$0xf]
      %v611 = vld [vmem:[%s497 + $0x1c4] sm:$0xf]
      %v612 = vld [vmem:[%s497 + $0x1c8] sm:$0xf]
      %v613 = vld [vmem:[%s497 + $0x1cc] sm:$0xf]
      %v614 = vld [vmem:[%s497 + $0x1d0] sm:$0xf]
      %v615 = vld [vmem:[%s497 + $0x1d4] sm:$0xf]
      %v616 = vld [vmem:[%s497 + $0x1d8] sm:$0xf]
      %v617 = vld [vmem:[%s497 + $0x1dc] sm:$0xf]
      %v618 = vld [vmem:[%s497 + $0x1e0] sm:$0xf]
      %v619 = vld [vmem:[%s497 + $0x1e4] sm:$0xf]
      %v620 = vld [vmem:[%s497 + $0x1e8] sm:$0xf]
      %v621 = vld [vmem:[%s497 + $0x1ec] sm:$0xf]
      %v622 = vld [vmem:[%s497 + $0x1f0] sm:$0xf]
      %v623 = vld [vmem:[%s497 + $0x1f4] sm:$0xf]
      %v624 = vld [vmem:[%s497 + $0x1f8] sm:$0xf]
      %v625 = vld [vmem:[%s497 + $0x1fc] sm:$0xf]
      %v658 = vunpack.c.l.b16 %v465
      %v659 = vunpack.c.h.b16 %v465
      %v660 = vunpack.c.l.b16 %v466
      %v661 = vunpack.c.h.b16 %v466
      %v662 = vunpack.c.l.b16 %v467
      %v663 = vunpack.c.h.b16 %v467
      %v664 = vunpack.c.l.b16 %v468
      %v665 = vunpack.c.h.b16 %v468
      %v666 = vunpack.c.l.b16 %v469
      %v667 = vunpack.c.h.b16 %v469
      %v668 = vunpack.c.l.b16 %v470
      %v669 = vunpack.c.h.b16 %v470
      %v670 = vunpack.c.l.b16 %v471
      %v671 = vunpack.c.h.b16 %v471
      %v672 = vunpack.c.l.b16 %v472
      %v673 = vunpack.c.h.b16 %v472
      %v674 = vunpack.c.l.b16 %v473
      %v675 = vunpack.c.h.b16 %v473
      %v676 = vunpack.c.l.b16 %v474
      %v677 = vunpack.c.h.b16 %v474
      %v678 = vunpack.c.l.b16 %v475
      %v679 = vunpack.c.h.b16 %v475
      %v680 = vunpack.c.l.b16 %v476
      %v681 = vunpack.c.h.b16 %v476
      %v682 = vunpack.c.l.b16 %v477
      %v683 = vunpack.c.h.b16 %v477
      %v684 = vunpack.c.l.b16 %v478
      %v685 = vunpack.c.h.b16 %v478
      %v686 = vunpack.c.l.b16 %v479
      %v687 = vunpack.c.h.b16 %v479
      %v688 = vunpack.c.l.b16 %v480
      %v689 = vunpack.c.h.b16 %v480
      %v690 = vunpack.c.l.b16 %v481
      %v691 = vunpack.c.h.b16 %v481
      %v692 = vunpack.c.l.b16 %v482
      %v693 = vunpack.c.h.b16 %v482
      %v694 = vunpack.c.l.b16 %v483
      %v695 = vunpack.c.h.b16 %v483
      %v696 = vunpack.c.l.b16 %v484
      %v697 = vunpack.c.h.b16 %v484
      %v698 = vunpack.c.l.b16 %v485
      %v699 = vunpack.c.h.b16 %v485
      %v700 = vunpack.c.l.b16 %v486
      %v701 = vunpack.c.h.b16 %v486
      %v702 = vunpack.c.l.b16 %v487
      %v703 = vunpack.c.h.b16 %v487
      %v704 = vunpack.c.l.b16 %v488
      %v705 = vunpack.c.h.b16 %v488
      %v706 = vunpack.c.l.b16 %v489
      %v707 = vunpack.c.h.b16 %v489
      %v708 = vunpack.c.l.b16 %v490
      %v709 = vunpack.c.h.b16 %v490
      %v710 = vunpack.c.l.b16 %v491
      %v711 = vunpack.c.h.b16 %v491
      %v712 = vunpack.c.l.b16 %v492
      %v713 = vunpack.c.h.b16 %v492
      %v714 = vunpack.c.l.b16 %v493
      %v715 = vunpack.c.h.b16 %v493
      %v716 = vunpack.c.l.b16 %v494
      %v717 = vunpack.c.h.b16 %v494
      %v718 = vunpack.c.l.b16 %v495
      %v719 = vunpack.c.h.b16 %v495
      %v720 = vunpack.c.l.b16 %v496
      %v721 = vunpack.c.h.b16 %v496
      %v722 = vpack.c.b16 %v666, %v658
      %v723 = vpack.c.b16 %v667, %v659
      %v724 = vpack.c.b16 %v668, %v660
      %v725 = vpack.c.b16 %v669, %v661
      %v726 = vpack.c.b16 %v670, %v662
      %v727 = vpack.c.b16 %v671, %v663
      %v728 = vpack.c.b16 %v672, %v664
      %v729 = vpack.c.b16 %v673, %v665
      %v730 = vpack.c.b16 %v682, %v674
      %v731 = vpack.c.b16 %v683, %v675
      %v732 = vpack.c.b16 %v684, %v676
      %v733 = vpack.c.b16 %v685, %v677
      %v734 = vpack.c.b16 %v686, %v678
      %v735 = vpack.c.b16 %v687, %v679
      %v736 = vpack.c.b16 %v688, %v680
      %v737 = vpack.c.b16 %v689, %v681
      %v738 = vpack.c.b16 %v698, %v690
      %v739 = vpack.c.b16 %v699, %v691
      %v740 = vpack.c.b16 %v700, %v692
      %v741 = vpack.c.b16 %v701, %v693
      %v742 = vpack.c.b16 %v702, %v694
      %v743 = vpack.c.b16 %v703, %v695
      %v744 = vpack.c.b16 %v704, %v696
      %v745 = vpack.c.b16 %v705, %v697
      %v746 = vpack.c.b16 %v714, %v706
      %v747 = vpack.c.b16 %v715, %v707
      %v748 = vpack.c.b16 %v716, %v708
      %v749 = vpack.c.b16 %v717, %v709
      %v750 = vpack.c.b16 %v718, %v710
      %v751 = vpack.c.b16 %v719, %v711
      %v752 = vpack.c.b16 %v720, %v712
      %v753 = vpack.c.b16 %v721, %v713
      %v914 = vunpack.c.l.b16 %v498
      %v915 = vunpack.c.l.b16 %v499
      %v916 = vunpack.c.l.b16 %v500
      %v917 = vunpack.c.l.b16 %v501
      %v918 = vunpack.c.l.b16 %v502
      %v919 = vunpack.c.l.b16 %v503
      %v920 = vunpack.c.l.b16 %v504
      %v921 = vunpack.c.l.b16 %v505
      %v922 = vunpack.c.l.b16 %v506
      %v923 = vunpack.c.l.b16 %v507
      %v924 = vunpack.c.l.b16 %v508
      %v925 = vunpack.c.l.b16 %v509
      %v926 = vunpack.c.l.b16 %v510
      %v927 = vunpack.c.l.b16 %v511
      %v928 = vunpack.c.l.b16 %v512
      %v929 = vunpack.c.l.b16 %v513
      %v930 = vunpack.c.l.b16 %v514
      %v931 = vunpack.c.l.b16 %v515
      %v932 = vunpack.c.l.b16 %v516
      %v933 = vunpack.c.l.b16 %v517
      %v934 = vunpack.c.l.b16 %v518
      %v935 = vunpack.c.l.b16 %v519
      %v936 = vunpack.c.l.b16 %v520
      %v937 = vunpack.c.l.b16 %v521
      %v938 = vunpack.c.l.b16 %v522
      %v939 = vunpack.c.l.b16 %v523
      %v940 = vunpack.c.l.b16 %v524
      %v941 = vunpack.c.l.b16 %v525
      %v942 = vunpack.c.l.b16 %v526
      %v943 = vunpack.c.l.b16 %v527
      %v944 = vunpack.c.l.b16 %v528
      %v945 = vunpack.c.l.b16 %v529
      %v946 = vunpack.c.l.b16 %v530
      %v947 = vunpack.c.l.b16 %v531
      %v948 = vunpack.c.l.b16 %v532
      %v949 = vunpack.c.l.b16 %v533
      %v950 = vunpack.c.l.b16 %v534
      %v951 = vunpack.c.l.b16 %v535
      %v952 = vunpack.c.l.b16 %v536
      %v953 = vunpack.c.l.b16 %v537
      %v954 = vunpack.c.l.b16 %v538
      %v955 = vunpack.c.l.b16 %v539
      %v956 = vunpack.c.l.b16 %v540
      %v957 = vunpack.c.l.b16 %v541
      %v958 = vunpack.c.l.b16 %v542
      %v959 = vunpack.c.l.b16 %v543
      %v960 = vunpack.c.l.b16 %v544
      %v961 = vunpack.c.l.b16 %v545
      %v962 = vunpack.c.l.b16 %v546
      %v963 = vunpack.c.l.b16 %v547
      %v964 = vunpack.c.l.b16 %v548
      %v965 = vunpack.c.l.b16 %v549
      %v966 = vunpack.c.l.b16 %v550
      %v967 = vunpack.c.l.b16 %v551
      %v968 = vunpack.c.l.b16 %v552
      %v969 = vunpack.c.l.b16 %v553
      %v970 = vunpack.c.l.b16 %v554
      %v971 = vunpack.c.l.b16 %v555
      %v972 = vunpack.c.l.b16 %v556
      %v973 = vunpack.c.l.b16 %v557
      %v974 = vunpack.c.l.b16 %v558
      %v975 = vunpack.c.l.b16 %v559
      %v976 = vunpack.c.l.b16 %v560
      %v977 = vunpack.c.l.b16 %v561
      %v978 = vunpack.c.l.b16 %v562
      %v979 = vunpack.c.l.b16 %v563
      %v980 = vunpack.c.l.b16 %v564
      %v981 = vunpack.c.l.b16 %v565
      %v982 = vunpack.c.l.b16 %v566
      %v983 = vunpack.c.l.b16 %v567
      %v984 = vunpack.c.l.b16 %v568
      %v985 = vunpack.c.l.b16 %v569
      %v986 = vunpack.c.l.b16 %v570
      %v987 = vunpack.c.l.b16 %v571
      %v988 = vunpack.c.l.b16 %v572
      %v989 = vunpack.c.l.b16 %v573
      %v990 = vunpack.c.l.b16 %v574
      %v991 = vunpack.c.l.b16 %v575
      %v992 = vunpack.c.l.b16 %v576
      %v993 = vunpack.c.l.b16 %v577
      %v994 = vunpack.c.l.b16 %v578
      %v995 = vunpack.c.l.b16 %v579
      %v996 = vunpack.c.l.b16 %v580
      %v997 = vunpack.c.l.b16 %v581
      %v998 = vunpack.c.l.b16 %v582
      %v999 = vunpack.c.l.b16 %v583
      %v1000 = vunpack.c.l.b16 %v584
      %v1001 = vunpack.c.l.b16 %v585
      %v1002 = vunpack.c.l.b16 %v586
      %v1003 = vunpack.c.l.b16 %v587
      %v1004 = vunpack.c.l.b16 %v588
      %v1005 = vunpack.c.l.b16 %v589
      %v1006 = vunpack.c.l.b16 %v590
      %v1007 = vunpack.c.l.b16 %v591
      %v1008 = vunpack.c.l.b16 %v592
      %v1009 = vunpack.c.l.b16 %v593
      %v1010 = vunpack.c.l.b16 %v594
      %v1011 = vunpack.c.l.b16 %v595
      %v1012 = vunpack.c.l.b16 %v596
      %v1013 = vunpack.c.l.b16 %v597
      %v1014 = vunpack.c.l.b16 %v598
      %v1015 = vunpack.c.l.b16 %v599
      %v1016 = vunpack.c.l.b16 %v600
      %v1017 = vunpack.c.l.b16 %v601
      %v1018 = vunpack.c.l.b16 %v602
      %v1019 = vunpack.c.l.b16 %v603
      %v1020 = vunpack.c.l.b16 %v604
      %v1021 = vunpack.c.l.b16 %v605
      %v1022 = vunpack.c.l.b16 %v606
      %v1023 = vunpack.c.l.b16 %v607
      %v1024 = vunpack.c.l.b16 %v608
      %v1025 = vunpack.c.l.b16 %v609
      %v1026 = vunpack.c.l.b16 %v610
      %v1027 = vunpack.c.l.b16 %v611
      %v1028 = vunpack.c.l.b16 %v612
      %v1029 = vunpack.c.l.b16 %v613
      %v1030 = vunpack.c.l.b16 %v614
      %v1031 = vunpack.c.l.b16 %v615
      %v1032 = vunpack.c.l.b16 %v616
      %v1033 = vunpack.c.l.b16 %v617
      %v1034 = vunpack.c.l.b16 %v618
      %v1035 = vunpack.c.l.b16 %v619
      %v1036 = vunpack.c.l.b16 %v620
      %v1037 = vunpack.c.l.b16 %v621
      %v1038 = vunpack.c.l.b16 %v622
      %v1039 = vunpack.c.l.b16 %v623
      %v1040 = vunpack.c.l.b16 %v624
      %v1041 = vunpack.c.l.b16 %v625
      %v1042 = vpack.c.b16 %v915, %v914
      %v1043 = vpack.c.b16 %v917, %v916
      %v1044 = vpack.c.b16 %v919, %v918
      %v1045 = vpack.c.b16 %v921, %v920
      %v1046 = vpack.c.b16 %v923, %v922
      %v1047 = vpack.c.b16 %v925, %v924
      %v1048 = vpack.c.b16 %v927, %v926
      %v1049 = vpack.c.b16 %v929, %v928
      %v1050 = vpack.c.b16 %v931, %v930
      %v1051 = vpack.c.b16 %v933, %v932
      %v1052 = vpack.c.b16 %v935, %v934
      %v1053 = vpack.c.b16 %v937, %v936
      %v1054 = vpack.c.b16 %v939, %v938
      %v1055 = vpack.c.b16 %v941, %v940
      %v1056 = vpack.c.b16 %v943, %v942
      %v1057 = vpack.c.b16 %v945, %v944
      %v1058 = vpack.c.b16 %v947, %v946
      %v1059 = vpack.c.b16 %v949, %v948
      %v1060 = vpack.c.b16 %v951, %v950
      %v1061 = vpack.c.b16 %v953, %v952
      %v1062 = vpack.c.b16 %v955, %v954
      %v1063 = vpack.c.b16 %v957, %v956
      %v1064 = vpack.c.b16 %v959, %v958
      %v1065 = vpack.c.b16 %v961, %v960
      %v1066 = vpack.c.b16 %v963, %v962
      %v1067 = vpack.c.b16 %v965, %v964
      %v1068 = vpack.c.b16 %v967, %v966
      %v1069 = vpack.c.b16 %v969, %v968
      %v1070 = vpack.c.b16 %v971, %v970
      %v1071 = vpack.c.b16 %v973, %v972
      %v1072 = vpack.c.b16 %v975, %v974
      %v1073 = vpack.c.b16 %v977, %v976
      %v1074 = vpack.c.b16 %v979, %v978
      %v1075 = vpack.c.b16 %v981, %v980
      %v1076 = vpack.c.b16 %v983, %v982
      %v1077 = vpack.c.b16 %v985, %v984
      %v1078 = vpack.c.b16 %v987, %v986
      %v1079 = vpack.c.b16 %v989, %v988
      %v1080 = vpack.c.b16 %v991, %v990
      %v1081 = vpack.c.b16 %v993, %v992
      %v1082 = vpack.c.b16 %v995, %v994
      %v1083 = vpack.c.b16 %v997, %v996
      %v1084 = vpack.c.b16 %v999, %v998
      %v1085 = vpack.c.b16 %v1001, %v1000
      %v1086 = vpack.c.b16 %v1003, %v1002
      %v1087 = vpack.c.b16 %v1005, %v1004
      %v1088 = vpack.c.b16 %v1007, %v1006
      %v1089 = vpack.c.b16 %v1009, %v1008
      %v1090 = vpack.c.b16 %v1011, %v1010
      %v1091 = vpack.c.b16 %v1013, %v1012
      %v1092 = vpack.c.b16 %v1015, %v1014
      %v1093 = vpack.c.b16 %v1017, %v1016
      %v1094 = vpack.c.b16 %v1019, %v1018
      %v1095 = vpack.c.b16 %v1021, %v1020
      %v1096 = vpack.c.b16 %v1023, %v1022
      %v1097 = vpack.c.b16 %v1025, %v1024
      %v1098 = vpack.c.b16 %v1027, %v1026
      %v1099 = vpack.c.b16 %v1029, %v1028
      %v1100 = vpack.c.b16 %v1031, %v1030
      %v1101 = vpack.c.b16 %v1033, %v1032
      %v1102 = vpack.c.b16 %v1035, %v1034
      %v1103 = vpack.c.b16 %v1037, %v1036
      %v1104 = vpack.c.b16 %v1039, %v1038
      %v1105 = vpack.c.b16 %v1041, %v1040
      %1170 = vmatprep.subr.bf16.mxu0 0
      %1171 = vmatpush1.bf16.msra.mxu0 %v1042
      %1172 = vmatprep.subr.bf16.mxu0 0
      %1173 = vmatpush1.bf16.msra.mxu0 %v1043
      %1174 = vmatprep.subr.bf16.mxu0 0
      %1175 = vmatpush1.bf16.msra.mxu0 %v1044
      %1176 = vmatprep.subr.bf16.mxu0 0
      %1177 = vmatpush1.bf16.msra.mxu0 %v1045
      %1178 = vmatprep.subr.bf16.mxu0 0
      %1179 = vmatpush1.bf16.msra.mxu0 %v1046
      %1180 = vmatprep.subr.bf16.mxu0 0
      %1181 = vmatpush1.bf16.msra.mxu0 %v1047
      %1182 = vmatprep.subr.bf16.mxu0 0
      %1183 = vmatpush1.bf16.msra.mxu0 %v1048
      %1184 = vmatprep.subr.bf16.mxu0 0
      %1185 = vmatpush1.bf16.msra.mxu0 %v1049
      %1186 = vmatprep.subr.bf16.mxu0 0
      %1187 = vmatpush1.bf16.msra.mxu0 %v1050
      %1188 = vmatprep.subr.bf16.mxu0 0
      %1189 = vmatpush1.bf16.msra.mxu0 %v1051
      %1190 = vmatprep.subr.bf16.mxu0 0
      %1191 = vmatpush1.bf16.msra.mxu0 %v1052
      %1192 = vmatprep.subr.bf16.mxu0 0
      %1193 = vmatpush1.bf16.msra.mxu0 %v1053
      %1194 = vmatprep.subr.bf16.mxu0 0
      %1195 = vmatpush1.bf16.msra.mxu0 %v1054
      %1196 = vmatprep.subr.bf16.mxu0 0
      %1197 = vmatpush1.bf16.msra.mxu0 %v1055
      %1198 = vmatprep.subr.bf16.mxu0 0
      %1199 = vmatpush1.bf16.msra.mxu0 %v1056
      %1200 = vmatprep.subr.bf16.mxu0 0
      %1201 = vmatpush1.bf16.msra.mxu0 %v1057
      %1202 = vmatprep.mubr.bf16.mxu0 %v723
      %1203 = vmatmul.mubr.bf16.gmra.mrb[0].mxu0 %v722
      %v1204 = vpop.f32.mrb[0].mxu0
      %v1205 = vadd.f32 0.0, %v1204
      %v1206 = vpop.f32.mrb[0].mxu0
      %v1207 = vpop.f32.mrb[0].mxu0
      %v1208 = vadd.f32 0.0, %v1207
      %v1209 = vpop.f32.mrb[0].mxu0
      %1210 = vmatprep.mubr.bf16.mxu0 %v731
      %1211 = vmatmul.mubr.bf16.gmra.mrb[0].mxu0 %v730
      %v1212 = vpop.f32.mrb[0].mxu0
      %v1213 = vadd.f32 0.0, %v1212
      %v1214 = vpop.f32.mrb[0].mxu0
      %v1215 = vpop.f32.mrb[0].mxu0
      %v1216 = vadd.f32 0.0, %v1215
      %v1217 = vpop.f32.mrb[0].mxu0
      %1218 = vmatprep.mubr.bf16.mxu0 %v739
      %1219 = vmatmul.mubr.bf16.gmra.mrb[0].mxu0 %v738
      %v1220 = vpop.f32.mrb[0].mxu0
      %v1221 = vadd.f32 0.0, %v1220
      %v1222 = vpop.f32.mrb[0].mxu0
      %v1223 = vpop.f32.mrb[0].mxu0
      %v1224 = vadd.f32 0.0, %v1223
      %v1225 = vpop.f32.mrb[0].mxu0
      %1226 = vmatprep.mubr.bf16.mxu0 %v747
      %1227 = vmatmul.mubr.bf16.gmra.mrb[0].mxu0 %v746
      %v1228 = vpop.f32.mrb[0].mxu0
      %v1229 = vadd.f32 0.0, %v1228
      %v1230 = vpop.f32.mrb[0].mxu0
      %v1231 = vpop.f32.mrb[0].mxu0
      %v1232 = vadd.f32 0.0, %v1231
      %v1233 = vpop.f32.mrb[0].mxu0
      %1234 = vdwg.mxu0
      %1235 = vmatprep.subr.bf16.mxu0 0
      %1236 = vmatpush1.bf16.msra.mxu0 %v1058
      %1237 = vmatprep.subr.bf16.mxu0 0
      %1238 = vmatpush1.bf16.msra.mxu0 %v1059
      %1239 = vmatprep.subr.bf16.mxu0 0
      %1240 = vmatpush1.bf16.msra.mxu0 %v1060
      %1241 = vmatprep.subr.bf16.mxu0 0
      %1242 = vmatpush1.bf16.msra.mxu0 %v1061
      %1243 = vmatprep.subr.bf16.mxu0 0
      %1244 = vmatpush1.bf16.msra.mxu0 %v1062
      %1245 = vmatprep.subr.bf16.mxu0 0
      %1246 = vmatpush1.bf16.msra.mxu0 %v1063
      %1247 = vmatprep.subr.bf16.mxu0 0
      %1248 = vmatpush1.bf16.msra.mxu0 %v1064
      %1249 = vmatprep.subr.bf16.mxu0 0
      %1250 = vmatpush1.bf16.msra.mxu0 %v1065
      %1251 = vmatprep.subr.bf16.mxu0 0
      %1252 = vmatpush1.bf16.msra.mxu0 %v1066
      %1253 = vmatprep.subr.bf16.mxu0 0
      %1254 = vmatpush1.bf16.msra.mxu0 %v1067
      %1255 = vmatprep.subr.bf16.mxu0 0
      %1256 = vmatpush1.bf16.msra.mxu0 %v1068
      %1257 = vmatprep.subr.bf16.mxu0 0
      %1258 = vmatpush1.bf16.msra.mxu0 %v1069
      %1259 = vmatprep.subr.bf16.mxu0 0
      %1260 = vmatpush1.bf16.msra.mxu0 %v1070
      %1261 = vmatprep.subr.bf16.mxu0 0
      %1262 = vmatpush1.bf16.msra.mxu0 %v1071
      %1263 = vmatprep.subr.bf16.mxu0 0
      %1264 = vmatpush1.bf16.msra.mxu0 %v1072
      %1265 = vmatprep.subr.bf16.mxu0 0
      %1266 = vmatpush1.bf16.msra.mxu0 %v1073
      %1267 = vmatprep.mubr.bf16.mxu0 %v725
      %1268 = vmatmul.mubr.bf16.gmra.mrb[0].mxu0 %v724
      %v1269 = vpop.f32.mrb[0].mxu0
      %v1270 = vadd.f32 %v1205, %v1269
      %v1271 = vpop.f32.mrb[0].mxu0
      %v1272 = vpop.f32.mrb[0].mxu0
      %v1273 = vadd.f32 %v1208, %v1272
      %v1274 = vpop.f32.mrb[0].mxu0
      %1275 = vmatprep.mubr.bf16.mxu0 %v733
      %1276 = vmatmul.mubr.bf16.gmra.mrb[0].mxu0 %v732
      %v1277 = vpop.f32.mrb[0].mxu0
      %v1278 = vadd.f32 %v1213, %v1277
      %v1279 = vpop.f32.mrb[0].mxu0
      %v1280 = vpop.f32.mrb[0].mxu0
      %v1281 = vadd.f32 %v1216, %v1280
      %v1282 = vpop.f32.mrb[0].mxu0
      %1283 = vmatprep.mubr.bf16.mxu0 %v741
      %1284 = vmatmul.mubr.bf16.gmra.mrb[0].mxu0 %v740
      %v1285 = vpop.f32.mrb[0].mxu0
      %v1286 = vadd.f32 %v1221, %v1285
      %v1287 = vpop.f32.mrb[0].mxu0
      %v1288 = vpop.f32.mrb[0].mxu0
      %v1289 = vadd.f32 %v1224, %v1288
      %v1290 = vpop.f32.mrb[0].mxu0
      %1291 = vmatprep.mubr.bf16.mxu0 %v749
      %1292 = vmatmul.mubr.bf16.gmra.mrb[0].mxu0 %v748
      %v1293 = vpop.f32.mrb[0].mxu0
      %v1294 = vadd.f32 %v1229, %v1293
      %v1295 = vpop.f32.mrb[0].mxu0
      %v1296 = vpop.f32.mrb[0].mxu0
      %v1297 = vadd.f32 %v1232, %v1296
      %v1298 = vpop.f32.mrb[0].mxu0
      %1299 = vdwg.mxu0
      %1300 = vmatprep.subr.bf16.mxu0 0
      %1301 = vmatpush1.bf16.msra.mxu0 %v1074
      %1302 = vmatprep.subr.bf16.mxu0 0
      %1303 = vmatpush1.bf16.msra.mxu0 %v1075
      %1304 = vmatprep.subr.bf16.mxu0 0
      %1305 = vmatpush1.bf16.msra.mxu0 %v1076
      %1306 = vmatprep.subr.bf16.mxu0 0
      %1307 = vmatpush1.bf16.msra.mxu0 %v1077
      %1308 = vmatprep.subr.bf16.mxu0 0
      %1309 = vmatpush1.bf16.msra.mxu0 %v1078
      %1310 = vmatprep.subr.bf16.mxu0 0
      %1311 = vmatpush1.bf16.msra.mxu0 %v1079
      %1312 = vmatprep.subr.bf16.mxu0 0
      %1313 = vmatpush1.bf16.msra.mxu0 %v1080
      %1314 = vmatprep.subr.bf16.mxu0 0
      %1315 = vmatpush1.bf16.msra.mxu0 %v1081
      %1316 = vmatprep.subr.bf16.mxu0 0
      %1317 = vmatpush1.bf16.msra.mxu0 %v1082
      %1318 = vmatprep.subr.bf16.mxu0 0
      %1319 = vmatpush1.bf16.msra.mxu0 %v1083
      %1320 = vmatprep.subr.bf16.mxu0 0
      %1321 = vmatpush1.bf16.msra.mxu0 %v1084
      %1322 = vmatprep.subr.bf16.mxu0 0
      %1323 = vmatpush1.bf16.msra.mxu0 %v1085
      %1324 = vmatprep.subr.bf16.mxu0 0
      %1325 = vmatpush1.bf16.msra.mxu0 %v1086
      %1326 = vmatprep.subr.bf16.mxu0 0
      %1327 = vmatpush1.bf16.msra.mxu0 %v1087
      %1328 = vmatprep.subr.bf16.mxu0 0
      %1329 = vmatpush1.bf16.msra.mxu0 %v1088
      %1330 = vmatprep.subr.bf16.mxu0 0
      %1331 = vmatpush1.bf16.msra.mxu0 %v1089
      %1332 = vmatprep.mubr.bf16.mxu0 %v727
      %1333 = vmatmul.mubr.bf16.gmra.mrb[0].mxu0 %v726
      %v1334 = vpop.f32.mrb[0].mxu0
      %v1335 = vadd.f32 %v1270, %v1334
      %v1336 = vpop.f32.mrb[0].mxu0
      %v1337 = vpop.f32.mrb[0].mxu0
      %v1338 = vadd.f32 %v1273, %v1337
      %v1339 = vpop.f32.mrb[0].mxu0
      %1340 = vmatprep.mubr.bf16.mxu0 %v735
      %1341 = vmatmul.mubr.bf16.gmra.mrb[0].mxu0 %v734
      %v1342 = vpop.f32.mrb[0].mxu0
      %v1343 = vadd.f32 %v1278, %v1342
      %v1344 = vpop.f32.mrb[0].mxu0
      %v1345 = vpop.f32.mrb[0].mxu0
      %v1346 = vadd.f32 %v1281, %v1345
      %v1347 = vpop.f32.mrb[0].mxu0
      %1348 = vmatprep.mubr.bf16.mxu0 %v743
      %1349 = vmatmul.mubr.bf16.gmra.mrb[0].mxu0 %v742
      %v1350 = vpop.f32.mrb[0].mxu0
      %v1351 = vadd.f32 %v1286, %v1350
      %v1352 = vpop.f32.mrb[0].mxu0
      %v1353 = vpop.f32.mrb[0].mxu0
      %v1354 = vadd.f32 %v1289, %v1353
      %v1355 = vpop.f32.mrb[0].mxu0
      %1356 = vmatprep.mubr.bf16.mxu0 %v751
      %1357 = vmatmul.mubr.bf16.gmra.mrb[0].mxu0 %v750
      %v1358 = vpop.f32.mrb[0].mxu0
      %v1359 = vadd.f32 %v1294, %v1358
      %v1360 = vpop.f32.mrb[0].mxu0
      %v1361 = vpop.f32.mrb[0].mxu0
      %v1362 = vadd.f32 %v1297, %v1361
      %v1363 = vpop.f32.mrb[0].mxu0
      %1364 = vdwg.mxu0
      %1365 = vmatprep.subr.bf16.mxu0 0
      %1366 = vmatpush1.bf16.msra.mxu0 %v1090
      %1367 = vmatprep.subr.bf16.mxu0 0
      %1368 = vmatpush1.bf16.msra.mxu0 %v1091
      %1369 = vmatprep.subr.bf16.mxu0 0
      %1370 = vmatpush1.bf16.msra.mxu0 %v1092
      %1371 = vmatprep.subr.bf16.mxu0 0
      %1372 = vmatpush1.bf16.msra.mxu0 %v1093
      %1373 = vmatprep.subr.bf16.mxu0 0
      %1374 = vmatpush1.bf16.msra.mxu0 %v1094
      %1375 = vmatprep.subr.bf16.mxu0 0
      %1376 = vmatpush1.bf16.msra.mxu0 %v1095
      %1377 = vmatprep.subr.bf16.mxu0 0
      %1378 = vmatpush1.bf16.msra.mxu0 %v1096
      %1379 = vmatprep.subr.bf16.mxu0 0
      %1380 = vmatpush1.bf16.msra.mxu0 %v1097
      %1381 = vmatprep.subr.bf16.mxu0 0
      %1382 = vmatpush1.bf16.msra.mxu0 %v1098
      %1383 = vmatprep.subr.bf16.mxu0 0
      %1384 = vmatpush1.bf16.msra.mxu0 %v1099
      %1385 = vmatprep.subr.bf16.mxu0 0
      %1386 = vmatpush1.bf16.msra.mxu0 %v1100
      %1387 = vmatprep.subr.bf16.mxu0 0
      %1388 = vmatpush1.bf16.msra.mxu0 %v1101
      %1389 = vmatprep.subr.bf16.mxu0 0
      %1390 = vmatpush1.bf16.msra.mxu0 %v1102
      %1391 = vmatprep.subr.bf16.mxu0 0
      %1392 = vmatpush1.bf16.msra.mxu0 %v1103
      %1393 = vmatprep.subr.bf16.mxu0 0
      %1394 = vmatpush1.bf16.msra.mxu0 %v1104
      %1395 = vmatprep.subr.bf16.mxu0 0
      %1396 = vmatpush1.bf16.msra.mxu0 %v1105
      %1397 = vmatprep.mubr.bf16.mxu0 %v729
      %1398 = vmatmul.mubr.bf16.gmra.mrb[0].mxu0 %v728
      %v1399 = vpop.f32.mrb[0].mxu0
      %v1400 = vadd.f32 %v1335, %v1399
      %v1401 = vpop.f32.mrb[0].mxu0
      %v1402 = vpop.f32.mrb[0].mxu0
      %v1403 = vadd.f32 %v1338, %v1402
      %v1404 = vpop.f32.mrb[0].mxu0
      %1405 = vmatprep.mubr.bf16.mxu0 %v737
      %1406 = vmatmul.mubr.bf16.gmra.mrb[0].mxu0 %v736
      %v1407 = vpop.f32.mrb[0].mxu0
      %v1408 = vadd.f32 %v1343, %v1407
      %v1409 = vpop.f32.mrb[0].mxu0
      %v1410 = vpop.f32.mrb[0].mxu0
      %v1411 = vadd.f32 %v1346, %v1410
      %v1412 = vpop.f32.mrb[0].mxu0
      %1413 = vmatprep.mubr.bf16.mxu0 %v745
      %1414 = vmatmul.mubr.bf16.gmra.mrb[0].mxu0 %v744
      %v1415 = vpop.f32.mrb[0].mxu0
      %v1416 = vadd.f32 %v1351, %v1415
      %v1417 = vpop.f32.mrb[0].mxu0
      %v1418 = vpop.f32.mrb[0].mxu0
      %v1419 = vadd.f32 %v1354, %v1418
      %v1420 = vpop.f32.mrb[0].mxu0
      %1421 = vmatprep.mubr.bf16.mxu0 %v753
      %1422 = vmatmul.mubr.bf16.gmra.mrb[0].mxu0 %v752
      %v1423 = vpop.f32.mrb[0].mxu0
      %v1424 = vadd.f32 %v1359, %v1423
      %v1425 = vpop.f32.mrb[0].mxu0
      %v1426 = vpop.f32.mrb[0].mxu0
      %v1427 = vadd.f32 %v1362, %v1426
      %v1428 = vpop.f32.mrb[0].mxu0
      %1429 = vdwg.mxu0
      %v1462 = vunpack.c.l.b16 %v305
      %v1463 = vunpack.c.h.b16 %v305
      %v1464 = vunpack.c.l.b16 %v306
      %v1465 = vunpack.c.h.b16 %v306
      %v1466 = vunpack.c.l.b16 %v307
      %v1467 = vunpack.c.h.b16 %v307
      %v1468 = vunpack.c.l.b16 %v308
      %v1469 = vunpack.c.h.b16 %v308
      %v1470 = vunpack.c.l.b16 %v309
      %v1471 = vunpack.c.h.b16 %v309
      %v1472 = vunpack.c.l.b16 %v310
      %v1473 = vunpack.c.h.b16 %v310
      %v1474 = vunpack.c.l.b16 %v311
      %v1475 = vunpack.c.h.b16 %v311
      %v1476 = vunpack.c.l.b16 %v312
      %v1477 = vunpack.c.h.b16 %v312
      %v1478 = vunpack.c.l.b16 %v313
      %v1479 = vunpack.c.h.b16 %v313
      %v1480 = vunpack.c.l.b16 %v314
      %v1481 = vunpack.c.h.b16 %v314
      %v1482 = vunpack.c.l.b16 %v315
      %v1483 = vunpack.c.h.b16 %v315
      %v1484 = vunpack.c.l.b16 %v316
      %v1485 = vunpack.c.h.b16 %v316
      %v1486 = vunpack.c.l.b16 %v317
      %v1487 = vunpack.c.h.b16 %v317
      %v1488 = vunpack.c.l.b16 %v318
      %v1489 = vunpack.c.h.b16 %v318
      %v1490 = vunpack.c.l.b16 %v319
      %v1491 = vunpack.c.h.b16 %v319
      %v1492 = vunpack.c.l.b16 %v320
      %v1493 = vunpack.c.h.b16 %v320
      %v1494 = vunpack.c.l.b16 %v321
      %v1495 = vunpack.c.h.b16 %v321
      %v1496 = vunpack.c.l.b16 %v322
      %v1497 = vunpack.c.h.b16 %v322
      %v1498 = vunpack.c.l.b16 %v323
      %v1499 = vunpack.c.h.b16 %v323
      %v1500 = vunpack.c.l.b16 %v324
      %v1501 = vunpack.c.h.b16 %v324
      %v1502 = vunpack.c.l.b16 %v325
      %v1503 = vunpack.c.h.b16 %v325
      %v1504 = vunpack.c.l.b16 %v326
      %v1505 = vunpack.c.h.b16 %v326
      %v1506 = vunpack.c.l.b16 %v327
      %v1507 = vunpack.c.h.b16 %v327
      %v1508 = vunpack.c.l.b16 %v328
      %v1509 = vunpack.c.h.b16 %v328
      %v1510 = vunpack.c.l.b16 %v329
      %v1511 = vunpack.c.h.b16 %v329
      %v1512 = vunpack.c.l.b16 %v330
      %v1513 = vunpack.c.h.b16 %v330
      %v1514 = vunpack.c.l.b16 %v331
      %v1515 = vunpack.c.h.b16 %v331
      %v1516 = vunpack.c.l.b16 %v332
      %v1517 = vunpack.c.h.b16 %v332
      %v1518 = vunpack.c.l.b16 %v333
      %v1519 = vunpack.c.h.b16 %v333
      %v1520 = vunpack.c.l.b16 %v334
      %v1521 = vunpack.c.h.b16 %v334
      %v1522 = vunpack.c.l.b16 %v335
      %v1523 = vunpack.c.h.b16 %v335
      %v1524 = vunpack.c.l.b16 %v336
      %v1525 = vunpack.c.h.b16 %v336
      %v1526 = vpack.c.b16 %v1470, %v1462
      %v1527 = vpack.c.b16 %v1471, %v1463
      %v1528 = vpack.c.b16 %v1472, %v1464
      %v1529 = vpack.c.b16 %v1473, %v1465
      %v1530 = vpack.c.b16 %v1474, %v1466
      %v1531 = vpack.c.b16 %v1475, %v1467
      %v1532 = vpack.c.b16 %v1476, %v1468
      %v1533 = vpack.c.b16 %v1477, %v1469
      %v1534 = vpack.c.b16 %v1486, %v1478
      %v1535 = vpack.c.b16 %v1487, %v1479
      %v1536 = vpack.c.b16 %v1488, %v1480
      %v1537 = vpack.c.b16 %v1489, %v1481
      %v1538 = vpack.c.b16 %v1490, %v1482
      %v1539 = vpack.c.b16 %v1491, %v1483
      %v1540 = vpack.c.b16 %v1492, %v1484
      %v1541 = vpack.c.b16 %v1493, %v1485
      %v1542 = vpack.c.b16 %v1502, %v1494
      %v1543 = vpack.c.b16 %v1503, %v1495
      %v1544 = vpack.c.b16 %v1504, %v1496
      %v1545 = vpack.c.b16 %v1505, %v1497
      %v1546 = vpack.c.b16 %v1506, %v1498
      %v1547 = vpack.c.b16 %v1507, %v1499
      %v1548 = vpack.c.b16 %v1508, %v1500
      %v1549 = vpack.c.b16 %v1509, %v1501
      %v1550 = vpack.c.b16 %v1518, %v1510
      %v1551 = vpack.c.b16 %v1519, %v1511
      %v1552 = vpack.c.b16 %v1520, %v1512
      %v1553 = vpack.c.b16 %v1521, %v1513
      %v1554 = vpack.c.b16 %v1522, %v1514
      %v1555 = vpack.c.b16 %v1523, %v1515
      %v1556 = vpack.c.b16 %v1524, %v1516
      %v1557 = vpack.c.b16 %v1525, %v1517
      %v1718 = vunpack.c.l.b16 %v337
      %v1719 = vunpack.c.l.b16 %v338
      %v1720 = vunpack.c.l.b16 %v339
      %v1721 = vunpack.c.l.b16 %v340
      %v1722 = vunpack.c.l.b16 %v341
      %v1723 = vunpack.c.l.b16 %v342
      %v1724 = vunpack.c.l.b16 %v343
      %v1725 = vunpack.c.l.b16 %v344
      %v1726 = vunpack.c.l.b16 %v345
      %v1727 = vunpack.c.l.b16 %v346
      %v1728 = vunpack.c.l.b16 %v347
      %v1729 = vunpack.c.l.b16 %v348
      %v1730 = vunpack.c.l.b16 %v349
      %v1731 = vunpack.c.l.b16 %v350
      %v1732 = vunpack.c.l.b16 %v351
      %v1733 = vunpack.c.l.b16 %v352
      %v1734 = vunpack.c.l.b16 %v353
      %v1735 = vunpack.c.l.b16 %v354
      %v1736 = vunpack.c.l.b16 %v355
      %v1737 = vunpack.c.l.b16 %v356
      %v1738 = vunpack.c.l.b16 %v357
      %v1739 = vunpack.c.l.b16 %v358
      %v1740 = vunpack.c.l.b16 %v359
      %v1741 = vunpack.c.l.b16 %v360
      %v1742 = vunpack.c.l.b16 %v361
      %v1743 = vunpack.c.l.b16 %v362
      %v1744 = vunpack.c.l.b16 %v363
      %v1745 = vunpack.c.l.b16 %v364
      %v1746 = vunpack.c.l.b16 %v365
      %v1747 = vunpack.c.l.b16 %v366
      %v1748 = vunpack.c.l.b16 %v367
      %v1749 = vunpack.c.l.b16 %v368
      %v1750 = vunpack.c.l.b16 %v369
      %v1751 = vunpack.c.l.b16 %v370
      %v1752 = vunpack.c.l.b16 %v371
      %v1753 = vunpack.c.l.b16 %v372
      %v1754 = vunpack.c.l.b16 %v373
      %v1755 = vunpack.c.l.b16 %v374
      %v1756 = vunpack.c.l.b16 %v375
      %v1757 = vunpack.c.l.b16 %v376
      %v1758 = vunpack.c.l.b16 %v377
      %v1759 = vunpack.c.l.b16 %v378
      %v1760 = vunpack.c.l.b16 %v379
      %v1761 = vunpack.c.l.b16 %v380
      %v1762 = vunpack.c.l.b16 %v381
      %v1763 = vunpack.c.l.b16 %v382
      %v1764 = vunpack.c.l.b16 %v383
      %v1765 = vunpack.c.l.b16 %v384
      %v1766 = vunpack.c.l.b16 %v385
      %v1767 = vunpack.c.l.b16 %v386
      %v1768 = vunpack.c.l.b16 %v387
      %v1769 = vunpack.c.l.b16 %v388
      %v1770 = vunpack.c.l.b16 %v389
      %v1771 = vunpack.c.l.b16 %v390
      %v1772 = vunpack.c.l.b16 %v391
      %v1773 = vunpack.c.l.b16 %v392
      %v1774 = vunpack.c.l.b16 %v393
      %v1775 = vunpack.c.l.b16 %v394
      %v1776 = vunpack.c.l.b16 %v395
      %v1777 = vunpack.c.l.b16 %v396
      %v1778 = vunpack.c.l.b16 %v397
      %v1779 = vunpack.c.l.b16 %v398
      %v1780 = vunpack.c.l.b16 %v399
      %v1781 = vunpack.c.l.b16 %v400
      %v1782 = vunpack.c.l.b16 %v401
      %v1783 = vunpack.c.l.b16 %v402
      %v1784 = vunpack.c.l.b16 %v403
      %v1785 = vunpack.c.l.b16 %v404
      %v1786 = vunpack.c.l.b16 %v405
      %v1787 = vunpack.c.l.b16 %v406
      %v1788 = vunpack.c.l.b16 %v407
      %v1789 = vunpack.c.l.b16 %v408
      %v1790 = vunpack.c.l.b16 %v409
      %v1791 = vunpack.c.l.b16 %v410
      %v1792 = vunpack.c.l.b16 %v411
      %v1793 = vunpack.c.l.b16 %v412
      %v1794 = vunpack.c.l.b16 %v413
      %v1795 = vunpack.c.l.b16 %v414
      %v1796 = vunpack.c.l.b16 %v415
      %v1797 = vunpack.c.l.b16 %v416
      %v1798 = vunpack.c.l.b16 %v417
      %v1799 = vunpack.c.l.b16 %v418
      %v1800 = vunpack.c.l.b16 %v419
      %v1801 = vunpack.c.l.b16 %v420
      %v1802 = vunpack.c.l.b16 %v421
      %v1803 = vunpack.c.l.b16 %v422
      %v1804 = vunpack.c.l.b16 %v423
      %v1805 = vunpack.c.l.b16 %v424
      %v1806 = vunpack.c.l.b16 %v425
      %v1807 = vunpack.c.l.b16 %v426
      %v1808 = vunpack.c.l.b16 %v427
      %v1809 = vunpack.c.l.b16 %v428
      %v1810 = vunpack.c.l.b16 %v429
      %v1811 = vunpack.c.l.b16 %v430
      %v1812 = vunpack.c.l.b16 %v431
      %v1813 = vunpack.c.l.b16 %v432
      %v1814 = vunpack.c.l.b16 %v433
      %v1815 = vunpack.c.l.b16 %v434
      %v1816 = vunpack.c.l.b16 %v435
      %v1817 = vunpack.c.l.b16 %v436
      %v1818 = vunpack.c.l.b16 %v437
      %v1819 = vunpack.c.l.b16 %v438
      %v1820 = vunpack.c.l.b16 %v439
      %v1821 = vunpack.c.l.b16 %v440
      %v1822 = vunpack.c.l.b16 %v441
      %v1823 = vunpack.c.l.b16 %v442
      %v1824 = vunpack.c.l.b16 %v443
      %v1825 = vunpack.c.l.b16 %v444
      %v1826 = vunpack.c.l.b16 %v445
      %v1827 = vunpack.c.l.b16 %v446
      %v1828 = vunpack.c.l.b16 %v447
      %v1829 = vunpack.c.l.b16 %v448
      %v1830 = vunpack.c.l.b16 %v449
      %v1831 = vunpack.c.l.b16 %v450
      %v1832 = vunpack.c.l.b16 %v451
      %v1833 = vunpack.c.l.b16 %v452
      %v1834 = vunpack.c.l.b16 %v453
      %v1835 = vunpack.c.l.b16 %v454
      %v1836 = vunpack.c.l.b16 %v455
      %v1837 = vunpack.c.l.b16 %v456
      %v1838 = vunpack.c.l.b16 %v457
      %v1839 = vunpack.c.l.b16 %v458
      %v1840 = vunpack.c.l.b16 %v459
      %v1841 = vunpack.c.l.b16 %v460
      %v1842 = vunpack.c.l.b16 %v461
      %v1843 = vunpack.c.l.b16 %v462
      %v1844 = vunpack.c.l.b16 %v463
      %v1845 = vunpack.c.l.b16 %v464
      %v1846 = vpack.c.b16 %v1719, %v1718
      %v1847 = vpack.c.b16 %v1721, %v1720
      %v1848 = vpack.c.b16 %v1723, %v1722
      %v1849 = vpack.c.b16 %v1725, %v1724
      %v1850 = vpack.c.b16 %v1727, %v1726
      %v1851 = vpack.c.b16 %v1729, %v1728
      %v1852 = vpack.c.b16 %v1731, %v1730
      %v1853 = vpack.c.b16 %v1733, %v1732
      %v1854 = vpack.c.b16 %v1735, %v1734
      %v1855 = vpack.c.b16 %v1737, %v1736
      %v1856 = vpack.c.b16 %v1739, %v1738
      %v1857 = vpack.c.b16 %v1741, %v1740
      %v1858 = vpack.c.b16 %v1743, %v1742
      %v1859 = vpack.c.b16 %v1745, %v1744
      %v1860 = vpack.c.b16 %v1747, %v1746
      %v1861 = vpack.c.b16 %v1749, %v1748
      %v1862 = vpack.c.b16 %v1751, %v1750
      %v1863 = vpack.c.b16 %v1753, %v1752
      %v1864 = vpack.c.b16 %v1755, %v1754
      %v1865 = vpack.c.b16 %v1757, %v1756
      %v1866 = vpack.c.b16 %v1759, %v1758
      %v1867 = vpack.c.b16 %v1761, %v1760
      %v1868 = vpack.c.b16 %v1763, %v1762
      %v1869 = vpack.c.b16 %v1765, %v1764
      %v1870 = vpack.c.b16 %v1767, %v1766
      %v1871 = vpack.c.b16 %v1769, %v1768
      %v1872 = vpack.c.b16 %v1771, %v1770
      %v1873 = vpack.c.b16 %v1773, %v1772
      %v1874 = vpack.c.b16 %v1775, %v1774
      %v1875 = vpack.c.b16 %v1777, %v1776
      %v1876 = vpack.c.b16 %v1779, %v1778
      %v1877 = vpack.c.b16 %v1781, %v1780
      %v1878 = vpack.c.b16 %v1783, %v1782
      %v1879 = vpack.c.b16 %v1785, %v1784
      %v1880 = vpack.c.b16 %v1787, %v1786
      %v1881 = vpack.c.b16 %v1789, %v1788
      %v1882 = vpack.c.b16 %v1791, %v1790
      %v1883 = vpack.c.b16 %v1793, %v1792
      %v1884 = vpack.c.b16 %v1795, %v1794
      %v1885 = vpack.c.b16 %v1797, %v1796
      %v1886 = vpack.c.b16 %v1799, %v1798
      %v1887 = vpack.c.b16 %v1801, %v1800
      %v1888 = vpack.c.b16 %v1803, %v1802
      %v1889 = vpack.c.b16 %v1805, %v1804
      %v1890 = vpack.c.b16 %v1807, %v1806
      %v1891 = vpack.c.b16 %v1809, %v1808
      %v1892 = vpack.c.b16 %v1811, %v1810
      %v1893 = vpack.c.b16 %v1813, %v1812
      %v1894 = vpack.c.b16 %v1815, %v1814
      %v1895 = vpack.c.b16 %v1817, %v1816
      %v1896 = vpack.c.b16 %v1819, %v1818
      %v1897 = vpack.c.b16 %v1821, %v1820
      %v1898 = vpack.c.b16 %v1823, %v1822
      %v1899 = vpack.c.b16 %v1825, %v1824
      %v1900 = vpack.c.b16 %v1827, %v1826
      %v1901 = vpack.c.b16 %v1829, %v1828
      %v1902 = vpack.c.b16 %v1831, %v1830
      %v1903 = vpack.c.b16 %v1833, %v1832
      %v1904 = vpack.c.b16 %v1835, %v1834
      %v1905 = vpack.c.b16 %v1837, %v1836
      %v1906 = vpack.c.b16 %v1839, %v1838
      %v1907 = vpack.c.b16 %v1841, %v1840
      %v1908 = vpack.c.b16 %v1843, %v1842
      %v1909 = vpack.c.b16 %v1845, %v1844
      %1974 = vmatprep.subr.bf16.mxu0 0
      %1975 = vmatpush1.bf16.msra.mxu0 %v1846
      %1976 = vmatprep.subr.bf16.mxu0 0
      %1977 = vmatpush1.bf16.msra.mxu0 %v1847
      %1978 = vmatprep.subr.bf16.mxu0 0
      %1979 = vmatpush1.bf16.msra.mxu0 %v1848
      %1980 = vmatprep.subr.bf16.mxu0 0
      %1981 = vmatpush1.bf16.msra.mxu0 %v1849
      %1982 = vmatprep.subr.bf16.mxu0 0
      %1983 = vmatpush1.bf16.msra.mxu0 %v1850
      %1984 = vmatprep.subr.bf16.mxu0 0
      %1985 = vmatpush1.bf16.msra.mxu0 %v1851
      %1986 = vmatprep.subr.bf16.mxu0 0
      %1987 = vmatpush1.bf16.msra.mxu0 %v1852
      %1988 = vmatprep.subr.bf16.mxu0 0
      %1989 = vmatpush1.bf16.msra.mxu0 %v1853
      %1990 = vmatprep.subr.bf16.mxu0 0
      %1991 = vmatpush1.bf16.msra.mxu0 %v1854
      %1992 = vmatprep.subr.bf16.mxu0 0
      %1993 = vmatpush1.bf16.msra.mxu0 %v1855
      %1994 = vmatprep.subr.bf16.mxu0 0
      %1995 = vmatpush1.bf16.msra.mxu0 %v1856
      %1996 = vmatprep.subr.bf16.mxu0 0
      %1997 = vmatpush1.bf16.msra.mxu0 %v1857
      %1998 = vmatprep.subr.bf16.mxu0 0
      %1999 = vmatpush1.bf16.msra.mxu0 %v1858
      %2000 = vmatprep.subr.bf16.mxu0 0
      %2001 = vmatpush1.bf16.msra.mxu0 %v1859
      %2002 = vmatprep.subr.bf16.mxu0 0
      %2003 = vmatpush1.bf16.msra.mxu0 %v1860
      %2004 = vmatprep.subr.bf16.mxu0 0
      %2005 = vmatpush1.bf16.msra.mxu0 %v1861
      %2006 = vmatprep.mubr.bf16.mxu0 %v1527
      %2007 = vmatmul.mubr.bf16.gmra.mrb[0].mxu0 %v1526
      %v2008 = vpop.f32.mrb[0].mxu0
      %v2009 = vadd.f32 %v1400, %v2008
      %v2010 = vpop.f32.mrb[0].mxu0
      %v2011 = vpop.f32.mrb[0].mxu0
      %v2012 = vadd.f32 %v1403, %v2011
      %v2013 = vpop.f32.mrb[0].mxu0
      %2014 = vmatprep.mubr.bf16.mxu0 %v1535
      %2015 = vmatmul.mubr.bf16.gmra.mrb[0].mxu0 %v1534
      %v2016 = vpop.f32.mrb[0].mxu0
      %v2017 = vadd.f32 %v1408, %v2016
      %v2018 = vpop.f32.mrb[0].mxu0
      %v2019 = vpop.f32.mrb[0].mxu0
      %v2020 = vadd.f32 %v1411, %v2019
      %v2021 = vpop.f32.mrb[0].mxu0
      %2022 = vmatprep.mubr.bf16.mxu0 %v1543
      %2023 = vmatmul.mubr.bf16.gmra.mrb[0].mxu0 %v1542
      %v2024 = vpop.f32.mrb[0].mxu0
      %v2025 = vadd.f32 %v1416, %v2024
      %v2026 = vpop.f32.mrb[0].mxu0
      %v2027 = vpop.f32.mrb[0].mxu0
      %v2028 = vadd.f32 %v1419, %v2027
      %v2029 = vpop.f32.mrb[0].mxu0
      %2030 = vmatprep.mubr.bf16.mxu0 %v1551
      %2031 = vmatmul.mubr.bf16.gmra.mrb[0].mxu0 %v1550
      %v2032 = vpop.f32.mrb[0].mxu0
      %v2033 = vadd.f32 %v1424, %v2032
      %v2034 = vpop.f32.mrb[0].mxu0
      %v2035 = vpop.f32.mrb[0].mxu0
      %v2036 = vadd.f32 %v1427, %v2035
      %v2037 = vpop.f32.mrb[0].mxu0
      %2038 = vdwg.mxu0
      %2039 = vmatprep.subr.bf16.mxu0 0
      %2040 = vmatpush1.bf16.msra.mxu0 %v1862
      %2041 = vmatprep.subr.bf16.mxu0 0
      %2042 = vmatpush1.bf16.msra.mxu0 %v1863
      %2043 = vmatprep.subr.bf16.mxu0 0
      %2044 = vmatpush1.bf16.msra.mxu0 %v1864
      %2045 = vmatprep.subr.bf16.mxu0 0
      %2046 = vmatpush1.bf16.msra.mxu0 %v1865
      %2047 = vmatprep.subr.bf16.mxu0 0
      %2048 = vmatpush1.bf16.msra.mxu0 %v1866
      %2049 = vmatprep.subr.bf16.mxu0 0
      %2050 = vmatpush1.bf16.msra.mxu0 %v1867
      %2051 = vmatprep.subr.bf16.mxu0 0
      %2052 = vmatpush1.bf16.msra.mxu0 %v1868
      %2053 = vmatprep.subr.bf16.mxu0 0
      %2054 = vmatpush1.bf16.msra.mxu0 %v1869
      %2055 = vmatprep.subr.bf16.mxu0 0
      %2056 = vmatpush1.bf16.msra.mxu0 %v1870
      %2057 = vmatprep.subr.bf16.mxu0 0
      %2058 = vmatpush1.bf16.msra.mxu0 %v1871
      %2059 = vmatprep.subr.bf16.mxu0 0
      %2060 = vmatpush1.bf16.msra.mxu0 %v1872
      %2061 = vmatprep.subr.bf16.mxu0 0
      %2062 = vmatpush1.bf16.msra.mxu0 %v1873
      %2063 = vmatprep.subr.bf16.mxu0 0
      %2064 = vmatpush1.bf16.msra.mxu0 %v1874
      %2065 = vmatprep.subr.bf16.mxu0 0
      %2066 = vmatpush1.bf16.msra.mxu0 %v1875
      %2067 = vmatprep.subr.bf16.mxu0 0
      %2068 = vmatpush1.bf16.msra.mxu0 %v1876
      %2069 = vmatprep.subr.bf16.mxu0 0
      %2070 = vmatpush1.bf16.msra.mxu0 %v1877
      %2071 = vmatprep.mubr.bf16.mxu0 %v1529
      %2072 = vmatmul.mubr.bf16.gmra.mrb[0].mxu0 %v1528
      %v2073 = vpop.f32.mrb[0].mxu0
      %v2074 = vadd.f32 %v2009, %v2073
      %v2075 = vpop.f32.mrb[0].mxu0
      %v2076 = vpop.f32.mrb[0].mxu0
      %v2077 = vadd.f32 %v2012, %v2076
      %v2078 = vpop.f32.mrb[0].mxu0
      %2079 = vmatprep.mubr.bf16.mxu0 %v1537
      %2080 = vmatmul.mubr.bf16.gmra.mrb[0].mxu0 %v1536
      %v2081 = vpop.f32.mrb[0].mxu0
      %v2082 = vadd.f32 %v2017, %v2081
      %v2083 = vpop.f32.mrb[0].mxu0
      %v2084 = vpop.f32.mrb[0].mxu0
      %v2085 = vadd.f32 %v2020, %v2084
      %v2086 = vpop.f32.mrb[0].mxu0
      %2087 = vmatprep.mubr.bf16.mxu0 %v1545
      %2088 = vmatmul.mubr.bf16.gmra.mrb[0].mxu0 %v1544
      %v2089 = vpop.f32.mrb[0].mxu0
      %v2090 = vadd.f32 %v2025, %v2089
      %v2091 = vpop.f32.mrb[0].mxu0
      %v2092 = vpop.f32.mrb[0].mxu0
      %v2093 = vadd.f32 %v2028, %v2092
      %v2094 = vpop.f32.mrb[0].mxu0
      %2095 = vmatprep.mubr.bf16.mxu0 %v1553
      %2096 = vmatmul.mubr.bf16.gmra.mrb[0].mxu0 %v1552
      %v2097 = vpop.f32.mrb[0].mxu0
      %v2098 = vadd.f32 %v2033, %v2097
      %v2099 = vpop.f32.mrb[0].mxu0
      %v2100 = vpop.f32.mrb[0].mxu0
      %v2101 = vadd.f32 %v2036, %v2100
      %v2102 = vpop.f32.mrb[0].mxu0
      %2103 = vdwg.mxu0
      %2104 = vmatprep.subr.bf16.mxu0 0
      %2105 = vmatpush1.bf16.msra.mxu0 %v1878
      %2106 = vmatprep.subr.bf16.mxu0 0
      %2107 = vmatpush1.bf16.msra.mxu0 %v1879
      %2108 = vmatprep.subr.bf16.mxu0 0
      %2109 = vmatpush1.bf16.msra.mxu0 %v1880
      %2110 = vmatprep.subr.bf16.mxu0 0
      %2111 = vmatpush1.bf16.msra.mxu0 %v1881
      %2112 = vmatprep.subr.bf16.mxu0 0
      %2113 = vmatpush1.bf16.msra.mxu0 %v1882
      %2114 = vmatprep.subr.bf16.mxu0 0
      %2115 = vmatpush1.bf16.msra.mxu0 %v1883
      %2116 = vmatprep.subr.bf16.mxu0 0
      %2117 = vmatpush1.bf16.msra.mxu0 %v1884
      %2118 = vmatprep.subr.bf16.mxu0 0
      %2119 = vmatpush1.bf16.msra.mxu0 %v1885
      %2120 = vmatprep.subr.bf16.mxu0 0
      %2121 = vmatpush1.bf16.msra.mxu0 %v1886
      %2122 = vmatprep.subr.bf16.mxu0 0
      %2123 = vmatpush1.bf16.msra.mxu0 %v1887
      %2124 = vmatprep.subr.bf16.mxu0 0
      %2125 = vmatpush1.bf16.msra.mxu0 %v1888
      %2126 = vmatprep.subr.bf16.mxu0 0
      %2127 = vmatpush1.bf16.msra.mxu0 %v1889
      %2128 = vmatprep.subr.bf16.mxu0 0
      %2129 = vmatpush1.bf16.msra.mxu0 %v1890
      %2130 = vmatprep.subr.bf16.mxu0 0
      %2131 = vmatpush1.bf16.msra.mxu0 %v1891
      %2132 = vmatprep.subr.bf16.mxu0 0
      %2133 = vmatpush1.bf16.msra.mxu0 %v1892
      %2134 = vmatprep.subr.bf16.mxu0 0
      %2135 = vmatpush1.bf16.msra.mxu0 %v1893
      %2136 = vmatprep.mubr.bf16.mxu0 %v1531
      %2137 = vmatmul.mubr.bf16.gmra.mrb[0].mxu0 %v1530
      %v2138 = vpop.f32.mrb[0].mxu0
      %v2139 = vadd.f32 %v2074, %v2138
      %v2140 = vpop.f32.mrb[0].mxu0
      %v2141 = vpop.f32.mrb[0].mxu0
      %v2142 = vadd.f32 %v2077, %v2141
      %v2143 = vpop.f32.mrb[0].mxu0
      %2144 = vmatprep.mubr.bf16.mxu0 %v1539
      %2145 = vmatmul.mubr.bf16.gmra.mrb[0].mxu0 %v1538
      %v2146 = vpop.f32.mrb[0].mxu0
      %v2147 = vadd.f32 %v2082, %v2146
      %v2148 = vpop.f32.mrb[0].mxu0
      %v2149 = vpop.f32.mrb[0].mxu0
      %v2150 = vadd.f32 %v2085, %v2149
      %v2151 = vpop.f32.mrb[0].mxu0
      %2152 = vmatprep.mubr.bf16.mxu0 %v1547
      %2153 = vmatmul.mubr.bf16.gmra.mrb[0].mxu0 %v1546
      %v2154 = vpop.f32.mrb[0].mxu0
      %v2155 = vadd.f32 %v2090, %v2154
      %v2156 = vpop.f32.mrb[0].mxu0
      %v2157 = vpop.f32.mrb[0].mxu0
      %v2158 = vadd.f32 %v2093, %v2157
      %v2159 = vpop.f32.mrb[0].mxu0
      %2160 = vmatprep.mubr.bf16.mxu0 %v1555
      %2161 = vmatmul.mubr.bf16.gmra.mrb[0].mxu0 %v1554
      %v2162 = vpop.f32.mrb[0].mxu0
      %v2163 = vadd.f32 %v2098, %v2162
      %v2164 = vpop.f32.mrb[0].mxu0
      %v2165 = vpop.f32.mrb[0].mxu0
      %v2166 = vadd.f32 %v2101, %v2165
      %v2167 = vpop.f32.mrb[0].mxu0
      %2168 = vdwg.mxu0
      %2169 = vmatprep.subr.bf16.mxu0 0
      %2170 = vmatpush1.bf16.msra.mxu0 %v1894
      %2171 = vmatprep.subr.bf16.mxu0 0
      %2172 = vmatpush1.bf16.msra.mxu0 %v1895
      %2173 = vmatprep.subr.bf16.mxu0 0
      %2174 = vmatpush1.bf16.msra.mxu0 %v1896
      %2175 = vmatprep.subr.bf16.mxu0 0
      %2176 = vmatpush1.bf16.msra.mxu0 %v1897
      %2177 = vmatprep.subr.bf16.mxu0 0
      %2178 = vmatpush1.bf16.msra.mxu0 %v1898
      %2179 = vmatprep.subr.bf16.mxu0 0
      %2180 = vmatpush1.bf16.msra.mxu0 %v1899
      %2181 = vmatprep.subr.bf16.mxu0 0
      %2182 = vmatpush1.bf16.msra.mxu0 %v1900
      %2183 = vmatprep.subr.bf16.mxu0 0
      %2184 = vmatpush1.bf16.msra.mxu0 %v1901
      %2185 = vmatprep.subr.bf16.mxu0 0
      %2186 = vmatpush1.bf16.msra.mxu0 %v1902
      %2187 = vmatprep.subr.bf16.mxu0 0
      %2188 = vmatpush1.bf16.msra.mxu0 %v1903
      %2189 = vmatprep.subr.bf16.mxu0 0
      %2190 = vmatpush1.bf16.msra.mxu0 %v1904
      %2191 = vmatprep.subr.bf16.mxu0 0
      %2192 = vmatpush1.bf16.msra.mxu0 %v1905
      %2193 = vmatprep.subr.bf16.mxu0 0
      %2194 = vmatpush1.bf16.msra.mxu0 %v1906
      %2195 = vmatprep.subr.bf16.mxu0 0
      %2196 = vmatpush1.bf16.msra.mxu0 %v1907
      %2197 = vmatprep.subr.bf16.mxu0 0
      %2198 = vmatpush1.bf16.msra.mxu0 %v1908
      %2199 = vmatprep.subr.bf16.mxu0 0
      %2200 = vmatpush1.bf16.msra.mxu0 %v1909
      %2201 = vmatprep.mubr.bf16.mxu0 %v1533
      %2202 = vmatmul.mubr.bf16.gmra.mrb[0].mxu0 %v1532
      %v2203 = vpop.f32.mrb[0].mxu0
      %v2204 = vadd.f32 %v2139, %v2203
      %v2205 = vpop.f32.mrb[0].mxu0
      %v2206 = vpop.f32.mrb[0].mxu0
      %v2207 = vadd.f32 %v2142, %v2206
      %v2208 = vpop.f32.mrb[0].mxu0
      %2209 = vmatprep.mubr.bf16.mxu0 %v1541
      %2210 = vmatmul.mubr.bf16.gmra.mrb[0].mxu0 %v1540
      %v2211 = vpop.f32.mrb[0].mxu0
      %v2212 = vadd.f32 %v2147, %v2211
      %v2213 = vpop.f32.mrb[0].mxu0
      %v2214 = vpop.f32.mrb[0].mxu0
      %v2215 = vadd.f32 %v2150, %v2214
      %v2216 = vpop.f32.mrb[0].mxu0
      %2217 = vmatprep.mubr.bf16.mxu0 %v1549
      %2218 = vmatmul.mubr.bf16.gmra.mrb[0].mxu0 %v1548
      %v2219 = vpop.f32.mrb[0].mxu0
      %v2220 = vadd.f32 %v2155, %v2219
      %v2221 = vpop.f32.mrb[0].mxu0
      %v2222 = vpop.f32.mrb[0].mxu0
      %v2223 = vadd.f32 %v2158, %v2222
      %v2224 = vpop.f32.mrb[0].mxu0
      %2225 = vmatprep.mubr.bf16.mxu0 %v1557
      %2226 = vmatmul.mubr.bf16.gmra.mrb[0].mxu0 %v1556
      %v2227 = vpop.f32.mrb[0].mxu0
      %v2228 = vadd.f32 %v2163, %v2227
      %v2229 = vpop.f32.mrb[0].mxu0
      %v2230 = vpop.f32.mrb[0].mxu0
      %v2231 = vadd.f32 %v2166, %v2230
      %v2232 = vpop.f32.mrb[0].mxu0
      %2233 = vdwg.mxu0
      %v2234 = vld [vmem:[%s289] sm:$0x1]
      %v2236 = vlaneseq
      %v2237 = vshrl.u32 %v2236, 7
      %v2238 = vsub.s32 0, %v2237
      %v2239 = vrot.slane %v2234, %v2238
      %v2241 = vadd.f32 %v2204, %v2239
      %v2242 = vadd.f32 %v2207, %v2239
      %v2243 = vadd.f32 %v2212, %v2239
      %v2244 = vadd.f32 %v2215, %v2239
      %v2245 = vadd.f32 %v2220, %v2239
      %v2246 = vadd.f32 %v2223, %v2239
      %v2247 = vadd.f32 %v2228, %v2239
      %v2248 = vadd.f32 %v2231, %v2239
      %v2249 = vlaneseq
      %v2250 = vshrl.u32 %v2249, 7
      %v2251 = vadd.s32 %v2250, 8
      %v2252 = vadd.s32 %v2250, 16
      %v2253 = vadd.s32 %v2250, 24
      %v2254 = vadd.s32 %v2250, 32
      %v2255 = vadd.s32 %v2250, 40
      %v2256 = vadd.s32 %v2250, 48
      %v2257 = vadd.s32 %v2250, 56
      %vm2258 = vcmp.lt.s32.totalorder %v2250, 0
      %v2259 = vsub.s32 0, %v2250
      %v2260 = vsel %vm2258, %v2259, %v2250
      %v2261 = vshrl.u32 %v2260, 4
      %v2262 = vand.u32 %v2260, 15
      %v2263 = vsub.s32 0, %v2262
      %v2264 = vsel %vm2258, %v2263, %v2262
      %vm2265 = vcmp.lt.s32.totalorder %v2251, 0
      %v2266 = vsub.s32 0, %v2251
      %v2267 = vsel %vm2265, %v2266, %v2251
      %v2268 = vshrl.u32 %v2267, 4
      %v2269 = vand.u32 %v2267, 15
      %v2270 = vsub.s32 0, %v2269
      %v2271 = vsel %vm2265, %v2270, %v2269
      %vm2272 = vcmp.lt.s32.totalorder %v2252, 0
      %v2273 = vsub.s32 0, %v2252
      %v2274 = vsel %vm2272, %v2273, %v2252
      %v2275 = vshrl.u32 %v2274, 4
      %v2276 = vand.u32 %v2274, 15
      %v2277 = vsub.s32 0, %v2276
      %v2278 = vsel %vm2272, %v2277, %v2276
      %vm2279 = vcmp.lt.s32.totalorder %v2253, 0
      %v2280 = vsub.s32 0, %v2253
      %v2281 = vsel %vm2279, %v2280, %v2253
      %v2282 = vshrl.u32 %v2281, 4
      %v2283 = vand.u32 %v2281, 15
      %v2284 = vsub.s32 0, %v2283
      %v2285 = vsel %vm2279, %v2284, %v2283
      %vm2286 = vcmp.lt.s32.totalorder %v2254, 0
      %v2287 = vsub.s32 0, %v2254
      %v2288 = vsel %vm2286, %v2287, %v2254
      %v2289 = vshrl.u32 %v2288, 4
      %v2290 = vand.u32 %v2288, 15
      %v2291 = vsub.s32 0, %v2290
      %v2292 = vsel %vm2286, %v2291, %v2290
      %vm2293 = vcmp.lt.s32.totalorder %v2255, 0
      %v2294 = vsub.s32 0, %v2255
      %v2295 = vsel %vm2293, %v2294, %v2255
      %v2296 = vshrl.u32 %v2295, 4
      %v2297 = vand.u32 %v2295, 15
      %v2298 = vsub.s32 0, %v2297
      %v2299 = vsel %vm2293, %v2298, %v2297
      %vm2300 = vcmp.lt.s32.totalorder %v2256, 0
      %v2301 = vsub.s32 0, %v2256
      %v2302 = vsel %vm2300, %v2301, %v2256
      %v2303 = vshrl.u32 %v2302, 4
      %v2304 = vand.u32 %v2302, 15
      %v2305 = vsub.s32 0, %v2304
      %v2306 = vsel %vm2300, %v2305, %v2304
      %vm2307 = vcmp.lt.s32.totalorder %v2257, 0
      %v2308 = vsub.s32 0, %v2257
      %v2309 = vsel %vm2307, %v2308, %v2257
      %v2310 = vshrl.u32 %v2309, 4
      %v2311 = vand.u32 %v2309, 15
      %v2312 = vsub.s32 0, %v2311
      %v2313 = vsel %vm2307, %v2312, %v2311
      %vm2314 = vcmp.ne.s32.totalorder %v2264, 0
      %vm2315 = vcmp.ne.s32.totalorder %v2271, 0
      %vm2316 = vcmp.ne.s32.totalorder %v2278, 0
      %vm2317 = vcmp.ne.s32.totalorder %v2285, 0
      %vm2318 = vcmp.ne.s32.totalorder %v2292, 0
      %vm2319 = vcmp.ne.s32.totalorder %v2299, 0
      %vm2320 = vcmp.ne.s32.totalorder %v2306, 0
      %vm2321 = vcmp.ne.s32.totalorder %v2313, 0
      %vm2322 = vcmp.lt.s32.totalorder %v2264, 0
      %vm2323 = vcmp.lt.s32.totalorder %v2271, 0
      %vm2324 = vcmp.lt.s32.totalorder %v2278, 0
      %vm2325 = vcmp.lt.s32.totalorder %v2285, 0
      %vm2326 = vcmp.lt.s32.totalorder %v2292, 0
      %vm2327 = vcmp.lt.s32.totalorder %v2299, 0
      %vm2328 = vcmp.lt.s32.totalorder %v2306, 0
      %vm2329 = vcmp.lt.s32.totalorder %v2313, 0
      %vm2330 = vmand %vm2322, %vm2314
      %vm2331 = vmand %vm2323, %vm2315
      %vm2332 = vmand %vm2324, %vm2316
      %vm2333 = vmand %vm2325, %vm2317
      %vm2334 = vmand %vm2326, %vm2318
      %vm2335 = vmand %vm2327, %vm2319
      %vm2336 = vmand %vm2328, %vm2320
      %vm2337 = vmand %vm2329, %vm2321
      %v2338 = vadd.s32 %v2264, 16
      %v2339 = vadd.s32 %v2271, 16
      %v2340 = vadd.s32 %v2278, 16
      %v2341 = vadd.s32 %v2285, 16
      %v2342 = vadd.s32 %v2292, 16
      %v2343 = vadd.s32 %v2299, 16
      %v2344 = vadd.s32 %v2306, 16
      %v2345 = vadd.s32 %v2313, 16
      %v2346 = vsel %vm2330, %v2338, %v2264
      %v2347 = vsel %vm2331, %v2339, %v2271
      %v2348 = vsel %vm2332, %v2340, %v2278
      %v2349 = vsel %vm2333, %v2341, %v2285
      %v2350 = vsel %vm2334, %v2342, %v2292
      %v2351 = vsel %vm2335, %v2343, %v2299
      %v2352 = vsel %vm2336, %v2344, %v2306
      %v2353 = vsel %vm2337, %v2345, %v2313
      %vm2354 = vcmp.lt.s32.totalorder %v2346, 4
      %vm2355 = vcmp.lt.s32.totalorder %v2347, 4
      %vm2356 = vcmp.lt.s32.totalorder %v2348, 4
      %vm2357 = vcmp.lt.s32.totalorder %v2349, 4
      %vm2358 = vcmp.lt.s32.totalorder %v2350, 4
      %vm2359 = vcmp.lt.s32.totalorder %v2351, 4
      %vm2360 = vcmp.lt.s32.totalorder %v2352, 4
      %vm2361 = vcmp.lt.s32.totalorder %v2353, 4
      %v2362 = vsel %vm2354, 1, 0
      %v2363 = vsel %vm2355, 1, 0
      %v2364 = vsel %vm2356, 1, 0
      %v2365 = vsel %vm2357, 1, 0
      %v2366 = vsel %vm2358, 1, 0
      %v2367 = vsel %vm2359, 1, 0
      %v2368 = vsel %vm2360, 1, 0
      %v2369 = vsel %vm2361, 1, 0
      %v2370 = vcvt.s32.f32 %v2362
      %v2371 = vcvt.s32.f32 %v2363
      %v2372 = vcvt.s32.f32 %v2364
      %v2373 = vcvt.s32.f32 %v2365
      %v2374 = vcvt.s32.f32 %v2366
      %v2375 = vcvt.s32.f32 %v2367
      %v2376 = vcvt.s32.f32 %v2368
      %v2377 = vcvt.s32.f32 %v2369
      %v2378 = vmul.f32 %v2241, %v2370
      %v2379 = vmul.f32 %v2242, %v2371
      %v2380 = vmul.f32 %v2243, %v2372
      %v2381 = vmul.f32 %v2244, %v2373
      %v2382 = vmul.f32 %v2245, %v2374
      %v2383 = vmul.f32 %v2246, %v2375
      %v2384 = vmul.f32 %v2247, %v2376
      %v2385 = vmul.f32 %v2248, %v2377
      %v2386 = vadd.f32 %v2378, %v2379
      %v2387 = vadd.f32 %v2386, %v2380
      %v2388 = vadd.f32 %v2387, %v2381
      %v2389 = vadd.f32 %v2388, %v2382
      %v2390 = vadd.f32 %v2389, %v2383
      %v2391 = vadd.f32 %v2390, %v2384
      %v2392 = vadd.f32 %v2391, %v2385
      %v2393 = vrot.slane %v2392, 4
      %v2394 = vadd.f32 %v2392, %v2393
      %v2395 = vrot.slane %v2394, 2
      %v2396 = vadd.f32 %v2394, %v2395
      %v2397 = vrot.slane %v2396, 1
      %v2398 = vadd.f32 %v2396, %v2397
      %v2399 = vmul.f32 %v2398, 0.0625
      %v2400 = vmul.f32 %v2378, %v2241
      %v2401 = vmul.f32 %v2379, %v2242
      %v2402 = vmul.f32 %v2380, %v2243
      %v2403 = vmul.f32 %v2381, %v2244
      %v2404 = vmul.f32 %v2382, %v2245
      %v2405 = vmul.f32 %v2383, %v2246
      %v2406 = vmul.f32 %v2384, %v2247
      %v2407 = vmul.f32 %v2385, %v2248
      %v2408 = vadd.f32 %v2400, %v2401
      %v2409 = vadd.f32 %v2408, %v2402
      %v2410 = vadd.f32 %v2409, %v2403
      %v2411 = vadd.f32 %v2410, %v2404
      %v2412 = vadd.f32 %v2411, %v2405
      %v2413 = vadd.f32 %v2412, %v2406
      %v2414 = vadd.f32 %v2413, %v2407
      %v2415 = vrot.slane %v2414, 4
      %v2416 = vadd.f32 %v2414, %v2415
      %v2417 = vrot.slane %v2416, 2
      %v2418 = vadd.f32 %v2416, %v2417
      %v2419 = vrot.slane %v2418, 1
      %v2420 = vadd.f32 %v2418, %v2419
      %v2421 = vmul.f32 %v2420, 0.0625
      %v2422 = vmul.f32 %v2399, %v2399
      %v2423 = vsub.f32 %v2421, %v2422
      %v2424 = vmax.f32 %v2423, 0.0
      %v2425 = vsub.f32 %v2241, %v2399
      %v2426 = vsub.f32 %v2242, %v2399
      %v2427 = vsub.f32 %v2243, %v2399
      %v2428 = vsub.f32 %v2244, %v2399
      %v2429 = vsub.f32 %v2245, %v2399
      %v2430 = vsub.f32 %v2246, %v2399
      %v2431 = vsub.f32 %v2247, %v2399
      %v2432 = vsub.f32 %v2248, %v2399
      %v2433 = vadd.f32 %v2424, 1e-05
      %v2434 = vrsqrt.pop %v2433
      %v2435 = vmul.f32 %v2425, %v2434
      %v2436 = vmul.f32 %v2426, %v2434
      %v2437 = vmul.f32 %v2427, %v2434
      %v2438 = vmul.f32 %v2428, %v2434
      %v2439 = vmul.f32 %v2429, %v2434
      %v2440 = vmul.f32 %v2430, %v2434
      %v2441 = vmul.f32 %v2431, %v2434
      %v2442 = vmul.f32 %v2432, %v2434
      %v2443 = vld [vmem:[%s292] sm:$0x1]
      %v2445 = vlaneseq
      %v2446 = vshrl.u32 %v2445, 7
      %v2447 = vsub.s32 0, %v2446
      %v2448 = vrot.slane %v2443, %v2447
      %v2450 = vmul.f32 %v2435, %v2448
      %v2451 = vmul.f32 %v2436, %v2448
      %v2452 = vmul.f32 %v2437, %v2448
      %v2453 = vmul.f32 %v2438, %v2448
      %v2454 = vmul.f32 %v2439, %v2448
      %v2455 = vmul.f32 %v2440, %v2448
      %v2456 = vmul.f32 %v2441, %v2448
      %v2457 = vmul.f32 %v2442, %v2448
      %v2458 = vld [vmem:[%s295] sm:$0x1]
      %v2460 = vlaneseq
      %v2461 = vshrl.u32 %v2460, 7
      %v2462 = vsub.s32 0, %v2461
      %v2463 = vrot.slane %v2458, %v2462
      %v2465 = vadd.f32 %v2450, %v2463
      %v2466 = vadd.f32 %v2451, %v2463
      %v2467 = vadd.f32 %v2452, %v2463
      %v2468 = vadd.f32 %v2453, %v2463
      %v2469 = vadd.f32 %v2454, %v2463
      %v2470 = vadd.f32 %v2455, %v2463
      %v2471 = vadd.f32 %v2456, %v2463
      %v2472 = vadd.f32 %v2457, %v2463
      %v2473 = vmul.f32 %v2465, 0.1
      %v2474 = vmul.f32 %v2466, 0.1
      %v2475 = vmul.f32 %v2467, 0.1
      %v2476 = vmul.f32 %v2468, 0.1
      %v2477 = vmul.f32 %v2469, 0.1
      %v2478 = vmul.f32 %v2470, 0.1
      %v2479 = vmul.f32 %v2471, 0.1
      %v2480 = vmul.f32 %v2472, 0.1
      %v2481 = vmax.f32 %v2465, %v2473
      %v2482 = vmax.f32 %v2466, %v2474
      %v2483 = vmax.f32 %v2467, %v2475
      %v2484 = vmax.f32 %v2468, %v2476
      %v2485 = vmax.f32 %v2469, %v2477
      %v2486 = vmax.f32 %v2470, %v2478
      %v2487 = vmax.f32 %v2471, %v2479
      %v2488 = vmax.f32 %v2472, %v2480
      %v2489 = vpack.c.bf16 %v2482, %v2481
      %v2490 = vpack.c.bf16 %v2484, %v2483
      %v2491 = vpack.c.bf16 %v2486, %v2485
      %v2492 = vpack.c.bf16 %v2488, %v2487
      %v2497 = vunpack.c.l.b16 %v2489
      %v2498 = vunpack.c.h.b16 %v2489
      %v2499 = vunpack.c.l.b16 %v2490
      %v2500 = vunpack.c.h.b16 %v2490
      %v2501 = vunpack.c.l.b16 %v2491
      %v2502 = vunpack.c.h.b16 %v2491
      %v2503 = vunpack.c.l.b16 %v2492
      %v2504 = vunpack.c.h.b16 %v2492
      %v2505 = vpack.c.b16 %v2497, %v2497
      %v2506 = vpack.c.b16 %v2498, %v2498
      %v2507 = vpack.c.b16 %v2499, %v2499
      %v2508 = vpack.c.b16 %v2500, %v2500
      %v2509 = vpack.c.b16 %v2501, %v2501
      %v2510 = vpack.c.b16 %v2502, %v2502
      %v2511 = vpack.c.b16 %v2503, %v2503
      %v2512 = vpack.c.b16 %v2504, %v2504
      %2521 = vst [vmem:[%s303] sm:$0xf] %v2505
      %2522 = vst [vmem:[%s303 + $0x4] sm:$0xf] %v2506
      %2523 = vst [vmem:[%s303 + $0x8] sm:$0xf] %v2507
      %2524 = vst [vmem:[%s303 + $0xc] sm:$0xf] %v2508
      %2525 = vst [vmem:[%s303 + $0x10] sm:$0xf] %v2509
      %2526 = vst [vmem:[%s303 + $0x14] sm:$0xf] %v2510
      %2527 = vst [vmem:[%s303 + $0x18] sm:$0xf] %v2511
      %2528 = vst [vmem:[%s303 + $0x1c] sm:$0xf] %v2512
      %p2529 = scmp.lt.s32.totalorder %s21, 1
      %s2530 = scalar_select %p2529, %s21, 1
      %p2531 = scmp.lt.s32.totalorder %s20, 0
      %s2532 = scalar_select %p2531, %s20, 0
      %s2533 = smul.addr %s2530, 8
      %s2534 = sadd.s32 %s2532, %s2533
      %s2535 = smul.addr %s2534, 4
      %s2536 = scalar_lea.vmem %s5, %s2535
      // Predicated region
      $region41: #{_lambda_.6} parent=39 // pred_check
        %p2537 = pneg %p178
      $region42: #{_lambda_.6} parent=39 // pred_check_branch
        %2539 = sbr.rel (%p2537) target = $region44
      $region43: #{_lambda_.6} parent=39 // pred_region
        _
      $region44: #{_lambda_.6} parent=39 // pred_fallthru
        _
    $region40: #{_lambda_.6} parent=5 // pred_fallthru
      _
    %p2540 = scmp.le.s32.totalorder 2, %s11
    // Predicated region
    $region45: #{_lambda_.6} parent=5 // pred_check
      %p2541 = pneg %p2540
    $region46: #{_lambda_.6} parent=5 // pred_check_branch
      %2543 = sbr.rel (%p2541) target = $region48
    $region47: #{_lambda_.6} parent=5 // pred_region
      %s2544 = ssub.s32 %s11, 2
      // Predicated region
      $region49: #{_lambda_.6} parent=47 // pred_check
        %p2545 = pneg %p184
      $region50: #{_lambda_.6} parent=47 // pred_check_branch
        %2547 = sbr.rel (%p2545) target = $region52
      $region51: #{_lambda_.6} parent=47 // pred_region
        %p2548 = scmp.lt.s32.totalorder %s23, 1
        %s2549 = scalar_select %p2548, %s23, 1
        %p2550 = scmp.lt.s32.totalorder %s22, 0
        %s2551 = scalar_select %p2550, %s22, 0
        %s2552 = smul.addr %s2549, 8
        %s2553 = sadd.s32 %s2551, %s2552
        %s2554 = smul.addr %s2553, 4
        %s2555 = scalar_lea.vmem %s5, %s2554
      $region52: #{_lambda_.6} parent=47 // pred_fallthru
        _
    $region48: #{_lambda_.6} parent=5 // pred_fallthru
      _
  $region6: #{_lambda_.6} parent=0 // loop_footer
    %s15 = sadd.s32 1, %s11
  $region7: #{_lambda_.6} parent=0 // loop_footer_branch
    %10 = sbr.rel target = $region3
  $region8: #{_lambda_.6} parent=0 // loop_exit
    _

// kernel: _lambda_.7
$region0: #{_lambda_.7}
  #allocation0 [shape = 'u32[]', space=smem, size = 0x4, offset = 0x4, fixed_abs, tag = 'smem constant byte address 0x4 - core index']
  #allocation1 [shape = 'u32[144,128]{1,0:T(1,128)}', space=vmem, size = 0x12000, scoped, tag = 'internal scratch']
  %s0 = inlined_call_operand.vmem [shape: bf16[2,48,1024], index: 0, kind: input, shape index: {}]
  %s1 = inlined_call_operand.vmem [shape: bf16[2,1024,128], index: 1, kind: input, shape index: {}]
  %s2 = inlined_call_operand.vmem [shape: f32[1,128], index: 2, kind: input, shape index: {}]
  %s3 = inlined_call_operand.vmem [shape: f32[1,128], index: 3, kind: input, shape index: {}]
  %s4 = inlined_call_operand.vmem [shape: f32[1,128], index: 4, kind: input, shape index: {}]
  %s5 = inlined_call_operand.vmem [shape: bf16[2,32,128], index: 5, kind: output, shape index: {}]
  %s6 = sld [smem:[#allocation0]]
  $region53: #{_lambda_.7} parent=0
    _
  %s8 = ssub.s32 1, %s6
  %s9 = scalar_select 0, %s8, %s6
  loop: start=0, step=1, limit=4
  $region2: #{_lambda_.7} parent=0 // loop_pre_header
    _
  $region3: #{_lambda_.7} parent=0 // loop_header
    %s11 = sphi 0, %s15
    %p12 = scmp.ge.s32.totalorder %s11, 4
    %s18 = sphi 0, %s30
    %s19 = sphi 0, %s26
    %s20 = sphi 0, %s18
    %s21 = sphi 0, %s19
    %s22 = sphi 0, %s20
    %s23 = sphi 0, %s21
    %s33 = sphi 0, %s35
    %s36 = sphi 0, %s33
    %s37 = sphi 0, %s36
    %s53 = sphi 0, %s37
    %s59 = sphi 0, %s61
    %s62 = sphi 0, %s59
    %s63 = sphi 0, %s62
    %s79 = sphi 0, %s63
    %s85 = sphi 0, %s87
    %s88 = sphi 0, %s85
    %s89 = sphi 0, %s88
    %s105 = sphi 0, %s89
    %s111 = sphi 0, %s113
    %s114 = sphi 0, %s111
    %s115 = sphi 0, %s114
    %s131 = sphi 0, %s115
    %s137 = sphi 0, %s139
    %s140 = sphi 0, %s137
    %s141 = sphi 0, %s140
    %s157 = sphi 0, %s141
    %s165 = sphi 0, %s167
    %s168 = sphi 0, %s165
    %s169 = sphi 0, %s168
    %s185 = sphi 0, %s169
  $region4: #{_lambda_.7} parent=0 // loop_header_branch
    %14 = sbr.rel (%p12) target = $region8
  $region5: #{_lambda_.7} parent=0 // loop_body
    %s16 = ssub.s32 %s11, 1
    %s17 = ssub.s32 %s11, 2
    %s24 = sadd.s32 1, %s19
    %p25 = scmp.ge.s32.totalorder %s24, 2
    %s26 = scalar_select %p25, 0, %s24
    %s27 = sadd.s32 1, %s18
    %s28 = scalar_select %p25, %s27, %s18
    %p29 = scmp.ge.s32.totalorder %s28, 1
    %s30 = scalar_select %p29, 0, %s28
    %s31 = ssub.s32 %s19, %s26
    %p32 = scmp.eq.s32.totalorder %s31, 0
    %s34 = sadd.s32 %s33, 1
    %s35 = scalar_select %p32, %s33, %s34
    %p38 = pneg %p32
    %p39 = scmp.eq.s32.totalorder %s11, 1
    %p40 = por %p38, %p39
    %p41 = scmp.ne.s32.totalorder %s33, %s36
    %p42 = scmp.eq.s32.totalorder %s11, 0
    %p43 = por %p41, %p42
    %p44 = scmp.ne.s32.totalorder %s33, %s36
    %p45 = scmp.eq.s32.totalorder %s16, 1
    %p46 = por %p44, %p45
    %p47 = scmp.ne.s32.totalorder %s36, %s37
    %p48 = scmp.eq.s32.totalorder %s16, 0
    %p49 = por %p47, %p48
    %p50 = scmp.ne.s32.totalorder %s36, %s37
    %p51 = scmp.eq.s32.totalorder %s17, 1
    %p52 = por %p50, %p51
    %p54 = scmp.ne.s32.totalorder %s37, %s53
    %p55 = scmp.eq.s32.totalorder %s17, 0
    %p56 = por %p54, %p55
    %s57 = ssub.s32 %s18, %s30
    %p58 = scmp.eq.s32.totalorder %s57, 0
    %s60 = sadd.s32 %s59, 1
    %s61 = scalar_select %p58, %s59, %s60
    %p64 = pneg %p58
    %p65 = scmp.eq.s32.totalorder %s11, 1
    %p66 = por %p64, %p65
    %p67 = scmp.ne.s32.totalorder %s59, %s62
    %p68 = scmp.eq.s32.totalorder %s11, 0
    %p69 = por %p67, %p68
    %p70 = scmp.ne.s32.totalorder %s59, %s62
    %p71 = scmp.eq.s32.totalorder %s16, 1
    %p72 = por %p70, %p71
    %p73 = scmp.ne.s32.totalorder %s62, %s63
    %p74 = scmp.eq.s32.totalorder %s16, 0
    %p75 = por %p73, %p74
    %p76 = scmp.ne.s32.totalorder %s62, %s63
    %p77 = scmp.eq.s32.totalorder %s17, 1
    %p78 = por %p76, %p77
    %p80 = scmp.ne.s32.totalorder %s63, %s79
    %p81 = scmp.eq.s32.totalorder %s17, 0
    %p82 = por %p80, %p81
    %s83 = ssub.s32 %s18, %s30
    %p84 = scmp.eq.s32.totalorder %s83, 0
    %s86 = sadd.s32 %s85, 1
    %s87 = scalar_select %p84, %s85, %s86
    %p90 = pneg %p84
    %p91 = scmp.eq.s32.totalorder %s11, 1
    %p92 = por %p90, %p91
    %p93 = scmp.ne.s32.totalorder %s85, %s88
    %p94 = scmp.eq.s32.totalorder %s11, 0
    %p95 = por %p93, %p94
    %p96 = scmp.ne.s32.totalorder %s85, %s88
    %p97 = scmp.eq.s32.totalorder %s16, 1
    %p98 = por %p96, %p97
    %p99 = scmp.ne.s32.totalorder %s88, %s89
    %p100 = scmp.eq.s32.totalorder %s16, 0
    %p101 = por %p99, %p100
    %p102 = scmp.ne.s32.totalorder %s88, %s89
    %p103 = scmp.eq.s32.totalorder %s17, 1
    %p104 = por %p102, %p103
    %p106 = scmp.ne.s32.totalorder %s89, %s105
    %p107 = scmp.eq.s32.totalorder %s17, 0
    %p108 = por %p106, %p107
    %s109 = ssub.s32 %s18, %s30
    %p110 = scmp.eq.s32.totalorder %s109, 0
    %s112 = sadd.s32 %s111, 1
    %s113 = scalar_select %p110, %s111, %s112
    %p116 = pneg %p110
    %p117 = scmp.eq.s32.totalorder %s11, 1
    %p118 = por %p116, %p117
    %p119 = scmp.ne.s32.totalorder %s111, %s114
    %p120 = scmp.eq.s32.totalorder %s11, 0
    %p121 = por %p119, %p120
    %p122 = scmp.ne.s32.totalorder %s111, %s114
    %p123 = scmp.eq.s32.totalorder %s16, 1
    %p124 = por %p122, %p123
    %p125 = scmp.ne.s32.totalorder %s114, %s115
    %p126 = scmp.eq.s32.totalorder %s16, 0
    %p127 = por %p125, %p126
    %p128 = scmp.ne.s32.totalorder %s114, %s115
    %p129 = scmp.eq.s32.totalorder %s17, 1
    %p130 = por %p128, %p129
    %p132 = scmp.ne.s32.totalorder %s115, %s131
    %p133 = scmp.eq.s32.totalorder %s17, 0
    %p134 = por %p132, %p133
    %s135 = ssub.s32 %s18, %s30
    %p136 = scmp.eq.s32.totalorder %s135, 0
    %s138 = sadd.s32 %s137, 1
    %s139 = scalar_select %p136, %s137, %s138
    %p142 = pneg %p136
    %p143 = scmp.eq.s32.totalorder %s11, 1
    %p144 = por %p142, %p143
    %p145 = scmp.ne.s32.totalorder %s137, %s140
    %p146 = scmp.eq.s32.totalorder %s11, 0
    %p147 = por %p145, %p146
    %p148 = scmp.ne.s32.totalorder %s137, %s140
    %p149 = scmp.eq.s32.totalorder %s16, 1
    %p150 = por %p148, %p149
    %p151 = scmp.ne.s32.totalorder %s140, %s141
    %p152 = scmp.eq.s32.totalorder %s16, 0
    %p153 = por %p151, %p152
    %p154 = scmp.ne.s32.totalorder %s140, %s141
    %p155 = scmp.eq.s32.totalorder %s17, 1
    %p156 = por %p154, %p155
    %p158 = scmp.ne.s32.totalorder %s141, %s157
    %p159 = scmp.eq.s32.totalorder %s17, 0
    %p160 = por %p158, %p159
    %s161 = ssub.s32 %s19, %s26
    %s162 = ssub.s32 %s18, %s30
    %s163 = sor.u32 %s161, %s162
    %p164 = scmp.eq.s32.totalorder %s163, 0
    %s166 = sadd.s32 %s165, 1
    %s167 = scalar_select %p164, %s165, %s166
    %p170 = pneg %p164
    %p171 = scmp.eq.s32.totalorder %s11, 1
    %p172 = por %p170, %p171
    %p173 = scmp.ne.s32.totalorder %s165, %s168
    %p174 = scmp.eq.s32.totalorder %s11, 0
    %p175 = por %p173, %p174
    %p176 = scmp.ne.s32.totalorder %s165, %s168
    %p177 = scmp.eq.s32.totalorder %s16, 1
    %p178 = por %p176, %p177
    %p179 = scmp.ne.s32.totalorder %s168, %s169
    %p180 = scmp.eq.s32.totalorder %s16, 0
    %p181 = por %p179, %p180
    %p182 = scmp.ne.s32.totalorder %s168, %s169
    %p183 = scmp.eq.s32.totalorder %s17, 1
    %p184 = por %p182, %p183
    %p186 = scmp.ne.s32.totalorder %s169, %s185
    %p187 = scmp.eq.s32.totalorder %s17, 0
    %p188 = por %p186, %p187
    %p189 = scmp.le.s32.totalorder 1, %s11
    %p190 = scmp.lt.s32.totalorder %s11, 3
    %p191 = pnand %p189, %p190
    %p192 = pneg %p191
    // Predicated region
    $region9: #{_lambda_.7} parent=5 // pred_check
      _
    $region10: #{_lambda_.7} parent=5 // pred_check_branch
      %194 = sbr.rel (%p191) target = $region12
    $region11: #{_lambda_.7} parent=5 // pred_region
      %s195 = ssub.s32 %s11, 1
      // Predicated region
      $region13: #{_lambda_.7} parent=11 // pred_check
        %p196 = pneg %p75
      $region14: #{_lambda_.7} parent=11 // pred_check_branch
        %198 = sbr.rel (%p196) target = $region16
      $region15: #{_lambda_.7} parent=11 // pred_region
        %p199 = scmp.lt.s32.totalorder %s20, 0
        %s200 = scalar_select %p199, %s20, 0
        %s201 = smul.addr %s200, 4
        %s202 = scalar_lea.vmem %s1, %s201
      $region16: #{_lambda_.7} parent=11 // pred_fallthru
        _
      // Predicated region
      $region17: #{_lambda_.7} parent=11 // pred_check
        %p203 = pneg %p101
      $region18: #{_lambda_.7} parent=11 // pred_check_branch
        %205 = sbr.rel (%p203) target = $region20
      $region19: #{_lambda_.7} parent=11 // pred_region
        %p206 = scmp.lt.s32.totalorder %s20, 0
        %s207 = scalar_select %p206, %s20, 0
        %s208 = scalar_lea.vmem %s2, %s207
      $region20: #{_lambda_.7} parent=11 // pred_fallthru
        _
      // Predicated region
      $region21: #{_lambda_.7} parent=11 // pred_check
        %p209 = pneg %p127
      $region22: #{_lambda_.7} parent=11 // pred_check_branch
        %211 = sbr.rel (%p209) target = $region24
      $region23: #{_lambda_.7} parent=11 // pred_region
        %p212 = scmp.lt.s32.totalorder %s20, 0
        %s213 = scalar_select %p212, %s20, 0
        %s214 = scalar_lea.vmem %s3, %s213
      $region24: #{_lambda_.7} parent=11 // pred_fallthru
        _
      // Predicated region
      $region25: #{_lambda_.7} parent=11 // pred_check
        %p215 = pneg %p153
      $region26: #{_lambda_.7} parent=11 // pred_check_branch
        %217 = sbr.rel (%p215) target = $region28
      $region27: #{_lambda_.7} parent=11 // pred_region
        %p218 = scmp.lt.s32.totalorder %s20, 0
        %s219 = scalar_select %p218, %s20, 0
        %s220 = scalar_lea.vmem %s4, %s219
      $region28: #{_lambda_.7} parent=11 // pred_fallthru
        _
    $region12: #{_lambda_.7} parent=5 // pred_fallthru
      _
    %p221 = scmp.lt.s32.totalorder %s11, 2
    // Predicated region
    $region29: #{_lambda_.7} parent=5 // pred_check
      %p222 = pneg %p221
    $region30: #{_lambda_.7} parent=5 // pred_check_branch
      %224 = sbr.rel (%p222) target = $region32
    $region31: #{_lambda_.7} parent=5 // pred_region
      // Predicated region
      $region33: #{_lambda_.7} parent=31 // pred_check
        %p225 = pneg %p43
      $region34: #{_lambda_.7} parent=31 // pred_check_branch
        %227 = sbr.rel (%p225) target = $region36
      $region35: #{_lambda_.7} parent=31 // pred_region
        %p228 = scmp.lt.s32.totalorder %s19, 1
        %s229 = scalar_select %p228, %s19, 1
        %s230 = smul.addr %s229, 48
        %s231 = smul.addr %s230, 4
        %s232 = scalar_lea.vmem %s0, %s231
      $region36: #{_lambda_.7} parent=31 // pred_fallthru
        _
    $region32: #{_lambda_.7} parent=5 // pred_fallthru
      _
    %p233 = scmp.le.s32.totalorder 1, %s11
    %p234 = scmp.lt.s32.totalorder %s11, 3
    %p235 = pnand %p233, %p234
    %p236 = pneg %p235
    // Predicated region
    $region37: #{_lambda_.7} parent=5 // pred_check
      _
    $region38: #{_lambda_.7} parent=5 // pred_check_branch
      %238 = sbr.rel (%p235) target = $region40
    $region39: #{_lambda_.7} parent=5 // pred_region
      %s239 = ssub.s32 %s11, 1
      %p240 = scmp.lt.s32.totalorder %s21, 1
      %s241 = scalar_select %p240, %s21, 1
      %s242 = smul.addr %s241, 48
      %s243 = smul.addr %s242, 4
      %s244 = scalar_lea.vmem %s0, %s243
      %p245 = pneg %p49
      %p246 = pneg %p46
      %p247 = scmp.lt.s32.totalorder %s20, 0
      %s248 = scalar_select %p247, %s20, 0
      %s249 = smul.addr %s248, 4
      %s250 = scalar_lea.vmem %s1, %s249
      %p251 = pneg %p75
      %p252 = pneg %p72
      %p253 = scmp.lt.s32.totalorder %s20, 0
      %s254 = scalar_select %p253, %s20, 0
      %s255 = scalar_lea.vmem %s2, %s254
      %p256 = pneg %p101
      %p257 = pneg %p98
      %p258 = scmp.lt.s32.totalorder %s20, 0
      %s259 = scalar_select %p258, %s20, 0
      %s260 = scalar_lea.vmem %s3, %s259
      %p261 = pneg %p127
      %p262 = pneg %p124
      %p263 = scmp.lt.s32.totalorder %s20, 0
      %s264 = scalar_select %p263, %s20, 0
      %s265 = scalar_lea.vmem %s4, %s264
      %p266 = pneg %p153
      %p267 = pneg %p150
      %p268 = pneg %p181
      %p269 = pneg %p178
      %p270 = scmp.lt.s32.totalorder %s21, 1
      %s271 = scalar_select %p270, %s21, 1
      %p272 = scmp.lt.s32.totalorder %s20, 0
      %s273 = scalar_select %p272, %s20, 0
      %s274 = smul.addr %s271, 4
      %s275 = sadd.s32 %s273, %s274
      %s276 = smul.addr %s275, 4
      %s277 = scalar_lea.vmem %s5, %s276
      %p278 = scmp.lt.s32.totalorder %s21, 1
      %s279 = scalar_select %p278, %s21, 1
      %s280 = smul.addr %s279, 48
      %s281 = smul.addr %s280, 4
      %s282 = scalar_lea.vmem %s0, %s281
      %p283 = scmp.lt.s32.totalorder %s20, 0
      %s284 = scalar_select %p283, %s20, 0
      %s285 = smul.addr %s284, 4
      %s286 = scalar_lea.vmem %s1, %s285
      %p287 = scmp.lt.s32.totalorder %s20, 0
      %s288 = scalar_select %p287, %s20, 0
      %s289 = scalar_lea.vmem %s2, %s288
      %p290 = scmp.lt.s32.totalorder %s20, 0
      %s291 = scalar_select %p290, %s20, 0
      %s292 = scalar_lea.vmem %s3, %s291
      %p293 = scmp.lt.s32.totalorder %s20, 0
      %s294 = scalar_select %p293, %s20, 0
      %s295 = scalar_lea.vmem %s4, %s294
      %p296 = scmp.lt.s32.totalorder %s21, 1
      %s297 = scalar_select %p296, %s21, 1
      %p298 = scmp.lt.s32.totalorder %s20, 0
      %s299 = scalar_select %p298, %s20, 0
      %s300 = smul.addr %s297, 4
      %s301 = sadd.s32 %s299, %s300
      %s302 = smul.addr %s301, 4
      %s303 = scalar_lea.vmem %s5, %s302
      %v305 = vld [vmem:[%s282] sm:$0xff]
      %v306 = vld [vmem:[%s282 + $0x8] sm:$0xff]
      %v307 = vld [vmem:[%s282 + $0x10] sm:$0xff]
      %v308 = vld [vmem:[%s282 + $0x18] sm:$0xff]
      %v309 = vld [vmem:[%s282 + $0x20] sm:$0xff]
      %v310 = vld [vmem:[%s282 + $0x28] sm:$0xff]
      %v311 = vld [vmem:[%s282 + $0x30] sm:$0xff]
      %v312 = vld [vmem:[%s282 + $0x38] sm:$0xff]
      %v313 = vld [vmem:[%s282 + $0x40] sm:$0xff]
      %v314 = vld [vmem:[%s282 + $0x48] sm:$0xff]
      %v315 = vld [vmem:[%s282 + $0x50] sm:$0xff]
      %v316 = vld [vmem:[%s282 + $0x58] sm:$0xff]
      %v317 = vld [vmem:[%s282 + $0x60] sm:$0xff]
      %v318 = vld [vmem:[%s282 + $0x68] sm:$0xff]
      %v319 = vld [vmem:[%s282 + $0x70] sm:$0xff]
      %v320 = vld [vmem:[%s282 + $0x78] sm:$0xff]
      %v321 = vld [vmem:[%s286] sm:$0xf]
      %v322 = vld [vmem:[%s286 + $0x4] sm:$0xf]
      %v323 = vld [vmem:[%s286 + $0x8] sm:$0xf]
      %v324 = vld [vmem:[%s286 + $0xc] sm:$0xf]
      %v325 = vld [vmem:[%s286 + $0x10] sm:$0xf]
      %v326 = vld [vmem:[%s286 + $0x14] sm:$0xf]
      %v327 = vld [vmem:[%s286 + $0x18] sm:$0xf]
      %v328 = vld [vmem:[%s286 + $0x1c] sm:$0xf]
      %v329 = vld [vmem:[%s286 + $0x20] sm:$0xf]
      %v330 = vld [vmem:[%s286 + $0x24] sm:$0xf]
      %v331 = vld [vmem:[%s286 + $0x28] sm:$0xf]
      %v332 = vld [vmem:[%s286 + $0x2c] sm:$0xf]
      %v333 = vld [vmem:[%s286 + $0x30] sm:$0xf]
      %v334 = vld [vmem:[%s286 + $0x34] sm:$0xf]
      %v335 = vld [vmem:[%s286 + $0x38] sm:$0xf]
      %v336 = vld [vmem:[%s286 + $0x3c] sm:$0xf]
      %v337 = vld [vmem:[%s286 + $0x40] sm:$0xf]
      %v338 = vld [vmem:[%s286 + $0x44] sm:$0xf]
      %v339 = vld [vmem:[%s286 + $0x48] sm:$0xf]
      %v340 = vld [vmem:[%s286 + $0x4c] sm:$0xf]
      %v341 = vld [vmem:[%s286 + $0x50] sm:$0xf]
      %v342 = vld [vmem:[%s286 + $0x54] sm:$0xf]
      %v343 = vld [vmem:[%s286 + $0x58] sm:$0xf]
      %v344 = vld [vmem:[%s286 + $0x5c] sm:$0xf]
      %v345 = vld [vmem:[%s286 + $0x60] sm:$0xf]
      %v346 = vld [vmem:[%s286 + $0x64] sm:$0xf]
      %v347 = vld [vmem:[%s286 + $0x68] sm:$0xf]
      %v348 = vld [vmem:[%s286 + $0x6c] sm:$0xf]
      %v349 = vld [vmem:[%s286 + $0x70] sm:$0xf]
      %v350 = vld [vmem:[%s286 + $0x74] sm:$0xf]
      %v351 = vld [vmem:[%s286 + $0x78] sm:$0xf]
      %v352 = vld [vmem:[%s286 + $0x7c] sm:$0xf]
      %v353 = vld [vmem:[%s286 + $0x80] sm:$0xf]
      %v354 = vld [vmem:[%s286 + $0x84] sm:$0xf]
      %v355 = vld [vmem:[%s286 + $0x88] sm:$0xf]
      %v356 = vld [vmem:[%s286 + $0x8c] sm:$0xf]
      %v357 = vld [vmem:[%s286 + $0x90] sm:$0xf]
      %v358 = vld [vmem:[%s286 + $0x94] sm:$0xf]
      %v359 = vld [vmem:[%s286 + $0x98] sm:$0xf]
      %v360 = vld [vmem:[%s286 + $0x9c] sm:$0xf]
      %v361 = vld [vmem:[%s286 + $0xa0] sm:$0xf]
      %v362 = vld [vmem:[%s286 + $0xa4] sm:$0xf]
      %v363 = vld [vmem:[%s286 + $0xa8] sm:$0xf]
      %v364 = vld [vmem:[%s286 + $0xac] sm:$0xf]
      %v365 = vld [vmem:[%s286 + $0xb0] sm:$0xf]
      %v366 = vld [vmem:[%s286 + $0xb4] sm:$0xf]
      %v367 = vld [vmem:[%s286 + $0xb8] sm:$0xf]
      %v368 = vld [vmem:[%s286 + $0xbc] sm:$0xf]
      %v369 = vld [vmem:[%s286 + $0xc0] sm:$0xf]
      %v370 = vld [vmem:[%s286 + $0xc4] sm:$0xf]
      %v371 = vld [vmem:[%s286 + $0xc8] sm:$0xf]
      %v372 = vld [vmem:[%s286 + $0xcc] sm:$0xf]
      %v373 = vld [vmem:[%s286 + $0xd0] sm:$0xf]
      %v374 = vld [vmem:[%s286 + $0xd4] sm:$0xf]
      %v375 = vld [vmem:[%s286 + $0xd8] sm:$0xf]
      %v376 = vld [vmem:[%s286 + $0xdc] sm:$0xf]
      %v377 = vld [vmem:[%s286 + $0xe0] sm:$0xf]
      %v378 = vld [vmem:[%s286 + $0xe4] sm:$0xf]
      %v379 = vld [vmem:[%s286 + $0xe8] sm:$0xf]
      %v380 = vld [vmem:[%s286 + $0xec] sm:$0xf]
      %v381 = vld [vmem:[%s286 + $0xf0] sm:$0xf]
      %v382 = vld [vmem:[%s286 + $0xf4] sm:$0xf]
      %v383 = vld [vmem:[%s286 + $0xf8] sm:$0xf]
      %v384 = vld [vmem:[%s286 + $0xfc] sm:$0xf]
      %v385 = vld [vmem:[%s286 + $0x100] sm:$0xf]
      %v386 = vld [vmem:[%s286 + $0x104] sm:$0xf]
      %v387 = vld [vmem:[%s286 + $0x108] sm:$0xf]
      %v388 = vld [vmem:[%s286 + $0x10c] sm:$0xf]
      %v389 = vld [vmem:[%s286 + $0x110] sm:$0xf]
      %v390 = vld [vmem:[%s286 + $0x114] sm:$0xf]
      %v391 = vld [vmem:[%s286 + $0x118] sm:$0xf]
      %v392 = vld [vmem:[%s286 + $0x11c] sm:$0xf]
      %v393 = vld [vmem:[%s286 + $0x120] sm:$0xf]
      %v394 = vld [vmem:[%s286 + $0x124] sm:$0xf]
      %v395 = vld [vmem:[%s286 + $0x128] sm:$0xf]
      %v396 = vld [vmem:[%s286 + $0x12c] sm:$0xf]
      %v397 = vld [vmem:[%s286 + $0x130] sm:$0xf]
      %v398 = vld [vmem:[%s286 + $0x134] sm:$0xf]
      %v399 = vld [vmem:[%s286 + $0x138] sm:$0xf]
      %v400 = vld [vmem:[%s286 + $0x13c] sm:$0xf]
      %v401 = vld [vmem:[%s286 + $0x140] sm:$0xf]
      %v402 = vld [vmem:[%s286 + $0x144] sm:$0xf]
      %v403 = vld [vmem:[%s286 + $0x148] sm:$0xf]
      %v404 = vld [vmem:[%s286 + $0x14c] sm:$0xf]
      %v405 = vld [vmem:[%s286 + $0x150] sm:$0xf]
      %v406 = vld [vmem:[%s286 + $0x154] sm:$0xf]
      %v407 = vld [vmem:[%s286 + $0x158] sm:$0xf]
      %v408 = vld [vmem:[%s286 + $0x15c] sm:$0xf]
      %v409 = vld [vmem:[%s286 + $0x160] sm:$0xf]
      %v410 = vld [vmem:[%s286 + $0x164] sm:$0xf]
      %v411 = vld [vmem:[%s286 + $0x168] sm:$0xf]
      %v412 = vld [vmem:[%s286 + $0x16c] sm:$0xf]
      %v413 = vld [vmem:[%s286 + $0x170] sm:$0xf]
      %v414 = vld [vmem:[%s286 + $0x174] sm:$0xf]
      %v415 = vld [vmem:[%s286 + $0x178] sm:$0xf]
      %v416 = vld [vmem:[%s286 + $0x17c] sm:$0xf]
      %v417 = vld [vmem:[%s286 + $0x180] sm:$0xf]
      %v418 = vld [vmem:[%s286 + $0x184] sm:$0xf]
      %v419 = vld [vmem:[%s286 + $0x188] sm:$0xf]
      %v420 = vld [vmem:[%s286 + $0x18c] sm:$0xf]
      %v421 = vld [vmem:[%s286 + $0x190] sm:$0xf]
      %v422 = vld [vmem:[%s286 + $0x194] sm:$0xf]
      %v423 = vld [vmem:[%s286 + $0x198] sm:$0xf]
      %v424 = vld [vmem:[%s286 + $0x19c] sm:$0xf]
      %v425 = vld [vmem:[%s286 + $0x1a0] sm:$0xf]
      %v426 = vld [vmem:[%s286 + $0x1a4] sm:$0xf]
      %v427 = vld [vmem:[%s286 + $0x1a8] sm:$0xf]
      %v428 = vld [vmem:[%s286 + $0x1ac] sm:$0xf]
      %v429 = vld [vmem:[%s286 + $0x1b0] sm:$0xf]
      %v430 = vld [vmem:[%s286 + $0x1b4] sm:$0xf]
      %v431 = vld [vmem:[%s286 + $0x1b8] sm:$0xf]
      %v432 = vld [vmem:[%s286 + $0x1bc] sm:$0xf]
      %v433 = vld [vmem:[%s286 + $0x1c0] sm:$0xf]
      %v434 = vld [vmem:[%s286 + $0x1c4] sm:$0xf]
      %v435 = vld [vmem:[%s286 + $0x1c8] sm:$0xf]
      %v436 = vld [vmem:[%s286 + $0x1cc] sm:$0xf]
      %v437 = vld [vmem:[%s286 + $0x1d0] sm:$0xf]
      %v438 = vld [vmem:[%s286 + $0x1d4] sm:$0xf]
      %v439 = vld [vmem:[%s286 + $0x1d8] sm:$0xf]
      %v440 = vld [vmem:[%s286 + $0x1dc] sm:$0xf]
      %v441 = vld [vmem:[%s286 + $0x1e0] sm:$0xf]
      %v442 = vld [vmem:[%s286 + $0x1e4] sm:$0xf]
      %v443 = vld [vmem:[%s286 + $0x1e8] sm:$0xf]
      %v444 = vld [vmem:[%s286 + $0x1ec] sm:$0xf]
      %v445 = vld [vmem:[%s286 + $0x1f0] sm:$0xf]
      %v446 = vld [vmem:[%s286 + $0x1f4] sm:$0xf]
      %v447 = vld [vmem:[%s286 + $0x1f8] sm:$0xf]
      %v448 = vld [vmem:[%s286 + $0x1fc] sm:$0xf]
      %v449 = vld [vmem:[%s282 + $0x40] sm:$0xff]
      %v450 = vld [vmem:[%s282 + $0x48] sm:$0xff]
      %v451 = vld [vmem:[%s282 + $0x50] sm:$0xff]
      %v452 = vld [vmem:[%s282 + $0x58] sm:$0xff]
      %v453 = vld [vmem:[%s282 + $0x60] sm:$0xff]
      %v454 = vld [vmem:[%s282 + $0x68] sm:$0xff]
      %v455 = vld [vmem:[%s282 + $0x70] sm:$0xff]
      %v456 = vld [vmem:[%s282 + $0x78] sm:$0xff]
      %v457 = vld [vmem:[%s282 + $0x80] sm:$0xff]
      %v458 = vld [vmem:[%s282 + $0x88] sm:$0xff]
      %v459 = vld [vmem:[%s282 + $0x90] sm:$0xff]
      %v460 = vld [vmem:[%s282 + $0x98] sm:$0xff]
      %v461 = vld [vmem:[%s282 + $0xa0] sm:$0xff]
      %v462 = vld [vmem:[%s282 + $0xa8] sm:$0xff]
      %v463 = vld [vmem:[%s282 + $0xb0] sm:$0xff]
      %v464 = vld [vmem:[%s282 + $0xb8] sm:$0xff]
      %s465 = scalar_lea.vmem %s286, 512
      %v466 = vld [vmem:[%s465] sm:$0xf]
      %v467 = vld [vmem:[%s465 + $0x4] sm:$0xf]
      %v468 = vld [vmem:[%s465 + $0x8] sm:$0xf]
      %v469 = vld [vmem:[%s465 + $0xc] sm:$0xf]
      %v470 = vld [vmem:[%s465 + $0x10] sm:$0xf]
      %v471 = vld [vmem:[%s465 + $0x14] sm:$0xf]
      %v472 = vld [vmem:[%s465 + $0x18] sm:$0xf]
      %v473 = vld [vmem:[%s465 + $0x1c] sm:$0xf]
      %v474 = vld [vmem:[%s465 + $0x20] sm:$0xf]
      %v475 = vld [vmem:[%s465 + $0x24] sm:$0xf]
      %v476 = vld [vmem:[%s465 + $0x28] sm:$0xf]
      %v477 = vld [vmem:[%s465 + $0x2c] sm:$0xf]
      %v478 = vld [vmem:[%s465 + $0x30] sm:$0xf]
      %v479 = vld [vmem:[%s465 + $0x34] sm:$0xf]
      %v480 = vld [vmem:[%s465 + $0x38] sm:$0xf]
      %v481 = vld [vmem:[%s465 + $0x3c] sm:$0xf]
      %v482 = vld [vmem:[%s465 + $0x40] sm:$0xf]
      %v483 = vld [vmem:[%s465 + $0x44] sm:$0xf]
      %v484 = vld [vmem:[%s465 + $0x48] sm:$0xf]
      %v485 = vld [vmem:[%s465 + $0x4c] sm:$0xf]
      %v486 = vld [vmem:[%s465 + $0x50] sm:$0xf]
      %v487 = vld [vmem:[%s465 + $0x54] sm:$0xf]
      %v488 = vld [vmem:[%s465 + $0x58] sm:$0xf]
      %v489 = vld [vmem:[%s465 + $0x5c] sm:$0xf]
      %v490 = vld [vmem:[%s465 + $0x60] sm:$0xf]
      %v491 = vld [vmem:[%s465 + $0x64] sm:$0xf]
      %v492 = vld [vmem:[%s465 + $0x68] sm:$0xf]
      %v493 = vld [vmem:[%s465 + $0x6c] sm:$0xf]
      %v494 = vld [vmem:[%s465 + $0x70] sm:$0xf]
      %v495 = vld [vmem:[%s465 + $0x74] sm:$0xf]
      %v496 = vld [vmem:[%s465 + $0x78] sm:$0xf]
      %v497 = vld [vmem:[%s465 + $0x7c] sm:$0xf]
      %v498 = vld [vmem:[%s465 + $0x80] sm:$0xf]
      %v499 = vld [vmem:[%s465 + $0x84] sm:$0xf]
      %v500 = vld [vmem:[%s465 + $0x88] sm:$0xf]
      %v501 = vld [vmem:[%s465 + $0x8c] sm:$0xf]
      %v502 = vld [vmem:[%s465 + $0x90] sm:$0xf]
      %v503 = vld [vmem:[%s465 + $0x94] sm:$0xf]
      %v504 = vld [vmem:[%s465 + $0x98] sm:$0xf]
      %v505 = vld [vmem:[%s465 + $0x9c] sm:$0xf]
      %v506 = vld [vmem:[%s465 + $0xa0] sm:$0xf]
      %v507 = vld [vmem:[%s465 + $0xa4] sm:$0xf]
      %v508 = vld [vmem:[%s465 + $0xa8] sm:$0xf]
      %v509 = vld [vmem:[%s465 + $0xac] sm:$0xf]
      %v510 = vld [vmem:[%s465 + $0xb0] sm:$0xf]
      %v511 = vld [vmem:[%s465 + $0xb4] sm:$0xf]
      %v512 = vld [vmem:[%s465 + $0xb8] sm:$0xf]
      %v513 = vld [vmem:[%s465 + $0xbc] sm:$0xf]
      %v514 = vld [vmem:[%s465 + $0xc0] sm:$0xf]
      %v515 = vld [vmem:[%s465 + $0xc4] sm:$0xf]
      %v516 = vld [vmem:[%s465 + $0xc8] sm:$0xf]
      %v517 = vld [vmem:[%s465 + $0xcc] sm:$0xf]
      %v518 = vld [vmem:[%s465 + $0xd0] sm:$0xf]
      %v519 = vld [vmem:[%s465 + $0xd4] sm:$0xf]
      %v520 = vld [vmem:[%s465 + $0xd8] sm:$0xf]
      %v521 = vld [vmem:[%s465 + $0xdc] sm:$0xf]
      %v522 = vld [vmem:[%s465 + $0xe0] sm:$0xf]
      %v523 = vld [vmem:[%s465 + $0xe4] sm:$0xf]
      %v524 = vld [vmem:[%s465 + $0xe8] sm:$0xf]
      %v525 = vld [vmem:[%s465 + $0xec] sm:$0xf]
      %v526 = vld [vmem:[%s465 + $0xf0] sm:$0xf]
      %v527 = vld [vmem:[%s465 + $0xf4] sm:$0xf]
      %v528 = vld [vmem:[%s465 + $0xf8] sm:$0xf]
      %v529 = vld [vmem:[%s465 + $0xfc] sm:$0xf]
      %v530 = vld [vmem:[%s465 + $0x100] sm:$0xf]
      %v531 = vld [vmem:[%s465 + $0x104] sm:$0xf]
      %v532 = vld [vmem:[%s465 + $0x108] sm:$0xf]
      %v533 = vld [vmem:[%s465 + $0x10c] sm:$0xf]
      %v534 = vld [vmem:[%s465 + $0x110] sm:$0xf]
      %v535 = vld [vmem:[%s465 + $0x114] sm:$0xf]
      %v536 = vld [vmem:[%s465 + $0x118] sm:$0xf]
      %v537 = vld [vmem:[%s465 + $0x11c] sm:$0xf]
      %v538 = vld [vmem:[%s465 + $0x120] sm:$0xf]
      %v539 = vld [vmem:[%s465 + $0x124] sm:$0xf]
      %v540 = vld [vmem:[%s465 + $0x128] sm:$0xf]
      %v541 = vld [vmem:[%s465 + $0x12c] sm:$0xf]
      %v542 = vld [vmem:[%s465 + $0x130] sm:$0xf]
      %v543 = vld [vmem:[%s465 + $0x134] sm:$0xf]
      %v544 = vld [vmem:[%s465 + $0x138] sm:$0xf]
      %v545 = vld [vmem:[%s465 + $0x13c] sm:$0xf]
      %v546 = vld [vmem:[%s465 + $0x140] sm:$0xf]
      %v547 = vld [vmem:[%s465 + $0x144] sm:$0xf]
      %v548 = vld [vmem:[%s465 + $0x148] sm:$0xf]
      %v549 = vld [vmem:[%s465 + $0x14c] sm:$0xf]
      %v550 = vld [vmem:[%s465 + $0x150] sm:$0xf]
      %v551 = vld [vmem:[%s465 + $0x154] sm:$0xf]
      %v552 = vld [vmem:[%s465 + $0x158] sm:$0xf]
      %v553 = vld [vmem:[%s465 + $0x15c] sm:$0xf]
      %v554 = vld [vmem:[%s465 + $0x160] sm:$0xf]
      %v555 = vld [vmem:[%s465 + $0x164] sm:$0xf]
      %v556 = vld [vmem:[%s465 + $0x168] sm:$0xf]
      %v557 = vld [vmem:[%s465 + $0x16c] sm:$0xf]
      %v558 = vld [vmem:[%s465 + $0x170] sm:$0xf]
      %v559 = vld [vmem:[%s465 + $0x174] sm:$0xf]
      %v560 = vld [vmem:[%s465 + $0x178] sm:$0xf]
      %v561 = vld [vmem:[%s465 + $0x17c] sm:$0xf]
      %v562 = vld [vmem:[%s465 + $0x180] sm:$0xf]
      %v563 = vld [vmem:[%s465 + $0x184] sm:$0xf]
      %v564 = vld [vmem:[%s465 + $0x188] sm:$0xf]
      %v565 = vld [vmem:[%s465 + $0x18c] sm:$0xf]
      %v566 = vld [vmem:[%s465 + $0x190] sm:$0xf]
      %v567 = vld [vmem:[%s465 + $0x194] sm:$0xf]
      %v568 = vld [vmem:[%s465 + $0x198] sm:$0xf]
      %v569 = vld [vmem:[%s465 + $0x19c] sm:$0xf]
      %v570 = vld [vmem:[%s465 + $0x1a0] sm:$0xf]
      %v571 = vld [vmem:[%s465 + $0x1a4] sm:$0xf]
      %v572 = vld [vmem:[%s465 + $0x1a8] sm:$0xf]
      %v573 = vld [vmem:[%s465 + $0x1ac] sm:$0xf]
      %v574 = vld [vmem:[%s465 + $0x1b0] sm:$0xf]
      %v575 = vld [vmem:[%s465 + $0x1b4] sm:$0xf]
      %v576 = vld [vmem:[%s465 + $0x1b8] sm:$0xf]
      %v577 = vld [vmem:[%s465 + $0x1bc] sm:$0xf]
      %v578 = vld [vmem:[%s465 + $0x1c0] sm:$0xf]
      %v579 = vld [vmem:[%s465 + $0x1c4] sm:$0xf]
      %v580 = vld [vmem:[%s465 + $0x1c8] sm:$0xf]
      %v581 = vld [vmem:[%s465 + $0x1cc] sm:$0xf]
      %v582 = vld [vmem:[%s465 + $0x1d0] sm:$0xf]
      %v583 = vld [vmem:[%s465 + $0x1d4] sm:$0xf]
      %v584 = vld [vmem:[%s465 + $0x1d8] sm:$0xf]
      %v585 = vld [vmem:[%s465 + $0x1dc] sm:$0xf]
      %v586 = vld [vmem:[%s465 + $0x1e0] sm:$0xf]
      %v587 = vld [vmem:[%s465 + $0x1e4] sm:$0xf]
      %v588 = vld [vmem:[%s465 + $0x1e8] sm:$0xf]
      %v589 = vld [vmem:[%s465 + $0x1ec] sm:$0xf]
      %v590 = vld [vmem:[%s465 + $0x1f0] sm:$0xf]
      %v591 = vld [vmem:[%s465 + $0x1f4] sm:$0xf]
      %v592 = vld [vmem:[%s465 + $0x1f8] sm:$0xf]
      %v593 = vld [vmem:[%s465 + $0x1fc] sm:$0xf]
      %v610 = vunpack.c.l.b16 %v449
      %v611 = vunpack.c.h.b16 %v449
      %v612 = vunpack.c.l.b16 %v450
      %v613 = vunpack.c.h.b16 %v450
      %v614 = vunpack.c.l.b16 %v451
      %v615 = vunpack.c.h.b16 %v451
      %v616 = vunpack.c.l.b16 %v452
      %v617 = vunpack.c.h.b16 %v452
      %v618 = vunpack.c.l.b16 %v453
      %v619 = vunpack.c.h.b16 %v453
      %v620 = vunpack.c.l.b16 %v454
      %v621 = vunpack.c.h.b16 %v454
      %v622 = vunpack.c.l.b16 %v455
      %v623 = vunpack.c.h.b16 %v455
      %v624 = vunpack.c.l.b16 %v456
      %v625 = vunpack.c.h.b16 %v456
      %v626 = vunpack.c.l.b16 %v457
      %v627 = vunpack.c.h.b16 %v457
      %v628 = vunpack.c.l.b16 %v458
      %v629 = vunpack.c.h.b16 %v458
      %v630 = vunpack.c.l.b16 %v459
      %v631 = vunpack.c.h.b16 %v459
      %v632 = vunpack.c.l.b16 %v460
      %v633 = vunpack.c.h.b16 %v460
      %v634 = vunpack.c.l.b16 %v461
      %v635 = vunpack.c.h.b16 %v461
      %v636 = vunpack.c.l.b16 %v462
      %v637 = vunpack.c.h.b16 %v462
      %v638 = vunpack.c.l.b16 %v463
      %v639 = vunpack.c.h.b16 %v463
      %v640 = vunpack.c.l.b16 %v464
      %v641 = vunpack.c.h.b16 %v464
      %v642 = vpack.c.b16 %v618, %v610
      %v643 = vpack.c.b16 %v619, %v611
      %v644 = vpack.c.b16 %v620, %v612
      %v645 = vpack.c.b16 %v621, %v613
      %v646 = vpack.c.b16 %v622, %v614
      %v647 = vpack.c.b16 %v623, %v615
      %v648 = vpack.c.b16 %v624, %v616
      %v649 = vpack.c.b16 %v625, %v617
      %v650 = vpack.c.b16 %v634, %v626
      %v651 = vpack.c.b16 %v635, %v627
      %v652 = vpack.c.b16 %v636, %v628
      %v653 = vpack.c.b16 %v637, %v629
      %v654 = vpack.c.b16 %v638, %v630
      %v655 = vpack.c.b16 %v639, %v631
      %v656 = vpack.c.b16 %v640, %v632
      %v657 = vpack.c.b16 %v641, %v633
      %v802 = vunpack.c.l.b16 %v466
      %v803 = vunpack.c.l.b16 %v467
      %v804 = vunpack.c.l.b16 %v468
      %v805 = vunpack.c.l.b16 %v469
      %v806 = vunpack.c.l.b16 %v470
      %v807 = vunpack.c.l.b16 %v471
      %v808 = vunpack.c.l.b16 %v472
      %v809 = vunpack.c.l.b16 %v473
      %v810 = vunpack.c.l.b16 %v474
      %v811 = vunpack.c.l.b16 %v475
      %v812 = vunpack.c.l.b16 %v476
      %v813 = vunpack.c.l.b16 %v477
      %v814 = vunpack.c.l.b16 %v478
      %v815 = vunpack.c.l.b16 %v479
      %v816 = vunpack.c.l.b16 %v480
      %v817 = vunpack.c.l.b16 %v481
      %v818 = vunpack.c.l.b16 %v482
      %v819 = vunpack.c.l.b16 %v483
      %v820 = vunpack.c.l.b16 %v484
      %v821 = vunpack.c.l.b16 %v485
      %v822 = vunpack.c.l.b16 %v486
      %v823 = vunpack.c.l.b16 %v487
      %v824 = vunpack.c.l.b16 %v488
      %v825 = vunpack.c.l.b16 %v489
      %v826 = vunpack.c.l.b16 %v490
      %v827 = vunpack.c.l.b16 %v491
      %v828 = vunpack.c.l.b16 %v492
      %v829 = vunpack.c.l.b16 %v493
      %v830 = vunpack.c.l.b16 %v494
      %v831 = vunpack.c.l.b16 %v495
      %v832 = vunpack.c.l.b16 %v496
      %v833 = vunpack.c.l.b16 %v497
      %v834 = vunpack.c.l.b16 %v498
      %v835 = vunpack.c.l.b16 %v499
      %v836 = vunpack.c.l.b16 %v500
      %v837 = vunpack.c.l.b16 %v501
      %v838 = vunpack.c.l.b16 %v502
      %v839 = vunpack.c.l.b16 %v503
      %v840 = vunpack.c.l.b16 %v504
      %v841 = vunpack.c.l.b16 %v505
      %v842 = vunpack.c.l.b16 %v506
      %v843 = vunpack.c.l.b16 %v507
      %v844 = vunpack.c.l.b16 %v508
      %v845 = vunpack.c.l.b16 %v509
      %v846 = vunpack.c.l.b16 %v510
      %v847 = vunpack.c.l.b16 %v511
      %v848 = vunpack.c.l.b16 %v512
      %v849 = vunpack.c.l.b16 %v513
      %v850 = vunpack.c.l.b16 %v514
      %v851 = vunpack.c.l.b16 %v515
      %v852 = vunpack.c.l.b16 %v516
      %v853 = vunpack.c.l.b16 %v517
      %v854 = vunpack.c.l.b16 %v518
      %v855 = vunpack.c.l.b16 %v519
      %v856 = vunpack.c.l.b16 %v520
      %v857 = vunpack.c.l.b16 %v521
      %v858 = vunpack.c.l.b16 %v522
      %v859 = vunpack.c.l.b16 %v523
      %v860 = vunpack.c.l.b16 %v524
      %v861 = vunpack.c.l.b16 %v525
      %v862 = vunpack.c.l.b16 %v526
      %v863 = vunpack.c.l.b16 %v527
      %v864 = vunpack.c.l.b16 %v528
      %v865 = vunpack.c.l.b16 %v529
      %v866 = vunpack.c.l.b16 %v530
      %v867 = vunpack.c.l.b16 %v531
      %v868 = vunpack.c.l.b16 %v532
      %v869 = vunpack.c.l.b16 %v533
      %v870 = vunpack.c.l.b16 %v534
      %v871 = vunpack.c.l.b16 %v535
      %v872 = vunpack.c.l.b16 %v536
      %v873 = vunpack.c.l.b16 %v537
      %v874 = vunpack.c.l.b16 %v538
      %v875 = vunpack.c.l.b16 %v539
      %v876 = vunpack.c.l.b16 %v540
      %v877 = vunpack.c.l.b16 %v541
      %v878 = vunpack.c.l.b16 %v542
      %v879 = vunpack.c.l.b16 %v543
      %v880 = vunpack.c.l.b16 %v544
      %v881 = vunpack.c.l.b16 %v545
      %v882 = vunpack.c.l.b16 %v546
      %v883 = vunpack.c.l.b16 %v547
      %v884 = vunpack.c.l.b16 %v548
      %v885 = vunpack.c.l.b16 %v549
      %v886 = vunpack.c.l.b16 %v550
      %v887 = vunpack.c.l.b16 %v551
      %v888 = vunpack.c.l.b16 %v552
      %v889 = vunpack.c.l.b16 %v553
      %v890 = vunpack.c.l.b16 %v554
      %v891 = vunpack.c.l.b16 %v555
      %v892 = vunpack.c.l.b16 %v556
      %v893 = vunpack.c.l.b16 %v557
      %v894 = vunpack.c.l.b16 %v558
      %v895 = vunpack.c.l.b16 %v559
      %v896 = vunpack.c.l.b16 %v560
      %v897 = vunpack.c.l.b16 %v561
      %v898 = vunpack.c.l.b16 %v562
      %v899 = vunpack.c.l.b16 %v563
      %v900 = vunpack.c.l.b16 %v564
      %v901 = vunpack.c.l.b16 %v565
      %v902 = vunpack.c.l.b16 %v566
      %v903 = vunpack.c.l.b16 %v567
      %v904 = vunpack.c.l.b16 %v568
      %v905 = vunpack.c.l.b16 %v569
      %v906 = vunpack.c.l.b16 %v570
      %v907 = vunpack.c.l.b16 %v571
      %v908 = vunpack.c.l.b16 %v572
      %v909 = vunpack.c.l.b16 %v573
      %v910 = vunpack.c.l.b16 %v574
      %v911 = vunpack.c.l.b16 %v575
      %v912 = vunpack.c.l.b16 %v576
      %v913 = vunpack.c.l.b16 %v577
      %v914 = vunpack.c.l.b16 %v578
      %v915 = vunpack.c.l.b16 %v579
      %v916 = vunpack.c.l.b16 %v580
      %v917 = vunpack.c.l.b16 %v581
      %v918 = vunpack.c.l.b16 %v582
      %v919 = vunpack.c.l.b16 %v583
      %v920 = vunpack.c.l.b16 %v584
      %v921 = vunpack.c.l.b16 %v585
      %v922 = vunpack.c.l.b16 %v586
      %v923 = vunpack.c.l.b16 %v587
      %v924 = vunpack.c.l.b16 %v588
      %v925 = vunpack.c.l.b16 %v589
      %v926 = vunpack.c.l.b16 %v590
      %v927 = vunpack.c.l.b16 %v591
      %v928 = vunpack.c.l.b16 %v592
      %v929 = vunpack.c.l.b16 %v593
      %v930 = vpack.c.b16 %v803, %v802
      %v931 = vpack.c.b16 %v805, %v804
      %v932 = vpack.c.b16 %v807, %v806
      %v933 = vpack.c.b16 %v809, %v808
      %v934 = vpack.c.b16 %v811, %v810
      %v935 = vpack.c.b16 %v813, %v812
      %v936 = vpack.c.b16 %v815, %v814
      %v937 = vpack.c.b16 %v817, %v816
      %v938 = vpack.c.b16 %v819, %v818
      %v939 = vpack.c.b16 %v821, %v820
      %v940 = vpack.c.b16 %v823, %v822
      %v941 = vpack.c.b16 %v825, %v824
      %v942 = vpack.c.b16 %v827, %v826
      %v943 = vpack.c.b16 %v829, %v828
      %v944 = vpack.c.b16 %v831, %v830
      %v945 = vpack.c.b16 %v833, %v832
      %v946 = vpack.c.b16 %v835, %v834
      %v947 = vpack.c.b16 %v837, %v836
      %v948 = vpack.c.b16 %v839, %v838
      %v949 = vpack.c.b16 %v841, %v840
      %v950 = vpack.c.b16 %v843, %v842
      %v951 = vpack.c.b16 %v845, %v844
      %v952 = vpack.c.b16 %v847, %v846
      %v953 = vpack.c.b16 %v849, %v848
      %v954 = vpack.c.b16 %v851, %v850
      %v955 = vpack.c.b16 %v853, %v852
      %v956 = vpack.c.b16 %v855, %v854
      %v957 = vpack.c.b16 %v857, %v856
      %v958 = vpack.c.b16 %v859, %v858
      %v959 = vpack.c.b16 %v861, %v860
      %v960 = vpack.c.b16 %v863, %v862
      %v961 = vpack.c.b16 %v865, %v864
      %v962 = vpack.c.b16 %v867, %v866
      %v963 = vpack.c.b16 %v869, %v868
      %v964 = vpack.c.b16 %v871, %v870
      %v965 = vpack.c.b16 %v873, %v872
      %v966 = vpack.c.b16 %v875, %v874
      %v967 = vpack.c.b16 %v877, %v876
      %v968 = vpack.c.b16 %v879, %v878
      %v969 = vpack.c.b16 %v881, %v880
      %v970 = vpack.c.b16 %v883, %v882
      %v971 = vpack.c.b16 %v885, %v884
      %v972 = vpack.c.b16 %v887, %v886
      %v973 = vpack.c.b16 %v889, %v888
      %v974 = vpack.c.b16 %v891, %v890
      %v975 = vpack.c.b16 %v893, %v892
      %v976 = vpack.c.b16 %v895, %v894
      %v977 = vpack.c.b16 %v897, %v896
      %v978 = vpack.c.b16 %v899, %v898
      %v979 = vpack.c.b16 %v901, %v900
      %v980 = vpack.c.b16 %v903, %v902
      %v981 = vpack.c.b16 %v905, %v904
      %v982 = vpack.c.b16 %v907, %v906
      %v983 = vpack.c.b16 %v909, %v908
      %v984 = vpack.c.b16 %v911, %v910
      %v985 = vpack.c.b16 %v913, %v912
      %v986 = vpack.c.b16 %v915, %v914
      %v987 = vpack.c.b16 %v917, %v916
      %v988 = vpack.c.b16 %v919, %v918
      %v989 = vpack.c.b16 %v921, %v920
      %v990 = vpack.c.b16 %v923, %v922
      %v991 = vpack.c.b16 %v925, %v924
      %v992 = vpack.c.b16 %v927, %v926
      %v993 = vpack.c.b16 %v929, %v928
      %1058 = vmatprep.subr.bf16.mxu0 0
      %1059 = vmatpush1.bf16.msra.mxu0 %v930
      %1060 = vmatprep.subr.bf16.mxu0 0
      %1061 = vmatpush1.bf16.msra.mxu0 %v931
      %1062 = vmatprep.subr.bf16.mxu0 0
      %1063 = vmatpush1.bf16.msra.mxu0 %v932
      %1064 = vmatprep.subr.bf16.mxu0 0
      %1065 = vmatpush1.bf16.msra.mxu0 %v933
      %1066 = vmatprep.subr.bf16.mxu0 0
      %1067 = vmatpush1.bf16.msra.mxu0 %v934
      %1068 = vmatprep.subr.bf16.mxu0 0
      %1069 = vmatpush1.bf16.msra.mxu0 %v935
      %1070 = vmatprep.subr.bf16.mxu0 0
      %1071 = vmatpush1.bf16.msra.mxu0 %v936
      %1072 = vmatprep.subr.bf16.mxu0 0
      %1073 = vmatpush1.bf16.msra.mxu0 %v937
      %1074 = vmatprep.subr.bf16.mxu0 0
      %1075 = vmatpush1.bf16.msra.mxu0 %v938
      %1076 = vmatprep.subr.bf16.mxu0 0
      %1077 = vmatpush1.bf16.msra.mxu0 %v939
      %1078 = vmatprep.subr.bf16.mxu0 0
      %1079 = vmatpush1.bf16.msra.mxu0 %v940
      %1080 = vmatprep.subr.bf16.mxu0 0
      %1081 = vmatpush1.bf16.msra.mxu0 %v941
      %1082 = vmatprep.subr.bf16.mxu0 0
      %1083 = vmatpush1.bf16.msra.mxu0 %v942
      %1084 = vmatprep.subr.bf16.mxu0 0
      %1085 = vmatpush1.bf16.msra.mxu0 %v943
      %1086 = vmatprep.subr.bf16.mxu0 0
      %1087 = vmatpush1.bf16.msra.mxu0 %v944
      %1088 = vmatprep.subr.bf16.mxu0 0
      %1089 = vmatpush1.bf16.msra.mxu0 %v945
      %1090 = vmatprep.mubr.bf16.mxu0 %v643
      %1091 = vmatmul.mubr.bf16.gmra.mrb[0].mxu0 %v642
      %v1092 = vpop.f32.mrb[0].mxu0
      %v1093 = vadd.f32 0.0, %v1092
      %v1094 = vpop.f32.mrb[0].mxu0
      %v1095 = vpop.f32.mrb[0].mxu0
      %v1096 = vadd.f32 0.0, %v1095
      %v1097 = vpop.f32.mrb[0].mxu0
      %1098 = vmatprep.mubr.bf16.mxu0 %v651
      %1099 = vmatmul.mubr.bf16.gmra.mrb[0].mxu0 %v650
      %v1100 = vpop.f32.mrb[0].mxu0
      %v1101 = vadd.f32 0.0, %v1100
      %v1102 = vpop.f32.mrb[0].mxu0
      %v1103 = vpop.f32.mrb[0].mxu0
      %v1104 = vadd.f32 0.0, %v1103
      %v1105 = vpop.f32.mrb[0].mxu0
      %1106 = vdwg.mxu0
      %1107 = vmatprep.subr.bf16.mxu0 0
      %1108 = vmatpush1.bf16.msra.mxu0 %v946
      %1109 = vmatprep.subr.bf16.mxu0 0
      %1110 = vmatpush1.bf16.msra.mxu0 %v947
      %1111 = vmatprep.subr.bf16.mxu0 0
      %1112 = vmatpush1.bf16.msra.mxu0 %v948
      %1113 = vmatprep.subr.bf16.mxu0 0
      %1114 = vmatpush1.bf16.msra.mxu0 %v949
      %1115 = vmatprep.subr.bf16.mxu0 0
      %1116 = vmatpush1.bf16.msra.mxu0 %v950
      %1117 = vmatprep.subr.bf16.mxu0 0
      %1118 = vmatpush1.bf16.msra.mxu0 %v951
      %1119 = vmatprep.subr.bf16.mxu0 0
      %1120 = vmatpush1.bf16.msra.mxu0 %v952
      %1121 = vmatprep.subr.bf16.mxu0 0
      %1122 = vmatpush1.bf16.msra.mxu0 %v953
      %1123 = vmatprep.subr.bf16.mxu0 0
      %1124 = vmatpush1.bf16.msra.mxu0 %v954
      %1125 = vmatprep.subr.bf16.mxu0 0
      %1126 = vmatpush1.bf16.msra.mxu0 %v955
      %1127 = vmatprep.subr.bf16.mxu0 0
      %1128 = vmatpush1.bf16.msra.mxu0 %v956
      %1129 = vmatprep.subr.bf16.mxu0 0
      %1130 = vmatpush1.bf16.msra.mxu0 %v957
      %1131 = vmatprep.subr.bf16.mxu0 0
      %1132 = vmatpush1.bf16.msra.mxu0 %v958
      %1133 = vmatprep.subr.bf16.mxu0 0
      %1134 = vmatpush1.bf16.msra.mxu0 %v959
      %1135 = vmatprep.subr.bf16.mxu0 0
      %1136 = vmatpush1.bf16.msra.mxu0 %v960
      %1137 = vmatprep.subr.bf16.mxu0 0
      %1138 = vmatpush1.bf16.msra.mxu0 %v961
      %1139 = vmatprep.mubr.bf16.mxu0 %v645
      %1140 = vmatmul.mubr.bf16.gmra.mrb[0].mxu0 %v644
      %v1141 = vpop.f32.mrb[0].mxu0
      %v1142 = vadd.f32 %v1093, %v1141
      %v1143 = vpop.f32.mrb[0].mxu0
      %v1144 = vpop.f32.mrb[0].mxu0
      %v1145 = vadd.f32 %v1096, %v1144
      %v1146 = vpop.f32.mrb[0].mxu0
      %1147 = vmatprep.mubr.bf16.mxu0 %v653
      %1148 = vmatmul.mubr.bf16.gmra.mrb[0].mxu0 %v652
      %v1149 = vpop.f32.mrb[0].mxu0
      %v1150 = vadd.f32 %v1101, %v1149
      %v1151 = vpop.f32.mrb[0].mxu0
      %v1152 = vpop.f32.mrb[0].mxu0
      %v1153 = vadd.f32 %v1104, %v1152
      %v1154 = vpop.f32.mrb[0].mxu0
      %1155 = vdwg.mxu0
      %1156 = vmatprep.subr.bf16.mxu0 0
      %1157 = vmatpush1.bf16.msra.mxu0 %v962
      %1158 = vmatprep.subr.bf16.mxu0 0
      %1159 = vmatpush1.bf16.msra.mxu0 %v963
      %1160 = vmatprep.subr.bf16.mxu0 0
      %1161 = vmatpush1.bf16.msra.mxu0 %v964
      %1162 = vmatprep.subr.bf16.mxu0 0
      %1163 = vmatpush1.bf16.msra.mxu0 %v965
      %1164 = vmatprep.subr.bf16.mxu0 0
      %1165 = vmatpush1.bf16.msra.mxu0 %v966
      %1166 = vmatprep.subr.bf16.mxu0 0
      %1167 = vmatpush1.bf16.msra.mxu0 %v967
      %1168 = vmatprep.subr.bf16.mxu0 0
      %1169 = vmatpush1.bf16.msra.mxu0 %v968
      %1170 = vmatprep.subr.bf16.mxu0 0
      %1171 = vmatpush1.bf16.msra.mxu0 %v969
      %1172 = vmatprep.subr.bf16.mxu0 0
      %1173 = vmatpush1.bf16.msra.mxu0 %v970
      %1174 = vmatprep.subr.bf16.mxu0 0
      %1175 = vmatpush1.bf16.msra.mxu0 %v971
      %1176 = vmatprep.subr.bf16.mxu0 0
      %1177 = vmatpush1.bf16.msra.mxu0 %v972
      %1178 = vmatprep.subr.bf16.mxu0 0
      %1179 = vmatpush1.bf16.msra.mxu0 %v973
      %1180 = vmatprep.subr.bf16.mxu0 0
      %1181 = vmatpush1.bf16.msra.mxu0 %v974
      %1182 = vmatprep.subr.bf16.mxu0 0
      %1183 = vmatpush1.bf16.msra.mxu0 %v975
      %1184 = vmatprep.subr.bf16.mxu0 0
      %1185 = vmatpush1.bf16.msra.mxu0 %v976
      %1186 = vmatprep.subr.bf16.mxu0 0
      %1187 = vmatpush1.bf16.msra.mxu0 %v977
      %1188 = vmatprep.mubr.bf16.mxu0 %v647
      %1189 = vmatmul.mubr.bf16.gmra.mrb[0].mxu0 %v646
      %v1190 = vpop.f32.mrb[0].mxu0
      %v1191 = vadd.f32 %v1142, %v1190
      %v1192 = vpop.f32.mrb[0].mxu0
      %v1193 = vpop.f32.mrb[0].mxu0
      %v1194 = vadd.f32 %v1145, %v1193
      %v1195 = vpop.f32.mrb[0].mxu0
      %1196 = vmatprep.mubr.bf16.mxu0 %v655
      %1197 = vmatmul.mubr.bf16.gmra.mrb[0].mxu0 %v654
      %v1198 = vpop.f32.mrb[0].mxu0
      %v1199 = vadd.f32 %v1150, %v1198
      %v1200 = vpop.f32.mrb[0].mxu0
      %v1201 = vpop.f32.mrb[0].mxu0
      %v1202 = vadd.f32 %v1153, %v1201
      %v1203 = vpop.f32.mrb[0].mxu0
      %1204 = vdwg.mxu0
      %1205 = vmatprep.subr.bf16.mxu0 0
      %1206 = vmatpush1.bf16.msra.mxu0 %v978
      %1207 = vmatprep.subr.bf16.mxu0 0
      %1208 = vmatpush1.bf16.msra.mxu0 %v979
      %1209 = vmatprep.subr.bf16.mxu0 0
      %1210 = vmatpush1.bf16.msra.mxu0 %v980
      %1211 = vmatprep.subr.bf16.mxu0 0
      %1212 = vmatpush1.bf16.msra.mxu0 %v981
      %1213 = vmatprep.subr.bf16.mxu0 0
      %1214 = vmatpush1.bf16.msra.mxu0 %v982
      %1215 = vmatprep.subr.bf16.mxu0 0
      %1216 = vmatpush1.bf16.msra.mxu0 %v983
      %1217 = vmatprep.subr.bf16.mxu0 0
      %1218 = vmatpush1.bf16.msra.mxu0 %v984
      %1219 = vmatprep.subr.bf16.mxu0 0
      %1220 = vmatpush1.bf16.msra.mxu0 %v985
      %1221 = vmatprep.subr.bf16.mxu0 0
      %1222 = vmatpush1.bf16.msra.mxu0 %v986
      %1223 = vmatprep.subr.bf16.mxu0 0
      %1224 = vmatpush1.bf16.msra.mxu0 %v987
      %1225 = vmatprep.subr.bf16.mxu0 0
      %1226 = vmatpush1.bf16.msra.mxu0 %v988
      %1227 = vmatprep.subr.bf16.mxu0 0
      %1228 = vmatpush1.bf16.msra.mxu0 %v989
      %1229 = vmatprep.subr.bf16.mxu0 0
      %1230 = vmatpush1.bf16.msra.mxu0 %v990
      %1231 = vmatprep.subr.bf16.mxu0 0
      %1232 = vmatpush1.bf16.msra.mxu0 %v991
      %1233 = vmatprep.subr.bf16.mxu0 0
      %1234 = vmatpush1.bf16.msra.mxu0 %v992
      %1235 = vmatprep.subr.bf16.mxu0 0
      %1236 = vmatpush1.bf16.msra.mxu0 %v993
      %1237 = vmatprep.mubr.bf16.mxu0 %v649
      %1238 = vmatmul.mubr.bf16.gmra.mrb[0].mxu0 %v648
      %v1239 = vpop.f32.mrb[0].mxu0
      %v1240 = vadd.f32 %v1191, %v1239
      %v1241 = vpop.f32.mrb[0].mxu0
      %v1242 = vpop.f32.mrb[0].mxu0
      %v1243 = vadd.f32 %v1194, %v1242
      %v1244 = vpop.f32.mrb[0].mxu0
      %1245 = vmatprep.mubr.bf16.mxu0 %v657
      %1246 = vmatmul.mubr.bf16.gmra.mrb[0].mxu0 %v656
      %v1247 = vpop.f32.mrb[0].mxu0
      %v1248 = vadd.f32 %v1199, %v1247
      %v1249 = vpop.f32.mrb[0].mxu0
      %v1250 = vpop.f32.mrb[0].mxu0
      %v1251 = vadd.f32 %v1202, %v1250
      %v1252 = vpop.f32.mrb[0].mxu0
      %1253 = vdwg.mxu0
      %v1270 = vunpack.c.l.b16 %v305
      %v1271 = vunpack.c.h.b16 %v305
      %v1272 = vunpack.c.l.b16 %v306
      %v1273 = vunpack.c.h.b16 %v306
      %v1274 = vunpack.c.l.b16 %v307
      %v1275 = vunpack.c.h.b16 %v307
      %v1276 = vunpack.c.l.b16 %v308
      %v1277 = vunpack.c.h.b16 %v308
      %v1278 = vunpack.c.l.b16 %v309
      %v1279 = vunpack.c.h.b16 %v309
      %v1280 = vunpack.c.l.b16 %v310
      %v1281 = vunpack.c.h.b16 %v310
      %v1282 = vunpack.c.l.b16 %v311
      %v1283 = vunpack.c.h.b16 %v311
      %v1284 = vunpack.c.l.b16 %v312
      %v1285 = vunpack.c.h.b16 %v312
      %v1286 = vunpack.c.l.b16 %v313
      %v1287 = vunpack.c.h.b16 %v313
      %v1288 = vunpack.c.l.b16 %v314
      %v1289 = vunpack.c.h.b16 %v314
      %v1290 = vunpack.c.l.b16 %v315
      %v1291 = vunpack.c.h.b16 %v315
      %v1292 = vunpack.c.l.b16 %v316
      %v1293 = vunpack.c.h.b16 %v316
      %v1294 = vunpack.c.l.b16 %v317
      %v1295 = vunpack.c.h.b16 %v317
      %v1296 = vunpack.c.l.b16 %v318
      %v1297 = vunpack.c.h.b16 %v318
      %v1298 = vunpack.c.l.b16 %v319
      %v1299 = vunpack.c.h.b16 %v319
      %v1300 = vunpack.c.l.b16 %v320
      %v1301 = vunpack.c.h.b16 %v320
      %v1302 = vpack.c.b16 %v1278, %v1270
      %v1303 = vpack.c.b16 %v1279, %v1271
      %v1304 = vpack.c.b16 %v1280, %v1272
      %v1305 = vpack.c.b16 %v1281, %v1273
      %v1306 = vpack.c.b16 %v1282, %v1274
      %v1307 = vpack.c.b16 %v1283, %v1275
      %v1308 = vpack.c.b16 %v1284, %v1276
      %v1309 = vpack.c.b16 %v1285, %v1277
      %v1310 = vpack.c.b16 %v1294, %v1286
      %v1311 = vpack.c.b16 %v1295, %v1287
      %v1312 = vpack.c.b16 %v1296, %v1288
      %v1313 = vpack.c.b16 %v1297, %v1289
      %v1314 = vpack.c.b16 %v1298, %v1290
      %v1315 = vpack.c.b16 %v1299, %v1291
      %v1316 = vpack.c.b16 %v1300, %v1292
      %v1317 = vpack.c.b16 %v1301, %v1293
      %v1462 = vunpack.c.l.b16 %v321
      %v1463 = vunpack.c.l.b16 %v322
      %v1464 = vunpack.c.l.b16 %v323
      %v1465 = vunpack.c.l.b16 %v324
      %v1466 = vunpack.c.l.b16 %v325
      %v1467 = vunpack.c.l.b16 %v326
      %v1468 = vunpack.c.l.b16 %v327
      %v1469 = vunpack.c.l.b16 %v328
      %v1470 = vunpack.c.l.b16 %v329
      %v1471 = vunpack.c.l.b16 %v330
      %v1472 = vunpack.c.l.b16 %v331
      %v1473 = vunpack.c.l.b16 %v332
      %v1474 = vunpack.c.l.b16 %v333
      %v1475 = vunpack.c.l.b16 %v334
      %v1476 = vunpack.c.l.b16 %v335
      %v1477 = vunpack.c.l.b16 %v336
      %v1478 = vunpack.c.l.b16 %v337
      %v1479 = vunpack.c.l.b16 %v338
      %v1480 = vunpack.c.l.b16 %v339
      %v1481 = vunpack.c.l.b16 %v340
      %v1482 = vunpack.c.l.b16 %v341
      %v1483 = vunpack.c.l.b16 %v342
      %v1484 = vunpack.c.l.b16 %v343
      %v1485 = vunpack.c.l.b16 %v344
      %v1486 = vunpack.c.l.b16 %v345
      %v1487 = vunpack.c.l.b16 %v346
      %v1488 = vunpack.c.l.b16 %v347
      %v1489 = vunpack.c.l.b16 %v348
      %v1490 = vunpack.c.l.b16 %v349
      %v1491 = vunpack.c.l.b16 %v350
      %v1492 = vunpack.c.l.b16 %v351
      %v1493 = vunpack.c.l.b16 %v352
      %v1494 = vunpack.c.l.b16 %v353
      %v1495 = vunpack.c.l.b16 %v354
      %v1496 = vunpack.c.l.b16 %v355
      %v1497 = vunpack.c.l.b16 %v356
      %v1498 = vunpack.c.l.b16 %v357
      %v1499 = vunpack.c.l.b16 %v358
      %v1500 = vunpack.c.l.b16 %v359
      %v1501 = vunpack.c.l.b16 %v360
      %v1502 = vunpack.c.l.b16 %v361
      %v1503 = vunpack.c.l.b16 %v362
      %v1504 = vunpack.c.l.b16 %v363
      %v1505 = vunpack.c.l.b16 %v364
      %v1506 = vunpack.c.l.b16 %v365
      %v1507 = vunpack.c.l.b16 %v366
      %v1508 = vunpack.c.l.b16 %v367
      %v1509 = vunpack.c.l.b16 %v368
      %v1510 = vunpack.c.l.b16 %v369
      %v1511 = vunpack.c.l.b16 %v370
      %v1512 = vunpack.c.l.b16 %v371
      %v1513 = vunpack.c.l.b16 %v372
      %v1514 = vunpack.c.l.b16 %v373
      %v1515 = vunpack.c.l.b16 %v374
      %v1516 = vunpack.c.l.b16 %v375
      %v1517 = vunpack.c.l.b16 %v376
      %v1518 = vunpack.c.l.b16 %v377
      %v1519 = vunpack.c.l.b16 %v378
      %v1520 = vunpack.c.l.b16 %v379
      %v1521 = vunpack.c.l.b16 %v380
      %v1522 = vunpack.c.l.b16 %v381
      %v1523 = vunpack.c.l.b16 %v382
      %v1524 = vunpack.c.l.b16 %v383
      %v1525 = vunpack.c.l.b16 %v384
      %v1526 = vunpack.c.l.b16 %v385
      %v1527 = vunpack.c.l.b16 %v386
      %v1528 = vunpack.c.l.b16 %v387
      %v1529 = vunpack.c.l.b16 %v388
      %v1530 = vunpack.c.l.b16 %v389
      %v1531 = vunpack.c.l.b16 %v390
      %v1532 = vunpack.c.l.b16 %v391
      %v1533 = vunpack.c.l.b16 %v392
      %v1534 = vunpack.c.l.b16 %v393
      %v1535 = vunpack.c.l.b16 %v394
      %v1536 = vunpack.c.l.b16 %v395
      %v1537 = vunpack.c.l.b16 %v396
      %v1538 = vunpack.c.l.b16 %v397
      %v1539 = vunpack.c.l.b16 %v398
      %v1540 = vunpack.c.l.b16 %v399
      %v1541 = vunpack.c.l.b16 %v400
      %v1542 = vunpack.c.l.b16 %v401
      %v1543 = vunpack.c.l.b16 %v402
      %v1544 = vunpack.c.l.b16 %v403
      %v1545 = vunpack.c.l.b16 %v404
      %v1546 = vunpack.c.l.b16 %v405
      %v1547 = vunpack.c.l.b16 %v406
      %v1548 = vunpack.c.l.b16 %v407
      %v1549 = vunpack.c.l.b16 %v408
      %v1550 = vunpack.c.l.b16 %v409
      %v1551 = vunpack.c.l.b16 %v410
      %v1552 = vunpack.c.l.b16 %v411
      %v1553 = vunpack.c.l.b16 %v412
      %v1554 = vunpack.c.l.b16 %v413
      %v1555 = vunpack.c.l.b16 %v414
      %v1556 = vunpack.c.l.b16 %v415
      %v1557 = vunpack.c.l.b16 %v416
      %v1558 = vunpack.c.l.b16 %v417
      %v1559 = vunpack.c.l.b16 %v418
      %v1560 = vunpack.c.l.b16 %v419
      %v1561 = vunpack.c.l.b16 %v420
      %v1562 = vunpack.c.l.b16 %v421
      %v1563 = vunpack.c.l.b16 %v422
      %v1564 = vunpack.c.l.b16 %v423
      %v1565 = vunpack.c.l.b16 %v424
      %v1566 = vunpack.c.l.b16 %v425
      %v1567 = vunpack.c.l.b16 %v426
      %v1568 = vunpack.c.l.b16 %v427
      %v1569 = vunpack.c.l.b16 %v428
      %v1570 = vunpack.c.l.b16 %v429
      %v1571 = vunpack.c.l.b16 %v430
      %v1572 = vunpack.c.l.b16 %v431
      %v1573 = vunpack.c.l.b16 %v432
      %v1574 = vunpack.c.l.b16 %v433
      %v1575 = vunpack.c.l.b16 %v434
      %v1576 = vunpack.c.l.b16 %v435
      %v1577 = vunpack.c.l.b16 %v436
      %v1578 = vunpack.c.l.b16 %v437
      %v1579 = vunpack.c.l.b16 %v438
      %v1580 = vunpack.c.l.b16 %v439
      %v1581 = vunpack.c.l.b16 %v440
      %v1582 = vunpack.c.l.b16 %v441
      %v1583 = vunpack.c.l.b16 %v442
      %v1584 = vunpack.c.l.b16 %v443
      %v1585 = vunpack.c.l.b16 %v444
      %v1586 = vunpack.c.l.b16 %v445
      %v1587 = vunpack.c.l.b16 %v446
      %v1588 = vunpack.c.l.b16 %v447
      %v1589 = vunpack.c.l.b16 %v448
      %v1590 = vpack.c.b16 %v1463, %v1462
      %v1591 = vpack.c.b16 %v1465, %v1464
      %v1592 = vpack.c.b16 %v1467, %v1466
      %v1593 = vpack.c.b16 %v1469, %v1468
      %v1594 = vpack.c.b16 %v1471, %v1470
      %v1595 = vpack.c.b16 %v1473, %v1472
      %v1596 = vpack.c.b16 %v1475, %v1474
      %v1597 = vpack.c.b16 %v1477, %v1476
      %v1598 = vpack.c.b16 %v1479, %v1478
      %v1599 = vpack.c.b16 %v1481, %v1480
      %v1600 = vpack.c.b16 %v1483, %v1482
      %v1601 = vpack.c.b16 %v1485, %v1484
      %v1602 = vpack.c.b16 %v1487, %v1486
      %v1603 = vpack.c.b16 %v1489, %v1488
      %v1604 = vpack.c.b16 %v1491, %v1490
      %v1605 = vpack.c.b16 %v1493, %v1492
      %v1606 = vpack.c.b16 %v1495, %v1494
      %v1607 = vpack.c.b16 %v1497, %v1496
      %v1608 = vpack.c.b16 %v1499, %v1498
      %v1609 = vpack.c.b16 %v1501, %v1500
      %v1610 = vpack.c.b16 %v1503, %v1502
      %v1611 = vpack.c.b16 %v1505, %v1504
      %v1612 = vpack.c.b16 %v1507, %v1506
      %v1613 = vpack.c.b16 %v1509, %v1508
      %v1614 = vpack.c.b16 %v1511, %v1510
      %v1615 = vpack.c.b16 %v1513, %v1512
      %v1616 = vpack.c.b16 %v1515, %v1514
      %v1617 = vpack.c.b16 %v1517, %v1516
      %v1618 = vpack.c.b16 %v1519, %v1518
      %v1619 = vpack.c.b16 %v1521, %v1520
      %v1620 = vpack.c.b16 %v1523, %v1522
      %v1621 = vpack.c.b16 %v1525, %v1524
      %v1622 = vpack.c.b16 %v1527, %v1526
      %v1623 = vpack.c.b16 %v1529, %v1528
      %v1624 = vpack.c.b16 %v1531, %v1530
      %v1625 = vpack.c.b16 %v1533, %v1532
      %v1626 = vpack.c.b16 %v1535, %v1534
      %v1627 = vpack.c.b16 %v1537, %v1536
      %v1628 = vpack.c.b16 %v1539, %v1538
      %v1629 = vpack.c.b16 %v1541, %v1540
      %v1630 = vpack.c.b16 %v1543, %v1542
      %v1631 = vpack.c.b16 %v1545, %v1544
      %v1632 = vpack.c.b16 %v1547, %v1546
      %v1633 = vpack.c.b16 %v1549, %v1548
      %v1634 = vpack.c.b16 %v1551, %v1550
      %v1635 = vpack.c.b16 %v1553, %v1552
      %v1636 = vpack.c.b16 %v1555, %v1554
      %v1637 = vpack.c.b16 %v1557, %v1556
      %v1638 = vpack.c.b16 %v1559, %v1558
      %v1639 = vpack.c.b16 %v1561, %v1560
      %v1640 = vpack.c.b16 %v1563, %v1562
      %v1641 = vpack.c.b16 %v1565, %v1564
      %v1642 = vpack.c.b16 %v1567, %v1566
      %v1643 = vpack.c.b16 %v1569, %v1568
      %v1644 = vpack.c.b16 %v1571, %v1570
      %v1645 = vpack.c.b16 %v1573, %v1572
      %v1646 = vpack.c.b16 %v1575, %v1574
      %v1647 = vpack.c.b16 %v1577, %v1576
      %v1648 = vpack.c.b16 %v1579, %v1578
      %v1649 = vpack.c.b16 %v1581, %v1580
      %v1650 = vpack.c.b16 %v1583, %v1582
      %v1651 = vpack.c.b16 %v1585, %v1584
      %v1652 = vpack.c.b16 %v1587, %v1586
      %v1653 = vpack.c.b16 %v1589, %v1588
      %1718 = vmatprep.subr.bf16.mxu0 0
      %1719 = vmatpush1.bf16.msra.mxu0 %v1590
      %1720 = vmatprep.subr.bf16.mxu0 0
      %1721 = vmatpush1.bf16.msra.mxu0 %v1591
      %1722 = vmatprep.subr.bf16.mxu0 0
      %1723 = vmatpush1.bf16.msra.mxu0 %v1592
      %1724 = vmatprep.subr.bf16.mxu0 0
      %1725 = vmatpush1.bf16.msra.mxu0 %v1593
      %1726 = vmatprep.subr.bf16.mxu0 0
      %1727 = vmatpush1.bf16.msra.mxu0 %v1594
      %1728 = vmatprep.subr.bf16.mxu0 0
      %1729 = vmatpush1.bf16.msra.mxu0 %v1595
      %1730 = vmatprep.subr.bf16.mxu0 0
      %1731 = vmatpush1.bf16.msra.mxu0 %v1596
      %1732 = vmatprep.subr.bf16.mxu0 0
      %1733 = vmatpush1.bf16.msra.mxu0 %v1597
      %1734 = vmatprep.subr.bf16.mxu0 0
      %1735 = vmatpush1.bf16.msra.mxu0 %v1598
      %1736 = vmatprep.subr.bf16.mxu0 0
      %1737 = vmatpush1.bf16.msra.mxu0 %v1599
      %1738 = vmatprep.subr.bf16.mxu0 0
      %1739 = vmatpush1.bf16.msra.mxu0 %v1600
      %1740 = vmatprep.subr.bf16.mxu0 0
      %1741 = vmatpush1.bf16.msra.mxu0 %v1601
      %1742 = vmatprep.subr.bf16.mxu0 0
      %1743 = vmatpush1.bf16.msra.mxu0 %v1602
      %1744 = vmatprep.subr.bf16.mxu0 0
      %1745 = vmatpush1.bf16.msra.mxu0 %v1603
      %1746 = vmatprep.subr.bf16.mxu0 0
      %1747 = vmatpush1.bf16.msra.mxu0 %v1604
      %1748 = vmatprep.subr.bf16.mxu0 0
      %1749 = vmatpush1.bf16.msra.mxu0 %v1605
      %1750 = vmatprep.mubr.bf16.mxu0 %v1303
      %1751 = vmatmul.mubr.bf16.gmra.mrb[0].mxu0 %v1302
      %v1752 = vpop.f32.mrb[0].mxu0
      %v1753 = vadd.f32 %v1240, %v1752
      %v1754 = vpop.f32.mrb[0].mxu0
      %v1755 = vpop.f32.mrb[0].mxu0
      %v1756 = vadd.f32 %v1243, %v1755
      %v1757 = vpop.f32.mrb[0].mxu0
      %1758 = vmatprep.mubr.bf16.mxu0 %v1311
      %1759 = vmatmul.mubr.bf16.gmra.mrb[0].mxu0 %v1310
      %v1760 = vpop.f32.mrb[0].mxu0
      %v1761 = vadd.f32 %v1248, %v1760
      %v1762 = vpop.f32.mrb[0].mxu0
      %v1763 = vpop.f32.mrb[0].mxu0
      %v1764 = vadd.f32 %v1251, %v1763
      %v1765 = vpop.f32.mrb[0].mxu0
      %1766 = vdwg.mxu0
      %1767 = vmatprep.subr.bf16.mxu0 0
      %1768 = vmatpush1.bf16.msra.mxu0 %v1606
      %1769 = vmatprep.subr.bf16.mxu0 0
      %1770 = vmatpush1.bf16.msra.mxu0 %v1607
      %1771 = vmatprep.subr.bf16.mxu0 0
      %1772 = vmatpush1.bf16.msra.mxu0 %v1608
      %1773 = vmatprep.subr.bf16.mxu0 0
      %1774 = vmatpush1.bf16.msra.mxu0 %v1609
      %1775 = vmatprep.subr.bf16.mxu0 0
      %1776 = vmatpush1.bf16.msra.mxu0 %v1610
      %1777 = vmatprep.subr.bf16.mxu0 0
      %1778 = vmatpush1.bf16.msra.mxu0 %v1611
      %1779 = vmatprep.subr.bf16.mxu0 0
      %1780 = vmatpush1.bf16.msra.mxu0 %v1612
      %1781 = vmatprep.subr.bf16.mxu0 0
      %1782 = vmatpush1.bf16.msra.mxu0 %v1613
      %1783 = vmatprep.subr.bf16.mxu0 0
      %1784 = vmatpush1.bf16.msra.mxu0 %v1614
      %1785 = vmatprep.subr.bf16.mxu0 0
      %1786 = vmatpush1.bf16.msra.mxu0 %v1615
      %1787 = vmatprep.subr.bf16.mxu0 0
      %1788 = vmatpush1.bf16.msra.mxu0 %v1616
      %1789 = vmatprep.subr.bf16.mxu0 0
      %1790 = vmatpush1.bf16.msra.mxu0 %v1617
      %1791 = vmatprep.subr.bf16.mxu0 0
      %1792 = vmatpush1.bf16.msra.mxu0 %v1618
      %1793 = vmatprep.subr.bf16.mxu0 0
      %1794 = vmatpush1.bf16.msra.mxu0 %v1619
      %1795 = vmatprep.subr.bf16.mxu0 0
      %1796 = vmatpush1.bf16.msra.mxu0 %v1620
      %1797 = vmatprep.subr.bf16.mxu0 0
      %1798 = vmatpush1.bf16.msra.mxu0 %v1621
      %1799 = vmatprep.mubr.bf16.mxu0 %v1305
      %1800 = vmatmul.mubr.bf16.gmra.mrb[0].mxu0 %v1304
      %v1801 = vpop.f32.mrb[0].mxu0
      %v1802 = vadd.f32 %v1753, %v1801
      %v1803 = vpop.f32.mrb[0].mxu0
      %v1804 = vpop.f32.mrb[0].mxu0
      %v1805 = vadd.f32 %v1756, %v1804
      %v1806 = vpop.f32.mrb[0].mxu0
      %1807 = vmatprep.mubr.bf16.mxu0 %v1313
      %1808 = vmatmul.mubr.bf16.gmra.mrb[0].mxu0 %v1312
      %v1809 = vpop.f32.mrb[0].mxu0
      %v1810 = vadd.f32 %v1761, %v1809
      %v1811 = vpop.f32.mrb[0].mxu0
      %v1812 = vpop.f32.mrb[0].mxu0
      %v1813 = vadd.f32 %v1764, %v1812
      %v1814 = vpop.f32.mrb[0].mxu0
      %1815 = vdwg.mxu0
      %1816 = vmatprep.subr.bf16.mxu0 0
      %1817 = vmatpush1.bf16.msra.mxu0 %v1622
      %1818 = vmatprep.subr.bf16.mxu0 0
      %1819 = vmatpush1.bf16.msra.mxu0 %v1623
      %1820 = vmatprep.subr.bf16.mxu0 0
      %1821 = vmatpush1.bf16.msra.mxu0 %v1624
      %1822 = vmatprep.subr.bf16.mxu0 0
      %1823 = vmatpush1.bf16.msra.mxu0 %v1625
      %1824 = vmatprep.subr.bf16.mxu0 0
      %1825 = vmatpush1.bf16.msra.mxu0 %v1626
      %1826 = vmatprep.subr.bf16.mxu0 0
      %1827 = vmatpush1.bf16.msra.mxu0 %v1627
      %1828 = vmatprep.subr.bf16.mxu0 0
      %1829 = vmatpush1.bf16.msra.mxu0 %v1628
      %1830 = vmatprep.subr.bf16.mxu0 0
      %1831 = vmatpush1.bf16.msra.mxu0 %v1629
      %1832 = vmatprep.subr.bf16.mxu0 0
      %1833 = vmatpush1.bf16.msra.mxu0 %v1630
      %1834 = vmatprep.subr.bf16.mxu0 0
      %1835 = vmatpush1.bf16.msra.mxu0 %v1631
      %1836 = vmatprep.subr.bf16.mxu0 0
      %1837 = vmatpush1.bf16.msra.mxu0 %v1632
      %1838 = vmatprep.subr.bf16.mxu0 0
      %1839 = vmatpush1.bf16.msra.mxu0 %v1633
      %1840 = vmatprep.subr.bf16.mxu0 0
      %1841 = vmatpush1.bf16.msra.mxu0 %v1634
      %1842 = vmatprep.subr.bf16.mxu0 0
      %1843 = vmatpush1.bf16.msra.mxu0 %v1635
      %1844 = vmatprep.subr.bf16.mxu0 0
      %1845 = vmatpush1.bf16.msra.mxu0 %v1636
      %1846 = vmatprep.subr.bf16.mxu0 0
      %1847 = vmatpush1.bf16.msra.mxu0 %v1637
      %1848 = vmatprep.mubr.bf16.mxu0 %v1307
      %1849 = vmatmul.mubr.bf16.gmra.mrb[0].mxu0 %v1306
      %v1850 = vpop.f32.mrb[0].mxu0
      %v1851 = vadd.f32 %v1802, %v1850
      %v1852 = vpop.f32.mrb[0].mxu0
      %v1853 = vpop.f32.mrb[0].mxu0
      %v1854 = vadd.f32 %v1805, %v1853
      %v1855 = vpop.f32.mrb[0].mxu0
      %1856 = vmatprep.mubr.bf16.mxu0 %v1315
      %1857 = vmatmul.mubr.bf16.gmra.mrb[0].mxu0 %v1314
      %v1858 = vpop.f32.mrb[0].mxu0
      %v1859 = vadd.f32 %v1810, %v1858
      %v1860 = vpop.f32.mrb[0].mxu0
      %v1861 = vpop.f32.mrb[0].mxu0
      %v1862 = vadd.f32 %v1813, %v1861
      %v1863 = vpop.f32.mrb[0].mxu0
      %1864 = vdwg.mxu0
      %1865 = vmatprep.subr.bf16.mxu0 0
      %1866 = vmatpush1.bf16.msra.mxu0 %v1638
      %1867 = vmatprep.subr.bf16.mxu0 0
      %1868 = vmatpush1.bf16.msra.mxu0 %v1639
      %1869 = vmatprep.subr.bf16.mxu0 0
      %1870 = vmatpush1.bf16.msra.mxu0 %v1640
      %1871 = vmatprep.subr.bf16.mxu0 0
      %1872 = vmatpush1.bf16.msra.mxu0 %v1641
      %1873 = vmatprep.subr.bf16.mxu0 0
      %1874 = vmatpush1.bf16.msra.mxu0 %v1642
      %1875 = vmatprep.subr.bf16.mxu0 0
      %1876 = vmatpush1.bf16.msra.mxu0 %v1643
      %1877 = vmatprep.subr.bf16.mxu0 0
      %1878 = vmatpush1.bf16.msra.mxu0 %v1644
      %1879 = vmatprep.subr.bf16.mxu0 0
      %1880 = vmatpush1.bf16.msra.mxu0 %v1645
      %1881 = vmatprep.subr.bf16.mxu0 0
      %1882 = vmatpush1.bf16.msra.mxu0 %v1646
      %1883 = vmatprep.subr.bf16.mxu0 0
      %1884 = vmatpush1.bf16.msra.mxu0 %v1647
      %1885 = vmatprep.subr.bf16.mxu0 0
      %1886 = vmatpush1.bf16.msra.mxu0 %v1648
      %1887 = vmatprep.subr.bf16.mxu0 0
      %1888 = vmatpush1.bf16.msra.mxu0 %v1649
      %1889 = vmatprep.subr.bf16.mxu0 0
      %1890 = vmatpush1.bf16.msra.mxu0 %v1650
      %1891 = vmatprep.subr.bf16.mxu0 0
      %1892 = vmatpush1.bf16.msra.mxu0 %v1651
      %1893 = vmatprep.subr.bf16.mxu0 0
      %1894 = vmatpush1.bf16.msra.mxu0 %v1652
      %1895 = vmatprep.subr.bf16.mxu0 0
      %1896 = vmatpush1.bf16.msra.mxu0 %v1653
      %1897 = vmatprep.mubr.bf16.mxu0 %v1309
      %1898 = vmatmul.mubr.bf16.gmra.mrb[0].mxu0 %v1308
      %v1899 = vpop.f32.mrb[0].mxu0
      %v1900 = vadd.f32 %v1851, %v1899
      %v1901 = vpop.f32.mrb[0].mxu0
      %v1902 = vpop.f32.mrb[0].mxu0
      %v1903 = vadd.f32 %v1854, %v1902
      %v1904 = vpop.f32.mrb[0].mxu0
      %1905 = vmatprep.mubr.bf16.mxu0 %v1317
      %1906 = vmatmul.mubr.bf16.gmra.mrb[0].mxu0 %v1316
      %v1907 = vpop.f32.mrb[0].mxu0
      %v1908 = vadd.f32 %v1859, %v1907
      %v1909 = vpop.f32.mrb[0].mxu0
      %v1910 = vpop.f32.mrb[0].mxu0
      %v1911 = vadd.f32 %v1862, %v1910
      %v1912 = vpop.f32.mrb[0].mxu0
      %1913 = vdwg.mxu0
      %v1914 = vld [vmem:[%s289] sm:$0x1]
      %v1916 = vlaneseq
      %v1917 = vshrl.u32 %v1916, 7
      %v1918 = vsub.s32 0, %v1917
      %v1919 = vrot.slane %v1914, %v1918
      %v1921 = vadd.f32 %v1900, %v1919
      %v1922 = vadd.f32 %v1903, %v1919
      %v1923 = vadd.f32 %v1908, %v1919
      %v1924 = vadd.f32 %v1911, %v1919
      %v1925 = vlaneseq
      %v1926 = vshrl.u32 %v1925, 7
      %v1927 = vadd.s32 %v1926, 8
      %v1928 = vadd.s32 %v1926, 16
      %v1929 = vadd.s32 %v1926, 24
      %vm1930 = vcmp.lt.s32.totalorder %v1926, 0
      %v1931 = vsub.s32 0, %v1926
      %v1932 = vsel %vm1930, %v1931, %v1926
      %v1933 = vshrl.u32 %v1932, 4
      %v1934 = vand.u32 %v1932, 15
      %v1935 = vsub.s32 0, %v1934
      %v1936 = vsel %vm1930, %v1935, %v1934
      %vm1937 = vcmp.lt.s32.totalorder %v1927, 0
      %v1938 = vsub.s32 0, %v1927
      %v1939 = vsel %vm1937, %v1938, %v1927
      %v1940 = vshrl.u32 %v1939, 4
      %v1941 = vand.u32 %v1939, 15
      %v1942 = vsub.s32 0, %v1941
      %v1943 = vsel %vm1937, %v1942, %v1941
      %vm1944 = vcmp.lt.s32.totalorder %v1928, 0
      %v1945 = vsub.s32 0, %v1928
      %v1946 = vsel %vm1944, %v1945, %v1928
      %v1947 = vshrl.u32 %v1946, 4
      %v1948 = vand.u32 %v1946, 15
      %v1949 = vsub.s32 0, %v1948
      %v1950 = vsel %vm1944, %v1949, %v1948
      %vm1951 = vcmp.lt.s32.totalorder %v1929, 0
      %v1952 = vsub.s32 0, %v1929
      %v1953 = vsel %vm1951, %v1952, %v1929
      %v1954 = vshrl.u32 %v1953, 4
      %v1955 = vand.u32 %v1953, 15
      %v1956 = vsub.s32 0, %v1955
      %v1957 = vsel %vm1951, %v1956, %v1955
      %vm1958 = vcmp.ne.s32.totalorder %v1936, 0
      %vm1959 = vcmp.ne.s32.totalorder %v1943, 0
      %vm1960 = vcmp.ne.s32.totalorder %v1950, 0
      %vm1961 = vcmp.ne.s32.totalorder %v1957, 0
      %vm1962 = vcmp.lt.s32.totalorder %v1936, 0
      %vm1963 = vcmp.lt.s32.totalorder %v1943, 0
      %vm1964 = vcmp.lt.s32.totalorder %v1950, 0
      %vm1965 = vcmp.lt.s32.totalorder %v1957, 0
      %vm1966 = vmand %vm1962, %vm1958
      %vm1967 = vmand %vm1963, %vm1959
      %vm1968 = vmand %vm1964, %vm1960
      %vm1969 = vmand %vm1965, %vm1961
      %v1970 = vadd.s32 %v1936, 16
      %v1971 = vadd.s32 %v1943, 16
      %v1972 = vadd.s32 %v1950, 16
      %v1973 = vadd.s32 %v1957, 16
      %v1974 = vsel %vm1966, %v1970, %v1936
      %v1975 = vsel %vm1967, %v1971, %v1943
      %v1976 = vsel %vm1968, %v1972, %v1950
      %v1977 = vsel %vm1969, %v1973, %v1957
      %vm1978 = vcmp.lt.s32.totalorder %v1974, 2
      %vm1979 = vcmp.lt.s32.totalorder %v1975, 2
      %vm1980 = vcmp.lt.s32.totalorder %v1976, 2
      %vm1981 = vcmp.lt.s32.totalorder %v1977, 2
      %v1982 = vsel %vm1978, 1, 0
      %v1983 = vsel %vm1979, 1, 0
      %v1984 = vsel %vm1980, 1, 0
      %v1985 = vsel %vm1981, 1, 0
      %v1986 = vcvt.s32.f32 %v1982
      %v1987 = vcvt.s32.f32 %v1983
      %v1988 = vcvt.s32.f32 %v1984
      %v1989 = vcvt.s32.f32 %v1985
      %v1990 = vmul.f32 %v1921, %v1986
      %v1991 = vmul.f32 %v1922, %v1987
      %v1992 = vmul.f32 %v1923, %v1988
      %v1993 = vmul.f32 %v1924, %v1989
      %v1994 = vadd.f32 %v1990, %v1991
      %v1995 = vadd.f32 %v1994, %v1992
      %v1996 = vadd.f32 %v1995, %v1993
      %v1997 = vrot.slane %v1996, 4
      %v1998 = vadd.f32 %v1996, %v1997
      %v1999 = vrot.slane %v1998, 2
      %v2000 = vadd.f32 %v1998, %v1999
      %v2001 = vrot.slane %v2000, 1
      %v2002 = vadd.f32 %v2000, %v2001
      %v2003 = vmul.f32 %v2002, 0.25
      %v2004 = vmul.f32 %v1990, %v1921
      %v2005 = vmul.f32 %v1991, %v1922
      %v2006 = vmul.f32 %v1992, %v1923
      %v2007 = vmul.f32 %v1993, %v1924
      %v2008 = vadd.f32 %v2004, %v2005
      %v2009 = vadd.f32 %v2008, %v2006
      %v2010 = vadd.f32 %v2009, %v2007
      %v2011 = vrot.slane %v2010, 4
      %v2012 = vadd.f32 %v2010, %v2011
      %v2013 = vrot.slane %v2012, 2
      %v2014 = vadd.f32 %v2012, %v2013
      %v2015 = vrot.slane %v2014, 1
      %v2016 = vadd.f32 %v2014, %v2015
      %v2017 = vmul.f32 %v2016, 0.25
      %v2018 = vmul.f32 %v2003, %v2003
      %v2019 = vsub.f32 %v2017, %v2018
      %v2020 = vmax.f32 %v2019, 0.0
      %v2021 = vsub.f32 %v1921, %v2003
      %v2022 = vsub.f32 %v1922, %v2003
      %v2023 = vsub.f32 %v1923, %v2003
      %v2024 = vsub.f32 %v1924, %v2003
      %v2025 = vadd.f32 %v2020, 1e-05
      %v2026 = vrsqrt.pop %v2025
      %v2027 = vmul.f32 %v2021, %v2026
      %v2028 = vmul.f32 %v2022, %v2026
      %v2029 = vmul.f32 %v2023, %v2026
      %v2030 = vmul.f32 %v2024, %v2026
      %v2031 = vld [vmem:[%s292] sm:$0x1]
      %v2033 = vlaneseq
      %v2034 = vshrl.u32 %v2033, 7
      %v2035 = vsub.s32 0, %v2034
      %v2036 = vrot.slane %v2031, %v2035
      %v2038 = vmul.f32 %v2027, %v2036
      %v2039 = vmul.f32 %v2028, %v2036
      %v2040 = vmul.f32 %v2029, %v2036
      %v2041 = vmul.f32 %v2030, %v2036
      %v2042 = vld [vmem:[%s295] sm:$0x1]
      %v2044 = vlaneseq
      %v2045 = vshrl.u32 %v2044, 7
      %v2046 = vsub.s32 0, %v2045
      %v2047 = vrot.slane %v2042, %v2046
      %v2049 = vadd.f32 %v2038, %v2047
      %v2050 = vadd.f32 %v2039, %v2047
      %v2051 = vadd.f32 %v2040, %v2047
      %v2052 = vadd.f32 %v2041, %v2047
      %v2053 = vmul.f32 %v2049, 0.1
      %v2054 = vmul.f32 %v2050, 0.1
      %v2055 = vmul.f32 %v2051, 0.1
      %v2056 = vmul.f32 %v2052, 0.1
      %v2057 = vmax.f32 %v2049, %v2053
      %v2058 = vmax.f32 %v2050, %v2054
      %v2059 = vmax.f32 %v2051, %v2055
      %v2060 = vmax.f32 %v2052, %v2056
      %v2061 = vpack.c.bf16 %v2058, %v2057
      %v2062 = vpack.c.bf16 %v2060, %v2059
      %v2065 = vunpack.c.l.b16 %v2061
      %v2066 = vunpack.c.h.b16 %v2061
      %v2067 = vunpack.c.l.b16 %v2062
      %v2068 = vunpack.c.h.b16 %v2062
      %v2069 = vpack.c.b16 %v2065, %v2065
      %v2070 = vpack.c.b16 %v2066, %v2066
      %v2071 = vpack.c.b16 %v2067, %v2067
      %v2072 = vpack.c.b16 %v2068, %v2068
      %2077 = vst [vmem:[%s303] sm:$0xf] %v2069
      %2078 = vst [vmem:[%s303 + $0x4] sm:$0xf] %v2070
      %2079 = vst [vmem:[%s303 + $0x8] sm:$0xf] %v2071
      %2080 = vst [vmem:[%s303 + $0xc] sm:$0xf] %v2072
      %p2081 = scmp.lt.s32.totalorder %s21, 1
      %s2082 = scalar_select %p2081, %s21, 1
      %p2083 = scmp.lt.s32.totalorder %s20, 0
      %s2084 = scalar_select %p2083, %s20, 0
      %s2085 = smul.addr %s2082, 4
      %s2086 = sadd.s32 %s2084, %s2085
      %s2087 = smul.addr %s2086, 4
      %s2088 = scalar_lea.vmem %s5, %s2087
      // Predicated region
      $region41: #{_lambda_.7} parent=39 // pred_check
        %p2089 = pneg %p178
      $region42: #{_lambda_.7} parent=39 // pred_check_branch
        %2091 = sbr.rel (%p2089) target = $region44
      $region43: #{_lambda_.7} parent=39 // pred_region
        _
      $region44: #{_lambda_.7} parent=39 // pred_fallthru
        _
    $region40: #{_lambda_.7} parent=5 // pred_fallthru
      _
    %p2092 = scmp.le.s32.totalorder 2, %s11
    // Predicated region
    $region45: #{_lambda_.7} parent=5 // pred_check
      %p2093 = pneg %p2092
    $region46: #{_lambda_.7} parent=5 // pred_check_branch
      %2095 = sbr.rel (%p2093) target = $region48
    $region47: #{_lambda_.7} parent=5 // pred_region
      %s2096 = ssub.s32 %s11, 2
      // Predicated region
      $region49: #{_lambda_.7} parent=47 // pred_check
        %p2097 = pneg %p184
      $region50: #{_lambda_.7} parent=47 // pred_check_branch
        %2099 = sbr.rel (%p2097) target = $region52
      $region51: #{_lambda_.7} parent=47 // pred_region
        %p2100 = scmp.lt.s32.totalorder %s23, 1
        %s2101 = scalar_select %p2100, %s23, 1
        %p2102 = scmp.lt.s32.totalorder %s22, 0
        %s2103 = scalar_select %p2102, %s22, 0
        %s2104 = smul.addr %s2101, 4
        %s2105 = sadd.s32 %s2103, %s2104
        %s2106 = smul.addr %s2105, 4
        %s2107 = scalar_lea.vmem %s5, %s2106
      $region52: #{_lambda_.7} parent=47 // pred_fallthru
        _
    $region48: #{_lambda_.7} parent=5 // pred_fallthru
      _
  $region6: #{_lambda_.7} parent=0 // loop_footer
    %s15 = sadd.s32 1, %s11
  $region7: #{_lambda_.7} parent=0 // loop_footer_branch
    %10 = sbr.rel target = $region3
  $region8: #{_lambda_.7} parent=0 // loop_exit
    _

// kernel: _lambda_.9
$region0: #{_lambda_.9}
  #allocation0 [shape = 'u32[]', space=smem, size = 0x4, offset = 0x4, fixed_abs, tag = 'smem constant byte address 0x4 - core index']
  #allocation1 [shape = 'u32[144,128]{1,0:T(1,128)}', space=vmem, size = 0x12000, scoped, tag = 'internal scratch']
  %s0 = inlined_call_operand.vmem [shape: bf16[2,64,384], index: 0, kind: input, shape index: {}]
  %s1 = inlined_call_operand.vmem [shape: bf16[3,384,128], index: 1, kind: input, shape index: {}]
  %s2 = inlined_call_operand.vmem [shape: f32[2,32,128], index: 2, kind: output, shape index: {}]
  %s3 = sld [smem:[#allocation0]]
  $region41: #{_lambda_.9} parent=0
    _
  %s5 = ssub.s32 1, %s3
  %s6 = scalar_select 0, %s5, %s3
  loop: start=0, step=1, limit=4
  $region2: #{_lambda_.9} parent=0 // loop_pre_header
    _
  $region3: #{_lambda_.9} parent=0 // loop_header
    %s8 = sphi 0, %s12
    %p9 = scmp.ge.s32.totalorder %s8, 4
    %s15 = sphi 0, %s27
    %s16 = sphi 0, %s23
    %s17 = sphi 0, %s15
    %s18 = sphi 0, %s16
    %s19 = sphi 0, %s17
    %s20 = sphi 0, %s18
    %s30 = sphi 0, %s32
    %s33 = sphi 0, %s30
    %s34 = sphi 0, %s33
    %s50 = sphi 0, %s34
    %s56 = sphi 0, %s58
    %s59 = sphi 0, %s56
    %s60 = sphi 0, %s59
    %s76 = sphi 0, %s60
    %s84 = sphi 0, %s86
    %s87 = sphi 0, %s84
    %s88 = sphi 0, %s87
    %s104 = sphi 0, %s88
  $region4: #{_lambda_.9} parent=0 // loop_header_branch
    %11 = sbr.rel (%p9) target = $region8
  $region5: #{_lambda_.9} parent=0 // loop_body
    %s13 = ssub.s32 %s8, 1
    %s14 = ssub.s32 %s8, 2
    %s21 = sadd.s32 1, %s16
    %p22 = scmp.ge.s32.totalorder %s21, 2
    %s23 = scalar_select %p22, 0, %s21
    %s24 = sadd.s32 1, %s15
    %s25 = scalar_select %p22, %s24, %s15
    %p26 = scmp.ge.s32.totalorder %s25, 1
    %s27 = scalar_select %p26, 0, %s25
    %s28 = ssub.s32 %s16, %s23
    %p29 = scmp.eq.s32.totalorder %s28, 0
    %s31 = sadd.s32 %s30, 1
    %s32 = scalar_select %p29, %s30, %s31
    %p35 = pneg %p29
    %p36 = scmp.eq.s32.totalorder %s8, 1
    %p37 = por %p35, %p36
    %p38 = scmp.ne.s32.totalorder %s30, %s33
    %p39 = scmp.eq.s32.totalorder %s8, 0
    %p40 = por %p38, %p39
    %p41 = scmp.ne.s32.totalorder %s30, %s33
    %p42 = scmp.eq.s32.totalorder %s13, 1
    %p43 = por %p41, %p42
    %p44 = scmp.ne.s32.totalorder %s33, %s34
    %p45 = scmp.eq.s32.totalorder %s13, 0
    %p46 = por %p44, %p45
    %p47 = scmp.ne.s32.totalorder %s33, %s34
    %p48 = scmp.eq.s32.totalorder %s14, 1
    %p49 = por %p47, %p48
    %p51 = scmp.ne.s32.totalorder %s34, %s50
    %p52 = scmp.eq.s32.totalorder %s14, 0
    %p53 = por %p51, %p52
    %s54 = ssub.s32 %s15, %s27
    %p55 = scmp.eq.s32.totalorder %s54, 0
    %s57 = sadd.s32 %s56, 1
    %s58 = scalar_select %p55, %s56, %s57
    %p61 = pneg %p55
    %p62 = scmp.eq.s32.totalorder %s8, 1
    %p63 = por %p61, %p62
    %p64 = scmp.ne.s32.totalorder %s56, %s59
    %p65 = scmp.eq.s32.totalorder %s8, 0
    %p66 = por %p64, %p65
    %p67 = scmp.ne.s32.totalorder %s56, %s59
    %p68 = scmp.eq.s32.totalorder %s13, 1
    %p69 = por %p67, %p68
    %p70 = scmp.ne.s32.totalorder %s59, %s60
    %p71 = scmp.eq.s32.totalorder %s13, 0
    %p72 = por %p70, %p71
    %p73 = scmp.ne.s32.totalorder %s59, %s60
    %p74 = scmp.eq.s32.totalorder %s14, 1
    %p75 = por %p73, %p74
    %p77 = scmp.ne.s32.totalorder %s60, %s76
    %p78 = scmp.eq.s32.totalorder %s14, 0
    %p79 = por %p77, %p78
    %s80 = ssub.s32 %s16, %s23
    %s81 = ssub.s32 %s15, %s27
    %s82 = sor.u32 %s80, %s81
    %p83 = scmp.eq.s32.totalorder %s82, 0
    %s85 = sadd.s32 %s84, 1
    %s86 = scalar_select %p83, %s84, %s85
    %p89 = pneg %p83
    %p90 = scmp.eq.s32.totalorder %s8, 1
    %p91 = por %p89, %p90
    %p92 = scmp.ne.s32.totalorder %s84, %s87
    %p93 = scmp.eq.s32.totalorder %s8, 0
    %p94 = por %p92, %p93
    %p95 = scmp.ne.s32.totalorder %s84, %s87
    %p96 = scmp.eq.s32.totalorder %s13, 1
    %p97 = por %p95, %p96
    %p98 = scmp.ne.s32.totalorder %s87, %s88
    %p99 = scmp.eq.s32.totalorder %s13, 0
    %p100 = por %p98, %p99
    %p101 = scmp.ne.s32.totalorder %s87, %s88
    %p102 = scmp.eq.s32.totalorder %s14, 1
    %p103 = por %p101, %p102
    %p105 = scmp.ne.s32.totalorder %s88, %s104
    %p106 = scmp.eq.s32.totalorder %s14, 0
    %p107 = por %p105, %p106
    %p108 = scmp.le.s32.totalorder 1, %s8
    %p109 = scmp.lt.s32.totalorder %s8, 3
    %p110 = pnand %p108, %p109
    %p111 = pneg %p110
    // Predicated region
    $region9: #{_lambda_.9} parent=5 // pred_check
      _
    $region10: #{_lambda_.9} parent=5 // pred_check_branch
      %113 = sbr.rel (%p110) target = $region12
    $region11: #{_lambda_.9} parent=5 // pred_region
      %s114 = ssub.s32 %s8, 1
      // Predicated region
      $region13: #{_lambda_.9} parent=11 // pred_check
        %p115 = pneg %p72
      $region14: #{_lambda_.9} parent=11 // pred_check_branch
        %117 = sbr.rel (%p115) target = $region16
      $region15: #{_lambda_.9} parent=11 // pred_region
        %p118 = scmp.lt.s32.totalorder %s17, 0
        %s119 = scalar_select %p118, %s17, 0
        %s120 = smul.addr %s119, 4
        %s121 = scalar_lea.vmem %s1, %s120
      $region16: #{_lambda_.9} parent=11 // pred_fallthru
        _
    $region12: #{_lambda_.9} parent=5 // pred_fallthru
      _
    %p122 = scmp.lt.s32.totalorder %s8, 2
    // Predicated region
    $region17: #{_lambda_.9} parent=5 // pred_check
      %p123 = pneg %p122
    $region18: #{_lambda_.9} parent=5 // pred_check_branch
      %125 = sbr.rel (%p123) target = $region20
    $region19: #{_lambda_.9} parent=5 // pred_region
      // Predicated region
      $region21: #{_lambda_.9} parent=19 // pred_check
        %p126 = pneg %p40
      $region22: #{_lambda_.9} parent=19 // pred_check_branch
        %128 = sbr.rel (%p126) target = $region24
      $region23: #{_lambda_.9} parent=19 // pred_region
        %p129 = scmp.lt.s32.totalorder %s16, 1
        %s130 = scalar_select %p129, %s16, 1
        %s131 = smul.addr %s130, 24
        %s132 = smul.addr %s131, 4
        %s133 = scalar_lea.vmem %s0, %s132
      $region24: #{_lambda_.9} parent=19 // pred_fallthru
        _
    $region20: #{_lambda_.9} parent=5 // pred_fallthru
      _
    %p134 = scmp.le.s32.totalorder 1, %s8
    %p135 = scmp.lt.s32.totalorder %s8, 3
    %p136 = pnand %p134, %p135
    %p137 = pneg %p136
    // Predicated region
    $region25: #{_lambda_.9} parent=5 // pred_check
      _
    $region26: #{_lambda_.9} parent=5 // pred_check_branch
      %139 = sbr.rel (%p136) target = $region28
    $region27: #{_lambda_.9} parent=5 // pred_region
      %s140 = ssub.s32 %s8, 1
      %p141 = scmp.lt.s32.totalorder %s18, 1
      %s142 = scalar_select %p141, %s18, 1
      %s143 = smul.addr %s142, 24
      %s144 = smul.addr %s143, 4
      %s145 = scalar_lea.vmem %s0, %s144
      %p146 = pneg %p46
      %p147 = pneg %p43
      %p148 = scmp.lt.s32.totalorder %s17, 0
      %s149 = scalar_select %p148, %s17, 0
      %s150 = smul.addr %s149, 4
      %s151 = scalar_lea.vmem %s1, %s150
      %p152 = pneg %p72
      %p153 = pneg %p69
      %p154 = pneg %p100
      %p155 = pneg %p97
      %p156 = scmp.lt.s32.totalorder %s18, 1
      %s157 = scalar_select %p156, %s18, 1
      %p158 = scmp.lt.s32.totalorder %s17, 0
      %s159 = scalar_select %p158, %s17, 0
      %s160 = smul.addr %s157, 4
      %s161 = sadd.s32 %s159, %s160
      %s162 = smul.addr %s161, 8
      %s163 = scalar_lea.vmem %s2, %s162
      %p164 = scmp.lt.s32.totalorder %s18, 1
      %s165 = scalar_select %p164, %s18, 1
      %s166 = smul.addr %s165, 24
      %s167 = smul.addr %s166, 4
      %s168 = scalar_lea.vmem %s0, %s167
      %p169 = scmp.lt.s32.totalorder %s17, 0
      %s170 = scalar_select %p169, %s17, 0
      %s171 = smul.addr %s170, 4
      %s172 = scalar_lea.vmem %s1, %s171
      %p173 = scmp.lt.s32.totalorder %s18, 1
      %s174 = scalar_select %p173, %s18, 1
      %p175 = scmp.lt.s32.totalorder %s17, 0
      %s176 = scalar_select %p175, %s17, 0
      %s177 = smul.addr %s174, 4
      %s178 = sadd.s32 %s176, %s177
      %s179 = smul.addr %s178, 8
      %s180 = scalar_lea.vmem %s2, %s179
      %v182 = vld [vmem:[%s168] sm:$0xff]
      %v183 = vld [vmem:[%s168 + $0x8] sm:$0xf]
      %v184 = vld [vmem:[%s168 + $0xc] sm:$0xff]
      %v185 = vld [vmem:[%s168 + $0x14] sm:$0xf]
      %v186 = vld [vmem:[%s168 + $0x18] sm:$0xff]
      %v187 = vld [vmem:[%s168 + $0x20] sm:$0xf]
      %v188 = vld [vmem:[%s168 + $0x24] sm:$0xff]
      %v189 = vld [vmem:[%s168 + $0x2c] sm:$0xf]
      %v190 = vld [vmem:[%s172] sm:$0xf]
      %v191 = vld [vmem:[%s172 + $0x4] sm:$0xf]
      %v192 = vld [vmem:[%s172 + $0x8] sm:$0xf]
      %v193 = vld [vmem:[%s172 + $0xc] sm:$0xf]
      %v194 = vld [vmem:[%s172 + $0x10] sm:$0xf]
      %v195 = vld [vmem:[%s172 + $0x14] sm:$0xf]
      %v196 = vld [vmem:[%s172 + $0x18] sm:$0xf]
      %v197 = vld [vmem:[%s172 + $0x1c] sm:$0xf]
      %v198 = vld [vmem:[%s172 + $0x20] sm:$0xf]
      %v199 = vld [vmem:[%s172 + $0x24] sm:$0xf]
      %v200 = vld [vmem:[%s172 + $0x28] sm:$0xf]
      %v201 = vld [vmem:[%s172 + $0x2c] sm:$0xf]
      %v202 = vld [vmem:[%s172 + $0x30] sm:$0xf]
      %v203 = vld [vmem:[%s172 + $0x34] sm:$0xf]
      %v204 = vld [vmem:[%s172 + $0x38] sm:$0xf]
      %v205 = vld [vmem:[%s172 + $0x3c] sm:$0xf]
      %v206 = vld [vmem:[%s172 + $0x40] sm:$0xf]
      %v207 = vld [vmem:[%s172 + $0x44] sm:$0xf]
      %v208 = vld [vmem:[%s172 + $0x48] sm:$0xf]
      %v209 = vld [vmem:[%s172 + $0x4c] sm:$0xf]
      %v210 = vld [vmem:[%s172 + $0x50] sm:$0xf]
      %v211 = vld [vmem:[%s172 + $0x54] sm:$0xf]
      %v212 = vld [vmem:[%s172 + $0x58] sm:$0xf]
      %v213 = vld [vmem:[%s172 + $0x5c] sm:$0xf]
      %v214 = vld [vmem:[%s172 + $0x60] sm:$0xf]
      %v215 = vld [vmem:[%s172 + $0x64] sm:$0xf]
      %v216 = vld [vmem:[%s172 + $0x68] sm:$0xf]
      %v217 = vld [vmem:[%s172 + $0x6c] sm:$0xf]
      %v218 = vld [vmem:[%s172 + $0x70] sm:$0xf]
      %v219 = vld [vmem:[%s172 + $0x74] sm:$0xf]
      %v220 = vld [vmem:[%s172 + $0x78] sm:$0xf]
      %v221 = vld [vmem:[%s172 + $0x7c] sm:$0xf]
      %v222 = vld [vmem:[%s172 + $0x80] sm:$0xf]
      %v223 = vld [vmem:[%s172 + $0x84] sm:$0xf]
      %v224 = vld [vmem:[%s172 + $0x88] sm:$0xf]
      %v225 = vld [vmem:[%s172 + $0x8c] sm:$0xf]
      %v226 = vld [vmem:[%s172 + $0x90] sm:$0xf]
      %v227 = vld [vmem:[%s172 + $0x94] sm:$0xf]
      %v228 = vld [vmem:[%s172 + $0x98] sm:$0xf]
      %v229 = vld [vmem:[%s172 + $0x9c] sm:$0xf]
      %v230 = vld [vmem:[%s172 + $0xa0] sm:$0xf]
      %v231 = vld [vmem:[%s172 + $0xa4] sm:$0xf]
      %v232 = vld [vmem:[%s172 + $0xa8] sm:$0xf]
      %v233 = vld [vmem:[%s172 + $0xac] sm:$0xf]
      %v234 = vld [vmem:[%s172 + $0xb0] sm:$0xf]
      %v235 = vld [vmem:[%s172 + $0xb4] sm:$0xf]
      %v236 = vld [vmem:[%s172 + $0xb8] sm:$0xf]
      %v237 = vld [vmem:[%s172 + $0xbc] sm:$0xf]
      %v238 = vld [vmem:[%s168 + $0x30] sm:$0xff]
      %v239 = vld [vmem:[%s168 + $0x38] sm:$0xf]
      %v240 = vld [vmem:[%s168 + $0x3c] sm:$0xff]
      %v241 = vld [vmem:[%s168 + $0x44] sm:$0xf]
      %s242 = scalar_lea.vmem %s172, 192
      %v243 = vld [vmem:[%s242] sm:$0xf]
      %v244 = vld [vmem:[%s242 + $0x4] sm:$0xf]
      %v245 = vld [vmem:[%s242 + $0x8] sm:$0xf]
      %v246 = vld [vmem:[%s242 + $0xc] sm:$0xf]
      %v247 = vld [vmem:[%s242 + $0x10] sm:$0xf]
      %v248 = vld [vmem:[%s242 + $0x14] sm:$0xf]
      %v249 = vld [vmem:[%s242 + $0x18] sm:$0xf]
      %v250 = vld [vmem:[%s242 + $0x1c] sm:$0xf]
      %v251 = vld [vmem:[%s242 + $0x20] sm:$0xf]
      %v252 = vld [vmem:[%s242 + $0x24] sm:$0xf]
      %v253 = vld [vmem:[%s242 + $0x28] sm:$0xf]
      %v254 = vld [vmem:[%s242 + $0x2c] sm:$0xf]
      %v255 = vld [vmem:[%s242 + $0x30] sm:$0xf]
      %v256 = vld [vmem:[%s242 + $0x34] sm:$0xf]
      %v257 = vld [vmem:[%s242 + $0x38] sm:$0xf]
      %v258 = vld [vmem:[%s242 + $0x3c] sm:$0xf]
      %v259 = vld [vmem:[%s242 + $0x40] sm:$0xf]
      %v260 = vld [vmem:[%s242 + $0x44] sm:$0xf]
      %v261 = vld [vmem:[%s242 + $0x48] sm:$0xf]
      %v262 = vld [vmem:[%s242 + $0x4c] sm:$0xf]
      %v263 = vld [vmem:[%s242 + $0x50] sm:$0xf]
      %v264 = vld [vmem:[%s242 + $0x54] sm:$0xf]
      %v265 = vld [vmem:[%s242 + $0x58] sm:$0xf]
      %v266 = vld [vmem:[%s242 + $0x5c] sm:$0xf]
      %v267 = vld [vmem:[%s242 + $0x60] sm:$0xf]
      %v268 = vld [vmem:[%s242 + $0x64] sm:$0xf]
      %v269 = vld [vmem:[%s242 + $0x68] sm:$0xf]
      %v270 = vld [vmem:[%s242 + $0x6c] sm:$0xf]
      %v271 = vld [vmem:[%s242 + $0x70] sm:$0xf]
      %v272 = vld [vmem:[%s242 + $0x74] sm:$0xf]
      %v273 = vld [vmem:[%s242 + $0x78] sm:$0xf]
      %v274 = vld [vmem:[%s242 + $0x7c] sm:$0xf]
      %v275 = vld [vmem:[%s242 + $0x80] sm:$0xf]
      %v276 = vld [vmem:[%s242 + $0x84] sm:$0xf]
      %v277 = vld [vmem:[%s242 + $0x88] sm:$0xf]
      %v278 = vld [vmem:[%s242 + $0x8c] sm:$0xf]
      %v279 = vld [vmem:[%s242 + $0x90] sm:$0xf]
      %v280 = vld [vmem:[%s242 + $0x94] sm:$0xf]
      %v281 = vld [vmem:[%s242 + $0x98] sm:$0xf]
      %v282 = vld [vmem:[%s242 + $0x9c] sm:$0xf]
      %v283 = vld [vmem:[%s242 + $0xa0] sm:$0xf]
      %v284 = vld [vmem:[%s242 + $0xa4] sm:$0xf]
      %v285 = vld [vmem:[%s242 + $0xa8] sm:$0xf]
      %v286 = vld [vmem:[%s242 + $0xac] sm:$0xf]
      %v287 = vld [vmem:[%s242 + $0xb0] sm:$0xf]
      %v288 = vld [vmem:[%s242 + $0xb4] sm:$0xf]
      %v289 = vld [vmem:[%s242 + $0xb8] sm:$0xf]
      %v290 = vld [vmem:[%s242 + $0xbc] sm:$0xf]
      %v299 = vunpack.c.l.b16 %v186
      %v300 = vunpack.c.h.b16 %v186
      %v301 = vunpack.c.l.b16 %v187
      %v302 = vunpack.c.l.b16 %v188
      %v303 = vunpack.c.h.b16 %v188
      %v304 = vunpack.c.l.b16 %v189
      %v305 = vunpack.c.l.b16 %v238
      %v306 = vunpack.c.h.b16 %v238
      %v307 = vunpack.c.l.b16 %v239
      %v308 = vunpack.c.l.b16 %v240
      %v309 = vunpack.c.h.b16 %v240
      %v310 = vunpack.c.l.b16 %v241
      %v311 = vpack.c.b16 %v302, %v299
      %v312 = vpack.c.b16 %v303, %v300
      %v313 = vpack.c.b16 %v304, %v301
      %v314 = vpack.c.b16 %v308, %v305
      %v315 = vpack.c.b16 %v309, %v306
      %v316 = vpack.c.b16 %v310, %v307
      %v371 = vunpack.c.l.b16 %v243
      %v372 = vunpack.c.l.b16 %v244
      %v373 = vunpack.c.l.b16 %v245
      %v374 = vunpack.c.l.b16 %v246
      %v375 = vunpack.c.l.b16 %v247
      %v376 = vunpack.c.l.b16 %v248
      %v377 = vunpack.c.l.b16 %v249
      %v378 = vunpack.c.l.b16 %v250
      %v379 = vunpack.c.l.b16 %v251
      %v380 = vunpack.c.l.b16 %v252
      %v381 = vunpack.c.l.b16 %v253
      %v382 = vunpack.c.l.b16 %v254
      %v383 = vunpack.c.l.b16 %v255
      %v384 = vunpack.c.l.b16 %v256
      %v385 = vunpack.c.l.b16 %v257
      %v386 = vunpack.c.l.b16 %v258
      %v387 = vunpack.c.l.b16 %v259
      %v388 = vunpack.c.l.b16 %v260
      %v389 = vunpack.c.l.b16 %v261
      %v390 = vunpack.c.l.b16 %v262
      %v391 = vunpack.c.l.b16 %v263
      %v392 = vunpack.c.l.b16 %v264
      %v393 = vunpack.c.l.b16 %v265
      %v394 = vunpack.c.l.b16 %v266
      %v395 = vunpack.c.l.b16 %v267
      %v396 = vunpack.c.l.b16 %v268
      %v397 = vunpack.c.l.b16 %v269
      %v398 = vunpack.c.l.b16 %v270
      %v399 = vunpack.c.l.b16 %v271
      %v400 = vunpack.c.l.b16 %v272
      %v401 = vunpack.c.l.b16 %v273
      %v402 = vunpack.c.l.b16 %v274
      %v403 = vunpack.c.l.b16 %v275
      %v404 = vunpack.c.l.b16 %v276
      %v405 = vunpack.c.l.b16 %v277
      %v406 = vunpack.c.l.b16 %v278
      %v407 = vunpack.c.l.b16 %v279
      %v408 = vunpack.c.l.b16 %v280
      %v409 = vunpack.c.l.b16 %v281
      %v410 = vunpack.c.l.b16 %v282
      %v411 = vunpack.c.l.b16 %v283
      %v412 = vunpack.c.l.b16 %v284
      %v413 = vunpack.c.l.b16 %v285
      %v414 = vunpack.c.l.b16 %v286
      %v415 = vunpack.c.l.b16 %v287
      %v416 = vunpack.c.l.b16 %v288
      %v417 = vunpack.c.l.b16 %v289
      %v418 = vunpack.c.l.b16 %v290
      %v419 = vpack.c.b16 %v372, %v371
      %v420 = vpack.c.b16 %v374, %v373
      %v421 = vpack.c.b16 %v376, %v375
      %v422 = vpack.c.b16 %v378, %v377
      %v423 = vpack.c.b16 %v380, %v379
      %v424 = vpack.c.b16 %v382, %v381
      %v425 = vpack.c.b16 %v384, %v383
      %v426 = vpack.c.b16 %v386, %v385
      %v427 = vpack.c.b16 %v388, %v387
      %v428 = vpack.c.b16 %v390, %v389
      %v429 = vpack.c.b16 %v392, %v391
      %v430 = vpack.c.b16 %v394, %v393
      %v431 = vpack.c.b16 %v396, %v395
      %v432 = vpack.c.b16 %v398, %v397
      %v433 = vpack.c.b16 %v400, %v399
      %v434 = vpack.c.b16 %v402, %v401
      %v435 = vpack.c.b16 %v404, %v403
      %v436 = vpack.c.b16 %v406, %v405
      %v437 = vpack.c.b16 %v408, %v407
      %v438 = vpack.c.b16 %v410, %v409
      %v439 = vpack.c.b16 %v412, %v411
      %v440 = vpack.c.b16 %v414, %v413
      %v441 = vpack.c.b16 %v416, %v415
      %v442 = vpack.c.b16 %v418, %v417
      %467 = vmatprep.subr.bf16.mxu0 0
      %468 = vmatpush1.bf16.msra.mxu0 %v419
      %469 = vmatprep.subr.bf16.mxu0 0
      %470 = vmatpush1.bf16.msra.mxu0 %v420
      %471 = vmatprep.subr.bf16.mxu0 0
      %472 = vmatpush1.bf16.msra.mxu0 %v421
      %473 = vmatprep.subr.bf16.mxu0 0
      %474 = vmatpush1.bf16.msra.mxu0 %v422
      %475 = vmatprep.subr.bf16.mxu0 0
      %476 = vmatpush1.bf16.msra.mxu0 %v423
      %477 = vmatprep.subr.bf16.mxu0 0
      %478 = vmatpush1.bf16.msra.mxu0 %v424
      %479 = vmatprep.subr.bf16.mxu0 0
      %480 = vmatpush1.bf16.msra.mxu0 %v425
      %481 = vmatprep.subr.bf16.mxu0 0
      %482 = vmatpush1.bf16.msra.mxu0 %v426
      %483 = vmatprep.subr.bf16.mxu0 0
      %484 = vmatpush1.bf16.msra.mxu0 %v427
      %485 = vmatprep.subr.bf16.mxu0 0
      %486 = vmatpush1.bf16.msra.mxu0 %v428
      %487 = vmatprep.subr.bf16.mxu0 0
      %488 = vmatpush1.bf16.msra.mxu0 %v429
      %489 = vmatprep.subr.bf16.mxu0 0
      %490 = vmatpush1.bf16.msra.mxu0 %v430
      %491 = vmatprep.subr.bf16.mxu0 0
      %492 = vmatpush1.bf16.msra.mxu0 %v431
      %493 = vmatprep.subr.bf16.mxu0 0
      %494 = vmatpush1.bf16.msra.mxu0 %v432
      %495 = vmatprep.subr.bf16.mxu0 0
      %496 = vmatpush1.bf16.msra.mxu0 %v433
      %497 = vmatprep.subr.bf16.mxu0 0
      %498 = vmatpush1.bf16.msra.mxu0 %v434
      %499 = vmatprep.mubr.bf16.mxu0 %v312
      %500 = vmatmul.mubr.bf16.gmra.mrb[0].mxu0 %v311
      %v501 = vpop.f32.mrb[0].mxu0
      %v502 = vadd.f32 0.0, %v501
      %v503 = vpop.f32.mrb[0].mxu0
      %v504 = vpop.f32.mrb[0].mxu0
      %v505 = vadd.f32 0.0, %v504
      %v506 = vpop.f32.mrb[0].mxu0
      %507 = vmatprep.mubr.bf16.mxu0 %v315
      %508 = vmatmul.mubr.bf16.gmra.mrb[0].mxu0 %v314
      %v509 = vpop.f32.mrb[0].mxu0
      %v510 = vadd.f32 0.0, %v509
      %v511 = vpop.f32.mrb[0].mxu0
      %v512 = vpop.f32.mrb[0].mxu0
      %v513 = vadd.f32 0.0, %v512
      %v514 = vpop.f32.mrb[0].mxu0
      %515 = vdwg.mxu0
      %516 = vmatprep.subr.bf16.mxu0 0
      %517 = vmatpush1.bf16.msra.mxu0 %v435
      %518 = vmatprep.subr.bf16.mxu0 0
      %519 = vmatpush1.bf16.msra.mxu0 %v436
      %520 = vmatprep.subr.bf16.mxu0 0
      %521 = vmatpush1.bf16.msra.mxu0 %v437
      %522 = vmatprep.subr.bf16.mxu0 0
      %523 = vmatpush1.bf16.msra.mxu0 %v438
      %524 = vmatprep.subr.bf16.mxu0 0
      %525 = vmatpush1.bf16.msra.mxu0 %v439
      %526 = vmatprep.subr.bf16.mxu0 0
      %527 = vmatpush1.bf16.msra.mxu0 %v440
      %528 = vmatprep.subr.bf16.mxu0 0
      %529 = vmatpush1.bf16.msra.mxu0 %v441
      %530 = vmatprep.subr.bf16.mxu0 0
      %531 = vmatpush1.bf16.msra.mxu0 %v442
      %532 = vmatprep.subr.bf16.mxu0 0
      %533 = vmatpush1.bf16.msra.mxu0 0
      %534 = vmatprep.subr.bf16.mxu0 0
      %535 = vmatpush1.bf16.msra.mxu0 0
      %536 = vmatprep.subr.bf16.mxu0 0
      %537 = vmatpush1.bf16.msra.mxu0 0
      %538 = vmatprep.subr.bf16.mxu0 0
      %539 = vmatpush1.bf16.msra.mxu0 0
      %540 = vmatprep.subr.bf16.mxu0 0
      %541 = vmatpush1.bf16.msra.mxu0 0
      %542 = vmatprep.subr.bf16.mxu0 0
      %543 = vmatpush1.bf16.msra.mxu0 0
      %544 = vmatprep.subr.bf16.mxu0 0
      %545 = vmatpush1.bf16.msra.mxu0 0
      %546 = vmatprep.subr.bf16.mxu0 0
      %547 = vmatpush1.bf16.msra.mxu0 0
      %548 = vmatprep.mubr.bf16.mxu0 0
      %549 = vmatmul.mubr.bf16.gmra.mrb[0].mxu0 %v313
      %v550 = vpop.f32.mrb[0].mxu0
      %v551 = vadd.f32 %v502, %v550
      %v552 = vpop.f32.mrb[0].mxu0
      %v553 = vpop.f32.mrb[0].mxu0
      %v554 = vadd.f32 %v505, %v553
      %v555 = vpop.f32.mrb[0].mxu0
      %556 = vmatprep.mubr.bf16.mxu0 0
      %557 = vmatmul.mubr.bf16.gmra.mrb[0].mxu0 %v316
      %v558 = vpop.f32.mrb[0].mxu0
      %v559 = vadd.f32 %v510, %v558
      %v560 = vpop.f32.mrb[0].mxu0
      %v561 = vpop.f32.mrb[0].mxu0
      %v562 = vadd.f32 %v513, %v561
      %v563 = vpop.f32.mrb[0].mxu0
      %564 = vdwg.mxu0
      %v569 = vunpack.c.l.b16 %v182
      %v570 = vunpack.c.h.b16 %v182
      %v571 = vunpack.c.l.b16 %v183
      %v572 = vunpack.c.l.b16 %v184
      %v573 = vunpack.c.h.b16 %v184
      %v574 = vunpack.c.l.b16 %v185
      %v575 = vpack.c.b16 %v572, %v569
      %v576 = vpack.c.b16 %v573, %v570
      %v577 = vpack.c.b16 %v574, %v571
      %v629 = vunpack.c.l.b16 %v190
      %v630 = vunpack.c.l.b16 %v191
      %v631 = vunpack.c.l.b16 %v192
      %v632 = vunpack.c.l.b16 %v193
      %v633 = vunpack.c.l.b16 %v194
      %v634 = vunpack.c.l.b16 %v195
      %v635 = vunpack.c.l.b16 %v196
      %v636 = vunpack.c.l.b16 %v197
      %v637 = vunpack.c.l.b16 %v198
      %v638 = vunpack.c.l.b16 %v199
      %v639 = vunpack.c.l.b16 %v200
      %v640 = vunpack.c.l.b16 %v201
      %v641 = vunpack.c.l.b16 %v202
      %v642 = vunpack.c.l.b16 %v203
      %v643 = vunpack.c.l.b16 %v204
      %v644 = vunpack.c.l.b16 %v205
      %v645 = vunpack.c.l.b16 %v206
      %v646 = vunpack.c.l.b16 %v207
      %v647 = vunpack.c.l.b16 %v208
      %v648 = vunpack.c.l.b16 %v209
      %v649 = vunpack.c.l.b16 %v210
      %v650 = vunpack.c.l.b16 %v211
      %v651 = vunpack.c.l.b16 %v212
      %v652 = vunpack.c.l.b16 %v213
      %v653 = vunpack.c.l.b16 %v214
      %v654 = vunpack.c.l.b16 %v215
      %v655 = vunpack.c.l.b16 %v216
      %v656 = vunpack.c.l.b16 %v217
      %v657 = vunpack.c.l.b16 %v218
      %v658 = vunpack.c.l.b16 %v219
      %v659 = vunpack.c.l.b16 %v220
      %v660 = vunpack.c.l.b16 %v221
      %v661 = vunpack.c.l.b16 %v222
      %v662 = vunpack.c.l.b16 %v223
      %v663 = vunpack.c.l.b16 %v224
      %v664 = vunpack.c.l.b16 %v225
      %v665 = vunpack.c.l.b16 %v226
      %v666 = vunpack.c.l.b16 %v227
      %v667 = vunpack.c.l.b16 %v228
      %v668 = vunpack.c.l.b16 %v229
      %v669 = vunpack.c.l.b16 %v230
      %v670 = vunpack.c.l.b16 %v231
      %v671 = vunpack.c.l.b16 %v232
      %v672 = vunpack.c.l.b16 %v233
      %v673 = vunpack.c.l.b16 %v234
      %v674 = vunpack.c.l.b16 %v235
      %v675 = vunpack.c.l.b16 %v236
      %v676 = vunpack.c.l.b16 %v237
      %v677 = vpack.c.b16 %v630, %v629
      %v678 = vpack.c.b16 %v632, %v631
      %v679 = vpack.c.b16 %v634, %v633
      %v680 = vpack.c.b16 %v636, %v635
      %v681 = vpack.c.b16 %v638, %v637
      %v682 = vpack.c.b16 %v640, %v639
      %v683 = vpack.c.b16 %v642, %v641
      %v684 = vpack.c.b16 %v644, %v643
      %v685 = vpack.c.b16 %v646, %v645
      %v686 = vpack.c.b16 %v648, %v647
      %v687 = vpack.c.b16 %v650, %v649
      %v688 = vpack.c.b16 %v652, %v651
      %v689 = vpack.c.b16 %v654, %v653
      %v690 = vpack.c.b16 %v656, %v655
      %v691 = vpack.c.b16 %v658, %v657
      %v692 = vpack.c.b16 %v660, %v659
      %v693 = vpack.c.b16 %v662, %v661
      %v694 = vpack.c.b16 %v664, %v663
      %v695 = vpack.c.b16 %v666, %v665
      %v696 = vpack.c.b16 %v668, %v667
      %v697 = vpack.c.b16 %v670, %v669
      %v698 = vpack.c.b16 %v672, %v671
      %v699 = vpack.c.b16 %v674, %v673
      %v700 = vpack.c.b16 %v676, %v675
      %725 = vmatprep.subr.bf16.mxu0 0
      %726 = vmatpush1.bf16.msra.mxu0 %v677
      %727 = vmatprep.subr.bf16.mxu0 0
      %728 = vmatpush1.bf16.msra.mxu0 %v678
      %729 = vmatprep.subr.bf16.mxu0 0
      %730 = vmatpush1.bf16.msra.mxu0 %v679
      %731 = vmatprep.subr.bf16.mxu0 0
      %732 = vmatpush1.bf16.msra.mxu0 %v680
      %733 = vmatprep.subr.bf16.mxu0 0
      %734 = vmatpush1.bf16.msra.mxu0 %v681
      %735 = vmatprep.subr.bf16.mxu0 0
      %736 = vmatpush1.bf16.msra.mxu0 %v682
      %737 = vmatprep.subr.bf16.mxu0 0
      %738 = vmatpush1.bf16.msra.mxu0 %v683
      %739 = vmatprep.subr.bf16.mxu0 0
      %740 = vmatpush1.bf16.msra.mxu0 %v684
      %741 = vmatprep.subr.bf16.mxu0 0
      %742 = vmatpush1.bf16.msra.mxu0 %v685
      %743 = vmatprep.subr.bf16.mxu0 0
      %744 = vmatpush1.bf16.msra.mxu0 %v686
      %745 = vmatprep.subr.bf16.mxu0 0
      %746 = vmatpush1.bf16.msra.mxu0 %v687
      %747 = vmatprep.subr.bf16.mxu0 0
      %748 = vmatpush1.bf16.msra.mxu0 %v688
      %749 = vmatprep.subr.bf16.mxu0 0
      %750 = vmatpush1.bf16.msra.mxu0 %v689
      %751 = vmatprep.subr.bf16.mxu0 0
      %752 = vmatpush1.bf16.msra.mxu0 %v690
      %753 = vmatprep.subr.bf16.mxu0 0
      %754 = vmatpush1.bf16.msra.mxu0 %v691
      %755 = vmatprep.subr.bf16.mxu0 0
      %756 = vmatpush1.bf16.msra.mxu0 %v692
      %757 = vmatprep.mubr.bf16.mxu0 %v576
      %758 = vmatmul.mubr.bf16.gmra.mrb[0].mxu0 %v575
      %v759 = vpop.f32.mrb[0].mxu0
      %v760 = vadd.f32 %v551, %v759
      %v761 = vpop.f32.mrb[0].mxu0
      %v762 = vpop.f32.mrb[0].mxu0
      %v763 = vadd.f32 %v554, %v762
      %v764 = vpop.f32.mrb[0].mxu0
      %765 = vmatprep.mubr.bf16.mxu0 %v312
      %766 = vmatmul.mubr.bf16.gmra.mrb[0].mxu0 %v311
      %v767 = vpop.f32.mrb[0].mxu0
      %v768 = vadd.f32 %v559, %v767
      %v769 = vpop.f32.mrb[0].mxu0
      %v770 = vpop.f32.mrb[0].mxu0
      %v771 = vadd.f32 %v562, %v770
      %v772 = vpop.f32.mrb[0].mxu0
      %773 = vdwg.mxu0
      %774 = vmatprep.subr.bf16.mxu0 0
      %775 = vmatpush1.bf16.msra.mxu0 %v693
      %776 = vmatprep.subr.bf16.mxu0 0
      %777 = vmatpush1.bf16.msra.mxu0 %v694
      %778 = vmatprep.subr.bf16.mxu0 0
      %779 = vmatpush1.bf16.msra.mxu0 %v695
      %780 = vmatprep.subr.bf16.mxu0 0
      %781 = vmatpush1.bf16.msra.mxu0 %v696
      %782 = vmatprep.subr.bf16.mxu0 0
      %783 = vmatpush1.bf16.msra.mxu0 %v697
      %784 = vmatprep.subr.bf16.mxu0 0
      %785 = vmatpush1.bf16.msra.mxu0 %v698
      %786 = vmatprep.subr.bf16.mxu0 0
      %787 = vmatpush1.bf16.msra.mxu0 %v699
      %788 = vmatprep.subr.bf16.mxu0 0
      %789 = vmatpush1.bf16.msra.mxu0 %v700
      %790 = vmatprep.subr.bf16.mxu0 0
      %791 = vmatpush1.bf16.msra.mxu0 0
      %792 = vmatprep.subr.bf16.mxu0 0
      %793 = vmatpush1.bf16.msra.mxu0 0
      %794 = vmatprep.subr.bf16.mxu0 0
      %795 = vmatpush1.bf16.msra.mxu0 0
      %796 = vmatprep.subr.bf16.mxu0 0
      %797 = vmatpush1.bf16.msra.mxu0 0
      %798 = vmatprep.subr.bf16.mxu0 0
      %799 = vmatpush1.bf16.msra.mxu0 0
      %800 = vmatprep.subr.bf16.mxu0 0
      %801 = vmatpush1.bf16.msra.mxu0 0
      %802 = vmatprep.subr.bf16.mxu0 0
      %803 = vmatpush1.bf16.msra.mxu0 0
      %804 = vmatprep.subr.bf16.mxu0 0
      %805 = vmatpush1.bf16.msra.mxu0 0
      %806 = vmatprep.mubr.bf16.mxu0 0
      %807 = vmatmul.mubr.bf16.gmra.mrb[0].mxu0 %v577
      %v808 = vpop.f32.mrb[0].mxu0
      %v809 = vadd.f32 %v760, %v808
      %v810 = vpop.f32.mrb[0].mxu0
      %v811 = vpop.f32.mrb[0].mxu0
      %v812 = vadd.f32 %v763, %v811
      %v813 = vpop.f32.mrb[0].mxu0
      %814 = vmatprep.mubr.bf16.mxu0 0
      %815 = vmatmul.mubr.bf16.gmra.mrb[0].mxu0 %v313
      %v816 = vpop.f32.mrb[0].mxu0
      %v817 = vadd.f32 %v768, %v816
      %v818 = vpop.f32.mrb[0].mxu0
      %v819 = vpop.f32.mrb[0].mxu0
      %v820 = vadd.f32 %v771, %v819
      %v821 = vpop.f32.mrb[0].mxu0
      %822 = vdwg.mxu0
      %v823 = vld [vmem:[%s168 + $0x30] sm:$0xff]
      %v824 = vld [vmem:[%s168 + $0x38] sm:$0xf]
      %v825 = vld [vmem:[%s168 + $0x3c] sm:$0xff]
      %v826 = vld [vmem:[%s168 + $0x44] sm:$0xf]
      %v827 = vld [vmem:[%s168 + $0x48] sm:$0xff]
      %v828 = vld [vmem:[%s168 + $0x50] sm:$0xf]
      %v829 = vld [vmem:[%s168 + $0x54] sm:$0xff]
      %v830 = vld [vmem:[%s168 + $0x5c] sm:$0xf]
      %s831 = scalar_lea.vmem %s172, 384
      %v832 = vld [vmem:[%s831] sm:$0xf]
      %v833 = vld [vmem:[%s831 + $0x4] sm:$0xf]
      %v834 = vld [vmem:[%s831 + $0x8] sm:$0xf]
      %v835 = vld [vmem:[%s831 + $0xc] sm:$0xf]
      %v836 = vld [vmem:[%s831 + $0x10] sm:$0xf]
      %v837 = vld [vmem:[%s831 + $0x14] sm:$0xf]
      %v838 = vld [vmem:[%s831 + $0x18] sm:$0xf]
      %v839 = vld [vmem:[%s831 + $0x1c] sm:$0xf]
      %v840 = vld [vmem:[%s831 + $0x20] sm:$0xf]
      %v841 = vld [vmem:[%s831 + $0x24] sm:$0xf]
      %v842 = vld [vmem:[%s831 + $0x28] sm:$0xf]
      %v843 = vld [vmem:[%s831 + $0x2c] sm:$0xf]
      %v844 = vld [vmem:[%s831 + $0x30] sm:$0xf]
      %v845 = vld [vmem:[%s831 + $0x34] sm:$0xf]
      %v846 = vld [vmem:[%s831 + $0x38] sm:$0xf]
      %v847 = vld [vmem:[%s831 + $0x3c] sm:$0xf]
      %v848 = vld [vmem:[%s831 + $0x40] sm:$0xf]
      %v849 = vld [vmem:[%s831 + $0x44] sm:$0xf]
      %v850 = vld [vmem:[%s831 + $0x48] sm:$0xf]
      %v851 = vld [vmem:[%s831 + $0x4c] sm:$0xf]
      %v852 = vld [vmem:[%s831 + $0x50] sm:$0xf]
      %v853 = vld [vmem:[%s831 + $0x54] sm:$0xf]
      %v854 = vld [vmem:[%s831 + $0x58] sm:$0xf]
      %v855 = vld [vmem:[%s831 + $0x5c] sm:$0xf]
      %v856 = vld [vmem:[%s831 + $0x60] sm:$0xf]
      %v857 = vld [vmem:[%s831 + $0x64] sm:$0xf]
      %v858 = vld [vmem:[%s831 + $0x68] sm:$0xf]
      %v859 = vld [vmem:[%s831 + $0x6c] sm:$0xf]
      %v860 = vld [vmem:[%s831 + $0x70] sm:$0xf]
      %v861 = vld [vmem:[%s831 + $0x74] sm:$0xf]
      %v862 = vld [vmem:[%s831 + $0x78] sm:$0xf]
      %v863 = vld [vmem:[%s831 + $0x7c] sm:$0xf]
      %v864 = vld [vmem:[%s831 + $0x80] sm:$0xf]
      %v865 = vld [vmem:[%s831 + $0x84] sm:$0xf]
      %v866 = vld [vmem:[%s831 + $0x88] sm:$0xf]
      %v867 = vld [vmem:[%s831 + $0x8c] sm:$0xf]
      %v868 = vld [vmem:[%s831 + $0x90] sm:$0xf]
      %v869 = vld [vmem:[%s831 + $0x94] sm:$0xf]
      %v870 = vld [vmem:[%s831 + $0x98] sm:$0xf]
      %v871 = vld [vmem:[%s831 + $0x9c] sm:$0xf]
      %v872 = vld [vmem:[%s831 + $0xa0] sm:$0xf]
      %v873 = vld [vmem:[%s831 + $0xa4] sm:$0xf]
      %v874 = vld [vmem:[%s831 + $0xa8] sm:$0xf]
      %v875 = vld [vmem:[%s831 + $0xac] sm:$0xf]
      %v876 = vld [vmem:[%s831 + $0xb0] sm:$0xf]
      %v877 = vld [vmem:[%s831 + $0xb4] sm:$0xf]
      %v878 = vld [vmem:[%s831 + $0xb8] sm:$0xf]
      %v879 = vld [vmem:[%s831 + $0xbc] sm:$0xf]
      %v888 = vunpack.c.l.b16 %v823
      %v889 = vunpack.c.h.b16 %v823
      %v890 = vunpack.c.l.b16 %v824
      %v891 = vunpack.c.l.b16 %v825
      %v892 = vunpack.c.h.b16 %v825
      %v893 = vunpack.c.l.b16 %v826
      %v894 = vunpack.c.l.b16 %v827
      %v895 = vunpack.c.h.b16 %v827
      %v896 = vunpack.c.l.b16 %v828
      %v897 = vunpack.c.l.b16 %v829
      %v898 = vunpack.c.h.b16 %v829
      %v899 = vunpack.c.l.b16 %v830
      %v900 = vpack.c.b16 %v891, %v888
      %v901 = vpack.c.b16 %v892, %v889
      %v902 = vpack.c.b16 %v893, %v890
      %v903 = vpack.c.b16 %v897, %v894
      %v904 = vpack.c.b16 %v898, %v895
      %v905 = vpack.c.b16 %v899, %v896
      %v960 = vunpack.c.l.b16 %v832
      %v961 = vunpack.c.l.b16 %v833
      %v962 = vunpack.c.l.b16 %v834
      %v963 = vunpack.c.l.b16 %v835
      %v964 = vunpack.c.l.b16 %v836
      %v965 = vunpack.c.l.b16 %v837
      %v966 = vunpack.c.l.b16 %v838
      %v967 = vunpack.c.l.b16 %v839
      %v968 = vunpack.c.l.b16 %v840
      %v969 = vunpack.c.l.b16 %v841
      %v970 = vunpack.c.l.b16 %v842
      %v971 = vunpack.c.l.b16 %v843
      %v972 = vunpack.c.l.b16 %v844
      %v973 = vunpack.c.l.b16 %v845
      %v974 = vunpack.c.l.b16 %v846
      %v975 = vunpack.c.l.b16 %v847
      %v976 = vunpack.c.l.b16 %v848
      %v977 = vunpack.c.l.b16 %v849
      %v978 = vunpack.c.l.b16 %v850
      %v979 = vunpack.c.l.b16 %v851
      %v980 = vunpack.c.l.b16 %v852
      %v981 = vunpack.c.l.b16 %v853
      %v982 = vunpack.c.l.b16 %v854
      %v983 = vunpack.c.l.b16 %v855
      %v984 = vunpack.c.l.b16 %v856
      %v985 = vunpack.c.l.b16 %v857
      %v986 = vunpack.c.l.b16 %v858
      %v987 = vunpack.c.l.b16 %v859
      %v988 = vunpack.c.l.b16 %v860
      %v989 = vunpack.c.l.b16 %v861
      %v990 = vunpack.c.l.b16 %v862
      %v991 = vunpack.c.l.b16 %v863
      %v992 = vunpack.c.l.b16 %v864
      %v993 = vunpack.c.l.b16 %v865
      %v994 = vunpack.c.l.b16 %v866
      %v995 = vunpack.c.l.b16 %v867
      %v996 = vunpack.c.l.b16 %v868
      %v997 = vunpack.c.l.b16 %v869
      %v998 = vunpack.c.l.b16 %v870
      %v999 = vunpack.c.l.b16 %v871
      %v1000 = vunpack.c.l.b16 %v872
      %v1001 = vunpack.c.l.b16 %v873
      %v1002 = vunpack.c.l.b16 %v874
      %v1003 = vunpack.c.l.b16 %v875
      %v1004 = vunpack.c.l.b16 %v876
      %v1005 = vunpack.c.l.b16 %v877
      %v1006 = vunpack.c.l.b16 %v878
      %v1007 = vunpack.c.l.b16 %v879
      %v1008 = vpack.c.b16 %v961, %v960
      %v1009 = vpack.c.b16 %v963, %v962
      %v1010 = vpack.c.b16 %v965, %v964
      %v1011 = vpack.c.b16 %v967, %v966
      %v1012 = vpack.c.b16 %v969, %v968
      %v1013 = vpack.c.b16 %v971, %v970
      %v1014 = vpack.c.b16 %v973, %v972
      %v1015 = vpack.c.b16 %v975, %v974
      %v1016 = vpack.c.b16 %v977, %v976
      %v1017 = vpack.c.b16 %v979, %v978
      %v1018 = vpack.c.b16 %v981, %v980
      %v1019 = vpack.c.b16 %v983, %v982
      %v1020 = vpack.c.b16 %v985, %v984
      %v1021 = vpack.c.b16 %v987, %v986
      %v1022 = vpack.c.b16 %v989, %v988
      %v1023 = vpack.c.b16 %v991, %v990
      %v1024 = vpack.c.b16 %v993, %v992
      %v1025 = vpack.c.b16 %v995, %v994
      %v1026 = vpack.c.b16 %v997, %v996
      %v1027 = vpack.c.b16 %v999, %v998
      %v1028 = vpack.c.b16 %v1001, %v1000
      %v1029 = vpack.c.b16 %v1003, %v1002
      %v1030 = vpack.c.b16 %v1005, %v1004
      %v1031 = vpack.c.b16 %v1007, %v1006
      %1056 = vmatprep.subr.bf16.mxu0 0
      %1057 = vmatpush1.bf16.msra.mxu0 %v1008
      %1058 = vmatprep.subr.bf16.mxu0 0
      %1059 = vmatpush1.bf16.msra.mxu0 %v1009
      %1060 = vmatprep.subr.bf16.mxu0 0
      %1061 = vmatpush1.bf16.msra.mxu0 %v1010
      %1062 = vmatprep.subr.bf16.mxu0 0
      %1063 = vmatpush1.bf16.msra.mxu0 %v1011
      %1064 = vmatprep.subr.bf16.mxu0 0
      %1065 = vmatpush1.bf16.msra.mxu0 %v1012
      %1066 = vmatprep.subr.bf16.mxu0 0
      %1067 = vmatpush1.bf16.msra.mxu0 %v1013
      %1068 = vmatprep.subr.bf16.mxu0 0
      %1069 = vmatpush1.bf16.msra.mxu0 %v1014
      %1070 = vmatprep.subr.bf16.mxu0 0
      %1071 = vmatpush1.bf16.msra.mxu0 %v1015
      %1072 = vmatprep.subr.bf16.mxu0 0
      %1073 = vmatpush1.bf16.msra.mxu0 %v1016
      %1074 = vmatprep.subr.bf16.mxu0 0
      %1075 = vmatpush1.bf16.msra.mxu0 %v1017
      %1076 = vmatprep.subr.bf16.mxu0 0
      %1077 = vmatpush1.bf16.msra.mxu0 %v1018
      %1078 = vmatprep.subr.bf16.mxu0 0
      %1079 = vmatpush1.bf16.msra.mxu0 %v1019
      %1080 = vmatprep.subr.bf16.mxu0 0
      %1081 = vmatpush1.bf16.msra.mxu0 %v1020
      %1082 = vmatprep.subr.bf16.mxu0 0
      %1083 = vmatpush1.bf16.msra.mxu0 %v1021
      %1084 = vmatprep.subr.bf16.mxu0 0
      %1085 = vmatpush1.bf16.msra.mxu0 %v1022
      %1086 = vmatprep.subr.bf16.mxu0 0
      %1087 = vmatpush1.bf16.msra.mxu0 %v1023
      %1088 = vmatprep.mubr.bf16.mxu0 %v901
      %1089 = vmatmul.mubr.bf16.gmra.mrb[0].mxu0 %v900
      %v1090 = vpop.f32.mrb[0].mxu0
      %v1091 = vadd.f32 0.0, %v1090
      %v1092 = vpop.f32.mrb[0].mxu0
      %v1093 = vpop.f32.mrb[0].mxu0
      %v1094 = vadd.f32 0.0, %v1093
      %v1095 = vpop.f32.mrb[0].mxu0
      %1096 = vmatprep.mubr.bf16.mxu0 %v904
      %1097 = vmatmul.mubr.bf16.gmra.mrb[0].mxu0 %v903
      %v1098 = vpop.f32.mrb[0].mxu0
      %v1099 = vadd.f32 0.0, %v1098
      %v1100 = vpop.f32.mrb[0].mxu0
      %v1101 = vpop.f32.mrb[0].mxu0
      %v1102 = vadd.f32 0.0, %v1101
      %v1103 = vpop.f32.mrb[0].mxu0
      %1104 = vdwg.mxu0
      %1105 = vmatprep.subr.bf16.mxu0 0
      %1106 = vmatpush1.bf16.msra.mxu0 %v1024
      %1107 = vmatprep.subr.bf16.mxu0 0
      %1108 = vmatpush1.bf16.msra.mxu0 %v1025
      %1109 = vmatprep.subr.bf16.mxu0 0
      %1110 = vmatpush1.bf16.msra.mxu0 %v1026
      %1111 = vmatprep.subr.bf16.mxu0 0
      %1112 = vmatpush1.bf16.msra.mxu0 %v1027
      %1113 = vmatprep.subr.bf16.mxu0 0
      %1114 = vmatpush1.bf16.msra.mxu0 %v1028
      %1115 = vmatprep.subr.bf16.mxu0 0
      %1116 = vmatpush1.bf16.msra.mxu0 %v1029
      %1117 = vmatprep.subr.bf16.mxu0 0
      %1118 = vmatpush1.bf16.msra.mxu0 %v1030
      %1119 = vmatprep.subr.bf16.mxu0 0
      %1120 = vmatpush1.bf16.msra.mxu0 %v1031
      %1121 = vmatprep.subr.bf16.mxu0 0
      %1122 = vmatpush1.bf16.msra.mxu0 0
      %1123 = vmatprep.subr.bf16.mxu0 0
      %1124 = vmatpush1.bf16.msra.mxu0 0
      %1125 = vmatprep.subr.bf16.mxu0 0
      %1126 = vmatpush1.bf16.msra.mxu0 0
      %1127 = vmatprep.subr.bf16.mxu0 0
      %1128 = vmatpush1.bf16.msra.mxu0 0
      %1129 = vmatprep.subr.bf16.mxu0 0
      %1130 = vmatpush1.bf16.msra.mxu0 0
      %1131 = vmatprep.subr.bf16.mxu0 0
      %1132 = vmatpush1.bf16.msra.mxu0 0
      %1133 = vmatprep.subr.bf16.mxu0 0
      %1134 = vmatpush1.bf16.msra.mxu0 0
      %1135 = vmatprep.subr.bf16.mxu0 0
      %1136 = vmatpush1.bf16.msra.mxu0 0
      %1137 = vmatprep.mubr.bf16.mxu0 0
      %1138 = vmatmul.mubr.bf16.gmra.mrb[0].mxu0 %v902
      %v1139 = vpop.f32.mrb[0].mxu0
      %v1140 = vadd.f32 %v1091, %v1139
      %v1141 = vpop.f32.mrb[0].mxu0
      %v1142 = vpop.f32.mrb[0].mxu0
      %v1143 = vadd.f32 %v1094, %v1142
      %v1144 = vpop.f32.mrb[0].mxu0
      %1145 = vmatprep.mubr.bf16.mxu0 0
      %1146 = vmatmul.mubr.bf16.gmra.mrb[0].mxu0 %v905
      %v1147 = vpop.f32.mrb[0].mxu0
      %v1148 = vadd.f32 %v1099, %v1147
      %v1149 = vpop.f32.mrb[0].mxu0
      %v1150 = vpop.f32.mrb[0].mxu0
      %v1151 = vadd.f32 %v1102, %v1150
      %v1152 = vpop.f32.mrb[0].mxu0
      %1153 = vdwg.mxu0
      %v1154 = vadd.f32 %v809, %v1140
      %v1155 = vadd.f32 %v812, %v1143
      %v1156 = vadd.f32 %v817, %v1148
      %v1157 = vadd.f32 %v820, %v1151
      %1158 = vst [vmem:[%s180] sm:$0xff] %v1154
      %1159 = vst [vmem:[%s180 + $0x8] sm:$0xff] %v1155
      %1160 = vst [vmem:[%s180 + $0x10] sm:$0xff] %v1156
      %1161 = vst [vmem:[%s180 + $0x18] sm:$0xff] %v1157
      %p1162 = scmp.lt.s32.totalorder %s18, 1
      %s1163 = scalar_select %p1162, %s18, 1
      %p1164 = scmp.lt.s32.totalorder %s17, 0
      %s1165 = scalar_select %p1164, %s17, 0
      %s1166 = smul.addr %s1163, 4
      %s1167 = sadd.s32 %s1165, %s1166
      %s1168 = smul.addr %s1167, 8
      %s1169 = scalar_lea.vmem %s2, %s1168
      // Predicated region
      $region29: #{_lambda_.9} parent=27 // pred_check
        %p1170 = pneg %p97
      $region30: #{_lambda_.9} parent=27 // pred_check_branch
        %1172 = sbr.rel (%p1170) target = $region32
      $region31: #{_lambda_.9} parent=27 // pred_region
        _
      $region32: #{_lambda_.9} parent=27 // pred_fallthru
        _
    $region28: #{_lambda_.9} parent=5 // pred_fallthru
      _
    %p1173 = scmp.le.s32.totalorder 2, %s8
    // Predicated region
    $region33: #{_lambda_.9} parent=5 // pred_check
      %p1174 = pneg %p1173
    $region34: #{_lambda_.9} parent=5 // pred_check_branch
      %1176 = sbr.rel (%p1174) target = $region36
    $region35: #{_lambda_.9} parent=5 // pred_region
      %s1177 = ssub.s32 %s8, 2
      // Predicated region
      $region37: #{_lambda_.9} parent=35 // pred_check
        %p1178 = pneg %p103
      $region38: #{_lambda_.9} parent=35 // pred_check_branch
        %1180 = sbr.rel (%p1178) target = $region40
      $region39: #{_lambda_.9} parent=35 // pred_region
        %p1181 = scmp.lt.s32.totalorder %s20, 1
        %s1182 = scalar_select %p1181, %s20, 1
        %p1183 = scmp.lt.s32.totalorder %s19, 0
        %s1184 = scalar_select %p1183, %s19, 0
        %s1185 = smul.addr %s1182, 4
        %s1186 = sadd.s32 %s1184, %s1185
        %s1187 = smul.addr %s1186, 8
        %s1188 = scalar_lea.vmem %s2, %s1187
      $region40: #{_lambda_.9} parent=35 // pred_fallthru
        _
    $region36: #{_lambda_.9} parent=5 // pred_fallthru
      _
  $region6: #{_lambda_.9} parent=0 // loop_footer
    %s12 = sadd.s32 1, %s8
  $region7: #{_lambda_.9} parent=0 // loop_footer_branch
    %7 = sbr.rel target = $region3
  $region8: #{_lambda_.9} parent=0 // loop_exit
    _

// kernel: _lambda_.8
$region0: #{_lambda_.8}
  #allocation0 [shape = 'u32[]', space=smem, size = 0x4, offset = 0x4, fixed_abs, tag = 'smem constant byte address 0x4 - core index']
  #allocation1 [shape = 'u32[144,128]{1,0:T(1,128)}', space=vmem, size = 0x12000, scoped, tag = 'internal scratch']
  %s0 = inlined_call_operand.vmem [shape: bf16[2,64,384], index: 0, kind: input, shape index: {}]
  %s1 = inlined_call_operand.vmem [shape: bf16[3,384,128], index: 1, kind: input, shape index: {}]
  %s2 = inlined_call_operand.vmem [shape: f32[1,128], index: 2, kind: input, shape index: {}]
  %s3 = inlined_call_operand.vmem [shape: f32[1,128], index: 3, kind: input, shape index: {}]
  %s4 = inlined_call_operand.vmem [shape: f32[1,128], index: 4, kind: input, shape index: {}]
  %s5 = inlined_call_operand.vmem [shape: bf16[2,32,128], index: 5, kind: output, shape index: {}]
  %s6 = sld [smem:[#allocation0]]
  $region53: #{_lambda_.8} parent=0
    _
  %s8 = ssub.s32 1, %s6
  %s9 = scalar_select 0, %s8, %s6
  loop: start=0, step=1, limit=4
  $region2: #{_lambda_.8} parent=0 // loop_pre_header
    _
  $region3: #{_lambda_.8} parent=0 // loop_header
    %s11 = sphi 0, %s15
    %p12 = scmp.ge.s32.totalorder %s11, 4
    %s18 = sphi 0, %s30
    %s19 = sphi 0, %s26
    %s20 = sphi 0, %s18
    %s21 = sphi 0, %s19
    %s22 = sphi 0, %s20
    %s23 = sphi 0, %s21
    %s33 = sphi 0, %s35
    %s36 = sphi 0, %s33
    %s37 = sphi 0, %s36
    %s53 = sphi 0, %s37
    %s59 = sphi 0, %s61
    %s62 = sphi 0, %s59
    %s63 = sphi 0, %s62
    %s79 = sphi 0, %s63
    %s85 = sphi 0, %s87
    %s88 = sphi 0, %s85
    %s89 = sphi 0, %s88
    %s105 = sphi 0, %s89
    %s111 = sphi 0, %s113
    %s114 = sphi 0, %s111
    %s115 = sphi 0, %s114
    %s131 = sphi 0, %s115
    %s137 = sphi 0, %s139
    %s140 = sphi 0, %s137
    %s141 = sphi 0, %s140
    %s157 = sphi 0, %s141
    %s165 = sphi 0, %s167
    %s168 = sphi 0, %s165
    %s169 = sphi 0, %s168
    %s185 = sphi 0, %s169
  $region4: #{_lambda_.8} parent=0 // loop_header_branch
    %14 = sbr.rel (%p12) target = $region8
  $region5: #{_lambda_.8} parent=0 // loop_body
    %s16 = ssub.s32 %s11, 1
    %s17 = ssub.s32 %s11, 2
    %s24 = sadd.s32 1, %s19
    %p25 = scmp.ge.s32.totalorder %s24, 2
    %s26 = scalar_select %p25, 0, %s24
    %s27 = sadd.s32 1, %s18
    %s28 = scalar_select %p25, %s27, %s18
    %p29 = scmp.ge.s32.totalorder %s28, 1
    %s30 = scalar_select %p29, 0, %s28
    %s31 = ssub.s32 %s19, %s26
    %p32 = scmp.eq.s32.totalorder %s31, 0
    %s34 = sadd.s32 %s33, 1
    %s35 = scalar_select %p32, %s33, %s34
    %p38 = pneg %p32
    %p39 = scmp.eq.s32.totalorder %s11, 1
    %p40 = por %p38, %p39
    %p41 = scmp.ne.s32.totalorder %s33, %s36
    %p42 = scmp.eq.s32.totalorder %s11, 0
    %p43 = por %p41, %p42
    %p44 = scmp.ne.s32.totalorder %s33, %s36
    %p45 = scmp.eq.s32.totalorder %s16, 1
    %p46 = por %p44, %p45
    %p47 = scmp.ne.s32.totalorder %s36, %s37
    %p48 = scmp.eq.s32.totalorder %s16, 0
    %p49 = por %p47, %p48
    %p50 = scmp.ne.s32.totalorder %s36, %s37
    %p51 = scmp.eq.s32.totalorder %s17, 1
    %p52 = por %p50, %p51
    %p54 = scmp.ne.s32.totalorder %s37, %s53
    %p55 = scmp.eq.s32.totalorder %s17, 0
    %p56 = por %p54, %p55
    %s57 = ssub.s32 %s18, %s30
    %p58 = scmp.eq.s32.totalorder %s57, 0
    %s60 = sadd.s32 %s59, 1
    %s61 = scalar_select %p58, %s59, %s60
    %p64 = pneg %p58
    %p65 = scmp.eq.s32.totalorder %s11, 1
    %p66 = por %p64, %p65
    %p67 = scmp.ne.s32.totalorder %s59, %s62
    %p68 = scmp.eq.s32.totalorder %s11, 0
    %p69 = por %p67, %p68
    %p70 = scmp.ne.s32.totalorder %s59, %s62
    %p71 = scmp.eq.s32.totalorder %s16, 1
    %p72 = por %p70, %p71
    %p73 = scmp.ne.s32.totalorder %s62, %s63
    %p74 = scmp.eq.s32.totalorder %s16, 0
    %p75 = por %p73, %p74
    %p76 = scmp.ne.s32.totalorder %s62, %s63
    %p77 = scmp.eq.s32.totalorder %s17, 1
    %p78 = por %p76, %p77
    %p80 = scmp.ne.s32.totalorder %s63, %s79
    %p81 = scmp.eq.s32.totalorder %s17, 0
    %p82 = por %p80, %p81
    %s83 = ssub.s32 %s18, %s30
    %p84 = scmp.eq.s32.totalorder %s83, 0
    %s86 = sadd.s32 %s85, 1
    %s87 = scalar_select %p84, %s85, %s86
    %p90 = pneg %p84
    %p91 = scmp.eq.s32.totalorder %s11, 1
    %p92 = por %p90, %p91
    %p93 = scmp.ne.s32.totalorder %s85, %s88
    %p94 = scmp.eq.s32.totalorder %s11, 0
    %p95 = por %p93, %p94
    %p96 = scmp.ne.s32.totalorder %s85, %s88
    %p97 = scmp.eq.s32.totalorder %s16, 1
    %p98 = por %p96, %p97
    %p99 = scmp.ne.s32.totalorder %s88, %s89
    %p100 = scmp.eq.s32.totalorder %s16, 0
    %p101 = por %p99, %p100
    %p102 = scmp.ne.s32.totalorder %s88, %s89
    %p103 = scmp.eq.s32.totalorder %s17, 1
    %p104 = por %p102, %p103
    %p106 = scmp.ne.s32.totalorder %s89, %s105
    %p107 = scmp.eq.s32.totalorder %s17, 0
    %p108 = por %p106, %p107
    %s109 = ssub.s32 %s18, %s30
    %p110 = scmp.eq.s32.totalorder %s109, 0
    %s112 = sadd.s32 %s111, 1
    %s113 = scalar_select %p110, %s111, %s112
    %p116 = pneg %p110
    %p117 = scmp.eq.s32.totalorder %s11, 1
    %p118 = por %p116, %p117
    %p119 = scmp.ne.s32.totalorder %s111, %s114
    %p120 = scmp.eq.s32.totalorder %s11, 0
    %p121 = por %p119, %p120
    %p122 = scmp.ne.s32.totalorder %s111, %s114
    %p123 = scmp.eq.s32.totalorder %s16, 1
    %p124 = por %p122, %p123
    %p125 = scmp.ne.s32.totalorder %s114, %s115
    %p126 = scmp.eq.s32.totalorder %s16, 0
    %p127 = por %p125, %p126
    %p128 = scmp.ne.s32.totalorder %s114, %s115
    %p129 = scmp.eq.s32.totalorder %s17, 1
    %p130 = por %p128, %p129
    %p132 = scmp.ne.s32.totalorder %s115, %s131
    %p133 = scmp.eq.s32.totalorder %s17, 0
    %p134 = por %p132, %p133
    %s135 = ssub.s32 %s18, %s30
    %p136 = scmp.eq.s32.totalorder %s135, 0
    %s138 = sadd.s32 %s137, 1
    %s139 = scalar_select %p136, %s137, %s138
    %p142 = pneg %p136
    %p143 = scmp.eq.s32.totalorder %s11, 1
    %p144 = por %p142, %p143
    %p145 = scmp.ne.s32.totalorder %s137, %s140
    %p146 = scmp.eq.s32.totalorder %s11, 0
    %p147 = por %p145, %p146
    %p148 = scmp.ne.s32.totalorder %s137, %s140
    %p149 = scmp.eq.s32.totalorder %s16, 1
    %p150 = por %p148, %p149
    %p151 = scmp.ne.s32.totalorder %s140, %s141
    %p152 = scmp.eq.s32.totalorder %s16, 0
    %p153 = por %p151, %p152
    %p154 = scmp.ne.s32.totalorder %s140, %s141
    %p155 = scmp.eq.s32.totalorder %s17, 1
    %p156 = por %p154, %p155
    %p158 = scmp.ne.s32.totalorder %s141, %s157
    %p159 = scmp.eq.s32.totalorder %s17, 0
    %p160 = por %p158, %p159
    %s161 = ssub.s32 %s19, %s26
    %s162 = ssub.s32 %s18, %s30
    %s163 = sor.u32 %s161, %s162
    %p164 = scmp.eq.s32.totalorder %s163, 0
    %s166 = sadd.s32 %s165, 1
    %s167 = scalar_select %p164, %s165, %s166
    %p170 = pneg %p164
    %p171 = scmp.eq.s32.totalorder %s11, 1
    %p172 = por %p170, %p171
    %p173 = scmp.ne.s32.totalorder %s165, %s168
    %p174 = scmp.eq.s32.totalorder %s11, 0
    %p175 = por %p173, %p174
    %p176 = scmp.ne.s32.totalorder %s165, %s168
    %p177 = scmp.eq.s32.totalorder %s16, 1
    %p178 = por %p176, %p177
    %p179 = scmp.ne.s32.totalorder %s168, %s169
    %p180 = scmp.eq.s32.totalorder %s16, 0
    %p181 = por %p179, %p180
    %p182 = scmp.ne.s32.totalorder %s168, %s169
    %p183 = scmp.eq.s32.totalorder %s17, 1
    %p184 = por %p182, %p183
    %p186 = scmp.ne.s32.totalorder %s169, %s185
    %p187 = scmp.eq.s32.totalorder %s17, 0
    %p188 = por %p186, %p187
    %p189 = scmp.le.s32.totalorder 1, %s11
    %p190 = scmp.lt.s32.totalorder %s11, 3
    %p191 = pnand %p189, %p190
    %p192 = pneg %p191
    // Predicated region
    $region9: #{_lambda_.8} parent=5 // pred_check
      _
    $region10: #{_lambda_.8} parent=5 // pred_check_branch
      %194 = sbr.rel (%p191) target = $region12
    $region11: #{_lambda_.8} parent=5 // pred_region
      %s195 = ssub.s32 %s11, 1
      // Predicated region
      $region13: #{_lambda_.8} parent=11 // pred_check
        %p196 = pneg %p75
      $region14: #{_lambda_.8} parent=11 // pred_check_branch
        %198 = sbr.rel (%p196) target = $region16
      $region15: #{_lambda_.8} parent=11 // pred_region
        %p199 = scmp.lt.s32.totalorder %s20, 0
        %s200 = scalar_select %p199, %s20, 0
        %s201 = smul.addr %s200, 4
        %s202 = scalar_lea.vmem %s1, %s201
      $region16: #{_lambda_.8} parent=11 // pred_fallthru
        _
      // Predicated region
      $region17: #{_lambda_.8} parent=11 // pred_check
        %p203 = pneg %p101
      $region18: #{_lambda_.8} parent=11 // pred_check_branch
        %205 = sbr.rel (%p203) target = $region20
      $region19: #{_lambda_.8} parent=11 // pred_region
        %p206 = scmp.lt.s32.totalorder %s20, 0
        %s207 = scalar_select %p206, %s20, 0
        %s208 = scalar_lea.vmem %s2, %s207
      $region20: #{_lambda_.8} parent=11 // pred_fallthru
        _
      // Predicated region
      $region21: #{_lambda_.8} parent=11 // pred_check
        %p209 = pneg %p127
      $region22: #{_lambda_.8} parent=11 // pred_check_branch
        %211 = sbr.rel (%p209) target = $region24
      $region23: #{_lambda_.8} parent=11 // pred_region
        %p212 = scmp.lt.s32.totalorder %s20, 0
        %s213 = scalar_select %p212, %s20, 0
        %s214 = scalar_lea.vmem %s3, %s213
      $region24: #{_lambda_.8} parent=11 // pred_fallthru
        _
      // Predicated region
      $region25: #{_lambda_.8} parent=11 // pred_check
        %p215 = pneg %p153
      $region26: #{_lambda_.8} parent=11 // pred_check_branch
        %217 = sbr.rel (%p215) target = $region28
      $region27: #{_lambda_.8} parent=11 // pred_region
        %p218 = scmp.lt.s32.totalorder %s20, 0
        %s219 = scalar_select %p218, %s20, 0
        %s220 = scalar_lea.vmem %s4, %s219
      $region28: #{_lambda_.8} parent=11 // pred_fallthru
        _
    $region12: #{_lambda_.8} parent=5 // pred_fallthru
      _
    %p221 = scmp.lt.s32.totalorder %s11, 2
    // Predicated region
    $region29: #{_lambda_.8} parent=5 // pred_check
      %p222 = pneg %p221
    $region30: #{_lambda_.8} parent=5 // pred_check_branch
      %224 = sbr.rel (%p222) target = $region32
    $region31: #{_lambda_.8} parent=5 // pred_region
      // Predicated region
      $region33: #{_lambda_.8} parent=31 // pred_check
        %p225 = pneg %p43
      $region34: #{_lambda_.8} parent=31 // pred_check_branch
        %227 = sbr.rel (%p225) target = $region36
      $region35: #{_lambda_.8} parent=31 // pred_region
        %p228 = scmp.lt.s32.totalorder %s19, 1
        %s229 = scalar_select %p228, %s19, 1
        %s230 = smul.addr %s229, 24
        %s231 = smul.addr %s230, 4
        %s232 = scalar_lea.vmem %s0, %s231
      $region36: #{_lambda_.8} parent=31 // pred_fallthru
        _
    $region32: #{_lambda_.8} parent=5 // pred_fallthru
      _
    %p233 = scmp.le.s32.totalorder 1, %s11
    %p234 = scmp.lt.s32.totalorder %s11, 3
    %p235 = pnand %p233, %p234
    %p236 = pneg %p235
    // Predicated region
    $region37: #{_lambda_.8} parent=5 // pred_check
      _
    $region38: #{_lambda_.8} parent=5 // pred_check_branch
      %238 = sbr.rel (%p235) target = $region40
    $region39: #{_lambda_.8} parent=5 // pred_region
      %s239 = ssub.s32 %s11, 1
      %p240 = scmp.lt.s32.totalorder %s21, 1
      %s241 = scalar_select %p240, %s21, 1
      %s242 = smul.addr %s241, 24
      %s243 = smul.addr %s242, 4
      %s244 = scalar_lea.vmem %s0, %s243
      %p245 = pneg %p49
      %p246 = pneg %p46
      %p247 = scmp.lt.s32.totalorder %s20, 0
      %s248 = scalar_select %p247, %s20, 0
      %s249 = smul.addr %s248, 4
      %s250 = scalar_lea.vmem %s1, %s249
      %p251 = pneg %p75
      %p252 = pneg %p72
      %p253 = scmp.lt.s32.totalorder %s20, 0
      %s254 = scalar_select %p253, %s20, 0
      %s255 = scalar_lea.vmem %s2, %s254
      %p256 = pneg %p101
      %p257 = pneg %p98
      %p258 = scmp.lt.s32.totalorder %s20, 0
      %s259 = scalar_select %p258, %s20, 0
      %s260 = scalar_lea.vmem %s3, %s259
      %p261 = pneg %p127
      %p262 = pneg %p124
      %p263 = scmp.lt.s32.totalorder %s20, 0
      %s264 = scalar_select %p263, %s20, 0
      %s265 = scalar_lea.vmem %s4, %s264
      %p266 = pneg %p153
      %p267 = pneg %p150
      %p268 = pneg %p181
      %p269 = pneg %p178
      %p270 = scmp.lt.s32.totalorder %s21, 1
      %s271 = scalar_select %p270, %s21, 1
      %p272 = scmp.lt.s32.totalorder %s20, 0
      %s273 = scalar_select %p272, %s20, 0
      %s274 = smul.addr %s271, 4
      %s275 = sadd.s32 %s273, %s274
      %s276 = smul.addr %s275, 4
      %s277 = scalar_lea.vmem %s5, %s276
      %p278 = scmp.lt.s32.totalorder %s21, 1
      %s279 = scalar_select %p278, %s21, 1
      %s280 = smul.addr %s279, 24
      %s281 = smul.addr %s280, 4
      %s282 = scalar_lea.vmem %s0, %s281
      %p283 = scmp.lt.s32.totalorder %s20, 0
      %s284 = scalar_select %p283, %s20, 0
      %s285 = smul.addr %s284, 4
      %s286 = scalar_lea.vmem %s1, %s285
      %p287 = scmp.lt.s32.totalorder %s20, 0
      %s288 = scalar_select %p287, %s20, 0
      %s289 = scalar_lea.vmem %s2, %s288
      %p290 = scmp.lt.s32.totalorder %s20, 0
      %s291 = scalar_select %p290, %s20, 0
      %s292 = scalar_lea.vmem %s3, %s291
      %p293 = scmp.lt.s32.totalorder %s20, 0
      %s294 = scalar_select %p293, %s20, 0
      %s295 = scalar_lea.vmem %s4, %s294
      %p296 = scmp.lt.s32.totalorder %s21, 1
      %s297 = scalar_select %p296, %s21, 1
      %p298 = scmp.lt.s32.totalorder %s20, 0
      %s299 = scalar_select %p298, %s20, 0
      %s300 = smul.addr %s297, 4
      %s301 = sadd.s32 %s299, %s300
      %s302 = smul.addr %s301, 4
      %s303 = scalar_lea.vmem %s5, %s302
      %v305 = vld [vmem:[%s282] sm:$0xff]
      %v306 = vld [vmem:[%s282 + $0x8] sm:$0xf]
      %v307 = vld [vmem:[%s282 + $0xc] sm:$0xff]
      %v308 = vld [vmem:[%s282 + $0x14] sm:$0xf]
      %v309 = vld [vmem:[%s282 + $0x18] sm:$0xff]
      %v310 = vld [vmem:[%s282 + $0x20] sm:$0xf]
      %v311 = vld [vmem:[%s282 + $0x24] sm:$0xff]
      %v312 = vld [vmem:[%s282 + $0x2c] sm:$0xf]
      %v313 = vld [vmem:[%s286] sm:$0xf]
      %v314 = vld [vmem:[%s286 + $0x4] sm:$0xf]
      %v315 = vld [vmem:[%s286 + $0x8] sm:$0xf]
      %v316 = vld [vmem:[%s286 + $0xc] sm:$0xf]
      %v317 = vld [vmem:[%s286 + $0x10] sm:$0xf]
      %v318 = vld [vmem:[%s286 + $0x14] sm:$0xf]
      %v319 = vld [vmem:[%s286 + $0x18] sm:$0xf]
      %v320 = vld [vmem:[%s286 + $0x1c] sm:$0xf]
      %v321 = vld [vmem:[%s286 + $0x20] sm:$0xf]
      %v322 = vld [vmem:[%s286 + $0x24] sm:$0xf]
      %v323 = vld [vmem:[%s286 + $0x28] sm:$0xf]
      %v324 = vld [vmem:[%s286 + $0x2c] sm:$0xf]
      %v325 = vld [vmem:[%s286 + $0x30] sm:$0xf]
      %v326 = vld [vmem:[%s286 + $0x34] sm:$0xf]
      %v327 = vld [vmem:[%s286 + $0x38] sm:$0xf]
      %v328 = vld [vmem:[%s286 + $0x3c] sm:$0xf]
      %v329 = vld [vmem:[%s286 + $0x40] sm:$0xf]
      %v330 = vld [vmem:[%s286 + $0x44] sm:$0xf]
      %v331 = vld [vmem:[%s286 + $0x48] sm:$0xf]
      %v332 = vld [vmem:[%s286 + $0x4c] sm:$0xf]
      %v333 = vld [vmem:[%s286 + $0x50] sm:$0xf]
      %v334 = vld [vmem:[%s286 + $0x54] sm:$0xf]
      %v335 = vld [vmem:[%s286 + $0x58] sm:$0xf]
      %v336 = vld [vmem:[%s286 + $0x5c] sm:$0xf]
      %v337 = vld [vmem:[%s286 + $0x60] sm:$0xf]
      %v338 = vld [vmem:[%s286 + $0x64] sm:$0xf]
      %v339 = vld [vmem:[%s286 + $0x68] sm:$0xf]
      %v340 = vld [vmem:[%s286 + $0x6c] sm:$0xf]
      %v341 = vld [vmem:[%s286 + $0x70] sm:$0xf]
      %v342 = vld [vmem:[%s286 + $0x74] sm:$0xf]
      %v343 = vld [vmem:[%s286 + $0x78] sm:$0xf]
      %v344 = vld [vmem:[%s286 + $0x7c] sm:$0xf]
      %v345 = vld [vmem:[%s286 + $0x80] sm:$0xf]
      %v346 = vld [vmem:[%s286 + $0x84] sm:$0xf]
      %v347 = vld [vmem:[%s286 + $0x88] sm:$0xf]
      %v348 = vld [vmem:[%s286 + $0x8c] sm:$0xf]
      %v349 = vld [vmem:[%s286 + $0x90] sm:$0xf]
      %v350 = vld [vmem:[%s286 + $0x94] sm:$0xf]
      %v351 = vld [vmem:[%s286 + $0x98] sm:$0xf]
      %v352 = vld [vmem:[%s286 + $0x9c] sm:$0xf]
      %v353 = vld [vmem:[%s286 + $0xa0] sm:$0xf]
      %v354 = vld [vmem:[%s286 + $0xa4] sm:$0xf]
      %v355 = vld [vmem:[%s286 + $0xa8] sm:$0xf]
      %v356 = vld [vmem:[%s286 + $0xac] sm:$0xf]
      %v357 = vld [vmem:[%s286 + $0xb0] sm:$0xf]
      %v358 = vld [vmem:[%s286 + $0xb4] sm:$0xf]
      %v359 = vld [vmem:[%s286 + $0xb8] sm:$0xf]
      %v360 = vld [vmem:[%s286 + $0xbc] sm:$0xf]
      %v361 = vld [vmem:[%s282 + $0x30] sm:$0xff]
      %v362 = vld [vmem:[%s282 + $0x38] sm:$0xf]
      %v363 = vld [vmem:[%s282 + $0x3c] sm:$0xff]
      %v364 = vld [vmem:[%s282 + $0x44] sm:$0xf]
      %s365 = scalar_lea.vmem %s286, 192
      %v366 = vld [vmem:[%s365] sm:$0xf]
      %v367 = vld [vmem:[%s365 + $0x4] sm:$0xf]
      %v368 = vld [vmem:[%s365 + $0x8] sm:$0xf]
      %v369 = vld [vmem:[%s365 + $0xc] sm:$0xf]
      %v370 = vld [vmem:[%s365 + $0x10] sm:$0xf]
      %v371 = vld [vmem:[%s365 + $0x14] sm:$0xf]
      %v372 = vld [vmem:[%s365 + $0x18] sm:$0xf]
      %v373 = vld [vmem:[%s365 + $0x1c] sm:$0xf]
      %v374 = vld [vmem:[%s365 + $0x20] sm:$0xf]
      %v375 = vld [vmem:[%s365 + $0x24] sm:$0xf]
      %v376 = vld [vmem:[%s365 + $0x28] sm:$0xf]
      %v377 = vld [vmem:[%s365 + $0x2c] sm:$0xf]
      %v378 = vld [vmem:[%s365 + $0x30] sm:$0xf]
      %v379 = vld [vmem:[%s365 + $0x34] sm:$0xf]
      %v380 = vld [vmem:[%s365 + $0x38] sm:$0xf]
      %v381 = vld [vmem:[%s365 + $0x3c] sm:$0xf]
      %v382 = vld [vmem:[%s365 + $0x40] sm:$0xf]
      %v383 = vld [vmem:[%s365 + $0x44] sm:$0xf]
      %v384 = vld [vmem:[%s365 + $0x48] sm:$0xf]
      %v385 = vld [vmem:[%s365 + $0x4c] sm:$0xf]
      %v386 = vld [vmem:[%s365 + $0x50] sm:$0xf]
      %v387 = vld [vmem:[%s365 + $0x54] sm:$0xf]
      %v388 = vld [vmem:[%s365 + $0x58] sm:$0xf]
      %v389 = vld [vmem:[%s365 + $0x5c] sm:$0xf]
      %v390 = vld [vmem:[%s365 + $0x60] sm:$0xf]
      %v391 = vld [vmem:[%s365 + $0x64] sm:$0xf]
      %v392 = vld [vmem:[%s365 + $0x68] sm:$0xf]
      %v393 = vld [vmem:[%s365 + $0x6c] sm:$0xf]
      %v394 = vld [vmem:[%s365 + $0x70] sm:$0xf]
      %v395 = vld [vmem:[%s365 + $0x74] sm:$0xf]
      %v396 = vld [vmem:[%s365 + $0x78] sm:$0xf]
      %v397 = vld [vmem:[%s365 + $0x7c] sm:$0xf]
      %v398 = vld [vmem:[%s365 + $0x80] sm:$0xf]
      %v399 = vld [vmem:[%s365 + $0x84] sm:$0xf]
      %v400 = vld [vmem:[%s365 + $0x88] sm:$0xf]
      %v401 = vld [vmem:[%s365 + $0x8c] sm:$0xf]
      %v402 = vld [vmem:[%s365 + $0x90] sm:$0xf]
      %v403 = vld [vmem:[%s365 + $0x94] sm:$0xf]
      %v404 = vld [vmem:[%s365 + $0x98] sm:$0xf]
      %v405 = vld [vmem:[%s365 + $0x9c] sm:$0xf]
      %v406 = vld [vmem:[%s365 + $0xa0] sm:$0xf]
      %v407 = vld [vmem:[%s365 + $0xa4] sm:$0xf]
      %v408 = vld [vmem:[%s365 + $0xa8] sm:$0xf]
      %v409 = vld [vmem:[%s365 + $0xac] sm:$0xf]
      %v410 = vld [vmem:[%s365 + $0xb0] sm:$0xf]
      %v411 = vld [vmem:[%s365 + $0xb4] sm:$0xf]
      %v412 = vld [vmem:[%s365 + $0xb8] sm:$0xf]
      %v413 = vld [vmem:[%s365 + $0xbc] sm:$0xf]
      %v422 = vunpack.c.l.b16 %v309
      %v423 = vunpack.c.h.b16 %v309
      %v424 = vunpack.c.l.b16 %v310
      %v425 = vunpack.c.l.b16 %v311
      %v426 = vunpack.c.h.b16 %v311
      %v427 = vunpack.c.l.b16 %v312
      %v428 = vunpack.c.l.b16 %v361
      %v429 = vunpack.c.h.b16 %v361
      %v430 = vunpack.c.l.b16 %v362
      %v431 = vunpack.c.l.b16 %v363
      %v432 = vunpack.c.h.b16 %v363
      %v433 = vunpack.c.l.b16 %v364
      %v434 = vpack.c.b16 %v425, %v422
      %v435 = vpack.c.b16 %v426, %v423
      %v436 = vpack.c.b16 %v427, %v424
      %v437 = vpack.c.b16 %v431, %v428
      %v438 = vpack.c.b16 %v432, %v429
      %v439 = vpack.c.b16 %v433, %v430
      %v494 = vunpack.c.l.b16 %v366
      %v495 = vunpack.c.l.b16 %v367
      %v496 = vunpack.c.l.b16 %v368
      %v497 = vunpack.c.l.b16 %v369
      %v498 = vunpack.c.l.b16 %v370
      %v499 = vunpack.c.l.b16 %v371
      %v500 = vunpack.c.l.b16 %v372
      %v501 = vunpack.c.l.b16 %v373
      %v502 = vunpack.c.l.b16 %v374
      %v503 = vunpack.c.l.b16 %v375
      %v504 = vunpack.c.l.b16 %v376
      %v505 = vunpack.c.l.b16 %v377
      %v506 = vunpack.c.l.b16 %v378
      %v507 = vunpack.c.l.b16 %v379
      %v508 = vunpack.c.l.b16 %v380
      %v509 = vunpack.c.l.b16 %v381
      %v510 = vunpack.c.l.b16 %v382
      %v511 = vunpack.c.l.b16 %v383
      %v512 = vunpack.c.l.b16 %v384
      %v513 = vunpack.c.l.b16 %v385
      %v514 = vunpack.c.l.b16 %v386
      %v515 = vunpack.c.l.b16 %v387
      %v516 = vunpack.c.l.b16 %v388
      %v517 = vunpack.c.l.b16 %v389
      %v518 = vunpack.c.l.b16 %v390
      %v519 = vunpack.c.l.b16 %v391
      %v520 = vunpack.c.l.b16 %v392
      %v521 = vunpack.c.l.b16 %v393
      %v522 = vunpack.c.l.b16 %v394
      %v523 = vunpack.c.l.b16 %v395
      %v524 = vunpack.c.l.b16 %v396
      %v525 = vunpack.c.l.b16 %v397
      %v526 = vunpack.c.l.b16 %v398
      %v527 = vunpack.c.l.b16 %v399
      %v528 = vunpack.c.l.b16 %v400
      %v529 = vunpack.c.l.b16 %v401
      %v530 = vunpack.c.l.b16 %v402
      %v531 = vunpack.c.l.b16 %v403
      %v532 = vunpack.c.l.b16 %v404
      %v533 = vunpack.c.l.b16 %v405
      %v534 = vunpack.c.l.b16 %v406
      %v535 = vunpack.c.l.b16 %v407
      %v536 = vunpack.c.l.b16 %v408
      %v537 = vunpack.c.l.b16 %v409
      %v538 = vunpack.c.l.b16 %v410
      %v539 = vunpack.c.l.b16 %v411
      %v540 = vunpack.c.l.b16 %v412
      %v541 = vunpack.c.l.b16 %v413
      %v542 = vpack.c.b16 %v495, %v494
      %v543 = vpack.c.b16 %v497, %v496
      %v544 = vpack.c.b16 %v499, %v498
      %v545 = vpack.c.b16 %v501, %v500
      %v546 = vpack.c.b16 %v503, %v502
      %v547 = vpack.c.b16 %v505, %v504
      %v548 = vpack.c.b16 %v507, %v506
      %v549 = vpack.c.b16 %v509, %v508
      %v550 = vpack.c.b16 %v511, %v510
      %v551 = vpack.c.b16 %v513, %v512
      %v552 = vpack.c.b16 %v515, %v514
      %v553 = vpack.c.b16 %v517, %v516
      %v554 = vpack.c.b16 %v519, %v518
      %v555 = vpack.c.b16 %v521, %v520
      %v556 = vpack.c.b16 %v523, %v522
      %v557 = vpack.c.b16 %v525, %v524
      %v558 = vpack.c.b16 %v527, %v526
      %v559 = vpack.c.b16 %v529, %v528
      %v560 = vpack.c.b16 %v531, %v530
      %v561 = vpack.c.b16 %v533, %v532
      %v562 = vpack.c.b16 %v535, %v534
      %v563 = vpack.c.b16 %v537, %v536
      %v564 = vpack.c.b16 %v539, %v538
      %v565 = vpack.c.b16 %v541, %v540
      %590 = vmatprep.subr.bf16.mxu0 0
      %591 = vmatpush1.bf16.msra.mxu0 %v542
      %592 = vmatprep.subr.bf16.mxu0 0
      %593 = vmatpush1.bf16.msra.mxu0 %v543
      %594 = vmatprep.subr.bf16.mxu0 0
      %595 = vmatpush1.bf16.msra.mxu0 %v544
      %596 = vmatprep.subr.bf16.mxu0 0
      %597 = vmatpush1.bf16.msra.mxu0 %v545
      %598 = vmatprep.subr.bf16.mxu0 0
      %599 = vmatpush1.bf16.msra.mxu0 %v546
      %600 = vmatprep.subr.bf16.mxu0 0
      %601 = vmatpush1.bf16.msra.mxu0 %v547
      %602 = vmatprep.subr.bf16.mxu0 0
      %603 = vmatpush1.bf16.msra.mxu0 %v548
      %604 = vmatprep.subr.bf16.mxu0 0
      %605 = vmatpush1.bf16.msra.mxu0 %v549
      %606 = vmatprep.subr.bf16.mxu0 0
      %607 = vmatpush1.bf16.msra.mxu0 %v550
      %608 = vmatprep.subr.bf16.mxu0 0
      %609 = vmatpush1.bf16.msra.mxu0 %v551
      %610 = vmatprep.subr.bf16.mxu0 0
      %611 = vmatpush1.bf16.msra.mxu0 %v552
      %612 = vmatprep.subr.bf16.mxu0 0
      %613 = vmatpush1.bf16.msra.mxu0 %v553
      %614 = vmatprep.subr.bf16.mxu0 0
      %615 = vmatpush1.bf16.msra.mxu0 %v554
      %616 = vmatprep.subr.bf16.mxu0 0
      %617 = vmatpush1.bf16.msra.mxu0 %v555
      %618 = vmatprep.subr.bf16.mxu0 0
      %619 = vmatpush1.bf16.msra.mxu0 %v556
      %620 = vmatprep.subr.bf16.mxu0 0
      %621 = vmatpush1.bf16.msra.mxu0 %v557
      %622 = vmatprep.mubr.bf16.mxu0 %v435
      %623 = vmatmul.mubr.bf16.gmra.mrb[0].mxu0 %v434
      %v624 = vpop.f32.mrb[0].mxu0
      %v625 = vadd.f32 0.0, %v624
      %v626 = vpop.f32.mrb[0].mxu0
      %v627 = vpop.f32.mrb[0].mxu0
      %v628 = vadd.f32 0.0, %v627
      %v629 = vpop.f32.mrb[0].mxu0
      %630 = vmatprep.mubr.bf16.mxu0 %v438
      %631 = vmatmul.mubr.bf16.gmra.mrb[0].mxu0 %v437
      %v632 = vpop.f32.mrb[0].mxu0
      %v633 = vadd.f32 0.0, %v632
      %v634 = vpop.f32.mrb[0].mxu0
      %v635 = vpop.f32.mrb[0].mxu0
      %v636 = vadd.f32 0.0, %v635
      %v637 = vpop.f32.mrb[0].mxu0
      %638 = vdwg.mxu0
      %639 = vmatprep.subr.bf16.mxu0 0
      %640 = vmatpush1.bf16.msra.mxu0 %v558
      %641 = vmatprep.subr.bf16.mxu0 0
      %642 = vmatpush1.bf16.msra.mxu0 %v559
      %643 = vmatprep.subr.bf16.mxu0 0
      %644 = vmatpush1.bf16.msra.mxu0 %v560
      %645 = vmatprep.subr.bf16.mxu0 0
      %646 = vmatpush1.bf16.msra.mxu0 %v561
      %647 = vmatprep.subr.bf16.mxu0 0
      %648 = vmatpush1.bf16.msra.mxu0 %v562
      %649 = vmatprep.subr.bf16.mxu0 0
      %650 = vmatpush1.bf16.msra.mxu0 %v563
      %651 = vmatprep.subr.bf16.mxu0 0
      %652 = vmatpush1.bf16.msra.mxu0 %v564
      %653 = vmatprep.subr.bf16.mxu0 0
      %654 = vmatpush1.bf16.msra.mxu0 %v565
      %655 = vmatprep.subr.bf16.mxu0 0
      %656 = vmatpush1.bf16.msra.mxu0 0
      %657 = vmatprep.subr.bf16.mxu0 0
      %658 = vmatpush1.bf16.msra.mxu0 0
      %659 = vmatprep.subr.bf16.mxu0 0
      %660 = vmatpush1.bf16.msra.mxu0 0
      %661 = vmatprep.subr.bf16.mxu0 0
      %662 = vmatpush1.bf16.msra.mxu0 0
      %663 = vmatprep.subr.bf16.mxu0 0
      %664 = vmatpush1.bf16.msra.mxu0 0
      %665 = vmatprep.subr.bf16.mxu0 0
      %666 = vmatpush1.bf16.msra.mxu0 0
      %667 = vmatprep.subr.bf16.mxu0 0
      %668 = vmatpush1.bf16.msra.mxu0 0
      %669 = vmatprep.subr.bf16.mxu0 0
      %670 = vmatpush1.bf16.msra.mxu0 0
      %671 = vmatprep.mubr.bf16.mxu0 0
      %672 = vmatmul.mubr.bf16.gmra.mrb[0].mxu0 %v436
      %v673 = vpop.f32.mrb[0].mxu0
      %v674 = vadd.f32 %v625, %v673
      %v675 = vpop.f32.mrb[0].mxu0
      %v676 = vpop.f32.mrb[0].mxu0
      %v677 = vadd.f32 %v628, %v676
      %v678 = vpop.f32.mrb[0].mxu0
      %679 = vmatprep.mubr.bf16.mxu0 0
      %680 = vmatmul.mubr.bf16.gmra.mrb[0].mxu0 %v439
      %v681 = vpop.f32.mrb[0].mxu0
      %v682 = vadd.f32 %v633, %v681
      %v683 = vpop.f32.mrb[0].mxu0
      %v684 = vpop.f32.mrb[0].mxu0
      %v685 = vadd.f32 %v636, %v684
      %v686 = vpop.f32.mrb[0].mxu0
      %687 = vdwg.mxu0
      %v692 = vunpack.c.l.b16 %v305
      %v693 = vunpack.c.h.b16 %v305
      %v694 = vunpack.c.l.b16 %v306
      %v695 = vunpack.c.l.b16 %v307
      %v696 = vunpack.c.h.b16 %v307
      %v697 = vunpack.c.l.b16 %v308
      %v698 = vpack.c.b16 %v695, %v692
      %v699 = vpack.c.b16 %v696, %v693
      %v700 = vpack.c.b16 %v697, %v694
      %v752 = vunpack.c.l.b16 %v313
      %v753 = vunpack.c.l.b16 %v314
      %v754 = vunpack.c.l.b16 %v315
      %v755 = vunpack.c.l.b16 %v316
      %v756 = vunpack.c.l.b16 %v317
      %v757 = vunpack.c.l.b16 %v318
      %v758 = vunpack.c.l.b16 %v319
      %v759 = vunpack.c.l.b16 %v320
      %v760 = vunpack.c.l.b16 %v321
      %v761 = vunpack.c.l.b16 %v322
      %v762 = vunpack.c.l.b16 %v323
      %v763 = vunpack.c.l.b16 %v324
      %v764 = vunpack.c.l.b16 %v325
      %v765 = vunpack.c.l.b16 %v326
      %v766 = vunpack.c.l.b16 %v327
      %v767 = vunpack.c.l.b16 %v328
      %v768 = vunpack.c.l.b16 %v329
      %v769 = vunpack.c.l.b16 %v330
      %v770 = vunpack.c.l.b16 %v331
      %v771 = vunpack.c.l.b16 %v332
      %v772 = vunpack.c.l.b16 %v333
      %v773 = vunpack.c.l.b16 %v334
      %v774 = vunpack.c.l.b16 %v335
      %v775 = vunpack.c.l.b16 %v336
      %v776 = vunpack.c.l.b16 %v337
      %v777 = vunpack.c.l.b16 %v338
      %v778 = vunpack.c.l.b16 %v339
      %v779 = vunpack.c.l.b16 %v340
      %v780 = vunpack.c.l.b16 %v341
      %v781 = vunpack.c.l.b16 %v342
      %v782 = vunpack.c.l.b16 %v343
      %v783 = vunpack.c.l.b16 %v344
      %v784 = vunpack.c.l.b16 %v345
      %v785 = vunpack.c.l.b16 %v346
      %v786 = vunpack.c.l.b16 %v347
      %v787 = vunpack.c.l.b16 %v348
      %v788 = vunpack.c.l.b16 %v349
      %v789 = vunpack.c.l.b16 %v350
      %v790 = vunpack.c.l.b16 %v351
      %v791 = vunpack.c.l.b16 %v352
      %v792 = vunpack.c.l.b16 %v353
      %v793 = vunpack.c.l.b16 %v354
      %v794 = vunpack.c.l.b16 %v355
      %v795 = vunpack.c.l.b16 %v356
      %v796 = vunpack.c.l.b16 %v357
      %v797 = vunpack.c.l.b16 %v358
      %v798 = vunpack.c.l.b16 %v359
      %v799 = vunpack.c.l.b16 %v360
      %v800 = vpack.c.b16 %v753, %v752
      %v801 = vpack.c.b16 %v755, %v754
      %v802 = vpack.c.b16 %v757, %v756
      %v803 = vpack.c.b16 %v759, %v758
      %v804 = vpack.c.b16 %v761, %v760
      %v805 = vpack.c.b16 %v763, %v762
      %v806 = vpack.c.b16 %v765, %v764
      %v807 = vpack.c.b16 %v767, %v766
      %v808 = vpack.c.b16 %v769, %v768
      %v809 = vpack.c.b16 %v771, %v770
      %v810 = vpack.c.b16 %v773, %v772
      %v811 = vpack.c.b16 %v775, %v774
      %v812 = vpack.c.b16 %v777, %v776
      %v813 = vpack.c.b16 %v779, %v778
      %v814 = vpack.c.b16 %v781, %v780
      %v815 = vpack.c.b16 %v783, %v782
      %v816 = vpack.c.b16 %v785, %v784
      %v817 = vpack.c.b16 %v787, %v786
      %v818 = vpack.c.b16 %v789, %v788
      %v819 = vpack.c.b16 %v791, %v790
      %v820 = vpack.c.b16 %v793, %v792
      %v821 = vpack.c.b16 %v795, %v794
      %v822 = vpack.c.b16 %v797, %v796
      %v823 = vpack.c.b16 %v799, %v798
      %848 = vmatprep.subr.bf16.mxu0 0
      %849 = vmatpush1.bf16.msra.mxu0 %v800
      %850 = vmatprep.subr.bf16.mxu0 0
      %851 = vmatpush1.bf16.msra.mxu0 %v801
      %852 = vmatprep.subr.bf16.mxu0 0
      %853 = vmatpush1.bf16.msra.mxu0 %v802
      %854 = vmatprep.subr.bf16.mxu0 0
      %855 = vmatpush1.bf16.msra.mxu0 %v803
      %856 = vmatprep.subr.bf16.mxu0 0
      %857 = vmatpush1.bf16.msra.mxu0 %v804
      %858 = vmatprep.subr.bf16.mxu0 0
      %859 = vmatpush1.bf16.msra.mxu0 %v805
      %860 = vmatprep.subr.bf16.mxu0 0
      %861 = vmatpush1.bf16.msra.mxu0 %v806
      %862 = vmatprep.subr.bf16.mxu0 0
      %863 = vmatpush1.bf16.msra.mxu0 %v807
      %864 = vmatprep.subr.bf16.mxu0 0
      %865 = vmatpush1.bf16.msra.mxu0 %v808
      %866 = vmatprep.subr.bf16.mxu0 0
      %867 = vmatpush1.bf16.msra.mxu0 %v809
      %868 = vmatprep.subr.bf16.mxu0 0
      %869 = vmatpush1.bf16.msra.mxu0 %v810
      %870 = vmatprep.subr.bf16.mxu0 0
      %871 = vmatpush1.bf16.msra.mxu0 %v811
      %872 = vmatprep.subr.bf16.mxu0 0
      %873 = vmatpush1.bf16.msra.mxu0 %v812
      %874 = vmatprep.subr.bf16.mxu0 0
      %875 = vmatpush1.bf16.msra.mxu0 %v813
      %876 = vmatprep.subr.bf16.mxu0 0
      %877 = vmatpush1.bf16.msra.mxu0 %v814
      %878 = vmatprep.subr.bf16.mxu0 0
      %879 = vmatpush1.bf16.msra.mxu0 %v815
      %880 = vmatprep.mubr.bf16.mxu0 %v699
      %881 = vmatmul.mubr.bf16.gmra.mrb[0].mxu0 %v698
      %v882 = vpop.f32.mrb[0].mxu0
      %v883 = vadd.f32 %v674, %v882
      %v884 = vpop.f32.mrb[0].mxu0
      %v885 = vpop.f32.mrb[0].mxu0
      %v886 = vadd.f32 %v677, %v885
      %v887 = vpop.f32.mrb[0].mxu0
      %888 = vmatprep.mubr.bf16.mxu0 %v435
      %889 = vmatmul.mubr.bf16.gmra.mrb[0].mxu0 %v434
      %v890 = vpop.f32.mrb[0].mxu0
      %v891 = vadd.f32 %v682, %v890
      %v892 = vpop.f32.mrb[0].mxu0
      %v893 = vpop.f32.mrb[0].mxu0
      %v894 = vadd.f32 %v685, %v893
      %v895 = vpop.f32.mrb[0].mxu0
      %896 = vdwg.mxu0
      %897 = vmatprep.subr.bf16.mxu0 0
      %898 = vmatpush1.bf16.msra.mxu0 %v816
      %899 = vmatprep.subr.bf16.mxu0 0
      %900 = vmatpush1.bf16.msra.mxu0 %v817
      %901 = vmatprep.subr.bf16.mxu0 0
      %902 = vmatpush1.bf16.msra.mxu0 %v818
      %903 = vmatprep.subr.bf16.mxu0 0
      %904 = vmatpush1.bf16.msra.mxu0 %v819
      %905 = vmatprep.subr.bf16.mxu0 0
      %906 = vmatpush1.bf16.msra.mxu0 %v820
      %907 = vmatprep.subr.bf16.mxu0 0
      %908 = vmatpush1.bf16.msra.mxu0 %v821
      %909 = vmatprep.subr.bf16.mxu0 0
      %910 = vmatpush1.bf16.msra.mxu0 %v822
      %911 = vmatprep.subr.bf16.mxu0 0
      %912 = vmatpush1.bf16.msra.mxu0 %v823
      %913 = vmatprep.subr.bf16.mxu0 0
      %914 = vmatpush1.bf16.msra.mxu0 0
      %915 = vmatprep.subr.bf16.mxu0 0
      %916 = vmatpush1.bf16.msra.mxu0 0
      %917 = vmatprep.subr.bf16.mxu0 0
      %918 = vmatpush1.bf16.msra.mxu0 0
      %919 = vmatprep.subr.bf16.mxu0 0
      %920 = vmatpush1.bf16.msra.mxu0 0
      %921 = vmatprep.subr.bf16.mxu0 0
      %922 = vmatpush1.bf16.msra.mxu0 0
      %923 = vmatprep.subr.bf16.mxu0 0
      %924 = vmatpush1.bf16.msra.mxu0 0
      %925 = vmatprep.subr.bf16.mxu0 0
      %926 = vmatpush1.bf16.msra.mxu0 0
      %927 = vmatprep.subr.bf16.mxu0 0
      %928 = vmatpush1.bf16.msra.mxu0 0
      %929 = vmatprep.mubr.bf16.mxu0 0
      %930 = vmatmul.mubr.bf16.gmra.mrb[0].mxu0 %v700
      %v931 = vpop.f32.mrb[0].mxu0
      %v932 = vadd.f32 %v883, %v931
      %v933 = vpop.f32.mrb[0].mxu0
      %v934 = vpop.f32.mrb[0].mxu0
      %v935 = vadd.f32 %v886, %v934
      %v936 = vpop.f32.mrb[0].mxu0
      %937 = vmatprep.mubr.bf16.mxu0 0
      %938 = vmatmul.mubr.bf16.gmra.mrb[0].mxu0 %v436
      %v939 = vpop.f32.mrb[0].mxu0
      %v940 = vadd.f32 %v891, %v939
      %v941 = vpop.f32.mrb[0].mxu0
      %v942 = vpop.f32.mrb[0].mxu0
      %v943 = vadd.f32 %v894, %v942
      %v944 = vpop.f32.mrb[0].mxu0
      %945 = vdwg.mxu0
      %v946 = vld [vmem:[%s282 + $0x30] sm:$0xff]
      %v947 = vld [vmem:[%s282 + $0x38] sm:$0xf]
      %v948 = vld [vmem:[%s282 + $0x3c] sm:$0xff]
      %v949 = vld [vmem:[%s282 + $0x44] sm:$0xf]
      %v950 = vld [vmem:[%s282 + $0x48] sm:$0xff]
      %v951 = vld [vmem:[%s282 + $0x50] sm:$0xf]
      %v952 = vld [vmem:[%s282 + $0x54] sm:$0xff]
      %v953 = vld [vmem:[%s282 + $0x5c] sm:$0xf]
      %s954 = scalar_lea.vmem %s286, 384
      %v955 = vld [vmem:[%s954] sm:$0xf]
      %v956 = vld [vmem:[%s954 + $0x4] sm:$0xf]
      %v957 = vld [vmem:[%s954 + $0x8] sm:$0xf]
      %v958 = vld [vmem:[%s954 + $0xc] sm:$0xf]
      %v959 = vld [vmem:[%s954 + $0x10] sm:$0xf]
      %v960 = vld [vmem:[%s954 + $0x14] sm:$0xf]
      %v961 = vld [vmem:[%s954 + $0x18] sm:$0xf]
      %v962 = vld [vmem:[%s954 + $0x1c] sm:$0xf]
      %v963 = vld [vmem:[%s954 + $0x20] sm:$0xf]
      %v964 = vld [vmem:[%s954 + $0x24] sm:$0xf]
      %v965 = vld [vmem:[%s954 + $0x28] sm:$0xf]
      %v966 = vld [vmem:[%s954 + $0x2c] sm:$0xf]
      %v967 = vld [vmem:[%s954 + $0x30] sm:$0xf]
      %v968 = vld [vmem:[%s954 + $0x34] sm:$0xf]
      %v969 = vld [vmem:[%s954 + $0x38] sm:$0xf]
      %v970 = vld [vmem:[%s954 + $0x3c] sm:$0xf]
      %v971 = vld [vmem:[%s954 + $0x40] sm:$0xf]
      %v972 = vld [vmem:[%s954 + $0x44] sm:$0xf]
      %v973 = vld [vmem:[%s954 + $0x48] sm:$0xf]
      %v974 = vld [vmem:[%s954 + $0x4c] sm:$0xf]
      %v975 = vld [vmem:[%s954 + $0x50] sm:$0xf]
      %v976 = vld [vmem:[%s954 + $0x54] sm:$0xf]
      %v977 = vld [vmem:[%s954 + $0x58] sm:$0xf]
      %v978 = vld [vmem:[%s954 + $0x5c] sm:$0xf]
      %v979 = vld [vmem:[%s954 + $0x60] sm:$0xf]
      %v980 = vld [vmem:[%s954 + $0x64] sm:$0xf]
      %v981 = vld [vmem:[%s954 + $0x68] sm:$0xf]
      %v982 = vld [vmem:[%s954 + $0x6c] sm:$0xf]
      %v983 = vld [vmem:[%s954 + $0x70] sm:$0xf]
      %v984 = vld [vmem:[%s954 + $0x74] sm:$0xf]
      %v985 = vld [vmem:[%s954 + $0x78] sm:$0xf]
      %v986 = vld [vmem:[%s954 + $0x7c] sm:$0xf]
      %v987 = vld [vmem:[%s954 + $0x80] sm:$0xf]
      %v988 = vld [vmem:[%s954 + $0x84] sm:$0xf]
      %v989 = vld [vmem:[%s954 + $0x88] sm:$0xf]
      %v990 = vld [vmem:[%s954 + $0x8c] sm:$0xf]
      %v991 = vld [vmem:[%s954 + $0x90] sm:$0xf]
      %v992 = vld [vmem:[%s954 + $0x94] sm:$0xf]
      %v993 = vld [vmem:[%s954 + $0x98] sm:$0xf]
      %v994 = vld [vmem:[%s954 + $0x9c] sm:$0xf]
      %v995 = vld [vmem:[%s954 + $0xa0] sm:$0xf]
      %v996 = vld [vmem:[%s954 + $0xa4] sm:$0xf]
      %v997 = vld [vmem:[%s954 + $0xa8] sm:$0xf]
      %v998 = vld [vmem:[%s954 + $0xac] sm:$0xf]
      %v999 = vld [vmem:[%s954 + $0xb0] sm:$0xf]
      %v1000 = vld [vmem:[%s954 + $0xb4] sm:$0xf]
      %v1001 = vld [vmem:[%s954 + $0xb8] sm:$0xf]
      %v1002 = vld [vmem:[%s954 + $0xbc] sm:$0xf]
      %v1011 = vunpack.c.l.b16 %v946
      %v1012 = vunpack.c.h.b16 %v946
      %v1013 = vunpack.c.l.b16 %v947
      %v1014 = vunpack.c.l.b16 %v948
      %v1015 = vunpack.c.h.b16 %v948
      %v1016 = vunpack.c.l.b16 %v949
      %v1017 = vunpack.c.l.b16 %v950
      %v1018 = vunpack.c.h.b16 %v950
      %v1019 = vunpack.c.l.b16 %v951
      %v1020 = vunpack.c.l.b16 %v952
      %v1021 = vunpack.c.h.b16 %v952
      %v1022 = vunpack.c.l.b16 %v953
      %v1023 = vpack.c.b16 %v1014, %v1011
      %v1024 = vpack.c.b16 %v1015, %v1012
      %v1025 = vpack.c.b16 %v1016, %v1013
      %v1026 = vpack.c.b16 %v1020, %v1017
      %v1027 = vpack.c.b16 %v1021, %v1018
      %v1028 = vpack.c.b16 %v1022, %v1019
      %v1083 = vunpack.c.l.b16 %v955
      %v1084 = vunpack.c.l.b16 %v956
      %v1085 = vunpack.c.l.b16 %v957
      %v1086 = vunpack.c.l.b16 %v958
      %v1087 = vunpack.c.l.b16 %v959
      %v1088 = vunpack.c.l.b16 %v960
      %v1089 = vunpack.c.l.b16 %v961
      %v1090 = vunpack.c.l.b16 %v962
      %v1091 = vunpack.c.l.b16 %v963
      %v1092 = vunpack.c.l.b16 %v964
      %v1093 = vunpack.c.l.b16 %v965
      %v1094 = vunpack.c.l.b16 %v966
      %v1095 = vunpack.c.l.b16 %v967
      %v1096 = vunpack.c.l.b16 %v968
      %v1097 = vunpack.c.l.b16 %v969
      %v1098 = vunpack.c.l.b16 %v970
      %v1099 = vunpack.c.l.b16 %v971
      %v1100 = vunpack.c.l.b16 %v972
      %v1101 = vunpack.c.l.b16 %v973
      %v1102 = vunpack.c.l.b16 %v974
      %v1103 = vunpack.c.l.b16 %v975
      %v1104 = vunpack.c.l.b16 %v976
      %v1105 = vunpack.c.l.b16 %v977
      %v1106 = vunpack.c.l.b16 %v978
      %v1107 = vunpack.c.l.b16 %v979
      %v1108 = vunpack.c.l.b16 %v980
      %v1109 = vunpack.c.l.b16 %v981
      %v1110 = vunpack.c.l.b16 %v982
      %v1111 = vunpack.c.l.b16 %v983
      %v1112 = vunpack.c.l.b16 %v984
      %v1113 = vunpack.c.l.b16 %v985
      %v1114 = vunpack.c.l.b16 %v986
      %v1115 = vunpack.c.l.b16 %v987
      %v1116 = vunpack.c.l.b16 %v988
      %v1117 = vunpack.c.l.b16 %v989
      %v1118 = vunpack.c.l.b16 %v990
      %v1119 = vunpack.c.l.b16 %v991
      %v1120 = vunpack.c.l.b16 %v992
      %v1121 = vunpack.c.l.b16 %v993
      %v1122 = vunpack.c.l.b16 %v994
      %v1123 = vunpack.c.l.b16 %v995
      %v1124 = vunpack.c.l.b16 %v996
      %v1125 = vunpack.c.l.b16 %v997
      %v1126 = vunpack.c.l.b16 %v998
      %v1127 = vunpack.c.l.b16 %v999
      %v1128 = vunpack.c.l.b16 %v1000
      %v1129 = vunpack.c.l.b16 %v1001
      %v1130 = vunpack.c.l.b16 %v1002
      %v1131 = vpack.c.b16 %v1084, %v1083
      %v1132 = vpack.c.b16 %v1086, %v1085
      %v1133 = vpack.c.b16 %v1088, %v1087
      %v1134 = vpack.c.b16 %v1090, %v1089
      %v1135 = vpack.c.b16 %v1092, %v1091
      %v1136 = vpack.c.b16 %v1094, %v1093
      %v1137 = vpack.c.b16 %v1096, %v1095
      %v1138 = vpack.c.b16 %v1098, %v1097
      %v1139 = vpack.c.b16 %v1100, %v1099
      %v1140 = vpack.c.b16 %v1102, %v1101
      %v1141 = vpack.c.b16 %v1104, %v1103
      %v1142 = vpack.c.b16 %v1106, %v1105
      %v1143 = vpack.c.b16 %v1108, %v1107
      %v1144 = vpack.c.b16 %v1110, %v1109
      %v1145 = vpack.c.b16 %v1112, %v1111
      %v1146 = vpack.c.b16 %v1114, %v1113
      %v1147 = vpack.c.b16 %v1116, %v1115
      %v1148 = vpack.c.b16 %v1118, %v1117
      %v1149 = vpack.c.b16 %v1120, %v1119
      %v1150 = vpack.c.b16 %v1122, %v1121
      %v1151 = vpack.c.b16 %v1124, %v1123
      %v1152 = vpack.c.b16 %v1126, %v1125
      %v1153 = vpack.c.b16 %v1128, %v1127
      %v1154 = vpack.c.b16 %v1130, %v1129
      %1179 = vmatprep.subr.bf16.mxu0 0
      %1180 = vmatpush1.bf16.msra.mxu0 %v1131
      %1181 = vmatprep.subr.bf16.mxu0 0
      %1182 = vmatpush1.bf16.msra.mxu0 %v1132
      %1183 = vmatprep.subr.bf16.mxu0 0
      %1184 = vmatpush1.bf16.msra.mxu0 %v1133
      %1185 = vmatprep.subr.bf16.mxu0 0
      %1186 = vmatpush1.bf16.msra.mxu0 %v1134
      %1187 = vmatprep.subr.bf16.mxu0 0
      %1188 = vmatpush1.bf16.msra.mxu0 %v1135
      %1189 = vmatprep.subr.bf16.mxu0 0
      %1190 = vmatpush1.bf16.msra.mxu0 %v1136
      %1191 = vmatprep.subr.bf16.mxu0 0
      %1192 = vmatpush1.bf16.msra.mxu0 %v1137
      %1193 = vmatprep.subr.bf16.mxu0 0
      %1194 = vmatpush1.bf16.msra.mxu0 %v1138
      %1195 = vmatprep.subr.bf16.mxu0 0
      %1196 = vmatpush1.bf16.msra.mxu0 %v1139
      %1197 = vmatprep.subr.bf16.mxu0 0
      %1198 = vmatpush1.bf16.msra.mxu0 %v1140
      %1199 = vmatprep.subr.bf16.mxu0 0
      %1200 = vmatpush1.bf16.msra.mxu0 %v1141
      %1201 = vmatprep.subr.bf16.mxu0 0
      %1202 = vmatpush1.bf16.msra.mxu0 %v1142
      %1203 = vmatprep.subr.bf16.mxu0 0
      %1204 = vmatpush1.bf16.msra.mxu0 %v1143
      %1205 = vmatprep.subr.bf16.mxu0 0
      %1206 = vmatpush1.bf16.msra.mxu0 %v1144
      %1207 = vmatprep.subr.bf16.mxu0 0
      %1208 = vmatpush1.bf16.msra.mxu0 %v1145
      %1209 = vmatprep.subr.bf16.mxu0 0
      %1210 = vmatpush1.bf16.msra.mxu0 %v1146
      %1211 = vmatprep.mubr.bf16.mxu0 %v1024
      %1212 = vmatmul.mubr.bf16.gmra.mrb[0].mxu0 %v1023
      %v1213 = vpop.f32.mrb[0].mxu0
      %v1214 = vadd.f32 0.0, %v1213
      %v1215 = vpop.f32.mrb[0].mxu0
      %v1216 = vpop.f32.mrb[0].mxu0
      %v1217 = vadd.f32 0.0, %v1216
      %v1218 = vpop.f32.mrb[0].mxu0
      %1219 = vmatprep.mubr.bf16.mxu0 %v1027
      %1220 = vmatmul.mubr.bf16.gmra.mrb[0].mxu0 %v1026
      %v1221 = vpop.f32.mrb[0].mxu0
      %v1222 = vadd.f32 0.0, %v1221
      %v1223 = vpop.f32.mrb[0].mxu0
      %v1224 = vpop.f32.mrb[0].mxu0
      %v1225 = vadd.f32 0.0, %v1224
      %v1226 = vpop.f32.mrb[0].mxu0
      %1227 = vdwg.mxu0
      %1228 = vmatprep.subr.bf16.mxu0 0
      %1229 = vmatpush1.bf16.msra.mxu0 %v1147
      %1230 = vmatprep.subr.bf16.mxu0 0
      %1231 = vmatpush1.bf16.msra.mxu0 %v1148
      %1232 = vmatprep.subr.bf16.mxu0 0
      %1233 = vmatpush1.bf16.msra.mxu0 %v1149
      %1234 = vmatprep.subr.bf16.mxu0 0
      %1235 = vmatpush1.bf16.msra.mxu0 %v1150
      %1236 = vmatprep.subr.bf16.mxu0 0
      %1237 = vmatpush1.bf16.msra.mxu0 %v1151
      %1238 = vmatprep.subr.bf16.mxu0 0
      %1239 = vmatpush1.bf16.msra.mxu0 %v1152
      %1240 = vmatprep.subr.bf16.mxu0 0
      %1241 = vmatpush1.bf16.msra.mxu0 %v1153
      %1242 = vmatprep.subr.bf16.mxu0 0
      %1243 = vmatpush1.bf16.msra.mxu0 %v1154
      %1244 = vmatprep.subr.bf16.mxu0 0
      %1245 = vmatpush1.bf16.msra.mxu0 0
      %1246 = vmatprep.subr.bf16.mxu0 0
      %1247 = vmatpush1.bf16.msra.mxu0 0
      %1248 = vmatprep.subr.bf16.mxu0 0
      %1249 = vmatpush1.bf16.msra.mxu0 0
      %1250 = vmatprep.subr.bf16.mxu0 0
      %1251 = vmatpush1.bf16.msra.mxu0 0
      %1252 = vmatprep.subr.bf16.mxu0 0
      %1253 = vmatpush1.bf16.msra.mxu0 0
      %1254 = vmatprep.subr.bf16.mxu0 0
      %1255 = vmatpush1.bf16.msra.mxu0 0
      %1256 = vmatprep.subr.bf16.mxu0 0
      %1257 = vmatpush1.bf16.msra.mxu0 0
      %1258 = vmatprep.subr.bf16.mxu0 0
      %1259 = vmatpush1.bf16.msra.mxu0 0
      %1260 = vmatprep.mubr.bf16.mxu0 0
      %1261 = vmatmul.mubr.bf16.gmra.mrb[0].mxu0 %v1025
      %v1262 = vpop.f32.mrb[0].mxu0
      %v1263 = vadd.f32 %v1214, %v1262
      %v1264 = vpop.f32.mrb[0].mxu0
      %v1265 = vpop.f32.mrb[0].mxu0
      %v1266 = vadd.f32 %v1217, %v1265
      %v1267 = vpop.f32.mrb[0].mxu0
      %1268 = vmatprep.mubr.bf16.mxu0 0
      %1269 = vmatmul.mubr.bf16.gmra.mrb[0].mxu0 %v1028
      %v1270 = vpop.f32.mrb[0].mxu0
      %v1271 = vadd.f32 %v1222, %v1270
      %v1272 = vpop.f32.mrb[0].mxu0
      %v1273 = vpop.f32.mrb[0].mxu0
      %v1274 = vadd.f32 %v1225, %v1273
      %v1275 = vpop.f32.mrb[0].mxu0
      %1276 = vdwg.mxu0
      %v1277 = vadd.f32 %v932, %v1263
      %v1278 = vadd.f32 %v935, %v1266
      %v1279 = vadd.f32 %v940, %v1271
      %v1280 = vadd.f32 %v943, %v1274
      %v1281 = vld [vmem:[%s289] sm:$0x1]
      %v1283 = vlaneseq
      %v1284 = vshrl.u32 %v1283, 7
      %v1285 = vsub.s32 0, %v1284
      %v1286 = vrot.slane %v1281, %v1285
      %v1288 = vadd.f32 %v1277, %v1286
      %v1289 = vadd.f32 %v1278, %v1286
      %v1290 = vadd.f32 %v1279, %v1286
      %v1291 = vadd.f32 %v1280, %v1286
      %v1292 = vlaneseq
      %v1293 = vshrl.u32 %v1292, 7
      %v1294 = vadd.s32 %v1293, 8
      %v1295 = vadd.s32 %v1293, 16
      %v1296 = vadd.s32 %v1293, 24
      %vm1297 = vcmp.lt.s32.totalorder %v1293, 0
      %v1298 = vsub.s32 0, %v1293
      %v1299 = vsel %vm1297, %v1298, %v1293
      %v1300 = vshrl.u32 %v1299, 4
      %v1301 = vand.u32 %v1299, 15
      %v1302 = vsub.s32 0, %v1301
      %v1303 = vsel %vm1297, %v1302, %v1301
      %vm1304 = vcmp.lt.s32.totalorder %v1294, 0
      %v1305 = vsub.s32 0, %v1294
      %v1306 = vsel %vm1304, %v1305, %v1294
      %v1307 = vshrl.u32 %v1306, 4
      %v1308 = vand.u32 %v1306, 15
      %v1309 = vsub.s32 0, %v1308
      %v1310 = vsel %vm1304, %v1309, %v1308
      %vm1311 = vcmp.lt.s32.totalorder %v1295, 0
      %v1312 = vsub.s32 0, %v1295
      %v1313 = vsel %vm1311, %v1312, %v1295
      %v1314 = vshrl.u32 %v1313, 4
      %v1315 = vand.u32 %v1313, 15
      %v1316 = vsub.s32 0, %v1315
      %v1317 = vsel %vm1311, %v1316, %v1315
      %vm1318 = vcmp.lt.s32.totalorder %v1296, 0
      %v1319 = vsub.s32 0, %v1296
      %v1320 = vsel %vm1318, %v1319, %v1296
      %v1321 = vshrl.u32 %v1320, 4
      %v1322 = vand.u32 %v1320, 15
      %v1323 = vsub.s32 0, %v1322
      %v1324 = vsel %vm1318, %v1323, %v1322
      %vm1325 = vcmp.ne.s32.totalorder %v1303, 0
      %vm1326 = vcmp.ne.s32.totalorder %v1310, 0
      %vm1327 = vcmp.ne.s32.totalorder %v1317, 0
      %vm1328 = vcmp.ne.s32.totalorder %v1324, 0
      %vm1329 = vcmp.lt.s32.totalorder %v1303, 0
      %vm1330 = vcmp.lt.s32.totalorder %v1310, 0
      %vm1331 = vcmp.lt.s32.totalorder %v1317, 0
      %vm1332 = vcmp.lt.s32.totalorder %v1324, 0
      %vm1333 = vmand %vm1329, %vm1325
      %vm1334 = vmand %vm1330, %vm1326
      %vm1335 = vmand %vm1331, %vm1327
      %vm1336 = vmand %vm1332, %vm1328
      %v1337 = vadd.s32 %v1303, 16
      %v1338 = vadd.s32 %v1310, 16
      %v1339 = vadd.s32 %v1317, 16
      %v1340 = vadd.s32 %v1324, 16
      %v1341 = vsel %vm1333, %v1337, %v1303
      %v1342 = vsel %vm1334, %v1338, %v1310
      %v1343 = vsel %vm1335, %v1339, %v1317
      %v1344 = vsel %vm1336, %v1340, %v1324
      %vm1345 = vcmp.lt.s32.totalorder %v1341, 2
      %vm1346 = vcmp.lt.s32.totalorder %v1342, 2
      %vm1347 = vcmp.lt.s32.totalorder %v1343, 2
      %vm1348 = vcmp.lt.s32.totalorder %v1344, 2
      %v1349 = vsel %vm1345, 1, 0
      %v1350 = vsel %vm1346, 1, 0
      %v1351 = vsel %vm1347, 1, 0
      %v1352 = vsel %vm1348, 1, 0
      %v1353 = vcvt.s32.f32 %v1349
      %v1354 = vcvt.s32.f32 %v1350
      %v1355 = vcvt.s32.f32 %v1351
      %v1356 = vcvt.s32.f32 %v1352
      %v1357 = vmul.f32 %v1288, %v1353
      %v1358 = vmul.f32 %v1289, %v1354
      %v1359 = vmul.f32 %v1290, %v1355
      %v1360 = vmul.f32 %v1291, %v1356
      %v1361 = vadd.f32 %v1357, %v1358
      %v1362 = vadd.f32 %v1361, %v1359
      %v1363 = vadd.f32 %v1362, %v1360
      %v1364 = vrot.slane %v1363, 4
      %v1365 = vadd.f32 %v1363, %v1364
      %v1366 = vrot.slane %v1365, 2
      %v1367 = vadd.f32 %v1365, %v1366
      %v1368 = vrot.slane %v1367, 1
      %v1369 = vadd.f32 %v1367, %v1368
      %v1370 = vmul.f32 %v1369, 0.25
      %v1371 = vmul.f32 %v1357, %v1288
      %v1372 = vmul.f32 %v1358, %v1289
      %v1373 = vmul.f32 %v1359, %v1290
      %v1374 = vmul.f32 %v1360, %v1291
      %v1375 = vadd.f32 %v1371, %v1372
      %v1376 = vadd.f32 %v1375, %v1373
      %v1377 = vadd.f32 %v1376, %v1374
      %v1378 = vrot.slane %v1377, 4
      %v1379 = vadd.f32 %v1377, %v1378
      %v1380 = vrot.slane %v1379, 2
      %v1381 = vadd.f32 %v1379, %v1380
      %v1382 = vrot.slane %v1381, 1
      %v1383 = vadd.f32 %v1381, %v1382
      %v1384 = vmul.f32 %v1383, 0.25
      %v1385 = vmul.f32 %v1370, %v1370
      %v1386 = vsub.f32 %v1384, %v1385
      %v1387 = vmax.f32 %v1386, 0.0
      %v1388 = vsub.f32 %v1288, %v1370
      %v1389 = vsub.f32 %v1289, %v1370
      %v1390 = vsub.f32 %v1290, %v1370
      %v1391 = vsub.f32 %v1291, %v1370
      %v1392 = vadd.f32 %v1387, 1e-05
      %v1393 = vrsqrt.pop %v1392
      %v1394 = vmul.f32 %v1388, %v1393
      %v1395 = vmul.f32 %v1389, %v1393
      %v1396 = vmul.f32 %v1390, %v1393
      %v1397 = vmul.f32 %v1391, %v1393
      %v1398 = vld [vmem:[%s292] sm:$0x1]
      %v1400 = vlaneseq
      %v1401 = vshrl.u32 %v1400, 7
      %v1402 = vsub.s32 0, %v1401
      %v1403 = vrot.slane %v1398, %v1402
      %v1405 = vmul.f32 %v1394, %v1403
      %v1406 = vmul.f32 %v1395, %v1403
      %v1407 = vmul.f32 %v1396, %v1403
      %v1408 = vmul.f32 %v1397, %v1403
      %v1409 = vld [vmem:[%s295] sm:$0x1]
      %v1411 = vlaneseq
      %v1412 = vshrl.u32 %v1411, 7
      %v1413 = vsub.s32 0, %v1412
      %v1414 = vrot.slane %v1409, %v1413
      %v1416 = vadd.f32 %v1405, %v1414
      %v1417 = vadd.f32 %v1406, %v1414
      %v1418 = vadd.f32 %v1407, %v1414
      %v1419 = vadd.f32 %v1408, %v1414
      %v1420 = vmul.f32 %v1416, 0.1
      %v1421 = vmul.f32 %v1417, 0.1
      %v1422 = vmul.f32 %v1418, 0.1
      %v1423 = vmul.f32 %v1419, 0.1
      %v1424 = vmax.f32 %v1416, %v1420
      %v1425 = vmax.f32 %v1417, %v1421
      %v1426 = vmax.f32 %v1418, %v1422
      %v1427 = vmax.f32 %v1419, %v1423
      %v1428 = vpack.c.bf16 %v1425, %v1424
      %v1429 = vpack.c.bf16 %v1427, %v1426
      %v1432 = vunpack.c.l.b16 %v1428
      %v1433 = vunpack.c.h.b16 %v1428
      %v1434 = vunpack.c.l.b16 %v1429
      %v1435 = vunpack.c.h.b16 %v1429
      %v1436 = vpack.c.b16 %v1432, %v1432
      %v1437 = vpack.c.b16 %v1433, %v1433
      %v1438 = vpack.c.b16 %v1434, %v1434
      %v1439 = vpack.c.b16 %v1435, %v1435
      %1444 = vst [vmem:[%s303] sm:$0xf] %v1436
      %1445 = vst [vmem:[%s303 + $0x4] sm:$0xf] %v1437
      %1446 = vst [vmem:[%s303 + $0x8] sm:$0xf] %v1438
      %1447 = vst [vmem:[%s303 + $0xc] sm:$0xf] %v1439
      %p1448 = scmp.lt.s32.totalorder %s21, 1
      %s1449 = scalar_select %p1448, %s21, 1
      %p1450 = scmp.lt.s32.totalorder %s20, 0
      %s1451 = scalar_select %p1450, %s20, 0
      %s1452 = smul.addr %s1449, 4
      %s1453 = sadd.s32 %s1451, %s1452
      %s1454 = smul.addr %s1453, 4
      %s1455 = scalar_lea.vmem %s5, %s1454
      // Predicated region
      $region41: #{_lambda_.8} parent=39 // pred_check
        %p1456 = pneg %p178
      $region42: #{_lambda_.8} parent=39 // pred_check_branch
        %1458 = sbr.rel (%p1456) target = $region44
      $region43: #{_lambda_.8} parent=39 // pred_region
        _
      $region44: #{_lambda_.8} parent=39 // pred_fallthru
        _
    $region40: #{_lambda_.8} parent=5 // pred_fallthru
      _
    %p1459 = scmp.le.s32.totalorder 2, %s11
    // Predicated region
    $region45: #{_lambda_.8} parent=5 // pred_check
      %p1460 = pneg %p1459
    $region46: #{_lambda_.8} parent=5 // pred_check_branch
      %1462 = sbr.rel (%p1460) target = $region48
    $region47: #{_lambda_.8} parent=5 // pred_region
      %s1463 = ssub.s32 %s11, 2
      // Predicated region
      $region49: #{_lambda_.8} parent=47 // pred_check
        %p1464 = pneg %p184
      $region50: #{_lambda_.8} parent=47 // pred_check_branch
        %1466 = sbr.rel (%p1464) target = $region52
      $region51: #{_lambda_.8} parent=47 // pred_region
        %p1467 = scmp.lt.s32.totalorder %s23, 1
        %s1468 = scalar_select %p1467, %s23, 1
        %p1469 = scmp.lt.s32.totalorder %s22, 0
        %s1470 = scalar_select %p1469, %s22, 0
        %s1471 = smul.addr %s1468, 4
        %s1472 = sadd.s32 %s1470, %s1471
        %s1473 = smul.addr %s1472, 4
        %s1474 = scalar_lea.vmem %s5, %s1473
      $region52: #{_lambda_.8} parent=47 // pred_fallthru
        _
    $region48: #{_lambda_.8} parent=5 // pred_fallthru
      _
  $region6: #{_lambda_.8} parent=0 // loop_footer
    %s15 = sadd.s32 1, %s11
  $region7: #{_lambda_.8} parent=0 // loop_footer_branch
    %10 = sbr.rel target = $region3
  $region8: #{_lambda_.8} parent=0 // loop_exit
    _

</llo_original>
